<compile_context>
chip_gen: v6e
topology: v6e:2x2x1
jax: 0.10.0
libtpu: 0.0.40
codegen_flags: <defaults>
</compile_context>

<pallas_src>
import functools

import jax
import jax.numpy as jnp
from jax.experimental import pallas as pl
from jax.experimental.pallas import tpu as pltpu


def _round_up(x, m):
    return (x + m - 1) // m * m


def _pow2_divisor(n):
    p = 1
    while n % (p * 2) == 0:
        p *= 2
    return p


def _vmem_limit_bytes():
    cap = 64 * 1024 * 1024
    try:
        info = pltpu.get_tpu_info()
        cap = int(getattr(info, "vmem_capacity_bytes", cap) or cap)
    except Exception:
        pass
    # Leave headroom: half of physical per-core VMEM, capped at 96 MiB.
    return int(min(cap // 2, 96 * 1024 * 1024))


def _bottleneck_kernel(*refs, stride, downsampling, H, W, Whp, Wo_p, TH, R,
                       Cin_p, P_p, Cout_p):
    if downsampling:
        (xp_ref, w1_ref, b1_ref, w2_ref, b2_ref, w3_ref, b3_ref,
         wd_ref, bd_ref, o_ref, hp_ref, hps_ref) = refs
    else:
        (xp_ref, w1_ref, b1_ref, w2_ref, b2_ref, w3_ref, b3_ref,
         o_ref, hp_ref, hps_ref) = refs
        wd_ref = bd_ref = None

    j = pl.program_id(1)
    row0 = pl.multiple_of(j * (TH * stride), _pow2_divisor(TH * stride))

    # ---- conv1 (1x1) + folded-BN bias + ReLU over the R-row halo window ----
    # (The minimal sublane-aligned column window covering the W+2 padded
    #  columns is Whp itself, so we keep the load/reshape tile-aligned rather
    #  than shaving halo columns at the price of misaligned stores.)
    xw = xp_ref[0, pl.ds(row0, R), :, :]                    # (R, Whp, Cin_p) bf16
    h1 = jnp.dot(xw.reshape(R * Whp, Cin_p), w1_ref[...],
                 preferred_element_type=jnp.float32)
    h1 = jnp.maximum(h1 + b1_ref[...], 0.0)
    hp_ref[...] = h1.reshape(R, Whp, P_p).astype(hp_ref.dtype)

    # conv2's zero padding: conv1(0) + bias != 0, so blank the spatial halo.
    zc = jnp.zeros((R, 1, P_p), hp_ref.dtype)
    hp_ref[:, 0:1, :] = zc
    hp_ref[:, W + 1:W + 2, :] = zc

    @pl.when(row0 == 0)                      # this tile holds the top pad row
    def _():
        hp_ref[0:1, :, :] = jnp.zeros((1, Whp, P_p), hp_ref.dtype)

    @pl.when(row0 + (R - 1) == H + 1)        # this tile holds the bottom pad row
    def _():
        hp_ref[R - 1:R, :, :] = jnp.zeros((1, Whp, P_p), hp_ref.dtype)

    # ---- de-interleave / K-stack: hps[r, w, dw*P_p + c] = hp[r, w*stride+dw, c]
    for dw in range(3):
        if stride == 1:
            slab = hp_ref[:, dw:dw + Wo_p, :]
        else:
            slab = hp_ref[:, pl.ds(dw, Wo_p, stride=stride), :]
        hps_ref[:, :, dw * P_p:(dw + 1) * P_p] = slab

    # ---- conv2 (3x3, stride, pad=1): 3 dots with K = 3*P_p, local f32 acc --
    acc = None
    for dh in range(3):
        if stride == 1:
            lhs = hps_ref[dh:dh + TH, :, :]
        else:
            lhs = hps_ref[pl.ds(dh, TH, stride=stride), :, :]
        t = jnp.dot(lhs.reshape(TH * Wo_p, 3 * P_p), w2_ref[dh],
                    preferred_element_type=jnp.float32)
        acc = t if acc is None else acc + t
    h2 = jnp.maximum(acc + b2_ref[...], 0.0).astype(jnp.bfloat16)

    # ---- conv3 (1x1) + folded-BN bias ---------------------------------------
    h3 = jnp.dot(h2, w3_ref[...], preferred_element_type=jnp.float32)
    h3 = h3 + b3_ref[...]

    # ---- residual path ------------------------------------------------------
    if stride == 1:
        xr = xp_ref[0, pl.ds(row0 + 1, TH), pl.ds(1, Wo_p), :]
    else:
        xr = xp_ref[0, pl.ds(row0 + 1, TH, stride=stride),
                    pl.ds(1, Wo_p, stride=stride), :]
    if downsampling:
        res = jnp.dot(xr.reshape(TH * Wo_p, Cin_p), wd_ref[...],
                      preferred_element_type=jnp.float32) + bd_ref[...]
    else:
        # identity residual (wrapper asserts Cin == Cout and stride == 1)
        res = xr.reshape(TH * Wo_p, Cout_p).astype(jnp.float32)

    out = jnp.maximum(h3 + res, 0.0)
    o_ref[0] = out.reshape(TH, Wo_p, Cout_p).astype(o_ref.dtype)


def _fold_bn(gamma, beta, mean, var, eps=1e-5):
    scale = gamma / jnp.sqrt(var + eps)
    bias = beta - mean * scale
    return scale, bias


def _pad2(w, r, c):
    return jnp.zeros((r, c), w.dtype).at[:w.shape[0], :w.shape[1]].set(w)


def _pad_bias(b, c):
    return jnp.zeros((1, c), jnp.float32).at[0, :b.shape[0]].set(
        b.astype(jnp.float32))


@functools.partial(jax.jit, static_argnames=("stride", "downsampling",
                                             "single_buffer_weights"))
def bottleneck_forward(x_nchw, params, *, stride=1, downsampling=False,
                       single_buffer_weights=True):
    """x_nchw: (N, Cin, H, W) float32 — PyTorch layout. Returns NCHW output."""
    N, Cin, H, W = x_nchw.shape
    w1 = params["w1"]          # (Cin, P)
    w2 = params["w2"]          # (3, 3, P, P)  HWIO
    w3 = params["w3"]          # (P, Cout)
    P = w1.shape[1]
    Cout = w3.shape[1]

    if not downsampling:
        assert stride == 1 and Cin == Cout, (
            "identity residual requires stride == 1 and Cin == Cout")

    s1, b1 = _fold_bn(*params["bn1"])
    s2, b2 = _fold_bn(*params["bn2"])
    s3, b3 = _fold_bn(*params["bn3"])

    # Lane-dense padded channel sizes.
    Cin_p = _round_up(Cin, 128)
    P_p = _round_up(P, 128)
    Cout_p = _round_up(Cout, 128)

    Ho = (H - 1) // stride + 1
    Wo = (W - 1) // stride + 1
    # Row-tile height: largest divisor of Ho that is <= 8 (handles Ho=7/14/28).
    TH = 1
    for d in range(2, 9):
        if d <= Ho and Ho % d == 0:
            TH = d
    JT = Ho // TH
    R = (TH - 1) * stride + 3            # padded-h1 rows needed per row tile
    Wo_p = _round_up(Wo, 8)              # sublane-aligned output width
    # Padded-x / padded-h1 width: covers the W+2 halo and every tap read for
    # the padded output width, rounded to a sublane multiple.
    Whp = max(_round_up(W + 2, 8), _round_up((Wo_p - 1) * stride + 3, 8))

    # Fold BN scale into conv weights; cast weights to bf16 for the MXU.
    w1f = _pad2(w1 * s1[None, :], Cin_p, P_p).astype(jnp.bfloat16)
    w2s = w2 * s2[None, None, None, :]
    # dw-stacked conv2 weight: (3, 3*P_p, P_p), rows [dw*P_p, dw*P_p+P) hold tap dw.
    w2f = jnp.zeros((3, 3 * P_p, P_p), jnp.float32)
    for dw in range(3):
        w2f = w2f.at[:, dw * P_p:dw * P_p + P, :P].set(w2s[:, dw])
    w2f = w2f.astype(jnp.bfloat16)
    w3f = _pad2(w3 * s3[None, :], P_p, Cout_p).astype(jnp.bfloat16)
    b1p = _pad_bias(b1, P_p)
    b2p = _pad_bias(b2, P_p)
    b3p = _pad_bias(b3, Cout_p)

    # NCHW -> NHWC, channel-padded to 128 lanes, 1-pixel zero spatial halo.
    # TODO(synk): fold this relayout/pad into the kernel (it is an extra HBM
    # round trip of the activations) if the surrounding model must stay NCHW.
    x_nhwc = jnp.transpose(x_nchw, (0, 2, 3, 1))
    xp = jnp.zeros((N, H + 2, Whp, Cin_p), jnp.bfloat16)
    xp = xp.at[:, 1:H + 1, 1:W + 1, :Cin].set(x_nhwc.astype(jnp.bfloat16))

    def wspec(shape):
        imap = lambda n, j: (0,) * len(shape)      # grid-invariant operand
        if single_buffer_weights:
            return pl.BlockSpec(shape, imap, pipeline_mode=pl.Buffered(1))
        return pl.BlockSpec(shape, imap)

    in_specs = [
        # TODO(synk): x stays whole-image resident (a few MiB for ResNet
        # shapes); row windows overlap by the conv halo, so true per-tile row
        # residency needs a manual-DMA (memory_space=pl.ANY) path.
        pl.BlockSpec((1, H + 2, Whp, Cin_p), lambda n, j: (n, 0, 0, 0)),  # x
        wspec((Cin_p, P_p)),                                              # w1
        wspec((1, P_p)),                                                  # b1
        wspec((3, 3 * P_p, P_p)),                                         # w2 (K-stacked)
        wspec((1, P_p)),                                                  # b2
        wspec((P_p, Cout_p)),                                             # w3
        wspec((1, Cout_p)),                                               # b3
    ]
    args = [xp, w1f, b1p, w2f, b2p, w3f, b3p]

    if downsampling:
        wd = params["wd"]                # (Cin, Cout)
        sd, bd = _fold_bn(*params["bnd"])
        wdf = _pad2(wd * sd[None, :], Cin_p, Cout_p).astype(jnp.bfloat16)
        bdp = _pad_bias(bd, Cout_p)
        in_specs += [wspec((Cin_p, Cout_p)), wspec((1, Cout_p))]          # wd, bd
        args += [wdf, bdp]

    kernel = functools.partial(
        _bottleneck_kernel,
        stride=stride, downsampling=downsampling,
        H=H, W=W, Whp=Whp, Wo_p=Wo_p, TH=TH, R=R,
        Cin_p=Cin_p, P_p=P_p, Cout_p=Cout_p)

    out_p = pl.pallas_call(
        kernel,
        out_shape=jax.ShapeDtypeStruct((N, Ho, Wo_p, Cout_p), jnp.float32),
        grid=(N, JT),
        in_specs=in_specs,
        out_specs=pl.BlockSpec((1, TH, Wo_p, Cout_p), lambda n, j: (n, j, 0, 0)),
        scratch_shapes=[
            pltpu.VMEM((R, Whp, P_p), jnp.bfloat16),        # padded conv1 tile
            pltpu.VMEM((R, Wo_p, 3 * P_p), jnp.bfloat16),   # dw-stacked conv1 tile
        ],
        compiler_params=pltpu.CompilerParams(
            dimension_semantics=("parallel", "parallel"),
            vmem_limit_bytes=_vmem_limit_bytes()),
    )(*args)

    out = out_p[:, :, :Wo, :Cout]                # strip width/channel padding
    # TODO(synk): emit bf16 / keep NHWC if the surrounding model allows it
    # (saves HBM bandwidth; most relevant on v5e).
    return jnp.transpose(out, (0, 3, 1, 2))      # NHWC -> NCHW


def _reference_forward(x_nchw, params, *, stride, downsampling, eps=1e-5):
    """Pure-JAX (XLA) reference: conv -> BN(running stats) -> ReLU chain."""
    dn = ("NHWC", "HWIO", "NHWC")

    def bn(y, stats):
        g, b, m, v = stats
        return (y - m) * (g / jnp.sqrt(v + eps)) + b

    xh = jnp.transpose(x_nchw, (0, 2, 3, 1)).astype(jnp.float32)
    h = jax.lax.conv_general_dilated(xh, params["w1"][None, None], (1, 1),
                                     "VALID", dimension_numbers=dn)
    h = jax.nn.relu(bn(h, params["bn1"]))
    h = jax.lax.conv_general_dilated(h, params["w2"], (stride, stride),
                                     ((1, 1), (1, 1)), dimension_numbers=dn)
    h = jax.nn.relu(bn(h, params["bn2"]))
    h = jax.lax.conv_general_dilated(h, params["w3"][None, None], (1, 1),
                                     "VALID", dimension_numbers=dn)
    h = bn(h, params["bn3"])
    if downsampling:
        r = jax.lax.conv_general_dilated(xh, params["wd"][None, None],
                                         (stride, stride), "VALID",
                                         dimension_numbers=dn)
        r = bn(r, params["bnd"])
    else:
        r = xh
    out = jax.nn.relu(h + r)
    return jnp.transpose(out, (0, 3, 1, 2))


def make_params(key, in_places, places, expansion=4, downsampling=False):
    cout = places * expansion
    ks = jax.random.split(key, 16)

    def bn(k, c):
        k1, k2, k3, k4 = jax.random.split(k, 4)
        gamma = 1.0 + 0.1 * jax.random.normal(k1, (c,), jnp.float32)
        beta = 0.1 * jax.random.normal(k2, (c,), jnp.float32)
        mean = 0.1 * jax.random.normal(k3, (c,), jnp.float32)
        var = 1.0 + 0.1 * jax.random.uniform(k4, (c,), jnp.float32)
        return (gamma, beta, mean, var)

    params = {
        # PyTorch conv weights are OIHW; here stored pre-transposed (HWIO / IO):
        "w1": 0.2 * jax.random.normal(ks[0], (in_places, places), jnp.float32),
        "w2": 0.2 * jax.random.normal(ks[1], (3, 3, places, places), jnp.float32),
        "w3": 0.2 * jax.random.normal(ks[2], (places, cout), jnp.float32),
        "bn1": bn(ks[3], places),
        "bn2": bn(ks[4], places),
        "bn3": bn(ks[5], cout),
    }
    if downsampling:
        params["wd"] = 0.2 * jax.random.normal(ks[6], (in_places, cout), jnp.float32)
        params["bnd"] = bn(ks[7], cout)
    return params


if __name__ == "__main__":
    key = jax.random.PRNGKey(0)
    k_x, k_p = jax.random.split(key)

    # Small shapes consistent with the module: in_places=4, places=4,
    # expansion=4 -> out channels 16; stride=1; downsampling=True since
    # in_places != places*expansion.
    N, Cin, H, W = 2, 4, 16, 16
    in_places, places, expansion = 4, 4, 4
    stride, downsampling = 1, True

    x = jax.random.normal(k_x, (N, Cin, H, W), jnp.float32)
    params = make_params(k_p, in_places, places, expansion, downsampling)

    ref = jax.block_until_ready(
        _reference_forward(x, params, stride=stride, downsampling=downsampling))

    def run(single_buffer_weights):
        out = bottleneck_forward(x, params, stride=stride,
                                 downsampling=downsampling,
                                 single_buffer_weights=single_buffer_weights)
        out = jax.block_until_ready(out)
        assert out.shape == (N, places * expansion, H // stride, W // stride)
        assert bool(jnp.all(jnp.isfinite(out)))
        assert bool(jnp.all(out >= 0.0))        # final ReLU
        err = float(jnp.max(jnp.abs(out - ref)) /
                    (jnp.max(jnp.abs(ref)) + 1e-6))
        assert err < 5e-2, f"mismatch vs reference: normalized max err = {err}"
        return out

    try:
        out = run(True)
    except Exception:
        # Fallback if this JAX build rejects pipeline_mode=pl.Buffered(1).
        out = run(False)

    print("KERNEL_OK")
</pallas_src>

<mosaic_0001>
module attributes {stable_mosaic.version = 11 : i64} {
  func.func @_bottleneck_kernel(%arg0: i32, %arg1: i32, %arg2: memref<1x18x24x128xbf16, #tpu.memory_space<vmem>>, %arg3: memref<128x128xbf16, #tpu.memory_space<vmem>>, %arg4: memref<1x128xf32, #tpu.memory_space<vmem>>, %arg5: memref<3x384x128xbf16, #tpu.memory_space<vmem>>, %arg6: memref<1x128xf32, #tpu.memory_space<vmem>>, %arg7: memref<128x128xbf16, #tpu.memory_space<vmem>>, %arg8: memref<1x128xf32, #tpu.memory_space<vmem>>, %arg9: memref<128x128xbf16, #tpu.memory_space<vmem>>, %arg10: memref<1x128xf32, #tpu.memory_space<vmem>>, %arg11: memref<1x8x16x128xf32, #tpu.memory_space<vmem>>, %arg12: memref<10x24x128xbf16, #tpu.memory_space<vmem>>, %arg13: memref<10x16x384xbf16, #tpu.memory_space<vmem>>) attributes {dimension_semantics = [#tpu.dimension_semantics<parallel>, #tpu.dimension_semantics<parallel>], iteration_bounds = array<i64: 2, 2>, scalar_prefetch = 0 : i64, scratch_operands = 2 : i64, tpu.core_type = #tpu.core_type<tc>, window_params = [{transform_indices = @transform_0, window_bounds = array<i64: 1, 18, 24, 128>}, {pipeline_mode = #tpu.pipeline_mode<synchronous>, transform_indices = @transform_1, window_bounds = array<i64: 128, 128>}, {pipeline_mode = #tpu.pipeline_mode<synchronous>, transform_indices = @transform_2, window_bounds = array<i64: 1, 128>}, {pipeline_mode = #tpu.pipeline_mode<synchronous>, transform_indices = @transform_3, window_bounds = array<i64: 3, 384, 128>}, {pipeline_mode = #tpu.pipeline_mode<synchronous>, transform_indices = @transform_4, window_bounds = array<i64: 1, 128>}, {pipeline_mode = #tpu.pipeline_mode<synchronous>, transform_indices = @transform_5, window_bounds = array<i64: 128, 128>}, {pipeline_mode = #tpu.pipeline_mode<synchronous>, transform_indices = @transform_6, window_bounds = array<i64: 1, 128>}, {pipeline_mode = #tpu.pipeline_mode<synchronous>, transform_indices = @transform_7, window_bounds = array<i64: 128, 128>}, {pipeline_mode = #tpu.pipeline_mode<synchronous>, transform_indices = @transform_8, window_bounds = array<i64: 1, 128>}, {transform_indices = @transform_9, window_bounds = array<i64: 1, 8, 16, 128>}]} {
    %c8_i32 = arith.constant 8 : i32
    %0 = arith.muli %arg1, %c8_i32 : i32
    %1 = tpu.assume_multiple %0, 8 : i32
    %c0 = arith.constant 0 : index
    %2 = arith.index_cast %1 : i32 to index
    %c0_0 = arith.constant 0 : index
    %c0_1 = arith.constant 0 : index
    %3 = vector.load %arg2[%c0, %2, %c0_0, %c0_1] : memref<1x18x24x128xbf16, #tpu.memory_space<vmem>>, vector<1x10x24x128xbf16>
    %4 = vector.shape_cast %3 : vector<1x10x24x128xbf16> to vector<10x24x128xbf16>
    %5 = vector.shape_cast %4 : vector<10x24x128xbf16> to vector<240x128xbf16>
    %c0_2 = arith.constant 0 : index
    %c0_3 = arith.constant 0 : index
    %6 = vector.load %arg3[%c0_2, %c0_3] : memref<128x128xbf16, #tpu.memory_space<vmem>>, vector<128x128xbf16>
    %cst = arith.constant dense<0.000000e+00> : vector<240x128xf32>
    %7 = tpu.matmul %5, %6, %cst {dimension_numbers = #tpu.dot_dimension_numbers<[1], [0], [0], [1], [0, 0, 1, 1], [], []>} : vector<240x128xbf16>, vector<128x128xbf16>, vector<240x128xf32> -> vector<240x128xf32>
    %c0_4 = arith.constant 0 : index
    %c0_5 = arith.constant 0 : index
    %8 = vector.load %arg4[%c0_4, %c0_5] : memref<1x128xf32, #tpu.memory_space<vmem>>, vector<1x128xf32>
    %9 = vector.broadcast %8 : vector<1x128xf32> to vector<240x128xf32>
    %10 = arith.addf %7, %9 : vector<240x128xf32>
    %cst_6 = arith.constant 0.000000e+00 : f32
    %11 = vector.broadcast %cst_6 : f32 to vector<240x128xf32>
    %12 = arith.maximumf %10, %11 : vector<240x128xf32>
    %13 = vector.shape_cast %12 : vector<240x128xf32> to vector<10x24x128xf32>
    %14 = arith.truncf %13 : vector<10x24x128xf32> to vector<10x24x128xbf16>
    %c0_7 = arith.constant 0 : index
    %c0_8 = arith.constant 0 : index
    %c0_9 = arith.constant 0 : index
    %15 = vector.load %arg12[%c0_7, %c0_8, %c0_9] : memref<10x24x128xbf16, #tpu.memory_space<vmem>>, vector<10x24x128xbf16>
    tpu.vector_store %arg12[%c0_7, %c0_8, %c0_9], %14 {strides = array<i32>} : memref<10x24x128xbf16, #tpu.memory_space<vmem>>, vector<10x24x128xbf16>,
    %cst_10 = arith.constant 0.000000e+00 : bf16
    %16 = vector.broadcast %cst_10 : bf16 to vector<10x1x128xbf16>
    %c0_11 = arith.constant 0 : index
    %c0_12 = arith.constant 0 : index
    %c0_13 = arith.constant 0 : index
    %17 = vector.load %arg12[%c0_11, %c0_12, %c0_13] : memref<10x24x128xbf16, #tpu.memory_space<vmem>>, vector<10x1x128xbf16>
    tpu.vector_store %arg12[%c0_11, %c0_12, %c0_13], %16 {strides = array<i32>} : memref<10x24x128xbf16, #tpu.memory_space<vmem>>, vector<10x1x128xbf16>,
    %c0_14 = arith.constant 0 : index
    %c17 = arith.constant 17 : index
    %c0_15 = arith.constant 0 : index
    %18 = vector.load %arg12[%c0_14, %c17, %c0_15] : memref<10x24x128xbf16, #tpu.memory_space<vmem>>, vector<10x1x128xbf16>
    tpu.vector_store %arg12[%c0_14, %c17, %c0_15], %16 {strides = array<i32>} : memref<10x24x128xbf16, #tpu.memory_space<vmem>>, vector<10x1x128xbf16>,
    %c0_i32 = arith.constant 0 : i32
    %19 = arith.cmpi eq, %1, %c0_i32 : i32
    %20 = arith.extui %19 : i1 to i32
    %c0_i32_16 = arith.constant 0 : i32
    %21 = arith.cmpi ne, %20, %c0_i32_16 : i32
    scf.if %21 {
      %cst_74 = arith.constant 0.000000e+00 : bf16
      %77 = vector.broadcast %cst_74 : bf16 to vector<1x24x128xbf16>
      %c0_75 = arith.constant 0 : index
      %c0_76 = arith.constant 0 : index
      %c0_77 = arith.constant 0 : index
      %78 = vector.load %arg12[%c0_75, %c0_76, %c0_77] : memref<10x24x128xbf16, #tpu.memory_space<vmem>>, vector<1x24x128xbf16>
      tpu.vector_store %arg12[%c0_75, %c0_76, %c0_77], %77 {strides = array<i32>} : memref<10x24x128xbf16, #tpu.memory_space<vmem>>, vector<1x24x128xbf16>,
    } else {
    }
    %c9_i32 = arith.constant 9 : i32
    %22 = arith.addi %1, %c9_i32 : i32
    %c17_i32 = arith.constant 17 : i32
    %23 = arith.cmpi eq, %22, %c17_i32 : i32
    %24 = arith.extui %23 : i1 to i32
    %c0_i32_17 = arith.constant 0 : i32
    %25 = arith.cmpi ne, %24, %c0_i32_17 : i32
    scf.if %25 {
      %cst_74 = arith.constant 0.000000e+00 : bf16
      %77 = vector.broadcast %cst_74 : bf16 to vector<1x24x128xbf16>
      %c9 = arith.constant 9 : index
      %c0_75 = arith.constant 0 : index
      %c0_76 = arith.constant 0 : index
      %78 = vector.load %arg12[%c9, %c0_75, %c0_76] : memref<10x24x128xbf16, #tpu.memory_space<vmem>>, vector<1x24x128xbf16>
      tpu.vector_store %arg12[%c9, %c0_75, %c0_76], %77 {strides = array<i32>} : memref<10x24x128xbf16, #tpu.memory_space<vmem>>, vector<1x24x128xbf16>,
    } else {
    }
    %c0_18 = arith.constant 0 : index
    %c0_19 = arith.constant 0 : index
    %c0_20 = arith.constant 0 : index
    %26 = vector.load %arg12[%c0_18, %c0_19, %c0_20] : memref<10x24x128xbf16, #tpu.memory_space<vmem>>, vector<10x16x128xbf16>
    %c0_21 = arith.constant 0 : index
    %c0_22 = arith.constant 0 : index
    %c0_23 = arith.constant 0 : index
    %27 = vector.load %arg13[%c0_21, %c0_22, %c0_23] : memref<10x16x384xbf16, #tpu.memory_space<vmem>>, vector<10x16x128xbf16>
    tpu.vector_store %arg13[%c0_21, %c0_22, %c0_23], %26 {strides = array<i32>} : memref<10x16x384xbf16, #tpu.memory_space<vmem>>, vector<10x16x128xbf16>,
    %c0_24 = arith.constant 0 : index
    %c1 = arith.constant 1 : index
    %c0_25 = arith.constant 0 : index
    %28 = vector.load %arg12[%c0_24, %c1, %c0_25] : memref<10x24x128xbf16, #tpu.memory_space<vmem>>, vector<10x16x128xbf16>
    %c0_26 = arith.constant 0 : index
    %c0_27 = arith.constant 0 : index
    %c128 = arith.constant 128 : index
    %29 = vector.load %arg13[%c0_26, %c0_27, %c128] : memref<10x16x384xbf16, #tpu.memory_space<vmem>>, vector<10x16x128xbf16>
    tpu.vector_store %arg13[%c0_26, %c0_27, %c128], %28 {strides = array<i32>} : memref<10x16x384xbf16, #tpu.memory_space<vmem>>, vector<10x16x128xbf16>,
    %c0_28 = arith.constant 0 : index
    %c2 = arith.constant 2 : index
    %c0_29 = arith.constant 0 : index
    %30 = vector.load %arg12[%c0_28, %c2, %c0_29] : memref<10x24x128xbf16, #tpu.memory_space<vmem>>, vector<10x16x128xbf16>
    %c0_30 = arith.constant 0 : index
    %c0_31 = arith.constant 0 : index
    %c256 = arith.constant 256 : index
    %31 = vector.load %arg13[%c0_30, %c0_31, %c256] : memref<10x16x384xbf16, #tpu.memory_space<vmem>>, vector<10x16x128xbf16>
    tpu.vector_store %arg13[%c0_30, %c0_31, %c256], %30 {strides = array<i32>} : memref<10x16x384xbf16, #tpu.memory_space<vmem>>, vector<10x16x128xbf16>,
    %c0_32 = arith.constant 0 : index
    %c0_33 = arith.constant 0 : index
    %c0_34 = arith.constant 0 : index
    %32 = vector.load %arg13[%c0_32, %c0_33, %c0_34] : memref<10x16x384xbf16, #tpu.memory_space<vmem>>, vector<8x16x384xbf16>
    %33 = vector.shape_cast %32 : vector<8x16x384xbf16> to vector<128x384xbf16>
    %c0_35 = arith.constant 0 : index
    %c0_36 = arith.constant 0 : index
    %c0_37 = arith.constant 0 : index
    %34 = vector.load %arg5[%c0_35, %c0_36, %c0_37] : memref<3x384x128xbf16, #tpu.memory_space<vmem>>, vector<1x384x128xbf16>
    %35 = vector.shape_cast %34 : vector<1x384x128xbf16> to vector<384x128xbf16>
    %cst_38 = arith.constant dense<0.000000e+00> : vector<128x128xf32>
    %36 = tpu.matmul %33, %35, %cst_38 {dimension_numbers = #tpu.dot_dimension_numbers<[1], [0], [0], [1], [0, 0, 1, 1], [], []>} : vector<128x384xbf16>, vector<384x128xbf16>, vector<128x128xf32> -> vector<128x128xf32>
    %c1_39 = arith.constant 1 : index
    %c0_40 = arith.constant 0 : index
    %c0_41 = arith.constant 0 : index
    %37 = vector.load %arg13[%c1_39, %c0_40, %c0_41] : memref<10x16x384xbf16, #tpu.memory_space<vmem>>, vector<8x16x384xbf16>
    %38 = vector.shape_cast %37 : vector<8x16x384xbf16> to vector<128x384xbf16>
    %c1_42 = arith.constant 1 : index
    %c0_43 = arith.constant 0 : index
    %c0_44 = arith.constant 0 : index
    %39 = vector.load %arg5[%c1_42, %c0_43, %c0_44] : memref<3x384x128xbf16, #tpu.memory_space<vmem>>, vector<1x384x128xbf16>
    %40 = vector.shape_cast %39 : vector<1x384x128xbf16> to vector<384x128xbf16>
    %cst_45 = arith.constant dense<0.000000e+00> : vector<128x128xf32>
    %41 = tpu.matmul %38, %40, %cst_45 {dimension_numbers = #tpu.dot_dimension_numbers<[1], [0], [0], [1], [0, 0, 1, 1], [], []>} : vector<128x384xbf16>, vector<384x128xbf16>, vector<128x128xf32> -> vector<128x128xf32>
    %42 = arith.addf %36, %41 : vector<128x128xf32>
    %c2_46 = arith.constant 2 : index
    %c0_47 = arith.constant 0 : index
    %c0_48 = arith.constant 0 : index
    %43 = vector.load %arg13[%c2_46, %c0_47, %c0_48] : memref<10x16x384xbf16, #tpu.memory_space<vmem>>, vector<8x16x384xbf16>
    %44 = vector.shape_cast %43 : vector<8x16x384xbf16> to vector<128x384xbf16>
    %c2_49 = arith.constant 2 : index
    %c0_50 = arith.constant 0 : index
    %c0_51 = arith.constant 0 : index
    %45 = vector.load %arg5[%c2_49, %c0_50, %c0_51] : memref<3x384x128xbf16, #tpu.memory_space<vmem>>, vector<1x384x128xbf16>
    %46 = vector.shape_cast %45 : vector<1x384x128xbf16> to vector<384x128xbf16>
    %cst_52 = arith.constant dense<0.000000e+00> : vector<128x128xf32>
    %47 = tpu.matmul %44, %46, %cst_52 {dimension_numbers = #tpu.dot_dimension_numbers<[1], [0], [0], [1], [0, 0, 1, 1], [], []>} : vector<128x384xbf16>, vector<384x128xbf16>, vector<128x128xf32> -> vector<128x128xf32>
    %48 = arith.addf %42, %47 : vector<128x128xf32>
    %c0_53 = arith.constant 0 : index
    %c0_54 = arith.constant 0 : index
    %49 = vector.load %arg6[%c0_53, %c0_54] : memref<1x128xf32, #tpu.memory_space<vmem>>, vector<1x128xf32>
    %50 = vector.broadcast %49 : vector<1x128xf32> to vector<128x128xf32>
    %51 = arith.addf %48, %50 : vector<128x128xf32>
    %cst_55 = arith.constant 0.000000e+00 : f32
    %52 = vector.broadcast %cst_55 : f32 to vector<128x128xf32>
    %53 = arith.maximumf %51, %52 : vector<128x128xf32>
    %54 = arith.truncf %53 : vector<128x128xf32> to vector<128x128xbf16>
    %c0_56 = arith.constant 0 : index
    %c0_57 = arith.constant 0 : index
    %55 = vector.load %arg7[%c0_56, %c0_57] : memref<128x128xbf16, #tpu.memory_space<vmem>>, vector<128x128xbf16>
    %cst_58 = arith.constant dense<0.000000e+00> : vector<128x128xf32>
    %56 = tpu.matmul %54, %55, %cst_58 {dimension_numbers = #tpu.dot_dimension_numbers<[1], [0], [0], [1], [0, 0, 1, 1], [], []>} : vector<128x128xbf16>, vector<128x128xbf16>, vector<128x128xf32> -> vector<128x128xf32>
    %c0_59 = arith.constant 0 : index
    %c0_60 = arith.constant 0 : index
    %57 = vector.load %arg8[%c0_59, %c0_60] : memref<1x128xf32, #tpu.memory_space<vmem>>, vector<1x128xf32>
    %58 = vector.broadcast %57 : vector<1x128xf32> to vector<128x128xf32>
    %59 = arith.addf %56, %58 : vector<128x128xf32>
    %c1_i32 = arith.constant 1 : i32
    %60 = arith.addi %1, %c1_i32 : i32
    %c0_61 = arith.constant 0 : index
    %61 = arith.index_cast %60 : i32 to index
    %c1_62 = arith.constant 1 : index
    %c0_63 = arith.constant 0 : index
    %62 = vector.load %arg2[%c0_61, %61, %c1_62, %c0_63] : memref<1x18x24x128xbf16, #tpu.memory_space<vmem>>, vector<1x8x16x128xbf16>
    %63 = vector.shape_cast %62 : vector<1x8x16x128xbf16> to vector<8x16x128xbf16>
    %64 = vector.shape_cast %63 : vector<8x16x128xbf16> to vector<128x128xbf16>
    %c0_64 = arith.constant 0 : index
    %c0_65 = arith.constant 0 : index
    %65 = vector.load %arg9[%c0_64, %c0_65] : memref<128x128xbf16, #tpu.memory_space<vmem>>, vector<128x128xbf16>
    %cst_66 = arith.constant dense<0.000000e+00> : vector<128x128xf32>
    %66 = tpu.matmul %64, %65, %cst_66 {dimension_numbers = #tpu.dot_dimension_numbers<[1], [0], [0], [1], [0, 0, 1, 1], [], []>} : vector<128x128xbf16>, vector<128x128xbf16>, vector<128x128xf32> -> vector<128x128xf32>
    %c0_67 = arith.constant 0 : index
    %c0_68 = arith.constant 0 : index
    %67 = vector.load %arg10[%c0_67, %c0_68] : memref<1x128xf32, #tpu.memory_space<vmem>>, vector<1x128xf32>
    %68 = vector.broadcast %67 : vector<1x128xf32> to vector<128x128xf32>
    %69 = arith.addf %66, %68 : vector<128x128xf32>
    %70 = arith.addf %59, %69 : vector<128x128xf32>
    %cst_69 = arith.constant 0.000000e+00 : f32
    %71 = vector.broadcast %cst_69 : f32 to vector<128x128xf32>
    %72 = arith.maximumf %70, %71 : vector<128x128xf32>
    %73 = vector.shape_cast %72 : vector<128x128xf32> to vector<8x16x128xf32>
    %c0_70 = arith.constant 0 : index
    %c0_71 = arith.constant 0 : index
    %c0_72 = arith.constant 0 : index
    %c0_73 = arith.constant 0 : index
    %74 = vector.load %arg11[%c0_70, %c0_71, %c0_72, %c0_73] : memref<1x8x16x128xf32, #tpu.memory_space<vmem>>, vector<1x8x16x128xf32>
    %75 = vector.shape_cast %74 : vector<1x8x16x128xf32> to vector<8x16x128xf32>
    %76 = vector.shape_cast %73 : vector<8x16x128xf32> to vector<1x8x16x128xf32>
    tpu.vector_store %arg11[%c0_70, %c0_71, %c0_72, %c0_73], %76 {strides = array<i32>} : memref<1x8x16x128xf32, #tpu.memory_space<vmem>>, vector<1x8x16x128xf32>,
    return
  }
  func.func @transform_0(%arg0: i32, %arg1: i32) -> (i32, i32, i32, i32) {
    %c0_i32 = arith.constant 0 : i32
    %c0_i32_0 = arith.constant 0 : i32
    %c0_i32_1 = arith.constant 0 : i32
    %c0_i32_2 = arith.constant 0 : i32
    return %arg0, %c0_i32, %c0_i32_0, %c0_i32_1 : i32, i32, i32, i32
  }
  func.func @transform_1(%arg0: i32, %arg1: i32) -> (i32, i32) {
    %c0_i32 = arith.constant 0 : i32
    %c0_i32_0 = arith.constant 0 : i32
    %c0_i32_1 = arith.constant 0 : i32
    return %c0_i32, %c0_i32_0 : i32, i32
  }
  func.func @transform_2(%arg0: i32, %arg1: i32) -> (i32, i32) {
    %c0_i32 = arith.constant 0 : i32
    %c0_i32_0 = arith.constant 0 : i32
    %c0_i32_1 = arith.constant 0 : i32
    return %c0_i32, %c0_i32_0 : i32, i32
  }
  func.func @transform_3(%arg0: i32, %arg1: i32) -> (i32, i32, i32) {
    %c0_i32 = arith.constant 0 : i32
    %c0_i32_0 = arith.constant 0 : i32
    %c0_i32_1 = arith.constant 0 : i32
    %c0_i32_2 = arith.constant 0 : i32
    return %c0_i32, %c0_i32_0, %c0_i32_1 : i32, i32, i32
  }
  func.func @transform_4(%arg0: i32, %arg1: i32) -> (i32, i32) {
    %c0_i32 = arith.constant 0 : i32
    %c0_i32_0 = arith.constant 0 : i32
    %c0_i32_1 = arith.constant 0 : i32
    return %c0_i32, %c0_i32_0 : i32, i32
  }
  func.func @transform_5(%arg0: i32, %arg1: i32) -> (i32, i32) {
    %c0_i32 = arith.constant 0 : i32
    %c0_i32_0 = arith.constant 0 : i32
    %c0_i32_1 = arith.constant 0 : i32
    return %c0_i32, %c0_i32_0 : i32, i32
  }
  func.func @transform_6(%arg0: i32, %arg1: i32) -> (i32, i32) {
    %c0_i32 = arith.constant 0 : i32
    %c0_i32_0 = arith.constant 0 : i32
    %c0_i32_1 = arith.constant 0 : i32
    return %c0_i32, %c0_i32_0 : i32, i32
  }
  func.func @transform_7(%arg0: i32, %arg1: i32) -> (i32, i32) {
    %c0_i32 = arith.constant 0 : i32
    %c0_i32_0 = arith.constant 0 : i32
    %c0_i32_1 = arith.constant 0 : i32
    return %c0_i32, %c0_i32_0 : i32, i32
  }
  func.func @transform_8(%arg0: i32, %arg1: i32) -> (i32, i32) {
    %c0_i32 = arith.constant 0 : i32
    %c0_i32_0 = arith.constant 0 : i32
    %c0_i32_1 = arith.constant 0 : i32
    return %c0_i32, %c0_i32_0 : i32, i32
  }
  func.func @transform_9(%arg0: i32, %arg1: i32) -> (i32, i32, i32, i32) {
    %c0_i32 = arith.constant 0 : i32
    %c0_i32_0 = arith.constant 0 : i32
    %c0_i32_1 = arith.constant 0 : i32
    return %arg0, %arg1, %c0_i32, %c0_i32_0 : i32, i32, i32, i32
  }
}

module attributes {stable_mosaic.version = 11 : i64} {
  func.func @_bottleneck_kernel(%arg0: i32, %arg1: i32, %arg2: memref<1x18x24x128xbf16, #tpu.memory_space<vmem>>, %arg3: memref<128x128xbf16, #tpu.memory_space<vmem>>, %arg4: memref<1x128xf32, #tpu.memory_space<vmem>>, %arg5: memref<3x384x128xbf16, #tpu.memory_space<vmem>>, %arg6: memref<1x128xf32, #tpu.memory_space<vmem>>, %arg7: memref<128x128xbf16, #tpu.memory_space<vmem>>, %arg8: memref<1x128xf32, #tpu.memory_space<vmem>>, %arg9: memref<128x128xbf16, #tpu.memory_space<vmem>>, %arg10: memref<1x128xf32, #tpu.memory_space<vmem>>, %arg11: memref<1x8x16x128xf32, #tpu.memory_space<vmem>>, %arg12: memref<10x24x128xbf16, #tpu.memory_space<vmem>>, %arg13: memref<10x16x384xbf16, #tpu.memory_space<vmem>>) attributes {dimension_semantics = [#tpu.dimension_semantics<parallel>, #tpu.dimension_semantics<parallel>], iteration_bounds = array<i64: 2, 2>, scalar_prefetch = 0 : i64, scratch_operands = 2 : i64, tpu.core_type = #tpu.core_type<tc>, window_params = [{transform_indices = @transform_0, window_bounds = array<i64: 1, 18, 24, 128>}, {pipeline_mode = #tpu.pipeline_mode<synchronous>, transform_indices = @transform_1, window_bounds = array<i64: 128, 128>}, {pipeline_mode = #tpu.pipeline_mode<synchronous>, transform_indices = @transform_2, window_bounds = array<i64: 1, 128>}, {pipeline_mode = #tpu.pipeline_mode<synchronous>, transform_indices = @transform_3, window_bounds = array<i64: 3, 384, 128>}, {pipeline_mode = #tpu.pipeline_mode<synchronous>, transform_indices = @transform_4, window_bounds = array<i64: 1, 128>}, {pipeline_mode = #tpu.pipeline_mode<synchronous>, transform_indices = @transform_5, window_bounds = array<i64: 128, 128>}, {pipeline_mode = #tpu.pipeline_mode<synchronous>, transform_indices = @transform_6, window_bounds = array<i64: 1, 128>}, {pipeline_mode = #tpu.pipeline_mode<synchronous>, transform_indices = @transform_7, window_bounds = array<i64: 128, 128>}, {pipeline_mode = #tpu.pipeline_mode<synchronous>, transform_indices = @transform_8, window_bounds = array<i64: 1, 128>}, {transform_indices = @transform_9, window_bounds = array<i64: 1, 8, 16, 128>}]} {
    %c8_i32 = arith.constant 8 : i32
    %0 = arith.muli %arg1, %c8_i32 : i32
    %1 = tpu.assume_multiple %0, 8 : i32
    %c0 = arith.constant 0 : index
    %2 = arith.index_cast %1 : i32 to index
    %c0_0 = arith.constant 0 : index
    %c0_1 = arith.constant 0 : index
    %3 = vector.load %arg2[%c0, %2, %c0_0, %c0_1] : memref<1x18x24x128xbf16, #tpu.memory_space<vmem>>, vector<1x10x24x128xbf16>
    %4 = vector.shape_cast %3 : vector<1x10x24x128xbf16> to vector<10x24x128xbf16>
    %5 = vector.shape_cast %4 : vector<10x24x128xbf16> to vector<240x128xbf16>
    %c0_2 = arith.constant 0 : index
    %c0_3 = arith.constant 0 : index
    %6 = vector.load %arg3[%c0_2, %c0_3] : memref<128x128xbf16, #tpu.memory_space<vmem>>, vector<128x128xbf16>
    %cst = arith.constant dense<0.000000e+00> : vector<240x128xf32>
    %7 = tpu.matmul %5, %6, %cst {dimension_numbers = #tpu.dot_dimension_numbers<[1], [0], [0], [1], [0, 0, 1, 1], [], []>} : vector<240x128xbf16>, vector<128x128xbf16>, vector<240x128xf32> -> vector<240x128xf32>
    %c0_4 = arith.constant 0 : index
    %c0_5 = arith.constant 0 : index
    %8 = vector.load %arg4[%c0_4, %c0_5] : memref<1x128xf32, #tpu.memory_space<vmem>>, vector<1x128xf32>
    %9 = vector.broadcast %8 : vector<1x128xf32> to vector<240x128xf32>
    %10 = arith.addf %7, %9 : vector<240x128xf32>
    %cst_6 = arith.constant 0.000000e+00 : f32
    %11 = vector.broadcast %cst_6 : f32 to vector<240x128xf32>
    %12 = arith.maximumf %10, %11 : vector<240x128xf32>
    %13 = vector.shape_cast %12 : vector<240x128xf32> to vector<10x24x128xf32>
    %14 = arith.truncf %13 : vector<10x24x128xf32> to vector<10x24x128xbf16>
    %c0_7 = arith.constant 0 : index
    %c0_8 = arith.constant 0 : index
    %c0_9 = arith.constant 0 : index
    %15 = vector.load %arg12[%c0_7, %c0_8, %c0_9] : memref<10x24x128xbf16, #tpu.memory_space<vmem>>, vector<10x24x128xbf16>
    tpu.vector_store %arg12[%c0_7, %c0_8, %c0_9], %14 {strides = array<i32>} : memref<10x24x128xbf16, #tpu.memory_space<vmem>>, vector<10x24x128xbf16>,
    %cst_10 = arith.constant 0.000000e+00 : bf16
    %16 = vector.broadcast %cst_10 : bf16 to vector<10x1x128xbf16>
    %c0_11 = arith.constant 0 : index
    %c0_12 = arith.constant 0 : index
    %c0_13 = arith.constant 0 : index
    %17 = vector.load %arg12[%c0_11, %c0_12, %c0_13] : memref<10x24x128xbf16, #tpu.memory_space<vmem>>, vector<10x1x128xbf16>
    tpu.vector_store %arg12[%c0_11, %c0_12, %c0_13], %16 {strides = array<i32>} : memref<10x24x128xbf16, #tpu.memory_space<vmem>>, vector<10x1x128xbf16>,
    %c0_14 = arith.constant 0 : index
    %c17 = arith.constant 17 : index
    %c0_15 = arith.constant 0 : index
    %18 = vector.load %arg12[%c0_14, %c17, %c0_15] : memref<10x24x128xbf16, #tpu.memory_space<vmem>>, vector<10x1x128xbf16>
    tpu.vector_store %arg12[%c0_14, %c17, %c0_15], %16 {strides = array<i32>} : memref<10x24x128xbf16, #tpu.memory_space<vmem>>, vector<10x1x128xbf16>,
    %c0_i32 = arith.constant 0 : i32
    %19 = arith.cmpi eq, %1, %c0_i32 : i32
    %20 = arith.extui %19 : i1 to i32
    %c0_i32_16 = arith.constant 0 : i32
    %21 = arith.cmpi ne, %20, %c0_i32_16 : i32
    scf.if %21 {
      %cst_74 = arith.constant 0.000000e+00 : bf16
      %77 = vector.broadcast %cst_74 : bf16 to vector<1x24x128xbf16>
      %c0_75 = arith.constant 0 : index
      %c0_76 = arith.constant 0 : index
      %c0_77 = arith.constant 0 : index
      %78 = vector.load %arg12[%c0_75, %c0_76, %c0_77] : memref<10x24x128xbf16, #tpu.memory_space<vmem>>, vector<1x24x128xbf16>
      tpu.vector_store %arg12[%c0_75, %c0_76, %c0_77], %77 {strides = array<i32>} : memref<10x24x128xbf16, #tpu.memory_space<vmem>>, vector<1x24x128xbf16>,
    } else {
    }
    %c9_i32 = arith.constant 9 : i32
    %22 = arith.addi %1, %c9_i32 : i32
    %c17_i32 = arith.constant 17 : i32
    %23 = arith.cmpi eq, %22, %c17_i32 : i32
    %24 = arith.extui %23 : i1 to i32
    %c0_i32_17 = arith.constant 0 : i32
    %25 = arith.cmpi ne, %24, %c0_i32_17 : i32
    scf.if %25 {
      %cst_74 = arith.constant 0.000000e+00 : bf16
      %77 = vector.broadcast %cst_74 : bf16 to vector<1x24x128xbf16>
      %c9 = arith.constant 9 : index
      %c0_75 = arith.constant 0 : index
      %c0_76 = arith.constant 0 : index
      %78 = vector.load %arg12[%c9, %c0_75, %c0_76] : memref<10x24x128xbf16, #tpu.memory_space<vmem>>, vector<1x24x128xbf16>
      tpu.vector_store %arg12[%c9, %c0_75, %c0_76], %77 {strides = array<i32>} : memref<10x24x128xbf16, #tpu.memory_space<vmem>>, vector<1x24x128xbf16>,
    } else {
    }
    %c0_18 = arith.constant 0 : index
    %c0_19 = arith.constant 0 : index
    %c0_20 = arith.constant 0 : index
    %26 = vector.load %arg12[%c0_18, %c0_19, %c0_20] : memref<10x24x128xbf16, #tpu.memory_space<vmem>>, vector<10x16x128xbf16>
    %c0_21 = arith.constant 0 : index
    %c0_22 = arith.constant 0 : index
    %c0_23 = arith.constant 0 : index
    %27 = vector.load %arg13[%c0_21, %c0_22, %c0_23] : memref<10x16x384xbf16, #tpu.memory_space<vmem>>, vector<10x16x128xbf16>
    tpu.vector_store %arg13[%c0_21, %c0_22, %c0_23], %26 {strides = array<i32>} : memref<10x16x384xbf16, #tpu.memory_space<vmem>>, vector<10x16x128xbf16>,
    %c0_24 = arith.constant 0 : index
    %c1 = arith.constant 1 : index
    %c0_25 = arith.constant 0 : index
    %28 = vector.load %arg12[%c0_24, %c1, %c0_25] : memref<10x24x128xbf16, #tpu.memory_space<vmem>>, vector<10x16x128xbf16>
    %c0_26 = arith.constant 0 : index
    %c0_27 = arith.constant 0 : index
    %c128 = arith.constant 128 : index
    %29 = vector.load %arg13[%c0_26, %c0_27, %c128] : memref<10x16x384xbf16, #tpu.memory_space<vmem>>, vector<10x16x128xbf16>
    tpu.vector_store %arg13[%c0_26, %c0_27, %c128], %28 {strides = array<i32>} : memref<10x16x384xbf16, #tpu.memory_space<vmem>>, vector<10x16x128xbf16>,
    %c0_28 = arith.constant 0 : index
    %c2 = arith.constant 2 : index
    %c0_29 = arith.constant 0 : index
    %30 = vector.load %arg12[%c0_28, %c2, %c0_29] : memref<10x24x128xbf16, #tpu.memory_space<vmem>>, vector<10x16x128xbf16>
    %c0_30 = arith.constant 0 : index
    %c0_31 = arith.constant 0 : index
    %c256 = arith.constant 256 : index
    %31 = vector.load %arg13[%c0_30, %c0_31, %c256] : memref<10x16x384xbf16, #tpu.memory_space<vmem>>, vector<10x16x128xbf16>
    tpu.vector_store %arg13[%c0_30, %c0_31, %c256], %30 {strides = array<i32>} : memref<10x16x384xbf16, #tpu.memory_space<vmem>>, vector<10x16x128xbf16>,
    %c0_32 = arith.constant 0 : index
    %c0_33 = arith.constant 0 : index
    %c0_34 = arith.constant 0 : index
    %32 = vector.load %arg13[%c0_32, %c0_33, %c0_34] : memref<10x16x384xbf16, #tpu.memory_space<vmem>>, vector<8x16x384xbf16>
    %33 = vector.shape_cast %32 : vector<8x16x384xbf16> to vector<128x384xbf16>
    %c0_35 = arith.constant 0 : index
    %c0_36 = arith.constant 0 : index
    %c0_37 = arith.constant 0 : index
    %34 = vector.load %arg5[%c0_35, %c0_36, %c0_37] : memref<3x384x128xbf16, #tpu.memory_space<vmem>>, vector<1x384x128xbf16>
    %35 = vector.shape_cast %34 : vector<1x384x128xbf16> to vector<384x128xbf16>
    %cst_38 = arith.constant dense<0.000000e+00> : vector<128x128xf32>
    %36 = tpu.matmul %33, %35, %cst_38 {dimension_numbers = #tpu.dot_dimension_numbers<[1], [0], [0], [1], [0, 0, 1, 1], [], []>} : vector<128x384xbf16>, vector<384x128xbf16>, vector<128x128xf32> -> vector<128x128xf32>
    %c1_39 = arith.constant 1 : index
    %c0_40 = arith.constant 0 : index
    %c0_41 = arith.constant 0 : index
    %37 = vector.load %arg13[%c1_39, %c0_40, %c0_41] : memref<10x16x384xbf16, #tpu.memory_space<vmem>>, vector<8x16x384xbf16>
    %38 = vector.shape_cast %37 : vector<8x16x384xbf16> to vector<128x384xbf16>
    %c1_42 = arith.constant 1 : index
    %c0_43 = arith.constant 0 : index
    %c0_44 = arith.constant 0 : index
    %39 = vector.load %arg5[%c1_42, %c0_43, %c0_44] : memref<3x384x128xbf16, #tpu.memory_space<vmem>>, vector<1x384x128xbf16>
    %40 = vector.shape_cast %39 : vector<1x384x128xbf16> to vector<384x128xbf16>
    %cst_45 = arith.constant dense<0.000000e+00> : vector<128x128xf32>
    %41 = tpu.matmul %38, %40, %cst_45 {dimension_numbers = #tpu.dot_dimension_numbers<[1], [0], [0], [1], [0, 0, 1, 1], [], []>} : vector<128x384xbf16>, vector<384x128xbf16>, vector<128x128xf32> -> vector<128x128xf32>
    %42 = arith.addf %36, %41 : vector<128x128xf32>
    %c2_46 = arith.constant 2 : index
    %c0_47 = arith.constant 0 : index
    %c0_48 = arith.constant 0 : index
    %43 = vector.load %arg13[%c2_46, %c0_47, %c0_48] : memref<10x16x384xbf16, #tpu.memory_space<vmem>>, vector<8x16x384xbf16>
    %44 = vector.shape_cast %43 : vector<8x16x384xbf16> to vector<128x384xbf16>
    %c2_49 = arith.constant 2 : index
    %c0_50 = arith.constant 0 : index
    %c0_51 = arith.constant 0 : index
    %45 = vector.load %arg5[%c2_49, %c0_50, %c0_51] : memref<3x384x128xbf16, #tpu.memory_space<vmem>>, vector<1x384x128xbf16>
    %46 = vector.shape_cast %45 : vector<1x384x128xbf16> to vector<384x128xbf16>
    %cst_52 = arith.constant dense<0.000000e+00> : vector<128x128xf32>
    %47 = tpu.matmul %44, %46, %cst_52 {dimension_numbers = #tpu.dot_dimension_numbers<[1], [0], [0], [1], [0, 0, 1, 1], [], []>} : vector<128x384xbf16>, vector<384x128xbf16>, vector<128x128xf32> -> vector<128x128xf32>
    %48 = arith.addf %42, %47 : vector<128x128xf32>
    %c0_53 = arith.constant 0 : index
    %c0_54 = arith.constant 0 : index
    %49 = vector.load %arg6[%c0_53, %c0_54] : memref<1x128xf32, #tpu.memory_space<vmem>>, vector<1x128xf32>
    %50 = vector.broadcast %49 : vector<1x128xf32> to vector<128x128xf32>
    %51 = arith.addf %48, %50 : vector<128x128xf32>
    %cst_55 = arith.constant 0.000000e+00 : f32
    %52 = vector.broadcast %cst_55 : f32 to vector<128x128xf32>
    %53 = arith.maximumf %51, %52 : vector<128x128xf32>
    %54 = arith.truncf %53 : vector<128x128xf32> to vector<128x128xbf16>
    %c0_56 = arith.constant 0 : index
    %c0_57 = arith.constant 0 : index
    %55 = vector.load %arg7[%c0_56, %c0_57] : memref<128x128xbf16, #tpu.memory_space<vmem>>, vector<128x128xbf16>
    %cst_58 = arith.constant dense<0.000000e+00> : vector<128x128xf32>
    %56 = tpu.matmul %54, %55, %cst_58 {dimension_numbers = #tpu.dot_dimension_numbers<[1], [0], [0], [1], [0, 0, 1, 1], [], []>} : vector<128x128xbf16>, vector<128x128xbf16>, vector<128x128xf32> -> vector<128x128xf32>
    %c0_59 = arith.constant 0 : index
    %c0_60 = arith.constant 0 : index
    %57 = vector.load %arg8[%c0_59, %c0_60] : memref<1x128xf32, #tpu.memory_space<vmem>>, vector<1x128xf32>
    %58 = vector.broadcast %57 : vector<1x128xf32> to vector<128x128xf32>
    %59 = arith.addf %56, %58 : vector<128x128xf32>
    %c1_i32 = arith.constant 1 : i32
    %60 = arith.addi %1, %c1_i32 : i32
    %c0_61 = arith.constant 0 : index
    %61 = arith.index_cast %60 : i32 to index
    %c1_62 = arith.constant 1 : index
    %c0_63 = arith.constant 0 : index
    %62 = vector.load %arg2[%c0_61, %61, %c1_62, %c0_63] : memref<1x18x24x128xbf16, #tpu.memory_space<vmem>>, vector<1x8x16x128xbf16>
    %63 = vector.shape_cast %62 : vector<1x8x16x128xbf16> to vector<8x16x128xbf16>
    %64 = vector.shape_cast %63 : vector<8x16x128xbf16> to vector<128x128xbf16>
    %c0_64 = arith.constant 0 : index
    %c0_65 = arith.constant 0 : index
    %65 = vector.load %arg9[%c0_64, %c0_65] : memref<128x128xbf16, #tpu.memory_space<vmem>>, vector<128x128xbf16>
    %cst_66 = arith.constant dense<0.000000e+00> : vector<128x128xf32>
    %66 = tpu.matmul %64, %65, %cst_66 {dimension_numbers = #tpu.dot_dimension_numbers<[1], [0], [0], [1], [0, 0, 1, 1], [], []>} : vector<128x128xbf16>, vector<128x128xbf16>, vector<128x128xf32> -> vector<128x128xf32>
    %c0_67 = arith.constant 0 : index
    %c0_68 = arith.constant 0 : index
    %67 = vector.load %arg10[%c0_67, %c0_68] : memref<1x128xf32, #tpu.memory_space<vmem>>, vector<1x128xf32>
    %68 = vector.broadcast %67 : vector<1x128xf32> to vector<128x128xf32>
    %69 = arith.addf %66, %68 : vector<128x128xf32>
    %70 = arith.addf %59, %69 : vector<128x128xf32>
    %cst_69 = arith.constant 0.000000e+00 : f32
    %71 = vector.broadcast %cst_69 : f32 to vector<128x128xf32>
    %72 = arith.maximumf %70, %71 : vector<128x128xf32>
    %73 = vector.shape_cast %72 : vector<128x128xf32> to vector<8x16x128xf32>
    %c0_70 = arith.constant 0 : index
    %c0_71 = arith.constant 0 : index
    %c0_72 = arith.constant 0 : index
    %c0_73 = arith.constant 0 : index
    %74 = vector.load %arg11[%c0_70, %c0_71, %c0_72, %c0_73] : memref<1x8x16x128xf32, #tpu.memory_space<vmem>>, vector<1x8x16x128xf32>
    %75 = vector.shape_cast %74 : vector<1x8x16x128xf32> to vector<8x16x128xf32>
    %76 = vector.shape_cast %73 : vector<8x16x128xf32> to vector<1x8x16x128xf32>
    tpu.vector_store %arg11[%c0_70, %c0_71, %c0_72, %c0_73], %76 {strides = array<i32>} : memref<1x8x16x128xf32, #tpu.memory_space<vmem>>, vector<1x8x16x128xf32>,
    return
  }
  func.func @transform_0(%arg0: i32, %arg1: i32) -> (i32, i32, i32, i32) {
    %c0_i32 = arith.constant 0 : i32
    %c0_i32_0 = arith.constant 0 : i32
    %c0_i32_1 = arith.constant 0 : i32
    %c0_i32_2 = arith.constant 0 : i32
    return %arg0, %c0_i32, %c0_i32_0, %c0_i32_1 : i32, i32, i32, i32
  }
  func.func @transform_1(%arg0: i32, %arg1: i32) -> (i32, i32) {
    %c0_i32 = arith.constant 0 : i32
    %c0_i32_0 = arith.constant 0 : i32
    %c0_i32_1 = arith.constant 0 : i32
    return %c0_i32, %c0_i32_0 : i32, i32
  }
  func.func @transform_2(%arg0: i32, %arg1: i32) -> (i32, i32) {
    %c0_i32 = arith.constant 0 : i32
    %c0_i32_0 = arith.constant 0 : i32
    %c0_i32_1 = arith.constant 0 : i32
    return %c0_i32, %c0_i32_0 : i32, i32
  }
  func.func @transform_3(%arg0: i32, %arg1: i32) -> (i32, i32, i32) {
    %c0_i32 = arith.constant 0 : i32
    %c0_i32_0 = arith.constant 0 : i32
    %c0_i32_1 = arith.constant 0 : i32
    %c0_i32_2 = arith.constant 0 : i32
    return %c0_i32, %c0_i32_0, %c0_i32_1 : i32, i32, i32
  }
  func.func @transform_4(%arg0: i32, %arg1: i32) -> (i32, i32) {
    %c0_i32 = arith.constant 0 : i32
    %c0_i32_0 = arith.constant 0 : i32
    %c0_i32_1 = arith.constant 0 : i32
    return %c0_i32, %c0_i32_0 : i32, i32
  }
  func.func @transform_5(%arg0: i32, %arg1: i32) -> (i32, i32) {
    %c0_i32 = arith.constant 0 : i32
    %c0_i32_0 = arith.constant 0 : i32
    %c0_i32_1 = arith.constant 0 : i32
    return %c0_i32, %c0_i32_0 : i32, i32
  }
  func.func @transform_6(%arg0: i32, %arg1: i32) -> (i32, i32) {
    %c0_i32 = arith.constant 0 : i32
    %c0_i32_0 = arith.constant 0 : i32
    %c0_i32_1 = arith.constant 0 : i32
    return %c0_i32, %c0_i32_0 : i32, i32
  }
  func.func @transform_7(%arg0: i32, %arg1: i32) -> (i32, i32) {
    %c0_i32 = arith.constant 0 : i32
    %c0_i32_0 = arith.constant 0 : i32
    %c0_i32_1 = arith.constant 0 : i32
    return %c0_i32, %c0_i32_0 : i32, i32
  }
  func.func @transform_8(%arg0: i32, %arg1: i32) -> (i32, i32) {
    %c0_i32 = arith.constant 0 : i32
    %c0_i32_0 = arith.constant 0 : i32
    %c0_i32_1 = arith.constant 0 : i32
    return %c0_i32, %c0_i32_0 : i32, i32
  }
  func.func @transform_9(%arg0: i32, %arg1: i32) -> (i32, i32, i32, i32) {
    %c0_i32 = arith.constant 0 : i32
    %c0_i32_0 = arith.constant 0 : i32
    %c0_i32_1 = arith.constant 0 : i32
    return %arg0, %arg1, %c0_i32, %c0_i32_0 : i32, i32, i32, i32
  }
}

</mosaic_0001>

<llo_original>
// kernel: bottleneck_forward.1
$region0: #{bottleneck_forward.1}
  #allocation0 [shape = 'u32[]', space=smem, size = 0x4, offset = 0x4, fixed_abs, tag = 'smem constant byte address 0x4 - core index']
  #allocation1 [shape = 'u32[144,128]{1,0:T(1,128)}', space=vmem, size = 0x12000, scoped, tag = 'internal scratch']
  #allocation2 [shape = 'bf16[10,24,128]{2,1,0:T(8,128)(2,1)}', space=vmem, size = 0xf000, scoped, tag = 'scratch operand']
  #allocation3 [shape = 'bf16[10,16,384]{2,1,0:T(8,128)(2,1)}', space=vmem, size = 0x1e000, scoped, tag = 'scratch operand']
  %s0 = inlined_call_operand.vmem [shape: bf16[2,18,24,128], index: 0, kind: input, shape index: {}]
  %s1 = inlined_call_operand.vmem [shape: bf16[128,128], index: 1, kind: input, shape index: {}]
  %s2 = inlined_call_operand.vmem [shape: f32[1,128], index: 2, kind: input, shape index: {}]
  %s3 = inlined_call_operand.vmem [shape: bf16[3,384,128], index: 3, kind: input, shape index: {}]
  %s4 = inlined_call_operand.vmem [shape: f32[1,128], index: 4, kind: input, shape index: {}]
  %s5 = inlined_call_operand.vmem [shape: bf16[128,128], index: 5, kind: input, shape index: {}]
  %s6 = inlined_call_operand.vmem [shape: f32[1,128], index: 6, kind: input, shape index: {}]
  %s7 = inlined_call_operand.vmem [shape: bf16[128,128], index: 7, kind: input, shape index: {}]
  %s8 = inlined_call_operand.vmem [shape: f32[1,128], index: 8, kind: input, shape index: {}]
  %s9 = inlined_call_operand.vmem [shape: f32[2,16,16,128], index: 9, kind: output, shape index: {}]
  %s10 = sld [smem:[#allocation0]]
  $region77: #{bottleneck_forward.1} parent=0
    _
  %s12 = ssub.s32 1, %s10
  %s13 = scalar_select 0, %s12, %s10
  loop: start=0, step=1, limit=6
  $region2: #{bottleneck_forward.1} parent=0 // loop_pre_header
    _
  $region3: #{bottleneck_forward.1} parent=0 // loop_header
    %s15 = sphi 0, %s19
    %p16 = scmp.ge.s32.totalorder %s15, 6
    %s22 = sphi 0, %s34
    %s23 = sphi 0, %s30
    %s24 = sphi 0, %s22
    %s25 = sphi 0, %s23
    %s26 = sphi 0, %s24
    %s27 = sphi 0, %s25
    %s37 = sphi 0, %s39
    %s40 = sphi 0, %s37
    %s41 = sphi 0, %s40
    %s57 = sphi 0, %s41
    %s61 = sphi 0, %s61
    %s63 = sphi 0, %s61
    %s64 = sphi 0, %s63
    %s78 = sphi 0, %s64
    %s82 = sphi 0, %s82
    %s84 = sphi 0, %s82
    %s85 = sphi 0, %s84
    %s99 = sphi 0, %s85
    %s103 = sphi 0, %s103
    %s105 = sphi 0, %s103
    %s106 = sphi 0, %s105
    %s120 = sphi 0, %s106
    %s124 = sphi 0, %s124
    %s126 = sphi 0, %s124
    %s127 = sphi 0, %s126
    %s141 = sphi 0, %s127
    %s145 = sphi 0, %s145
    %s147 = sphi 0, %s145
    %s148 = sphi 0, %s147
    %s162 = sphi 0, %s148
    %s166 = sphi 0, %s166
    %s168 = sphi 0, %s166
    %s169 = sphi 0, %s168
    %s183 = sphi 0, %s169
    %s187 = sphi 0, %s187
    %s189 = sphi 0, %s187
    %s190 = sphi 0, %s189
    %s204 = sphi 0, %s190
    %s208 = sphi 0, %s208
    %s210 = sphi 0, %s208
    %s211 = sphi 0, %s210
    %s225 = sphi 0, %s211
    %s233 = sphi 0, %s235
    %s236 = sphi 0, %s233
    %s237 = sphi 0, %s236
    %s253 = sphi 0, %s237
  $region4: #{bottleneck_forward.1} parent=0 // loop_header_branch
    %18 = sbr.rel (%p16) target = $region8
  $region5: #{bottleneck_forward.1} parent=0 // loop_body
    %s20 = ssub.s32 %s15, 1
    %s21 = ssub.s32 %s15, 2
    %s28 = sadd.s32 1, %s23
    %p29 = scmp.ge.s32.totalorder %s28, 2
    %s30 = scalar_select %p29, 0, %s28
    %s31 = sadd.s32 1, %s22
    %s32 = scalar_select %p29, %s31, %s22
    %p33 = scmp.ge.s32.totalorder %s32, 2
    %s34 = scalar_select %p33, 0, %s32
    %s35 = ssub.s32 %s22, %s34
    %p36 = scmp.eq.s32.totalorder %s35, 0
    %s38 = sadd.s32 %s37, 1
    %s39 = scalar_select %p36, %s37, %s38
    %p42 = pneg %p36
    %p43 = scmp.eq.s32.totalorder %s15, 3
    %p44 = por %p42, %p43
    %p45 = scmp.ne.s32.totalorder %s37, %s40
    %p46 = scmp.eq.s32.totalorder %s15, 0
    %p47 = por %p45, %p46
    %p48 = scmp.ne.s32.totalorder %s37, %s40
    %p49 = scmp.eq.s32.totalorder %s20, 3
    %p50 = por %p48, %p49
    %p51 = scmp.ne.s32.totalorder %s40, %s41
    %p52 = scmp.eq.s32.totalorder %s20, 0
    %p53 = por %p51, %p52
    %p54 = scmp.ne.s32.totalorder %s40, %s41
    %p55 = scmp.eq.s32.totalorder %s21, 3
    %p56 = por %p54, %p55
    %p58 = scmp.ne.s32.totalorder %s41, %s57
    %p59 = scmp.eq.s32.totalorder %s21, 0
    %p60 = por %p58, %p59
    %s62 = sadd.s32 %s61, 1
    %p65 = scmp.eq.s32.totalorder %s15, 3
    %p66 = scmp.ne.s32.totalorder %s61, %s63
    %p67 = scmp.eq.s32.totalorder %s15, 0
    %p68 = por %p66, %p67
    %p69 = scmp.ne.s32.totalorder %s61, %s63
    %p70 = scmp.eq.s32.totalorder %s20, 3
    %p71 = por %p69, %p70
    %p72 = scmp.ne.s32.totalorder %s63, %s64
    %p73 = scmp.eq.s32.totalorder %s20, 0
    %p74 = por %p72, %p73
    %p75 = scmp.ne.s32.totalorder %s63, %s64
    %p76 = scmp.eq.s32.totalorder %s21, 3
    %p77 = por %p75, %p76
    %p79 = scmp.ne.s32.totalorder %s64, %s78
    %p80 = scmp.eq.s32.totalorder %s21, 0
    %p81 = por %p79, %p80
    %s83 = sadd.s32 %s82, 1
    %p86 = scmp.eq.s32.totalorder %s15, 3
    %p87 = scmp.ne.s32.totalorder %s82, %s84
    %p88 = scmp.eq.s32.totalorder %s15, 0
    %p89 = por %p87, %p88
    %p90 = scmp.ne.s32.totalorder %s82, %s84
    %p91 = scmp.eq.s32.totalorder %s20, 3
    %p92 = por %p90, %p91
    %p93 = scmp.ne.s32.totalorder %s84, %s85
    %p94 = scmp.eq.s32.totalorder %s20, 0
    %p95 = por %p93, %p94
    %p96 = scmp.ne.s32.totalorder %s84, %s85
    %p97 = scmp.eq.s32.totalorder %s21, 3
    %p98 = por %p96, %p97
    %p100 = scmp.ne.s32.totalorder %s85, %s99
    %p101 = scmp.eq.s32.totalorder %s21, 0
    %p102 = por %p100, %p101
    %s104 = sadd.s32 %s103, 1
    %p107 = scmp.eq.s32.totalorder %s15, 3
    %p108 = scmp.ne.s32.totalorder %s103, %s105
    %p109 = scmp.eq.s32.totalorder %s15, 0
    %p110 = por %p108, %p109
    %p111 = scmp.ne.s32.totalorder %s103, %s105
    %p112 = scmp.eq.s32.totalorder %s20, 3
    %p113 = por %p111, %p112
    %p114 = scmp.ne.s32.totalorder %s105, %s106
    %p115 = scmp.eq.s32.totalorder %s20, 0
    %p116 = por %p114, %p115
    %p117 = scmp.ne.s32.totalorder %s105, %s106
    %p118 = scmp.eq.s32.totalorder %s21, 3
    %p119 = por %p117, %p118
    %p121 = scmp.ne.s32.totalorder %s106, %s120
    %p122 = scmp.eq.s32.totalorder %s21, 0
    %p123 = por %p121, %p122
    %s125 = sadd.s32 %s124, 1
    %p128 = scmp.eq.s32.totalorder %s15, 3
    %p129 = scmp.ne.s32.totalorder %s124, %s126
    %p130 = scmp.eq.s32.totalorder %s15, 0
    %p131 = por %p129, %p130
    %p132 = scmp.ne.s32.totalorder %s124, %s126
    %p133 = scmp.eq.s32.totalorder %s20, 3
    %p134 = por %p132, %p133
    %p135 = scmp.ne.s32.totalorder %s126, %s127
    %p136 = scmp.eq.s32.totalorder %s20, 0
    %p137 = por %p135, %p136
    %p138 = scmp.ne.s32.totalorder %s126, %s127
    %p139 = scmp.eq.s32.totalorder %s21, 3
    %p140 = por %p138, %p139
    %p142 = scmp.ne.s32.totalorder %s127, %s141
    %p143 = scmp.eq.s32.totalorder %s21, 0
    %p144 = por %p142, %p143
    %s146 = sadd.s32 %s145, 1
    %p149 = scmp.eq.s32.totalorder %s15, 3
    %p150 = scmp.ne.s32.totalorder %s145, %s147
    %p151 = scmp.eq.s32.totalorder %s15, 0
    %p152 = por %p150, %p151
    %p153 = scmp.ne.s32.totalorder %s145, %s147
    %p154 = scmp.eq.s32.totalorder %s20, 3
    %p155 = por %p153, %p154
    %p156 = scmp.ne.s32.totalorder %s147, %s148
    %p157 = scmp.eq.s32.totalorder %s20, 0
    %p158 = por %p156, %p157
    %p159 = scmp.ne.s32.totalorder %s147, %s148
    %p160 = scmp.eq.s32.totalorder %s21, 3
    %p161 = por %p159, %p160
    %p163 = scmp.ne.s32.totalorder %s148, %s162
    %p164 = scmp.eq.s32.totalorder %s21, 0
    %p165 = por %p163, %p164
    %s167 = sadd.s32 %s166, 1
    %p170 = scmp.eq.s32.totalorder %s15, 3
    %p171 = scmp.ne.s32.totalorder %s166, %s168
    %p172 = scmp.eq.s32.totalorder %s15, 0
    %p173 = por %p171, %p172
    %p174 = scmp.ne.s32.totalorder %s166, %s168
    %p175 = scmp.eq.s32.totalorder %s20, 3
    %p176 = por %p174, %p175
    %p177 = scmp.ne.s32.totalorder %s168, %s169
    %p178 = scmp.eq.s32.totalorder %s20, 0
    %p179 = por %p177, %p178
    %p180 = scmp.ne.s32.totalorder %s168, %s169
    %p181 = scmp.eq.s32.totalorder %s21, 3
    %p182 = por %p180, %p181
    %p184 = scmp.ne.s32.totalorder %s169, %s183
    %p185 = scmp.eq.s32.totalorder %s21, 0
    %p186 = por %p184, %p185
    %s188 = sadd.s32 %s187, 1
    %p191 = scmp.eq.s32.totalorder %s15, 3
    %p192 = scmp.ne.s32.totalorder %s187, %s189
    %p193 = scmp.eq.s32.totalorder %s15, 0
    %p194 = por %p192, %p193
    %p195 = scmp.ne.s32.totalorder %s187, %s189
    %p196 = scmp.eq.s32.totalorder %s20, 3
    %p197 = por %p195, %p196
    %p198 = scmp.ne.s32.totalorder %s189, %s190
    %p199 = scmp.eq.s32.totalorder %s20, 0
    %p200 = por %p198, %p199
    %p201 = scmp.ne.s32.totalorder %s189, %s190
    %p202 = scmp.eq.s32.totalorder %s21, 3
    %p203 = por %p201, %p202
    %p205 = scmp.ne.s32.totalorder %s190, %s204
    %p206 = scmp.eq.s32.totalorder %s21, 0
    %p207 = por %p205, %p206
    %s209 = sadd.s32 %s208, 1
    %p212 = scmp.eq.s32.totalorder %s15, 3
    %p213 = scmp.ne.s32.totalorder %s208, %s210
    %p214 = scmp.eq.s32.totalorder %s15, 0
    %p215 = por %p213, %p214
    %p216 = scmp.ne.s32.totalorder %s208, %s210
    %p217 = scmp.eq.s32.totalorder %s20, 3
    %p218 = por %p216, %p217
    %p219 = scmp.ne.s32.totalorder %s210, %s211
    %p220 = scmp.eq.s32.totalorder %s20, 0
    %p221 = por %p219, %p220
    %p222 = scmp.ne.s32.totalorder %s210, %s211
    %p223 = scmp.eq.s32.totalorder %s21, 3
    %p224 = por %p222, %p223
    %p226 = scmp.ne.s32.totalorder %s211, %s225
    %p227 = scmp.eq.s32.totalorder %s21, 0
    %p228 = por %p226, %p227
    %s229 = ssub.s32 %s22, %s34
    %s230 = ssub.s32 %s23, %s30
    %s231 = sor.u32 %s229, %s230
    %p232 = scmp.eq.s32.totalorder %s231, 0
    %s234 = sadd.s32 %s233, 1
    %s235 = scalar_select %p232, %s233, %s234
    %p238 = pneg %p232
    %p239 = scmp.eq.s32.totalorder %s15, 3
    %p240 = por %p238, %p239
    %p241 = scmp.ne.s32.totalorder %s233, %s236
    %p242 = scmp.eq.s32.totalorder %s15, 0
    %p243 = por %p241, %p242
    %p244 = scmp.ne.s32.totalorder %s233, %s236
    %p245 = scmp.eq.s32.totalorder %s20, 3
    %p246 = por %p244, %p245
    %p247 = scmp.ne.s32.totalorder %s236, %s237
    %p248 = scmp.eq.s32.totalorder %s20, 0
    %p249 = por %p247, %p248
    %p250 = scmp.ne.s32.totalorder %s236, %s237
    %p251 = scmp.eq.s32.totalorder %s21, 3
    %p252 = por %p250, %p251
    %p254 = scmp.ne.s32.totalorder %s237, %s253
    %p255 = scmp.eq.s32.totalorder %s21, 0
    %p256 = por %p254, %p255
    %p257 = scmp.le.s32.totalorder 1, %s15
    %p258 = scmp.lt.s32.totalorder %s15, 5
    %p259 = pnand %p257, %p258
    %p260 = pneg %p259
    // Predicated region
    $region9: #{bottleneck_forward.1} parent=5 // pred_check
      _
    $region10: #{bottleneck_forward.1} parent=5 // pred_check_branch
      %262 = sbr.rel (%p259) target = $region12
    $region11: #{bottleneck_forward.1} parent=5 // pred_region
      %s263 = ssub.s32 %s15, 1
      // Predicated region
      $region13: #{bottleneck_forward.1} parent=11 // pred_check
        %p264 = pneg %p74
      $region14: #{bottleneck_forward.1} parent=11 // pred_check_branch
        %266 = sbr.rel (%p264) target = $region16
      $region15: #{bottleneck_forward.1} parent=11 // pred_region
        _
      $region16: #{bottleneck_forward.1} parent=11 // pred_fallthru
        _
      // Predicated region
      $region17: #{bottleneck_forward.1} parent=11 // pred_check
        %p267 = pneg %p95
      $region18: #{bottleneck_forward.1} parent=11 // pred_check_branch
        %269 = sbr.rel (%p267) target = $region20
      $region19: #{bottleneck_forward.1} parent=11 // pred_region
        _
      $region20: #{bottleneck_forward.1} parent=11 // pred_fallthru
        _
      // Predicated region
      $region21: #{bottleneck_forward.1} parent=11 // pred_check
        %p270 = pneg %p116
      $region22: #{bottleneck_forward.1} parent=11 // pred_check_branch
        %272 = sbr.rel (%p270) target = $region24
      $region23: #{bottleneck_forward.1} parent=11 // pred_region
        _
      $region24: #{bottleneck_forward.1} parent=11 // pred_fallthru
        _
      // Predicated region
      $region25: #{bottleneck_forward.1} parent=11 // pred_check
        %p273 = pneg %p137
      $region26: #{bottleneck_forward.1} parent=11 // pred_check_branch
        %275 = sbr.rel (%p273) target = $region28
      $region27: #{bottleneck_forward.1} parent=11 // pred_region
        _
      $region28: #{bottleneck_forward.1} parent=11 // pred_fallthru
        _
      // Predicated region
      $region29: #{bottleneck_forward.1} parent=11 // pred_check
        %p276 = pneg %p158
      $region30: #{bottleneck_forward.1} parent=11 // pred_check_branch
        %278 = sbr.rel (%p276) target = $region32
      $region31: #{bottleneck_forward.1} parent=11 // pred_region
        _
      $region32: #{bottleneck_forward.1} parent=11 // pred_fallthru
        _
      // Predicated region
      $region33: #{bottleneck_forward.1} parent=11 // pred_check
        %p279 = pneg %p179
      $region34: #{bottleneck_forward.1} parent=11 // pred_check_branch
        %281 = sbr.rel (%p279) target = $region36
      $region35: #{bottleneck_forward.1} parent=11 // pred_region
        _
      $region36: #{bottleneck_forward.1} parent=11 // pred_fallthru
        _
      // Predicated region
      $region37: #{bottleneck_forward.1} parent=11 // pred_check
        %p282 = pneg %p200
      $region38: #{bottleneck_forward.1} parent=11 // pred_check_branch
        %284 = sbr.rel (%p282) target = $region40
      $region39: #{bottleneck_forward.1} parent=11 // pred_region
        _
      $region40: #{bottleneck_forward.1} parent=11 // pred_fallthru
        _
      // Predicated region
      $region41: #{bottleneck_forward.1} parent=11 // pred_check
        %p285 = pneg %p221
      $region42: #{bottleneck_forward.1} parent=11 // pred_check_branch
        %287 = sbr.rel (%p285) target = $region44
      $region43: #{bottleneck_forward.1} parent=11 // pred_region
        _
      $region44: #{bottleneck_forward.1} parent=11 // pred_fallthru
        _
    $region12: #{bottleneck_forward.1} parent=5 // pred_fallthru
      _
    %p288 = scmp.lt.s32.totalorder %s15, 4
    // Predicated region
    $region45: #{bottleneck_forward.1} parent=5 // pred_check
      %p289 = pneg %p288
    $region46: #{bottleneck_forward.1} parent=5 // pred_check_branch
      %291 = sbr.rel (%p289) target = $region48
    $region47: #{bottleneck_forward.1} parent=5 // pred_region
      // Predicated region
      $region49: #{bottleneck_forward.1} parent=47 // pred_check
        %p292 = pneg %p47
      $region50: #{bottleneck_forward.1} parent=47 // pred_check_branch
        %294 = sbr.rel (%p292) target = $region52
      $region51: #{bottleneck_forward.1} parent=47 // pred_region
        %p295 = scmp.lt.s32.totalorder %s22, 1
        %s296 = scalar_select %p295, %s22, 1
        %s297 = smul.addr %s296, 54
        %s298 = smul.addr %s297, 4
        %s299 = scalar_lea.vmem %s0, %s298
      $region52: #{bottleneck_forward.1} parent=47 // pred_fallthru
        _
    $region48: #{bottleneck_forward.1} parent=5 // pred_fallthru
      _
    %p300 = scmp.le.s32.totalorder 1, %s15
    %p301 = scmp.lt.s32.totalorder %s15, 5
    %p302 = pnand %p300, %p301
    %p303 = pneg %p302
    // Predicated region
    $region53: #{bottleneck_forward.1} parent=5 // pred_check
      _
    $region54: #{bottleneck_forward.1} parent=5 // pred_check_branch
      %305 = sbr.rel (%p302) target = $region56
    $region55: #{bottleneck_forward.1} parent=5 // pred_region
      %s306 = ssub.s32 %s15, 1
      %p307 = scmp.lt.s32.totalorder %s24, 1
      %s308 = scalar_select %p307, %s24, 1
      %s309 = smul.addr %s308, 54
      %s310 = smul.addr %s309, 4
      %s311 = scalar_lea.vmem %s0, %s310
      %p312 = pneg %p53
      %p313 = pneg %p50
      %p314 = pneg %p74
      %p315 = pneg %p71
      %p316 = pneg %p95
      %p317 = pneg %p92
      %p318 = pneg %p116
      %p319 = pneg %p113
      %p320 = pneg %p137
      %p321 = pneg %p134
      %p322 = pneg %p158
      %p323 = pneg %p155
      %p324 = pneg %p179
      %p325 = pneg %p176
      %p326 = pneg %p200
      %p327 = pneg %p197
      %p328 = pneg %p221
      %p329 = pneg %p218
      %p330 = pneg %p249
      %p331 = pneg %p246
      %s332 = smul.u32 8, %s25
      %p333 = scmp.lt.s32.totalorder %s24, 1
      %s334 = scalar_select %p333, %s24, 1
      %p335 = scmp.lt.s32.totalorder %s332, 15
      %s336 = scalar_select %p335, %s332, 15
      %s337 = smul.addr %s336, 2
      %s338 = smul.addr %s334, 32
      %s339 = sadd.s32 %s337, %s338
      %s340 = smul.addr %s339, 8
      %s341 = scalar_lea.vmem %s9, %s340
      %p342 = scmp.lt.s32.totalorder %s24, 1
      %s343 = scalar_select %p342, %s24, 1
      %s344 = smul.addr %s343, 54
      %s345 = smul.addr %s344, 4
      %s346 = scalar_lea.vmem %s0, %s345
      %s347 = smul.u32 8, %s25
      %p348 = scmp.lt.s32.totalorder %s24, 1
      %s349 = scalar_select %p348, %s24, 1
      %p350 = scmp.lt.s32.totalorder %s347, 15
      %s351 = scalar_select %p350, %s347, 15
      %s352 = smul.addr %s351, 2
      %s353 = smul.addr %s349, 32
      %s354 = sadd.s32 %s352, %s353
      %s355 = smul.addr %s354, 8
      %s356 = scalar_lea.vmem %s9, %s355
      %s357 = smul.u32 8, %s25
      %s359 = smul.u32 %s25, 8
      %s360 = smul.u32 %s359, 3
      %s361 = smul.addr %s360, 4
      %s362 = scalar_lea.vmem %s346, %s361
      %v363 = vld [vmem:[%s362] sm:$0xf]
      %v364 = vld [vmem:[%s362 + $0x4] sm:$0xf]
      %v365 = vld [vmem:[%s362 + $0x8] sm:$0xf]
      %v366 = vld [vmem:[%s362 + $0xc] sm:$0xf]
      %v367 = vld [vmem:[%s362 + $0x10] sm:$0xf]
      %v368 = vld [vmem:[%s362 + $0x14] sm:$0xf]
      %v369 = vld [vmem:[%s362 + $0x18] sm:$0xf]
      %v370 = vld [vmem:[%s362 + $0x1c] sm:$0xf]
      %v371 = vld [vmem:[%s362 + $0x20] sm:$0xf]
      %v372 = vld [vmem:[%s362 + $0x24] sm:$0xf]
      %v373 = vld [vmem:[%s362 + $0x28] sm:$0xf]
      %v374 = vld [vmem:[%s362 + $0x2c] sm:$0xf]
      %v375 = vld [vmem:[%s362 + $0x30] sm:$0xf]
      %v376 = vld [vmem:[%s362 + $0x34] sm:$0xf]
      %v377 = vld [vmem:[%s362 + $0x38] sm:$0xf]
      %v378 = vld [vmem:[%s362 + $0x3c] sm:$0xf]
      %v379 = vld [vmem:[%s362 + $0x40] sm:$0xf]
      %v380 = vld [vmem:[%s362 + $0x44] sm:$0xf]
      %v381 = vld [vmem:[%s362 + $0x48] sm:$0xf]
      %v382 = vld [vmem:[%s362 + $0x4c] sm:$0xf]
      %v383 = vld [vmem:[%s362 + $0x50] sm:$0xf]
      %v384 = vld [vmem:[%s362 + $0x54] sm:$0xf]
      %v385 = vld [vmem:[%s362 + $0x58] sm:$0xf]
      %v386 = vld [vmem:[%s362 + $0x5c] sm:$0xf]
      %v387 = vld [vmem:[%s362 + $0x60] sm:$0xf]
      %v388 = vld [vmem:[%s362 + $0x64] sm:$0xf]
      %v389 = vld [vmem:[%s362 + $0x68] sm:$0xf]
      %v390 = vld [vmem:[%s362 + $0x6c] sm:$0xf]
      %v391 = vld [vmem:[%s362 + $0x70] sm:$0xf]
      %v392 = vld [vmem:[%s362 + $0x74] sm:$0xf]
      %v393 = vld [vmem:[%s1] sm:$0xf]
      %v394 = vld [vmem:[%s1 + $0x4] sm:$0xf]
      %v395 = vld [vmem:[%s1 + $0x8] sm:$0xf]
      %v396 = vld [vmem:[%s1 + $0xc] sm:$0xf]
      %v397 = vld [vmem:[%s1 + $0x10] sm:$0xf]
      %v398 = vld [vmem:[%s1 + $0x14] sm:$0xf]
      %v399 = vld [vmem:[%s1 + $0x18] sm:$0xf]
      %v400 = vld [vmem:[%s1 + $0x1c] sm:$0xf]
      %v401 = vld [vmem:[%s1 + $0x20] sm:$0xf]
      %v402 = vld [vmem:[%s1 + $0x24] sm:$0xf]
      %v403 = vld [vmem:[%s1 + $0x28] sm:$0xf]
      %v404 = vld [vmem:[%s1 + $0x2c] sm:$0xf]
      %v405 = vld [vmem:[%s1 + $0x30] sm:$0xf]
      %v406 = vld [vmem:[%s1 + $0x34] sm:$0xf]
      %v407 = vld [vmem:[%s1 + $0x38] sm:$0xf]
      %v408 = vld [vmem:[%s1 + $0x3c] sm:$0xf]
      %v409 = vld [vmem:[%s2] sm:$0x1]
      %v411 = vlaneseq
      %v412 = vshrl.u32 %v411, 7
      %v413 = vsub.s32 0, %v412
      %v414 = vrot.slane %v409, %v413
      %v446 = vunpack.c.l.b16 %v363
      %v447 = vunpack.c.l.b16 %v364
      %v448 = vunpack.c.l.b16 %v365
      %v449 = vunpack.c.l.b16 %v366
      %v450 = vunpack.c.l.b16 %v367
      %v451 = vunpack.c.l.b16 %v368
      %v452 = vunpack.c.l.b16 %v369
      %v453 = vunpack.c.l.b16 %v370
      %v454 = vunpack.c.l.b16 %v371
      %v455 = vunpack.c.l.b16 %v372
      %v456 = vunpack.c.l.b16 %v373
      %v457 = vunpack.c.l.b16 %v374
      %v458 = vunpack.c.l.b16 %v375
      %v459 = vunpack.c.l.b16 %v376
      %v460 = vunpack.c.l.b16 %v377
      %v461 = vunpack.c.l.b16 %v378
      %v462 = vunpack.c.l.b16 %v379
      %v463 = vunpack.c.l.b16 %v380
      %v464 = vunpack.c.l.b16 %v381
      %v465 = vunpack.c.l.b16 %v382
      %v466 = vunpack.c.l.b16 %v383
      %v467 = vunpack.c.l.b16 %v384
      %v468 = vunpack.c.l.b16 %v385
      %v469 = vunpack.c.l.b16 %v386
      %v470 = vunpack.c.l.b16 %v387
      %v471 = vunpack.c.l.b16 %v388
      %v472 = vunpack.c.l.b16 %v389
      %v473 = vunpack.c.l.b16 %v390
      %v474 = vunpack.c.l.b16 %v391
      %v475 = vunpack.c.l.b16 %v392
      %v476 = vpack.c.b16 %v447, %v446
      %v477 = vpack.c.b16 %v449, %v448
      %v478 = vpack.c.b16 %v451, %v450
      %v479 = vpack.c.b16 %v453, %v452
      %v480 = vpack.c.b16 %v455, %v454
      %v481 = vpack.c.b16 %v457, %v456
      %v482 = vpack.c.b16 %v459, %v458
      %v483 = vpack.c.b16 %v461, %v460
      %v484 = vpack.c.b16 %v463, %v462
      %v485 = vpack.c.b16 %v465, %v464
      %v486 = vpack.c.b16 %v467, %v466
      %v487 = vpack.c.b16 %v469, %v468
      %v488 = vpack.c.b16 %v471, %v470
      %v489 = vpack.c.b16 %v473, %v472
      %v490 = vpack.c.b16 %v475, %v474
      %v522 = vunpack.c.l.b16 %v393
      %v523 = vunpack.c.l.b16 %v394
      %v524 = vunpack.c.l.b16 %v395
      %v525 = vunpack.c.l.b16 %v396
      %v526 = vunpack.c.l.b16 %v397
      %v527 = vunpack.c.l.b16 %v398
      %v528 = vunpack.c.l.b16 %v399
      %v529 = vunpack.c.l.b16 %v400
      %v530 = vunpack.c.l.b16 %v401
      %v531 = vunpack.c.l.b16 %v402
      %v532 = vunpack.c.l.b16 %v403
      %v533 = vunpack.c.l.b16 %v404
      %v534 = vunpack.c.l.b16 %v405
      %v535 = vunpack.c.l.b16 %v406
      %v536 = vunpack.c.l.b16 %v407
      %v537 = vunpack.c.l.b16 %v408
      %v538 = vpack.c.b16 %v523, %v522
      %v539 = vpack.c.b16 %v525, %v524
      %v540 = vpack.c.b16 %v527, %v526
      %v541 = vpack.c.b16 %v529, %v528
      %v542 = vpack.c.b16 %v531, %v530
      %v543 = vpack.c.b16 %v533, %v532
      %v544 = vpack.c.b16 %v535, %v534
      %v545 = vpack.c.b16 %v537, %v536
      %554 = vmatprep.subr.bf16.mxu0 0
      %555 = vmatpush1.bf16.msra.mxu0 %v545
      %556 = vmatprep.subr.bf16.mxu0 0
      %557 = vmatpush1.bf16.msra.mxu0 %v544
      %558 = vmatprep.subr.bf16.mxu0 0
      %559 = vmatpush1.bf16.msra.mxu0 %v543
      %560 = vmatprep.subr.bf16.mxu0 0
      %561 = vmatpush1.bf16.msra.mxu0 %v542
      %562 = vmatprep.subr.bf16.mxu0 0
      %563 = vmatpush1.bf16.msra.mxu0 %v541
      %564 = vmatprep.subr.bf16.mxu0 0
      %565 = vmatpush1.bf16.msra.mxu0 %v540
      %566 = vmatprep.subr.bf16.mxu0 0
      %567 = vmatpush1.bf16.msra.mxu0 %v539
      %568 = vmatprep.subr.bf16.mxu0 0
      %569 = vmatpush1.bf16.msra.mxu0 %v538
      %570 = vmatprep.subr.bf16.mxu0 0
      %571 = vmatpush2.bf16.msra.mxu0 0
      %572 = vmatprep.subr.bf16.mxu0 0
      %573 = vmatpush2.bf16.msra.mxu0 0
      %574 = vmatprep.subr.bf16.mxu0 0
      %575 = vmatpush2.bf16.msra.mxu0 0
      %576 = vmatprep.subr.bf16.mxu0 0
      %577 = vmatpush2.bf16.msra.mxu0 0
      %578 = vmatprep.subr.bf16.mxu0 0
      %579 = vmatpush2.bf16.msra.mxu0 0
      %580 = vmatprep.subr.bf16.mxu0 0
      %581 = vmatpush2.bf16.msra.mxu0 0
      %582 = vmatprep.subr.bf16.mxu0 0
      %583 = vmatpush2.bf16.msra.mxu0 0
      %584 = vmatprep.subr.bf16.mxu0 0
      %585 = vmatpush2.bf16.msra.mxu0 0
      %586 = vmatprep.mubr.bf16.mxu0 0
      %587 = vmatmul.mubr.bf16.gmra.mxu0 %v476
      %v588 = vpop.f32.mrf.mxu0
      %v589 = vadd.f32 %v414, %v588
      %v590 = vpop.f32.mrf.mxu0
      %v591 = vpop.f32.mrf.mxu0
      %v592 = vadd.f32 %v414, %v591
      %v593 = vpop.f32.mrf.mxu0
      %594 = vmatprep.mubr.bf16.mxu0 0
      %595 = vmatmul.mubr.bf16.gmra.mxu0 %v477
      %v596 = vpop.f32.mrf.mxu0
      %v597 = vadd.f32 %v414, %v596
      %v598 = vpop.f32.mrf.mxu0
      %v599 = vpop.f32.mrf.mxu0
      %v600 = vadd.f32 %v414, %v599
      %v601 = vpop.f32.mrf.mxu0
      %602 = vmatprep.mubr.bf16.mxu0 0
      %603 = vmatmul.mubr.bf16.gmra.mxu0 %v478
      %v604 = vpop.f32.mrf.mxu0
      %v605 = vadd.f32 %v414, %v604
      %v606 = vpop.f32.mrf.mxu0
      %v607 = vpop.f32.mrf.mxu0
      %v608 = vadd.f32 %v414, %v607
      %v609 = vpop.f32.mrf.mxu0
      %610 = vmatprep.mubr.bf16.mxu0 0
      %611 = vmatmul.mubr.bf16.gmra.mxu0 %v479
      %v612 = vpop.f32.mrf.mxu0
      %v613 = vadd.f32 %v414, %v612
      %v614 = vpop.f32.mrf.mxu0
      %v615 = vpop.f32.mrf.mxu0
      %v616 = vadd.f32 %v414, %v615
      %v617 = vpop.f32.mrf.mxu0
      %618 = vmatprep.mubr.bf16.mxu0 0
      %619 = vmatmul.mubr.bf16.gmra.mxu0 %v480
      %v620 = vpop.f32.mrf.mxu0
      %v621 = vadd.f32 %v414, %v620
      %v622 = vpop.f32.mrf.mxu0
      %v623 = vpop.f32.mrf.mxu0
      %v624 = vadd.f32 %v414, %v623
      %v625 = vpop.f32.mrf.mxu0
      %626 = vmatprep.mubr.bf16.mxu0 0
      %627 = vmatmul.mubr.bf16.gmra.mxu0 %v481
      %v628 = vpop.f32.mrf.mxu0
      %v629 = vadd.f32 %v414, %v628
      %v630 = vpop.f32.mrf.mxu0
      %v631 = vpop.f32.mrf.mxu0
      %v632 = vadd.f32 %v414, %v631
      %v633 = vpop.f32.mrf.mxu0
      %634 = vmatprep.mubr.bf16.mxu0 0
      %635 = vmatmul.mubr.bf16.gmra.mxu0 %v482
      %v636 = vpop.f32.mrf.mxu0
      %v637 = vadd.f32 %v414, %v636
      %v638 = vpop.f32.mrf.mxu0
      %v639 = vpop.f32.mrf.mxu0
      %v640 = vadd.f32 %v414, %v639
      %v641 = vpop.f32.mrf.mxu0
      %642 = vmatprep.mubr.bf16.mxu0 0
      %643 = vmatmul.mubr.bf16.gmra.mxu0 %v483
      %v644 = vpop.f32.mrf.mxu0
      %v645 = vadd.f32 %v414, %v644
      %v646 = vpop.f32.mrf.mxu0
      %v647 = vpop.f32.mrf.mxu0
      %v648 = vadd.f32 %v414, %v647
      %v649 = vpop.f32.mrf.mxu0
      %650 = vmatprep.mubr.bf16.mxu0 0
      %651 = vmatmul.mubr.bf16.gmra.mxu0 %v484
      %v652 = vpop.f32.mrf.mxu0
      %v653 = vadd.f32 %v414, %v652
      %v654 = vpop.f32.mrf.mxu0
      %v655 = vpop.f32.mrf.mxu0
      %v656 = vadd.f32 %v414, %v655
      %v657 = vpop.f32.mrf.mxu0
      %658 = vmatprep.mubr.bf16.mxu0 0
      %659 = vmatmul.mubr.bf16.gmra.mxu0 %v485
      %v660 = vpop.f32.mrf.mxu0
      %v661 = vadd.f32 %v414, %v660
      %v662 = vpop.f32.mrf.mxu0
      %v663 = vpop.f32.mrf.mxu0
      %v664 = vadd.f32 %v414, %v663
      %v665 = vpop.f32.mrf.mxu0
      %666 = vmatprep.mubr.bf16.mxu0 0
      %667 = vmatmul.mubr.bf16.gmra.mxu0 %v486
      %v668 = vpop.f32.mrf.mxu0
      %v669 = vadd.f32 %v414, %v668
      %v670 = vpop.f32.mrf.mxu0
      %v671 = vpop.f32.mrf.mxu0
      %v672 = vadd.f32 %v414, %v671
      %v673 = vpop.f32.mrf.mxu0
      %674 = vmatprep.mubr.bf16.mxu0 0
      %675 = vmatmul.mubr.bf16.gmra.mxu0 %v487
      %v676 = vpop.f32.mrf.mxu0
      %v677 = vadd.f32 %v414, %v676
      %v678 = vpop.f32.mrf.mxu0
      %v679 = vpop.f32.mrf.mxu0
      %v680 = vadd.f32 %v414, %v679
      %v681 = vpop.f32.mrf.mxu0
      %682 = vmatprep.mubr.bf16.mxu0 0
      %683 = vmatmul.mubr.bf16.gmra.mxu0 %v488
      %v684 = vpop.f32.mrf.mxu0
      %v685 = vadd.f32 %v414, %v684
      %v686 = vpop.f32.mrf.mxu0
      %v687 = vpop.f32.mrf.mxu0
      %v688 = vadd.f32 %v414, %v687
      %v689 = vpop.f32.mrf.mxu0
      %690 = vmatprep.mubr.bf16.mxu0 0
      %691 = vmatmul.mubr.bf16.gmra.mxu0 %v489
      %v692 = vpop.f32.mrf.mxu0
      %v693 = vadd.f32 %v414, %v692
      %v694 = vpop.f32.mrf.mxu0
      %v695 = vpop.f32.mrf.mxu0
      %v696 = vadd.f32 %v414, %v695
      %v697 = vpop.f32.mrf.mxu0
      %698 = vmatprep.mubr.bf16.mxu0 0
      %699 = vmatmul.mubr.bf16.gmra.mxu0 %v490
      %v700 = vpop.f32.mrf.mxu0
      %v701 = vadd.f32 %v414, %v700
      %v702 = vpop.f32.mrf.mxu0
      %v703 = vpop.f32.mrf.mxu0
      %v704 = vadd.f32 %v414, %v703
      %v705 = vpop.f32.mrf.mxu0
      %706 = vdwg.mxu0
      %v707 = vmax.f32 %v589, 0.0
      %v708 = vmax.f32 %v592, 0.0
      %v709 = vmax.f32 %v597, 0.0
      %v710 = vmax.f32 %v600, 0.0
      %v711 = vmax.f32 %v605, 0.0
      %v712 = vmax.f32 %v608, 0.0
      %v713 = vmax.f32 %v613, 0.0
      %v714 = vmax.f32 %v616, 0.0
      %v715 = vmax.f32 %v621, 0.0
      %v716 = vmax.f32 %v624, 0.0
      %v717 = vmax.f32 %v629, 0.0
      %v718 = vmax.f32 %v632, 0.0
      %v719 = vmax.f32 %v637, 0.0
      %v720 = vmax.f32 %v640, 0.0
      %v721 = vmax.f32 %v645, 0.0
      %v722 = vmax.f32 %v648, 0.0
      %v723 = vmax.f32 %v653, 0.0
      %v724 = vmax.f32 %v656, 0.0
      %v725 = vmax.f32 %v661, 0.0
      %v726 = vmax.f32 %v664, 0.0
      %v727 = vmax.f32 %v669, 0.0
      %v728 = vmax.f32 %v672, 0.0
      %v729 = vmax.f32 %v677, 0.0
      %v730 = vmax.f32 %v680, 0.0
      %v731 = vmax.f32 %v685, 0.0
      %v732 = vmax.f32 %v688, 0.0
      %v733 = vmax.f32 %v693, 0.0
      %v734 = vmax.f32 %v696, 0.0
      %v735 = vmax.f32 %v701, 0.0
      %v736 = vmax.f32 %v704, 0.0
      %v737 = vpack.c.bf16 %v708, %v707
      %v738 = vpack.c.bf16 %v709, %v709
      %v739 = vpack.c.bf16 %v711, %v710
      %v740 = vpack.c.bf16 %v712, %v712
      %v741 = vpack.c.bf16 %v714, %v713
      %v742 = vpack.c.bf16 %v715, %v715
      %v743 = vpack.c.bf16 %v717, %v716
      %v744 = vpack.c.bf16 %v718, %v718
      %v745 = vpack.c.bf16 %v720, %v719
      %v746 = vpack.c.bf16 %v721, %v721
      %v747 = vpack.c.bf16 %v723, %v722
      %v748 = vpack.c.bf16 %v724, %v724
      %v749 = vpack.c.bf16 %v726, %v725
      %v750 = vpack.c.bf16 %v727, %v727
      %v751 = vpack.c.bf16 %v729, %v728
      %v752 = vpack.c.bf16 %v730, %v730
      %v753 = vpack.c.bf16 %v732, %v731
      %v754 = vpack.c.bf16 %v733, %v733
      %v755 = vpack.c.bf16 %v735, %v734
      %v756 = vpack.c.bf16 %v736, %v736
      %v777 = vunpack.c.l.b16 %v737
      %v778 = vunpack.c.h.b16 %v737
      %v779 = vunpack.c.l.b16 %v738
      %v780 = vunpack.c.l.b16 %v739
      %v781 = vunpack.c.h.b16 %v739
      %v782 = vunpack.c.l.b16 %v740
      %v783 = vunpack.c.l.b16 %v741
      %v784 = vunpack.c.h.b16 %v741
      %v785 = vunpack.c.l.b16 %v742
      %v786 = vunpack.c.l.b16 %v743
      %v787 = vunpack.c.h.b16 %v743
      %v788 = vunpack.c.l.b16 %v744
      %v789 = vunpack.c.l.b16 %v745
      %v790 = vunpack.c.h.b16 %v745
      %v791 = vunpack.c.l.b16 %v746
      %v792 = vunpack.c.l.b16 %v747
      %v793 = vunpack.c.h.b16 %v747
      %v794 = vunpack.c.l.b16 %v748
      %v795 = vunpack.c.l.b16 %v749
      %v796 = vunpack.c.h.b16 %v749
      %v797 = vunpack.c.l.b16 %v750
      %v798 = vunpack.c.l.b16 %v751
      %v799 = vunpack.c.h.b16 %v751
      %v800 = vunpack.c.l.b16 %v752
      %v801 = vunpack.c.l.b16 %v753
      %v802 = vunpack.c.h.b16 %v753
      %v803 = vunpack.c.l.b16 %v754
      %v804 = vunpack.c.l.b16 %v755
      %v805 = vunpack.c.h.b16 %v755
      %v806 = vunpack.c.l.b16 %v756
      %v807 = vpack.c.b16 %v777, %v777
      %v808 = vpack.c.b16 %v778, %v778
      %v809 = vpack.c.b16 %v779, %v779
      %v810 = vpack.c.b16 %v780, %v780
      %v811 = vpack.c.b16 %v781, %v781
      %v812 = vpack.c.b16 %v782, %v782
      %v813 = vpack.c.b16 %v783, %v783
      %v814 = vpack.c.b16 %v784, %v784
      %v815 = vpack.c.b16 %v785, %v785
      %v816 = vpack.c.b16 %v786, %v786
      %v817 = vpack.c.b16 %v787, %v787
      %v818 = vpack.c.b16 %v788, %v788
      %v819 = vpack.c.b16 %v789, %v789
      %v820 = vpack.c.b16 %v790, %v790
      %v821 = vpack.c.b16 %v791, %v791
      %v822 = vpack.c.b16 %v792, %v792
      %v823 = vpack.c.b16 %v793, %v793
      %v824 = vpack.c.b16 %v794, %v794
      %v825 = vpack.c.b16 %v795, %v795
      %v826 = vpack.c.b16 %v796, %v796
      %v827 = vpack.c.b16 %v797, %v797
      %v828 = vpack.c.b16 %v798, %v798
      %v829 = vpack.c.b16 %v799, %v799
      %v830 = vpack.c.b16 %v800, %v800
      %v831 = vpack.c.b16 %v801, %v801
      %v832 = vpack.c.b16 %v802, %v802
      %v833 = vpack.c.b16 %v803, %v803
      %v834 = vpack.c.b16 %v804, %v804
      %v835 = vpack.c.b16 %v805, %v805
      %v836 = vpack.c.b16 %v806, %v806
      %867 = vst [vmem:[#allocation2] sm:$0xf] %v807
      %868 = vst [vmem:[#allocation2 + $0x4] sm:$0xf] %v808
      %869 = vst [vmem:[#allocation2 + $0x8] sm:$0xf] %v809
      %870 = vst [vmem:[#allocation2 + $0xc] sm:$0xf] %v810
      %871 = vst [vmem:[#allocation2 + $0x10] sm:$0xf] %v811
      %872 = vst [vmem:[#allocation2 + $0x14] sm:$0xf] %v812
      %873 = vst [vmem:[#allocation2 + $0x18] sm:$0xf] %v813
      %874 = vst [vmem:[#allocation2 + $0x1c] sm:$0xf] %v814
      %875 = vst [vmem:[#allocation2 + $0x20] sm:$0xf] %v815
      %876 = vst [vmem:[#allocation2 + $0x24] sm:$0xf] %v816
      %877 = vst [vmem:[#allocation2 + $0x28] sm:$0xf] %v817
      %878 = vst [vmem:[#allocation2 + $0x2c] sm:$0xf] %v818
      %879 = vst [vmem:[#allocation2 + $0x30] sm:$0xf] %v819
      %880 = vst [vmem:[#allocation2 + $0x34] sm:$0xf] %v820
      %881 = vst [vmem:[#allocation2 + $0x38] sm:$0xf] %v821
      %882 = vst [vmem:[#allocation2 + $0x3c] sm:$0xf] %v822
      %883 = vst [vmem:[#allocation2 + $0x40] sm:$0xf] %v823
      %884 = vst [vmem:[#allocation2 + $0x44] sm:$0xf] %v824
      %885 = vst [vmem:[#allocation2 + $0x48] sm:$0xf] %v825
      %886 = vst [vmem:[#allocation2 + $0x4c] sm:$0xf] %v826
      %887 = vst [vmem:[#allocation2 + $0x50] sm:$0xf] %v827
      %888 = vst [vmem:[#allocation2 + $0x54] sm:$0xf] %v828
      %889 = vst [vmem:[#allocation2 + $0x58] sm:$0xf] %v829
      %890 = vst [vmem:[#allocation2 + $0x5c] sm:$0xf] %v830
      %891 = vst [vmem:[#allocation2 + $0x60] sm:$0xf] %v831
      %892 = vst [vmem:[#allocation2 + $0x64] sm:$0xf] %v832
      %893 = vst [vmem:[#allocation2 + $0x68] sm:$0xf] %v833
      %894 = vst [vmem:[#allocation2 + $0x6c] sm:$0xf] %v834
      %895 = vst [vmem:[#allocation2 + $0x70] sm:$0xf] %v835
      %896 = vst [vmem:[#allocation2 + $0x74] sm:$0xf] %v836
      %vm897 = vcmask 1040384
      %vm898 = vsmask.f32 256
      %vm899 = vmand %vm897, %vm898
      %v900 = vld [vmem:[#allocation2] sm:$0x1]
      %v901 = vsel %vm899, 0, %v900
      %902 = vst [vmem:[#allocation2] sm:$0x1] %v901
      %v903 = vld [vmem:[#allocation2 + $0xc] sm:$0x1]
      %v904 = vsel %vm899, 0, %v903
      %905 = vst [vmem:[#allocation2 + $0xc] sm:$0x1] %v904
      %v906 = vld [vmem:[#allocation2 + $0x18] sm:$0x1]
      %v907 = vsel %vm899, 0, %v906
      %908 = vst [vmem:[#allocation2 + $0x18] sm:$0x1] %v907
      %v909 = vld [vmem:[#allocation2 + $0x24] sm:$0x1]
      %v910 = vsel %vm899, 0, %v909
      %911 = vst [vmem:[#allocation2 + $0x24] sm:$0x1] %v910
      %v912 = vld [vmem:[#allocation2 + $0x30] sm:$0x1]
      %v913 = vsel %vm899, 0, %v912
      %914 = vst [vmem:[#allocation2 + $0x30] sm:$0x1] %v913
      %v915 = vld [vmem:[#allocation2 + $0x3c] sm:$0x1]
      %v916 = vsel %vm899, 0, %v915
      %917 = vst [vmem:[#allocation2 + $0x3c] sm:$0x1] %v916
      %v918 = vld [vmem:[#allocation2 + $0x48] sm:$0x1]
      %v919 = vsel %vm899, 0, %v918
      %920 = vst [vmem:[#allocation2 + $0x48] sm:$0x1] %v919
      %v921 = vld [vmem:[#allocation2 + $0x54] sm:$0x1]
      %v922 = vsel %vm899, 0, %v921
      %923 = vst [vmem:[#allocation2 + $0x54] sm:$0x1] %v922
      %v924 = vld [vmem:[#allocation2 + $0x60] sm:$0x1]
      %v925 = vsel %vm899, 0, %v924
      %926 = vst [vmem:[#allocation2 + $0x60] sm:$0x1] %v925
      %v927 = vld [vmem:[#allocation2 + $0x6c] sm:$0x1]
      %v928 = vsel %vm899, 0, %v927
      %929 = vst [vmem:[#allocation2 + $0x6c] sm:$0x1] %v928
      %vm930 = vsmask.f32 7938
      %vm931 = vmand %vm897, %vm930
      %v932 = vld [vmem:[#allocation2 + $0x8] sm:$0x1]
      %v933 = vsel %vm931, 0, %v932
      %934 = vst [vmem:[#allocation2 + $0x8] sm:$0x1] %v933
      %v935 = vld [vmem:[#allocation2 + $0x14] sm:$0x1]
      %v936 = vsel %vm931, 0, %v935
      %937 = vst [vmem:[#allocation2 + $0x14] sm:$0x1] %v936
      %v938 = vld [vmem:[#allocation2 + $0x20] sm:$0x1]
      %v939 = vsel %vm931, 0, %v938
      %940 = vst [vmem:[#allocation2 + $0x20] sm:$0x1] %v939
      %v941 = vld [vmem:[#allocation2 + $0x2c] sm:$0x1]
      %v942 = vsel %vm931, 0, %v941
      %943 = vst [vmem:[#allocation2 + $0x2c] sm:$0x1] %v942
      %v944 = vld [vmem:[#allocation2 + $0x38] sm:$0x1]
      %v945 = vsel %vm931, 0, %v944
      %946 = vst [vmem:[#allocation2 + $0x38] sm:$0x1] %v945
      %v947 = vld [vmem:[#allocation2 + $0x44] sm:$0x1]
      %v948 = vsel %vm931, 0, %v947
      %949 = vst [vmem:[#allocation2 + $0x44] sm:$0x1] %v948
      %v950 = vld [vmem:[#allocation2 + $0x50] sm:$0x1]
      %v951 = vsel %vm931, 0, %v950
      %952 = vst [vmem:[#allocation2 + $0x50] sm:$0x1] %v951
      %v953 = vld [vmem:[#allocation2 + $0x5c] sm:$0x1]
      %v954 = vsel %vm931, 0, %v953
      %955 = vst [vmem:[#allocation2 + $0x5c] sm:$0x1] %v954
      %v956 = vld [vmem:[#allocation2 + $0x68] sm:$0x1]
      %v957 = vsel %vm931, 0, %v956
      %958 = vst [vmem:[#allocation2 + $0x68] sm:$0x1] %v957
      %v959 = vld [vmem:[#allocation2 + $0x74] sm:$0x1]
      %v960 = vsel %vm931, 0, %v959
      %961 = vst [vmem:[#allocation2 + $0x74] sm:$0x1] %v960
      %p962 = scmp.eq.s32.totalorder %s359, 0
      // Predicated region
      $region57: #{bottleneck_forward.1} parent=55 // pred_check
        %p963 = pneg %p962
      $region58: #{bottleneck_forward.1} parent=55 // pred_check_branch
        %965 = sbr.rel (%p963) target = $region60
      $region59: #{bottleneck_forward.1} parent=55 // pred_region
        %966 = vst [vmem:[#allocation2] sm:$0xf] 0
        %967 = vst [vmem:[#allocation2 + $0x4] sm:$0xf] 0
        %968 = vst [vmem:[#allocation2 + $0x8] sm:$0xf] 0
      $region60: #{bottleneck_forward.1} parent=55 // pred_fallthru
        _
      %s969 = sadd.s32 %s359, 9
      %p970 = scmp.eq.s32.totalorder %s969, 17
      // Predicated region
      $region61: #{bottleneck_forward.1} parent=55 // pred_check
        %p971 = pneg %p970
      $region62: #{bottleneck_forward.1} parent=55 // pred_check_branch
        %973 = sbr.rel (%p971) target = $region64
      $region63: #{bottleneck_forward.1} parent=55 // pred_region
        %s974 = scalar_lea.vmem [#allocation2], 108
        %975 = vst [vmem:[%s974] sm:$0xf] 0
        %976 = vst [vmem:[%s974 + $0x4] sm:$0xf] 0
        %977 = vst [vmem:[%s974 + $0x8] sm:$0xf] 0
      $region64: #{bottleneck_forward.1} parent=55 // pred_fallthru
        _
      %v978 = vld [vmem:[#allocation2] sm:$0xf]
      %v979 = vld [vmem:[#allocation2 + $0x4] sm:$0xf]
      %v980 = vld [vmem:[#allocation2 + $0xc] sm:$0xf]
      %v981 = vld [vmem:[#allocation2 + $0x10] sm:$0xf]
      %v982 = vld [vmem:[#allocation2 + $0x18] sm:$0xf]
      %v983 = vld [vmem:[#allocation2 + $0x1c] sm:$0xf]
      %v984 = vld [vmem:[#allocation2 + $0x24] sm:$0xf]
      %v985 = vld [vmem:[#allocation2 + $0x28] sm:$0xf]
      %v986 = vld [vmem:[#allocation2 + $0x30] sm:$0xf]
      %v987 = vld [vmem:[#allocation2 + $0x34] sm:$0xf]
      %v988 = vld [vmem:[#allocation2 + $0x3c] sm:$0xf]
      %v989 = vld [vmem:[#allocation2 + $0x40] sm:$0xf]
      %v990 = vld [vmem:[#allocation2 + $0x48] sm:$0xf]
      %v991 = vld [vmem:[#allocation2 + $0x4c] sm:$0xf]
      %v992 = vld [vmem:[#allocation2 + $0x54] sm:$0xf]
      %v993 = vld [vmem:[#allocation2 + $0x58] sm:$0xf]
      %v994 = vld [vmem:[#allocation2 + $0x60] sm:$0xf]
      %v995 = vld [vmem:[#allocation2 + $0x64] sm:$0xf]
      %v996 = vld [vmem:[#allocation2 + $0x6c] sm:$0xf]
      %v997 = vld [vmem:[#allocation2 + $0x70] sm:$0xf]
      %998 = vst [vmem:[#allocation3] sm:$0xf] %v978
      %999 = vst [vmem:[#allocation3 + $0xc] sm:$0xf] %v979
      %1000 = vst [vmem:[#allocation3 + $0x18] sm:$0xf] %v980
      %1001 = vst [vmem:[#allocation3 + $0x24] sm:$0xf] %v981
      %1002 = vst [vmem:[#allocation3 + $0x30] sm:$0xf] %v982
      %1003 = vst [vmem:[#allocation3 + $0x3c] sm:$0xf] %v983
      %1004 = vst [vmem:[#allocation3 + $0x48] sm:$0xf] %v984
      %1005 = vst [vmem:[#allocation3 + $0x54] sm:$0xf] %v985
      %1006 = vst [vmem:[#allocation3 + $0x60] sm:$0xf] %v986
      %1007 = vst [vmem:[#allocation3 + $0x6c] sm:$0xf] %v987
      %1008 = vst [vmem:[#allocation3 + $0x78] sm:$0xf] %v988
      %1009 = vst [vmem:[#allocation3 + $0x84] sm:$0xf] %v989
      %1010 = vst [vmem:[#allocation3 + $0x90] sm:$0xf] %v990
      %1011 = vst [vmem:[#allocation3 + $0x9c] sm:$0xf] %v991
      %1012 = vst [vmem:[#allocation3 + $0xa8] sm:$0xf] %v992
      %1013 = vst [vmem:[#allocation3 + $0xb4] sm:$0xf] %v993
      %1014 = vst [vmem:[#allocation3 + $0xc0] sm:$0xf] %v994
      %1015 = vst [vmem:[#allocation3 + $0xcc] sm:$0xf] %v995
      %1016 = vst [vmem:[#allocation3 + $0xd8] sm:$0xf] %v996
      %1017 = vst [vmem:[#allocation3 + $0xe4] sm:$0xf] %v997
      %v1018 = vld [vmem:[#allocation2] sm:$0xf]
      %v1019 = vld [vmem:[#allocation2 + $0x4] sm:$0xf]
      %v1020 = vld [vmem:[#allocation2 + $0x8] sm:$0x1]
      %v1021 = vld [vmem:[#allocation2 + $0xc] sm:$0xf]
      %v1022 = vld [vmem:[#allocation2 + $0x10] sm:$0xf]
      %v1023 = vld [vmem:[#allocation2 + $0x14] sm:$0x1]
      %v1024 = vld [vmem:[#allocation2 + $0x18] sm:$0xf]
      %v1025 = vld [vmem:[#allocation2 + $0x1c] sm:$0xf]
      %v1026 = vld [vmem:[#allocation2 + $0x20] sm:$0x1]
      %v1027 = vld [vmem:[#allocation2 + $0x24] sm:$0xf]
      %v1028 = vld [vmem:[#allocation2 + $0x28] sm:$0xf]
      %v1029 = vld [vmem:[#allocation2 + $0x2c] sm:$0x1]
      %v1030 = vld [vmem:[#allocation2 + $0x30] sm:$0xf]
      %v1031 = vld [vmem:[#allocation2 + $0x34] sm:$0xf]
      %v1032 = vld [vmem:[#allocation2 + $0x38] sm:$0x1]
      %v1033 = vld [vmem:[#allocation2 + $0x3c] sm:$0xf]
      %v1034 = vld [vmem:[#allocation2 + $0x40] sm:$0xf]
      %v1035 = vld [vmem:[#allocation2 + $0x44] sm:$0x1]
      %v1036 = vld [vmem:[#allocation2 + $0x48] sm:$0xf]
      %v1037 = vld [vmem:[#allocation2 + $0x4c] sm:$0xf]
      %v1038 = vld [vmem:[#allocation2 + $0x50] sm:$0x1]
      %v1039 = vld [vmem:[#allocation2 + $0x54] sm:$0xf]
      %v1040 = vld [vmem:[#allocation2 + $0x58] sm:$0xf]
      %v1041 = vld [vmem:[#allocation2 + $0x5c] sm:$0x1]
      %v1042 = vld [vmem:[#allocation2 + $0x60] sm:$0xf]
      %v1043 = vld [vmem:[#allocation2 + $0x64] sm:$0xf]
      %v1044 = vld [vmem:[#allocation2 + $0x68] sm:$0x1]
      %v1045 = vld [vmem:[#allocation2 + $0x6c] sm:$0xf]
      %v1046 = vld [vmem:[#allocation2 + $0x70] sm:$0xf]
      %v1047 = vld [vmem:[#allocation2 + $0x74] sm:$0x1]
      %vm1048 = vsmask.f32 3328
      %vm1049 = vsmask.f32 7440
      %vm1050 = vmor %vm1048, %vm1049
      %v1052 = vshrl.u32 %v1018, 16
      %v1054 = vrot.slane %v1052, 4
      %v1055 = vshll.u32 %v1018, 16
      %v1057 = vrot.slane %v1055, 5
      %v1058 = vor.u32 %v1054, %v1057
      %v1059 = vrot.slane %v1058, 4
      %v1061 = vshll.u32 %v1019, 16
      %v1063 = vrot.slane %v1061, 5
      %v1064 = vsel %vm1050, %v1059, %v1063
      %v1065 = vshrl.u32 %v1019, 16
      %v1067 = vrot.slane %v1065, 4
      %v1068 = vor.u32 %v1067, %v1063
      %v1069 = vrot.slane %v1068, 4
      %v1071 = vshll.u32 %v1020, 16
      %v1073 = vrot.slane %v1071, 5
      %v1074 = vsel %vm1050, %v1069, %v1073
      %v1076 = vshrl.u32 %v1021, 16
      %v1078 = vrot.slane %v1076, 4
      %v1079 = vshll.u32 %v1021, 16
      %v1081 = vrot.slane %v1079, 5
      %v1082 = vor.u32 %v1078, %v1081
      %v1083 = vrot.slane %v1082, 4
      %v1085 = vshll.u32 %v1022, 16
      %v1087 = vrot.slane %v1085, 5
      %v1088 = vsel %vm1050, %v1083, %v1087
      %v1089 = vshrl.u32 %v1022, 16
      %v1091 = vrot.slane %v1089, 4
      %v1092 = vor.u32 %v1091, %v1087
      %v1093 = vrot.slane %v1092, 4
      %v1095 = vshll.u32 %v1023, 16
      %v1097 = vrot.slane %v1095, 5
      %v1098 = vsel %vm1050, %v1093, %v1097
      %v1100 = vshrl.u32 %v1024, 16
      %v1102 = vrot.slane %v1100, 4
      %v1103 = vshll.u32 %v1024, 16
      %v1105 = vrot.slane %v1103, 5
      %v1106 = vor.u32 %v1102, %v1105
      %v1107 = vrot.slane %v1106, 4
      %v1109 = vshll.u32 %v1025, 16
      %v1111 = vrot.slane %v1109, 5
      %v1112 = vsel %vm1050, %v1107, %v1111
      %v1113 = vshrl.u32 %v1025, 16
      %v1115 = vrot.slane %v1113, 4
      %v1116 = vor.u32 %v1115, %v1111
      %v1117 = vrot.slane %v1116, 4
      %v1119 = vshll.u32 %v1026, 16
      %v1121 = vrot.slane %v1119, 5
      %v1122 = vsel %vm1050, %v1117, %v1121
      %v1124 = vshrl.u32 %v1027, 16
      %v1126 = vrot.slane %v1124, 4
      %v1127 = vshll.u32 %v1027, 16
      %v1129 = vrot.slane %v1127, 5
      %v1130 = vor.u32 %v1126, %v1129
      %v1131 = vrot.slane %v1130, 4
      %v1133 = vshll.u32 %v1028, 16
      %v1135 = vrot.slane %v1133, 5
      %v1136 = vsel %vm1050, %v1131, %v1135
      %v1137 = vshrl.u32 %v1028, 16
      %v1139 = vrot.slane %v1137, 4
      %v1140 = vor.u32 %v1139, %v1135
      %v1141 = vrot.slane %v1140, 4
      %v1143 = vshll.u32 %v1029, 16
      %v1145 = vrot.slane %v1143, 5
      %v1146 = vsel %vm1050, %v1141, %v1145
      %v1148 = vshrl.u32 %v1030, 16
      %v1150 = vrot.slane %v1148, 4
      %v1151 = vshll.u32 %v1030, 16
      %v1153 = vrot.slane %v1151, 5
      %v1154 = vor.u32 %v1150, %v1153
      %v1155 = vrot.slane %v1154, 4
      %v1157 = vshll.u32 %v1031, 16
      %v1159 = vrot.slane %v1157, 5
      %v1160 = vsel %vm1050, %v1155, %v1159
      %v1161 = vshrl.u32 %v1031, 16
      %v1163 = vrot.slane %v1161, 4
      %v1164 = vor.u32 %v1163, %v1159
      %v1165 = vrot.slane %v1164, 4
      %v1167 = vshll.u32 %v1032, 16
      %v1169 = vrot.slane %v1167, 5
      %v1170 = vsel %vm1050, %v1165, %v1169
      %v1172 = vshrl.u32 %v1033, 16
      %v1174 = vrot.slane %v1172, 4
      %v1175 = vshll.u32 %v1033, 16
      %v1177 = vrot.slane %v1175, 5
      %v1178 = vor.u32 %v1174, %v1177
      %v1179 = vrot.slane %v1178, 4
      %v1181 = vshll.u32 %v1034, 16
      %v1183 = vrot.slane %v1181, 5
      %v1184 = vsel %vm1050, %v1179, %v1183
      %v1185 = vshrl.u32 %v1034, 16
      %v1187 = vrot.slane %v1185, 4
      %v1188 = vor.u32 %v1187, %v1183
      %v1189 = vrot.slane %v1188, 4
      %v1191 = vshll.u32 %v1035, 16
      %v1193 = vrot.slane %v1191, 5
      %v1194 = vsel %vm1050, %v1189, %v1193
      %v1196 = vshrl.u32 %v1036, 16
      %v1198 = vrot.slane %v1196, 4
      %v1199 = vshll.u32 %v1036, 16
      %v1201 = vrot.slane %v1199, 5
      %v1202 = vor.u32 %v1198, %v1201
      %v1203 = vrot.slane %v1202, 4
      %v1205 = vshll.u32 %v1037, 16
      %v1207 = vrot.slane %v1205, 5
      %v1208 = vsel %vm1050, %v1203, %v1207
      %v1209 = vshrl.u32 %v1037, 16
      %v1211 = vrot.slane %v1209, 4
      %v1212 = vor.u32 %v1211, %v1207
      %v1213 = vrot.slane %v1212, 4
      %v1215 = vshll.u32 %v1038, 16
      %v1217 = vrot.slane %v1215, 5
      %v1218 = vsel %vm1050, %v1213, %v1217
      %v1220 = vshrl.u32 %v1039, 16
      %v1222 = vrot.slane %v1220, 4
      %v1223 = vshll.u32 %v1039, 16
      %v1225 = vrot.slane %v1223, 5
      %v1226 = vor.u32 %v1222, %v1225
      %v1227 = vrot.slane %v1226, 4
      %v1229 = vshll.u32 %v1040, 16
      %v1231 = vrot.slane %v1229, 5
      %v1232 = vsel %vm1050, %v1227, %v1231
      %v1233 = vshrl.u32 %v1040, 16
      %v1235 = vrot.slane %v1233, 4
      %v1236 = vor.u32 %v1235, %v1231
      %v1237 = vrot.slane %v1236, 4
      %v1239 = vshll.u32 %v1041, 16
      %v1241 = vrot.slane %v1239, 5
      %v1242 = vsel %vm1050, %v1237, %v1241
      %v1244 = vshrl.u32 %v1042, 16
      %v1246 = vrot.slane %v1244, 4
      %v1247 = vshll.u32 %v1042, 16
      %v1249 = vrot.slane %v1247, 5
      %v1250 = vor.u32 %v1246, %v1249
      %v1251 = vrot.slane %v1250, 4
      %v1253 = vshll.u32 %v1043, 16
      %v1255 = vrot.slane %v1253, 5
      %v1256 = vsel %vm1050, %v1251, %v1255
      %v1257 = vshrl.u32 %v1043, 16
      %v1259 = vrot.slane %v1257, 4
      %v1260 = vor.u32 %v1259, %v1255
      %v1261 = vrot.slane %v1260, 4
      %v1263 = vshll.u32 %v1044, 16
      %v1265 = vrot.slane %v1263, 5
      %v1266 = vsel %vm1050, %v1261, %v1265
      %v1268 = vshrl.u32 %v1045, 16
      %v1270 = vrot.slane %v1268, 4
      %v1271 = vshll.u32 %v1045, 16
      %v1273 = vrot.slane %v1271, 5
      %v1274 = vor.u32 %v1270, %v1273
      %v1275 = vrot.slane %v1274, 4
      %v1277 = vshll.u32 %v1046, 16
      %v1279 = vrot.slane %v1277, 5
      %v1280 = vsel %vm1050, %v1275, %v1279
      %v1281 = vshrl.u32 %v1046, 16
      %v1283 = vrot.slane %v1281, 4
      %v1284 = vor.u32 %v1283, %v1279
      %v1285 = vrot.slane %v1284, 4
      %v1287 = vshll.u32 %v1047, 16
      %v1289 = vrot.slane %v1287, 5
      %v1290 = vsel %vm1050, %v1285, %v1289
      %1311 = vst [vmem:[#allocation3 + $0x4] sm:$0xf] %v1064
      %1312 = vst [vmem:[#allocation3 + $0x10] sm:$0xf] %v1074
      %1313 = vst [vmem:[#allocation3 + $0x1c] sm:$0xf] %v1088
      %1314 = vst [vmem:[#allocation3 + $0x28] sm:$0xf] %v1098
      %1315 = vst [vmem:[#allocation3 + $0x34] sm:$0xf] %v1112
      %1316 = vst [vmem:[#allocation3 + $0x40] sm:$0xf] %v1122
      %1317 = vst [vmem:[#allocation3 + $0x4c] sm:$0xf] %v1136
      %1318 = vst [vmem:[#allocation3 + $0x58] sm:$0xf] %v1146
      %1319 = vst [vmem:[#allocation3 + $0x64] sm:$0xf] %v1160
      %1320 = vst [vmem:[#allocation3 + $0x70] sm:$0xf] %v1170
      %1321 = vst [vmem:[#allocation3 + $0x7c] sm:$0xf] %v1184
      %1322 = vst [vmem:[#allocation3 + $0x88] sm:$0xf] %v1194
      %1323 = vst [vmem:[#allocation3 + $0x94] sm:$0xf] %v1208
      %1324 = vst [vmem:[#allocation3 + $0xa0] sm:$0xf] %v1218
      %1325 = vst [vmem:[#allocation3 + $0xac] sm:$0xf] %v1232
      %1326 = vst [vmem:[#allocation3 + $0xb8] sm:$0xf] %v1242
      %1327 = vst [vmem:[#allocation3 + $0xc4] sm:$0xf] %v1256
      %1328 = vst [vmem:[#allocation3 + $0xd0] sm:$0xf] %v1266
      %1329 = vst [vmem:[#allocation3 + $0xdc] sm:$0xf] %v1280
      %1330 = vst [vmem:[#allocation3 + $0xe8] sm:$0xf] %v1290
      %v1331 = vld [vmem:[#allocation2] sm:$0xe]
      %v1332 = vld [vmem:[#allocation2 + $0x4] sm:$0xf]
      %v1333 = vld [vmem:[#allocation2 + $0x8] sm:$0x1]
      %v1334 = vld [vmem:[#allocation2 + $0xc] sm:$0xe]
      %v1335 = vld [vmem:[#allocation2 + $0x10] sm:$0xf]
      %v1336 = vld [vmem:[#allocation2 + $0x14] sm:$0x1]
      %v1337 = vld [vmem:[#allocation2 + $0x18] sm:$0xe]
      %v1338 = vld [vmem:[#allocation2 + $0x1c] sm:$0xf]
      %v1339 = vld [vmem:[#allocation2 + $0x20] sm:$0x1]
      %v1340 = vld [vmem:[#allocation2 + $0x24] sm:$0xe]
      %v1341 = vld [vmem:[#allocation2 + $0x28] sm:$0xf]
      %v1342 = vld [vmem:[#allocation2 + $0x2c] sm:$0x1]
      %v1343 = vld [vmem:[#allocation2 + $0x30] sm:$0xe]
      %v1344 = vld [vmem:[#allocation2 + $0x34] sm:$0xf]
      %v1345 = vld [vmem:[#allocation2 + $0x38] sm:$0x1]
      %v1346 = vld [vmem:[#allocation2 + $0x3c] sm:$0xe]
      %v1347 = vld [vmem:[#allocation2 + $0x40] sm:$0xf]
      %v1348 = vld [vmem:[#allocation2 + $0x44] sm:$0x1]
      %v1349 = vld [vmem:[#allocation2 + $0x48] sm:$0xe]
      %v1350 = vld [vmem:[#allocation2 + $0x4c] sm:$0xf]
      %v1351 = vld [vmem:[#allocation2 + $0x50] sm:$0x1]
      %v1352 = vld [vmem:[#allocation2 + $0x54] sm:$0xe]
      %v1353 = vld [vmem:[#allocation2 + $0x58] sm:$0xf]
      %v1354 = vld [vmem:[#allocation2 + $0x5c] sm:$0x1]
      %v1355 = vld [vmem:[#allocation2 + $0x60] sm:$0xe]
      %v1356 = vld [vmem:[#allocation2 + $0x64] sm:$0xf]
      %v1357 = vld [vmem:[#allocation2 + $0x68] sm:$0x1]
      %v1358 = vld [vmem:[#allocation2 + $0x6c] sm:$0xe]
      %v1359 = vld [vmem:[#allocation2 + $0x70] sm:$0xf]
      %v1360 = vld [vmem:[#allocation2 + $0x74] sm:$0x1]
      %vm1391 = vcmask 1042432
      %vm1392 = vcmask 1046532
      %vm1393 = vmor %vm1391, %vm1392
      %v1394 = vrot.slane %v1331, 5
      %v1395 = vrot.slane %v1394, 4
      %v1396 = vrot.slane %v1332, 5
      %v1397 = vsel %vm1393, %v1395, %v1396
      %v1398 = vrot.slane %v1396, 4
      %v1399 = vrot.slane %v1333, 5
      %v1400 = vsel %vm1393, %v1398, %v1399
      %v1401 = vrot.slane %v1334, 5
      %v1402 = vrot.slane %v1401, 4
      %v1403 = vrot.slane %v1335, 5
      %v1404 = vsel %vm1393, %v1402, %v1403
      %v1405 = vrot.slane %v1403, 4
      %v1406 = vrot.slane %v1336, 5
      %v1407 = vsel %vm1393, %v1405, %v1406
      %v1408 = vrot.slane %v1337, 5
      %v1409 = vrot.slane %v1408, 4
      %v1410 = vrot.slane %v1338, 5
      %v1411 = vsel %vm1393, %v1409, %v1410
      %v1412 = vrot.slane %v1410, 4
      %v1413 = vrot.slane %v1339, 5
      %v1414 = vsel %vm1393, %v1412, %v1413
      %v1415 = vrot.slane %v1340, 5
      %v1416 = vrot.slane %v1415, 4
      %v1417 = vrot.slane %v1341, 5
      %v1418 = vsel %vm1393, %v1416, %v1417
      %v1419 = vrot.slane %v1417, 4
      %v1420 = vrot.slane %v1342, 5
      %v1421 = vsel %vm1393, %v1419, %v1420
      %v1422 = vrot.slane %v1343, 5
      %v1423 = vrot.slane %v1422, 4
      %v1424 = vrot.slane %v1344, 5
      %v1425 = vsel %vm1393, %v1423, %v1424
      %v1426 = vrot.slane %v1424, 4
      %v1427 = vrot.slane %v1345, 5
      %v1428 = vsel %vm1393, %v1426, %v1427
      %v1429 = vrot.slane %v1346, 5
      %v1430 = vrot.slane %v1429, 4
      %v1431 = vrot.slane %v1347, 5
      %v1432 = vsel %vm1393, %v1430, %v1431
      %v1433 = vrot.slane %v1431, 4
      %v1434 = vrot.slane %v1348, 5
      %v1435 = vsel %vm1393, %v1433, %v1434
      %v1436 = vrot.slane %v1349, 5
      %v1437 = vrot.slane %v1436, 4
      %v1438 = vrot.slane %v1350, 5
      %v1439 = vsel %vm1393, %v1437, %v1438
      %v1440 = vrot.slane %v1438, 4
      %v1441 = vrot.slane %v1351, 5
      %v1442 = vsel %vm1393, %v1440, %v1441
      %v1443 = vrot.slane %v1352, 5
      %v1444 = vrot.slane %v1443, 4
      %v1445 = vrot.slane %v1353, 5
      %v1446 = vsel %vm1393, %v1444, %v1445
      %v1447 = vrot.slane %v1445, 4
      %v1448 = vrot.slane %v1354, 5
      %v1449 = vsel %vm1393, %v1447, %v1448
      %v1450 = vrot.slane %v1355, 5
      %v1451 = vrot.slane %v1450, 4
      %v1452 = vrot.slane %v1356, 5
      %v1453 = vsel %vm1393, %v1451, %v1452
      %v1454 = vrot.slane %v1452, 4
      %v1455 = vrot.slane %v1357, 5
      %v1456 = vsel %vm1393, %v1454, %v1455
      %v1457 = vrot.slane %v1358, 5
      %v1458 = vrot.slane %v1457, 4
      %v1459 = vrot.slane %v1359, 5
      %v1460 = vsel %vm1393, %v1458, %v1459
      %v1461 = vrot.slane %v1459, 4
      %v1462 = vrot.slane %v1360, 5
      %v1463 = vsel %vm1393, %v1461, %v1462
      %1484 = vst [vmem:[#allocation3 + $0x8] sm:$0xf] %v1397
      %1485 = vst [vmem:[#allocation3 + $0x14] sm:$0xf] %v1400
      %1486 = vst [vmem:[#allocation3 + $0x20] sm:$0xf] %v1404
      %1487 = vst [vmem:[#allocation3 + $0x2c] sm:$0xf] %v1407
      %1488 = vst [vmem:[#allocation3 + $0x38] sm:$0xf] %v1411
      %1489 = vst [vmem:[#allocation3 + $0x44] sm:$0xf] %v1414
      %1490 = vst [vmem:[#allocation3 + $0x50] sm:$0xf] %v1418
      %1491 = vst [vmem:[#allocation3 + $0x5c] sm:$0xf] %v1421
      %1492 = vst [vmem:[#allocation3 + $0x68] sm:$0xf] %v1425
      %1493 = vst [vmem:[#allocation3 + $0x74] sm:$0xf] %v1428
      %1494 = vst [vmem:[#allocation3 + $0x80] sm:$0xf] %v1432
      %1495 = vst [vmem:[#allocation3 + $0x8c] sm:$0xf] %v1435
      %1496 = vst [vmem:[#allocation3 + $0x98] sm:$0xf] %v1439
      %1497 = vst [vmem:[#allocation3 + $0xa4] sm:$0xf] %v1442
      %1498 = vst [vmem:[#allocation3 + $0xb0] sm:$0xf] %v1446
      %1499 = vst [vmem:[#allocation3 + $0xbc] sm:$0xf] %v1449
      %1500 = vst [vmem:[#allocation3 + $0xc8] sm:$0xf] %v1453
      %1501 = vst [vmem:[#allocation3 + $0xd4] sm:$0xf] %v1456
      %1502 = vst [vmem:[#allocation3 + $0xe0] sm:$0xf] %v1460
      %1503 = vst [vmem:[#allocation3 + $0xec] sm:$0xf] %v1463
      %v1504 = vld [vmem:[#allocation3] sm:$0xff]
      %v1505 = vld [vmem:[#allocation3 + $0x8] sm:$0xf]
      %v1506 = vld [vmem:[#allocation3 + $0xc] sm:$0xff]
      %v1507 = vld [vmem:[#allocation3 + $0x14] sm:$0xf]
      %v1508 = vld [vmem:[#allocation3 + $0x18] sm:$0xff]
      %v1509 = vld [vmem:[#allocation3 + $0x20] sm:$0xf]
      %v1510 = vld [vmem:[#allocation3 + $0x24] sm:$0xff]
      %v1511 = vld [vmem:[#allocation3 + $0x2c] sm:$0xf]
      %v1512 = vld [vmem:[#allocation3 + $0x30] sm:$0xff]
      %v1513 = vld [vmem:[#allocation3 + $0x38] sm:$0xf]
      %v1514 = vld [vmem:[#allocation3 + $0x3c] sm:$0xff]
      %v1515 = vld [vmem:[#allocation3 + $0x44] sm:$0xf]
      %v1516 = vld [vmem:[#allocation3 + $0x48] sm:$0xff]
      %v1517 = vld [vmem:[#allocation3 + $0x50] sm:$0xf]
      %v1518 = vld [vmem:[#allocation3 + $0x54] sm:$0xff]
      %v1519 = vld [vmem:[#allocation3 + $0x5c] sm:$0xf]
      %v1520 = vld [vmem:[#allocation3 + $0x60] sm:$0xff]
      %v1521 = vld [vmem:[#allocation3 + $0x68] sm:$0xf]
      %v1522 = vld [vmem:[#allocation3 + $0x6c] sm:$0xff]
      %v1523 = vld [vmem:[#allocation3 + $0x74] sm:$0xf]
      %v1524 = vld [vmem:[#allocation3 + $0x78] sm:$0xff]
      %v1525 = vld [vmem:[#allocation3 + $0x80] sm:$0xf]
      %v1526 = vld [vmem:[#allocation3 + $0x84] sm:$0xff]
      %v1527 = vld [vmem:[#allocation3 + $0x8c] sm:$0xf]
      %v1528 = vld [vmem:[#allocation3 + $0x90] sm:$0xff]
      %v1529 = vld [vmem:[#allocation3 + $0x98] sm:$0xf]
      %v1530 = vld [vmem:[#allocation3 + $0x9c] sm:$0xff]
      %v1531 = vld [vmem:[#allocation3 + $0xa4] sm:$0xf]
      %v1532 = vld [vmem:[#allocation3 + $0xa8] sm:$0xff]
      %v1533 = vld [vmem:[#allocation3 + $0xb0] sm:$0xf]
      %v1534 = vld [vmem:[#allocation3 + $0xb4] sm:$0xff]
      %v1535 = vld [vmem:[#allocation3 + $0xbc] sm:$0xf]
      %v1536 = vld [vmem:[%s3] sm:$0xf]
      %v1537 = vld [vmem:[%s3 + $0x4] sm:$0xf]
      %v1538 = vld [vmem:[%s3 + $0x8] sm:$0xf]
      %v1539 = vld [vmem:[%s3 + $0xc] sm:$0xf]
      %v1540 = vld [vmem:[%s3 + $0x10] sm:$0xf]
      %v1541 = vld [vmem:[%s3 + $0x14] sm:$0xf]
      %v1542 = vld [vmem:[%s3 + $0x18] sm:$0xf]
      %v1543 = vld [vmem:[%s3 + $0x1c] sm:$0xf]
      %v1544 = vld [vmem:[%s3 + $0x20] sm:$0xf]
      %v1545 = vld [vmem:[%s3 + $0x24] sm:$0xf]
      %v1546 = vld [vmem:[%s3 + $0x28] sm:$0xf]
      %v1547 = vld [vmem:[%s3 + $0x2c] sm:$0xf]
      %v1548 = vld [vmem:[%s3 + $0x30] sm:$0xf]
      %v1549 = vld [vmem:[%s3 + $0x34] sm:$0xf]
      %v1550 = vld [vmem:[%s3 + $0x38] sm:$0xf]
      %v1551 = vld [vmem:[%s3 + $0x3c] sm:$0xf]
      %v1552 = vld [vmem:[%s3 + $0x40] sm:$0xf]
      %v1553 = vld [vmem:[%s3 + $0x44] sm:$0xf]
      %v1554 = vld [vmem:[%s3 + $0x48] sm:$0xf]
      %v1555 = vld [vmem:[%s3 + $0x4c] sm:$0xf]
      %v1556 = vld [vmem:[%s3 + $0x50] sm:$0xf]
      %v1557 = vld [vmem:[%s3 + $0x54] sm:$0xf]
      %v1558 = vld [vmem:[%s3 + $0x58] sm:$0xf]
      %v1559 = vld [vmem:[%s3 + $0x5c] sm:$0xf]
      %v1560 = vld [vmem:[%s3 + $0x60] sm:$0xf]
      %v1561 = vld [vmem:[%s3 + $0x64] sm:$0xf]
      %v1562 = vld [vmem:[%s3 + $0x68] sm:$0xf]
      %v1563 = vld [vmem:[%s3 + $0x6c] sm:$0xf]
      %v1564 = vld [vmem:[%s3 + $0x70] sm:$0xf]
      %v1565 = vld [vmem:[%s3 + $0x74] sm:$0xf]
      %v1566 = vld [vmem:[%s3 + $0x78] sm:$0xf]
      %v1567 = vld [vmem:[%s3 + $0x7c] sm:$0xf]
      %v1568 = vld [vmem:[%s3 + $0x80] sm:$0xf]
      %v1569 = vld [vmem:[%s3 + $0x84] sm:$0xf]
      %v1570 = vld [vmem:[%s3 + $0x88] sm:$0xf]
      %v1571 = vld [vmem:[%s3 + $0x8c] sm:$0xf]
      %v1572 = vld [vmem:[%s3 + $0x90] sm:$0xf]
      %v1573 = vld [vmem:[%s3 + $0x94] sm:$0xf]
      %v1574 = vld [vmem:[%s3 + $0x98] sm:$0xf]
      %v1575 = vld [vmem:[%s3 + $0x9c] sm:$0xf]
      %v1576 = vld [vmem:[%s3 + $0xa0] sm:$0xf]
      %v1577 = vld [vmem:[%s3 + $0xa4] sm:$0xf]
      %v1578 = vld [vmem:[%s3 + $0xa8] sm:$0xf]
      %v1579 = vld [vmem:[%s3 + $0xac] sm:$0xf]
      %v1580 = vld [vmem:[%s3 + $0xb0] sm:$0xf]
      %v1581 = vld [vmem:[%s3 + $0xb4] sm:$0xf]
      %v1582 = vld [vmem:[%s3 + $0xb8] sm:$0xf]
      %v1583 = vld [vmem:[%s3 + $0xbc] sm:$0xf]
      %s1584 = scalar_lea.vmem [#allocation3], 24
      %v1585 = vld [vmem:[%s1584] sm:$0xff]
      %v1586 = vld [vmem:[%s1584 + $0x8] sm:$0xf]
      %v1587 = vld [vmem:[%s1584 + $0xc] sm:$0xff]
      %v1588 = vld [vmem:[%s1584 + $0x14] sm:$0xf]
      %v1589 = vld [vmem:[%s1584 + $0x18] sm:$0xff]
      %v1590 = vld [vmem:[%s1584 + $0x20] sm:$0xf]
      %v1591 = vld [vmem:[%s1584 + $0x24] sm:$0xff]
      %v1592 = vld [vmem:[%s1584 + $0x2c] sm:$0xf]
      %v1593 = vld [vmem:[%s1584 + $0x30] sm:$0xff]
      %v1594 = vld [vmem:[%s1584 + $0x38] sm:$0xf]
      %v1595 = vld [vmem:[%s1584 + $0x3c] sm:$0xff]
      %v1596 = vld [vmem:[%s1584 + $0x44] sm:$0xf]
      %v1597 = vld [vmem:[%s1584 + $0x48] sm:$0xff]
      %v1598 = vld [vmem:[%s1584 + $0x50] sm:$0xf]
      %v1599 = vld [vmem:[%s1584 + $0x54] sm:$0xff]
      %v1600 = vld [vmem:[%s1584 + $0x5c] sm:$0xf]
      %v1601 = vld [vmem:[%s1584 + $0x60] sm:$0xff]
      %v1602 = vld [vmem:[%s1584 + $0x68] sm:$0xf]
      %v1603 = vld [vmem:[%s1584 + $0x6c] sm:$0xff]
      %v1604 = vld [vmem:[%s1584 + $0x74] sm:$0xf]
      %v1605 = vld [vmem:[%s1584 + $0x78] sm:$0xff]
      %v1606 = vld [vmem:[%s1584 + $0x80] sm:$0xf]
      %v1607 = vld [vmem:[%s1584 + $0x84] sm:$0xff]
      %v1608 = vld [vmem:[%s1584 + $0x8c] sm:$0xf]
      %v1609 = vld [vmem:[%s1584 + $0x90] sm:$0xff]
      %v1610 = vld [vmem:[%s1584 + $0x98] sm:$0xf]
      %v1611 = vld [vmem:[%s1584 + $0x9c] sm:$0xff]
      %v1612 = vld [vmem:[%s1584 + $0xa4] sm:$0xf]
      %v1613 = vld [vmem:[%s1584 + $0xa8] sm:$0xff]
      %v1614 = vld [vmem:[%s1584 + $0xb0] sm:$0xf]
      %v1615 = vld [vmem:[%s1584 + $0xb4] sm:$0xff]
      %v1616 = vld [vmem:[%s1584 + $0xbc] sm:$0xf]
      %s1617 = scalar_lea.vmem %s3, 192
      %v1618 = vld [vmem:[%s1617] sm:$0xf]
      %v1619 = vld [vmem:[%s1617 + $0x4] sm:$0xf]
      %v1620 = vld [vmem:[%s1617 + $0x8] sm:$0xf]
      %v1621 = vld [vmem:[%s1617 + $0xc] sm:$0xf]
      %v1622 = vld [vmem:[%s1617 + $0x10] sm:$0xf]
      %v1623 = vld [vmem:[%s1617 + $0x14] sm:$0xf]
      %v1624 = vld [vmem:[%s1617 + $0x18] sm:$0xf]
      %v1625 = vld [vmem:[%s1617 + $0x1c] sm:$0xf]
      %v1626 = vld [vmem:[%s1617 + $0x20] sm:$0xf]
      %v1627 = vld [vmem:[%s1617 + $0x24] sm:$0xf]
      %v1628 = vld [vmem:[%s1617 + $0x28] sm:$0xf]
      %v1629 = vld [vmem:[%s1617 + $0x2c] sm:$0xf]
      %v1630 = vld [vmem:[%s1617 + $0x30] sm:$0xf]
      %v1631 = vld [vmem:[%s1617 + $0x34] sm:$0xf]
      %v1632 = vld [vmem:[%s1617 + $0x38] sm:$0xf]
      %v1633 = vld [vmem:[%s1617 + $0x3c] sm:$0xf]
      %v1634 = vld [vmem:[%s1617 + $0x40] sm:$0xf]
      %v1635 = vld [vmem:[%s1617 + $0x44] sm:$0xf]
      %v1636 = vld [vmem:[%s1617 + $0x48] sm:$0xf]
      %v1637 = vld [vmem:[%s1617 + $0x4c] sm:$0xf]
      %v1638 = vld [vmem:[%s1617 + $0x50] sm:$0xf]
      %v1639 = vld [vmem:[%s1617 + $0x54] sm:$0xf]
      %v1640 = vld [vmem:[%s1617 + $0x58] sm:$0xf]
      %v1641 = vld [vmem:[%s1617 + $0x5c] sm:$0xf]
      %v1642 = vld [vmem:[%s1617 + $0x60] sm:$0xf]
      %v1643 = vld [vmem:[%s1617 + $0x64] sm:$0xf]
      %v1644 = vld [vmem:[%s1617 + $0x68] sm:$0xf]
      %v1645 = vld [vmem:[%s1617 + $0x6c] sm:$0xf]
      %v1646 = vld [vmem:[%s1617 + $0x70] sm:$0xf]
      %v1647 = vld [vmem:[%s1617 + $0x74] sm:$0xf]
      %v1648 = vld [vmem:[%s1617 + $0x78] sm:$0xf]
      %v1649 = vld [vmem:[%s1617 + $0x7c] sm:$0xf]
      %v1650 = vld [vmem:[%s1617 + $0x80] sm:$0xf]
      %v1651 = vld [vmem:[%s1617 + $0x84] sm:$0xf]
      %v1652 = vld [vmem:[%s1617 + $0x88] sm:$0xf]
      %v1653 = vld [vmem:[%s1617 + $0x8c] sm:$0xf]
      %v1654 = vld [vmem:[%s1617 + $0x90] sm:$0xf]
      %v1655 = vld [vmem:[%s1617 + $0x94] sm:$0xf]
      %v1656 = vld [vmem:[%s1617 + $0x98] sm:$0xf]
      %v1657 = vld [vmem:[%s1617 + $0x9c] sm:$0xf]
      %v1658 = vld [vmem:[%s1617 + $0xa0] sm:$0xf]
      %v1659 = vld [vmem:[%s1617 + $0xa4] sm:$0xf]
      %v1660 = vld [vmem:[%s1617 + $0xa8] sm:$0xf]
      %v1661 = vld [vmem:[%s1617 + $0xac] sm:$0xf]
      %v1662 = vld [vmem:[%s1617 + $0xb0] sm:$0xf]
      %v1663 = vld [vmem:[%s1617 + $0xb4] sm:$0xf]
      %v1664 = vld [vmem:[%s1617 + $0xb8] sm:$0xf]
      %v1665 = vld [vmem:[%s1617 + $0xbc] sm:$0xf]
      %v1698 = vunpack.c.l.b16 %v1585
      %v1699 = vunpack.c.h.b16 %v1585
      %v1700 = vunpack.c.l.b16 %v1586
      %v1701 = vunpack.c.l.b16 %v1587
      %v1702 = vunpack.c.h.b16 %v1587
      %v1703 = vunpack.c.l.b16 %v1588
      %v1704 = vunpack.c.l.b16 %v1589
      %v1705 = vunpack.c.h.b16 %v1589
      %v1706 = vunpack.c.l.b16 %v1590
      %v1707 = vunpack.c.l.b16 %v1591
      %v1708 = vunpack.c.h.b16 %v1591
      %v1709 = vunpack.c.l.b16 %v1592
      %v1710 = vunpack.c.l.b16 %v1593
      %v1711 = vunpack.c.h.b16 %v1593
      %v1712 = vunpack.c.l.b16 %v1594
      %v1713 = vunpack.c.l.b16 %v1595
      %v1714 = vunpack.c.h.b16 %v1595
      %v1715 = vunpack.c.l.b16 %v1596
      %v1716 = vunpack.c.l.b16 %v1597
      %v1717 = vunpack.c.h.b16 %v1597
      %v1718 = vunpack.c.l.b16 %v1598
      %v1719 = vunpack.c.l.b16 %v1599
      %v1720 = vunpack.c.h.b16 %v1599
      %v1721 = vunpack.c.l.b16 %v1600
      %v1722 = vunpack.c.l.b16 %v1601
      %v1723 = vunpack.c.h.b16 %v1601
      %v1724 = vunpack.c.l.b16 %v1602
      %v1725 = vunpack.c.l.b16 %v1603
      %v1726 = vunpack.c.h.b16 %v1603
      %v1727 = vunpack.c.l.b16 %v1604
      %v1728 = vunpack.c.l.b16 %v1605
      %v1729 = vunpack.c.h.b16 %v1605
      %v1730 = vunpack.c.l.b16 %v1606
      %v1731 = vunpack.c.l.b16 %v1607
      %v1732 = vunpack.c.h.b16 %v1607
      %v1733 = vunpack.c.l.b16 %v1608
      %v1734 = vunpack.c.l.b16 %v1609
      %v1735 = vunpack.c.h.b16 %v1609
      %v1736 = vunpack.c.l.b16 %v1610
      %v1737 = vunpack.c.l.b16 %v1611
      %v1738 = vunpack.c.h.b16 %v1611
      %v1739 = vunpack.c.l.b16 %v1612
      %v1740 = vunpack.c.l.b16 %v1613
      %v1741 = vunpack.c.h.b16 %v1613
      %v1742 = vunpack.c.l.b16 %v1614
      %v1743 = vunpack.c.l.b16 %v1615
      %v1744 = vunpack.c.h.b16 %v1615
      %v1745 = vunpack.c.l.b16 %v1616
      %v1746 = vpack.c.b16 %v1701, %v1698
      %v1747 = vpack.c.b16 %v1702, %v1699
      %v1748 = vpack.c.b16 %v1703, %v1700
      %v1749 = vpack.c.b16 %v1707, %v1704
      %v1750 = vpack.c.b16 %v1708, %v1705
      %v1751 = vpack.c.b16 %v1709, %v1706
      %v1752 = vpack.c.b16 %v1713, %v1710
      %v1753 = vpack.c.b16 %v1714, %v1711
      %v1754 = vpack.c.b16 %v1715, %v1712
      %v1755 = vpack.c.b16 %v1719, %v1716
      %v1756 = vpack.c.b16 %v1720, %v1717
      %v1757 = vpack.c.b16 %v1721, %v1718
      %v1758 = vpack.c.b16 %v1725, %v1722
      %v1759 = vpack.c.b16 %v1726, %v1723
      %v1760 = vpack.c.b16 %v1727, %v1724
      %v1761 = vpack.c.b16 %v1731, %v1728
      %v1762 = vpack.c.b16 %v1732, %v1729
      %v1763 = vpack.c.b16 %v1733, %v1730
      %v1764 = vpack.c.b16 %v1737, %v1734
      %v1765 = vpack.c.b16 %v1738, %v1735
      %v1766 = vpack.c.b16 %v1739, %v1736
      %v1767 = vpack.c.b16 %v1743, %v1740
      %v1768 = vpack.c.b16 %v1744, %v1741
      %v1769 = vpack.c.b16 %v1745, %v1742
      %v1842 = vunpack.c.l.b16 %v1618
      %v1843 = vunpack.c.l.b16 %v1619
      %v1844 = vunpack.c.l.b16 %v1620
      %v1845 = vunpack.c.l.b16 %v1621
      %v1846 = vunpack.c.l.b16 %v1622
      %v1847 = vunpack.c.l.b16 %v1623
      %v1848 = vunpack.c.l.b16 %v1624
      %v1849 = vunpack.c.l.b16 %v1625
      %v1850 = vunpack.c.l.b16 %v1626
      %v1851 = vunpack.c.l.b16 %v1627
      %v1852 = vunpack.c.l.b16 %v1628
      %v1853 = vunpack.c.l.b16 %v1629
      %v1854 = vunpack.c.l.b16 %v1630
      %v1855 = vunpack.c.l.b16 %v1631
      %v1856 = vunpack.c.l.b16 %v1632
      %v1857 = vunpack.c.l.b16 %v1633
      %v1858 = vunpack.c.l.b16 %v1634
      %v1859 = vunpack.c.l.b16 %v1635
      %v1860 = vunpack.c.l.b16 %v1636
      %v1861 = vunpack.c.l.b16 %v1637
      %v1862 = vunpack.c.l.b16 %v1638
      %v1863 = vunpack.c.l.b16 %v1639
      %v1864 = vunpack.c.l.b16 %v1640
      %v1865 = vunpack.c.l.b16 %v1641
      %v1866 = vunpack.c.l.b16 %v1642
      %v1867 = vunpack.c.l.b16 %v1643
      %v1868 = vunpack.c.l.b16 %v1644
      %v1869 = vunpack.c.l.b16 %v1645
      %v1870 = vunpack.c.l.b16 %v1646
      %v1871 = vunpack.c.l.b16 %v1647
      %v1872 = vunpack.c.l.b16 %v1648
      %v1873 = vunpack.c.l.b16 %v1649
      %v1874 = vunpack.c.l.b16 %v1650
      %v1875 = vunpack.c.l.b16 %v1651
      %v1876 = vunpack.c.l.b16 %v1652
      %v1877 = vunpack.c.l.b16 %v1653
      %v1878 = vunpack.c.l.b16 %v1654
      %v1879 = vunpack.c.l.b16 %v1655
      %v1880 = vunpack.c.l.b16 %v1656
      %v1881 = vunpack.c.l.b16 %v1657
      %v1882 = vunpack.c.l.b16 %v1658
      %v1883 = vunpack.c.l.b16 %v1659
      %v1884 = vunpack.c.l.b16 %v1660
      %v1885 = vunpack.c.l.b16 %v1661
      %v1886 = vunpack.c.l.b16 %v1662
      %v1887 = vunpack.c.l.b16 %v1663
      %v1888 = vunpack.c.l.b16 %v1664
      %v1889 = vunpack.c.l.b16 %v1665
      %v1890 = vpack.c.b16 %v1843, %v1842
      %v1891 = vpack.c.b16 %v1845, %v1844
      %v1892 = vpack.c.b16 %v1847, %v1846
      %v1893 = vpack.c.b16 %v1849, %v1848
      %v1894 = vpack.c.b16 %v1851, %v1850
      %v1895 = vpack.c.b16 %v1853, %v1852
      %v1896 = vpack.c.b16 %v1855, %v1854
      %v1897 = vpack.c.b16 %v1857, %v1856
      %v1898 = vpack.c.b16 %v1859, %v1858
      %v1899 = vpack.c.b16 %v1861, %v1860
      %v1900 = vpack.c.b16 %v1863, %v1862
      %v1901 = vpack.c.b16 %v1865, %v1864
      %v1902 = vpack.c.b16 %v1867, %v1866
      %v1903 = vpack.c.b16 %v1869, %v1868
      %v1904 = vpack.c.b16 %v1871, %v1870
      %v1905 = vpack.c.b16 %v1873, %v1872
      %v1906 = vpack.c.b16 %v1875, %v1874
      %v1907 = vpack.c.b16 %v1877, %v1876
      %v1908 = vpack.c.b16 %v1879, %v1878
      %v1909 = vpack.c.b16 %v1881, %v1880
      %v1910 = vpack.c.b16 %v1883, %v1882
      %v1911 = vpack.c.b16 %v1885, %v1884
      %v1912 = vpack.c.b16 %v1887, %v1886
      %v1913 = vpack.c.b16 %v1889, %v1888
      %1938 = vmatprep.subr.bf16.mxu0 0
      %1939 = vmatpush1.bf16.msra.mxu0 %v1897
      %1940 = vmatprep.subr.bf16.mxu0 0
      %1941 = vmatpush1.bf16.msra.mxu0 %v1896
      %1942 = vmatprep.subr.bf16.mxu0 0
      %1943 = vmatpush1.bf16.msra.mxu0 %v1895
      %1944 = vmatprep.subr.bf16.mxu0 0
      %1945 = vmatpush1.bf16.msra.mxu0 %v1894
      %1946 = vmatprep.subr.bf16.mxu0 0
      %1947 = vmatpush1.bf16.msra.mxu0 %v1893
      %1948 = vmatprep.subr.bf16.mxu0 0
      %1949 = vmatpush1.bf16.msra.mxu0 %v1892
      %1950 = vmatprep.subr.bf16.mxu0 0
      %1951 = vmatpush1.bf16.msra.mxu0 %v1891
      %1952 = vmatprep.subr.bf16.mxu0 0
      %1953 = vmatpush1.bf16.msra.mxu0 %v1890
      %1954 = vmatprep.subr.bf16.mxu0 0
      %1955 = vmatpush2.bf16.msra.mxu0 %v1905
      %1956 = vmatprep.subr.bf16.mxu0 0
      %1957 = vmatpush2.bf16.msra.mxu0 %v1904
      %1958 = vmatprep.subr.bf16.mxu0 0
      %1959 = vmatpush2.bf16.msra.mxu0 %v1903
      %1960 = vmatprep.subr.bf16.mxu0 0
      %1961 = vmatpush2.bf16.msra.mxu0 %v1902
      %1962 = vmatprep.subr.bf16.mxu0 0
      %1963 = vmatpush2.bf16.msra.mxu0 %v1901
      %1964 = vmatprep.subr.bf16.mxu0 0
      %1965 = vmatpush2.bf16.msra.mxu0 %v1900
      %1966 = vmatprep.subr.bf16.mxu0 0
      %1967 = vmatpush2.bf16.msra.mxu0 %v1899
      %1968 = vmatprep.subr.bf16.mxu0 0
      %1969 = vmatpush2.bf16.msra.mxu0 %v1898
      %1970 = vmatprep.mubr.bf16.mxu0 %v1747
      %1971 = vmatmul.mubr.bf16.gmra.mxu0 %v1746
      %v1972 = vpop.f32.mrf.mxu0
      %v1973 = vadd.f32 0.0, %v1972
      %v1974 = vpop.f32.mrf.mxu0
      %v1975 = vpop.f32.mrf.mxu0
      %v1976 = vadd.f32 0.0, %v1975
      %v1977 = vpop.f32.mrf.mxu0
      %1978 = vmatprep.mubr.bf16.mxu0 %v1750
      %1979 = vmatmul.mubr.bf16.gmra.mxu0 %v1749
      %v1980 = vpop.f32.mrf.mxu0
      %v1981 = vadd.f32 0.0, %v1980
      %v1982 = vpop.f32.mrf.mxu0
      %v1983 = vpop.f32.mrf.mxu0
      %v1984 = vadd.f32 0.0, %v1983
      %v1985 = vpop.f32.mrf.mxu0
      %1986 = vmatprep.mubr.bf16.mxu0 %v1753
      %1987 = vmatmul.mubr.bf16.gmra.mxu0 %v1752
      %v1988 = vpop.f32.mrf.mxu0
      %v1989 = vadd.f32 0.0, %v1988
      %v1990 = vpop.f32.mrf.mxu0
      %v1991 = vpop.f32.mrf.mxu0
      %v1992 = vadd.f32 0.0, %v1991
      %v1993 = vpop.f32.mrf.mxu0
      %1994 = vmatprep.mubr.bf16.mxu0 %v1756
      %1995 = vmatmul.mubr.bf16.gmra.mxu0 %v1755
      %v1996 = vpop.f32.mrf.mxu0
      %v1997 = vadd.f32 0.0, %v1996
      %v1998 = vpop.f32.mrf.mxu0
      %v1999 = vpop.f32.mrf.mxu0
      %v2000 = vadd.f32 0.0, %v1999
      %v2001 = vpop.f32.mrf.mxu0
      %2002 = vmatprep.mubr.bf16.mxu0 %v1759
      %2003 = vmatmul.mubr.bf16.gmra.mxu0 %v1758
      %v2004 = vpop.f32.mrf.mxu0
      %v2005 = vadd.f32 0.0, %v2004
      %v2006 = vpop.f32.mrf.mxu0
      %v2007 = vpop.f32.mrf.mxu0
      %v2008 = vadd.f32 0.0, %v2007
      %v2009 = vpop.f32.mrf.mxu0
      %2010 = vmatprep.mubr.bf16.mxu0 %v1762
      %2011 = vmatmul.mubr.bf16.gmra.mxu0 %v1761
      %v2012 = vpop.f32.mrf.mxu0
      %v2013 = vadd.f32 0.0, %v2012
      %v2014 = vpop.f32.mrf.mxu0
      %v2015 = vpop.f32.mrf.mxu0
      %v2016 = vadd.f32 0.0, %v2015
      %v2017 = vpop.f32.mrf.mxu0
      %2018 = vmatprep.mubr.bf16.mxu0 %v1765
      %2019 = vmatmul.mubr.bf16.gmra.mxu0 %v1764
      %v2020 = vpop.f32.mrf.mxu0
      %v2021 = vadd.f32 0.0, %v2020
      %v2022 = vpop.f32.mrf.mxu0
      %v2023 = vpop.f32.mrf.mxu0
      %v2024 = vadd.f32 0.0, %v2023
      %v2025 = vpop.f32.mrf.mxu0
      %2026 = vmatprep.mubr.bf16.mxu0 %v1768
      %2027 = vmatmul.mubr.bf16.gmra.mxu0 %v1767
      %v2028 = vpop.f32.mrf.mxu0
      %v2029 = vadd.f32 0.0, %v2028
      %v2030 = vpop.f32.mrf.mxu0
      %v2031 = vpop.f32.mrf.mxu0
      %v2032 = vadd.f32 0.0, %v2031
      %v2033 = vpop.f32.mrf.mxu0
      %2034 = vdwg.mxu0
      %2035 = vmatprep.subr.bf16.mxu0 0
      %2036 = vmatpush1.bf16.msra.mxu0 %v1913
      %2037 = vmatprep.subr.bf16.mxu0 0
      %2038 = vmatpush1.bf16.msra.mxu0 %v1912
      %2039 = vmatprep.subr.bf16.mxu0 0
      %2040 = vmatpush1.bf16.msra.mxu0 %v1911
      %2041 = vmatprep.subr.bf16.mxu0 0
      %2042 = vmatpush1.bf16.msra.mxu0 %v1910
      %2043 = vmatprep.subr.bf16.mxu0 0
      %2044 = vmatpush1.bf16.msra.mxu0 %v1909
      %2045 = vmatprep.subr.bf16.mxu0 0
      %2046 = vmatpush1.bf16.msra.mxu0 %v1908
      %2047 = vmatprep.subr.bf16.mxu0 0
      %2048 = vmatpush1.bf16.msra.mxu0 %v1907
      %2049 = vmatprep.subr.bf16.mxu0 0
      %2050 = vmatpush1.bf16.msra.mxu0 %v1906
      %2051 = vmatprep.subr.bf16.mxu0 0
      %2052 = vmatpush2.bf16.msra.mxu0 0
      %2053 = vmatprep.subr.bf16.mxu0 0
      %2054 = vmatpush2.bf16.msra.mxu0 0
      %2055 = vmatprep.subr.bf16.mxu0 0
      %2056 = vmatpush2.bf16.msra.mxu0 0
      %2057 = vmatprep.subr.bf16.mxu0 0
      %2058 = vmatpush2.bf16.msra.mxu0 0
      %2059 = vmatprep.subr.bf16.mxu0 0
      %2060 = vmatpush2.bf16.msra.mxu0 0
      %2061 = vmatprep.subr.bf16.mxu0 0
      %2062 = vmatpush2.bf16.msra.mxu0 0
      %2063 = vmatprep.subr.bf16.mxu0 0
      %2064 = vmatpush2.bf16.msra.mxu0 0
      %2065 = vmatprep.subr.bf16.mxu0 0
      %2066 = vmatpush2.bf16.msra.mxu0 0
      %2067 = vmatprep.mubr.bf16.mxu0 0
      %2068 = vmatmul.mubr.bf16.gmra.mxu0 %v1748
      %v2069 = vpop.f32.mrf.mxu0
      %v2070 = vadd.f32 %v1973, %v2069
      %v2071 = vpop.f32.mrf.mxu0
      %v2072 = vpop.f32.mrf.mxu0
      %v2073 = vadd.f32 %v1976, %v2072
      %v2074 = vpop.f32.mrf.mxu0
      %2075 = vmatprep.mubr.bf16.mxu0 0
      %2076 = vmatmul.mubr.bf16.gmra.mxu0 %v1751
      %v2077 = vpop.f32.mrf.mxu0
      %v2078 = vadd.f32 %v1981, %v2077
      %v2079 = vpop.f32.mrf.mxu0
      %v2080 = vpop.f32.mrf.mxu0
      %v2081 = vadd.f32 %v1984, %v2080
      %v2082 = vpop.f32.mrf.mxu0
      %2083 = vmatprep.mubr.bf16.mxu0 0
      %2084 = vmatmul.mubr.bf16.gmra.mxu0 %v1754
      %v2085 = vpop.f32.mrf.mxu0
      %v2086 = vadd.f32 %v1989, %v2085
      %v2087 = vpop.f32.mrf.mxu0
      %v2088 = vpop.f32.mrf.mxu0
      %v2089 = vadd.f32 %v1992, %v2088
      %v2090 = vpop.f32.mrf.mxu0
      %2091 = vmatprep.mubr.bf16.mxu0 0
      %2092 = vmatmul.mubr.bf16.gmra.mxu0 %v1757
      %v2093 = vpop.f32.mrf.mxu0
      %v2094 = vadd.f32 %v1997, %v2093
      %v2095 = vpop.f32.mrf.mxu0
      %v2096 = vpop.f32.mrf.mxu0
      %v2097 = vadd.f32 %v2000, %v2096
      %v2098 = vpop.f32.mrf.mxu0
      %2099 = vmatprep.mubr.bf16.mxu0 0
      %2100 = vmatmul.mubr.bf16.gmra.mxu0 %v1760
      %v2101 = vpop.f32.mrf.mxu0
      %v2102 = vadd.f32 %v2005, %v2101
      %v2103 = vpop.f32.mrf.mxu0
      %v2104 = vpop.f32.mrf.mxu0
      %v2105 = vadd.f32 %v2008, %v2104
      %v2106 = vpop.f32.mrf.mxu0
      %2107 = vmatprep.mubr.bf16.mxu0 0
      %2108 = vmatmul.mubr.bf16.gmra.mxu0 %v1763
      %v2109 = vpop.f32.mrf.mxu0
      %v2110 = vadd.f32 %v2013, %v2109
      %v2111 = vpop.f32.mrf.mxu0
      %v2112 = vpop.f32.mrf.mxu0
      %v2113 = vadd.f32 %v2016, %v2112
      %v2114 = vpop.f32.mrf.mxu0
      %2115 = vmatprep.mubr.bf16.mxu0 0
      %2116 = vmatmul.mubr.bf16.gmra.mxu0 %v1766
      %v2117 = vpop.f32.mrf.mxu0
      %v2118 = vadd.f32 %v2021, %v2117
      %v2119 = vpop.f32.mrf.mxu0
      %v2120 = vpop.f32.mrf.mxu0
      %v2121 = vadd.f32 %v2024, %v2120
      %v2122 = vpop.f32.mrf.mxu0
      %2123 = vmatprep.mubr.bf16.mxu0 0
      %2124 = vmatmul.mubr.bf16.gmra.mxu0 %v1769
      %v2125 = vpop.f32.mrf.mxu0
      %v2126 = vadd.f32 %v2029, %v2125
      %v2127 = vpop.f32.mrf.mxu0
      %v2128 = vpop.f32.mrf.mxu0
      %v2129 = vadd.f32 %v2032, %v2128
      %v2130 = vpop.f32.mrf.mxu0
      %2131 = vdwg.mxu0
      %v2164 = vunpack.c.l.b16 %v1504
      %v2165 = vunpack.c.h.b16 %v1504
      %v2166 = vunpack.c.l.b16 %v1505
      %v2167 = vunpack.c.l.b16 %v1506
      %v2168 = vunpack.c.h.b16 %v1506
      %v2169 = vunpack.c.l.b16 %v1507
      %v2170 = vunpack.c.l.b16 %v1508
      %v2171 = vunpack.c.h.b16 %v1508
      %v2172 = vunpack.c.l.b16 %v1509
      %v2173 = vunpack.c.l.b16 %v1510
      %v2174 = vunpack.c.h.b16 %v1510
      %v2175 = vunpack.c.l.b16 %v1511
      %v2176 = vunpack.c.l.b16 %v1512
      %v2177 = vunpack.c.h.b16 %v1512
      %v2178 = vunpack.c.l.b16 %v1513
      %v2179 = vunpack.c.l.b16 %v1514
      %v2180 = vunpack.c.h.b16 %v1514
      %v2181 = vunpack.c.l.b16 %v1515
      %v2182 = vunpack.c.l.b16 %v1516
      %v2183 = vunpack.c.h.b16 %v1516
      %v2184 = vunpack.c.l.b16 %v1517
      %v2185 = vunpack.c.l.b16 %v1518
      %v2186 = vunpack.c.h.b16 %v1518
      %v2187 = vunpack.c.l.b16 %v1519
      %v2188 = vunpack.c.l.b16 %v1520
      %v2189 = vunpack.c.h.b16 %v1520
      %v2190 = vunpack.c.l.b16 %v1521
      %v2191 = vunpack.c.l.b16 %v1522
      %v2192 = vunpack.c.h.b16 %v1522
      %v2193 = vunpack.c.l.b16 %v1523
      %v2194 = vunpack.c.l.b16 %v1524
      %v2195 = vunpack.c.h.b16 %v1524
      %v2196 = vunpack.c.l.b16 %v1525
      %v2197 = vunpack.c.l.b16 %v1526
      %v2198 = vunpack.c.h.b16 %v1526
      %v2199 = vunpack.c.l.b16 %v1527
      %v2200 = vunpack.c.l.b16 %v1528
      %v2201 = vunpack.c.h.b16 %v1528
      %v2202 = vunpack.c.l.b16 %v1529
      %v2203 = vunpack.c.l.b16 %v1530
      %v2204 = vunpack.c.h.b16 %v1530
      %v2205 = vunpack.c.l.b16 %v1531
      %v2206 = vunpack.c.l.b16 %v1532
      %v2207 = vunpack.c.h.b16 %v1532
      %v2208 = vunpack.c.l.b16 %v1533
      %v2209 = vunpack.c.l.b16 %v1534
      %v2210 = vunpack.c.h.b16 %v1534
      %v2211 = vunpack.c.l.b16 %v1535
      %v2212 = vpack.c.b16 %v2167, %v2164
      %v2213 = vpack.c.b16 %v2168, %v2165
      %v2214 = vpack.c.b16 %v2169, %v2166
      %v2215 = vpack.c.b16 %v2173, %v2170
      %v2216 = vpack.c.b16 %v2174, %v2171
      %v2217 = vpack.c.b16 %v2175, %v2172
      %v2218 = vpack.c.b16 %v2179, %v2176
      %v2219 = vpack.c.b16 %v2180, %v2177
      %v2220 = vpack.c.b16 %v2181, %v2178
      %v2221 = vpack.c.b16 %v2185, %v2182
      %v2222 = vpack.c.b16 %v2186, %v2183
      %v2223 = vpack.c.b16 %v2187, %v2184
      %v2224 = vpack.c.b16 %v2191, %v2188
      %v2225 = vpack.c.b16 %v2192, %v2189
      %v2226 = vpack.c.b16 %v2193, %v2190
      %v2227 = vpack.c.b16 %v2197, %v2194
      %v2228 = vpack.c.b16 %v2198, %v2195
      %v2229 = vpack.c.b16 %v2199, %v2196
      %v2230 = vpack.c.b16 %v2203, %v2200
      %v2231 = vpack.c.b16 %v2204, %v2201
      %v2232 = vpack.c.b16 %v2205, %v2202
      %v2233 = vpack.c.b16 %v2209, %v2206
      %v2234 = vpack.c.b16 %v2210, %v2207
      %v2235 = vpack.c.b16 %v2211, %v2208
      %v2308 = vunpack.c.l.b16 %v1536
      %v2309 = vunpack.c.l.b16 %v1537
      %v2310 = vunpack.c.l.b16 %v1538
      %v2311 = vunpack.c.l.b16 %v1539
      %v2312 = vunpack.c.l.b16 %v1540
      %v2313 = vunpack.c.l.b16 %v1541
      %v2314 = vunpack.c.l.b16 %v1542
      %v2315 = vunpack.c.l.b16 %v1543
      %v2316 = vunpack.c.l.b16 %v1544
      %v2317 = vunpack.c.l.b16 %v1545
      %v2318 = vunpack.c.l.b16 %v1546
      %v2319 = vunpack.c.l.b16 %v1547
      %v2320 = vunpack.c.l.b16 %v1548
      %v2321 = vunpack.c.l.b16 %v1549
      %v2322 = vunpack.c.l.b16 %v1550
      %v2323 = vunpack.c.l.b16 %v1551
      %v2324 = vunpack.c.l.b16 %v1552
      %v2325 = vunpack.c.l.b16 %v1553
      %v2326 = vunpack.c.l.b16 %v1554
      %v2327 = vunpack.c.l.b16 %v1555
      %v2328 = vunpack.c.l.b16 %v1556
      %v2329 = vunpack.c.l.b16 %v1557
      %v2330 = vunpack.c.l.b16 %v1558
      %v2331 = vunpack.c.l.b16 %v1559
      %v2332 = vunpack.c.l.b16 %v1560
      %v2333 = vunpack.c.l.b16 %v1561
      %v2334 = vunpack.c.l.b16 %v1562
      %v2335 = vunpack.c.l.b16 %v1563
      %v2336 = vunpack.c.l.b16 %v1564
      %v2337 = vunpack.c.l.b16 %v1565
      %v2338 = vunpack.c.l.b16 %v1566
      %v2339 = vunpack.c.l.b16 %v1567
      %v2340 = vunpack.c.l.b16 %v1568
      %v2341 = vunpack.c.l.b16 %v1569
      %v2342 = vunpack.c.l.b16 %v1570
      %v2343 = vunpack.c.l.b16 %v1571
      %v2344 = vunpack.c.l.b16 %v1572
      %v2345 = vunpack.c.l.b16 %v1573
      %v2346 = vunpack.c.l.b16 %v1574
      %v2347 = vunpack.c.l.b16 %v1575
      %v2348 = vunpack.c.l.b16 %v1576
      %v2349 = vunpack.c.l.b16 %v1577
      %v2350 = vunpack.c.l.b16 %v1578
      %v2351 = vunpack.c.l.b16 %v1579
      %v2352 = vunpack.c.l.b16 %v1580
      %v2353 = vunpack.c.l.b16 %v1581
      %v2354 = vunpack.c.l.b16 %v1582
      %v2355 = vunpack.c.l.b16 %v1583
      %v2356 = vpack.c.b16 %v2309, %v2308
      %v2357 = vpack.c.b16 %v2311, %v2310
      %v2358 = vpack.c.b16 %v2313, %v2312
      %v2359 = vpack.c.b16 %v2315, %v2314
      %v2360 = vpack.c.b16 %v2317, %v2316
      %v2361 = vpack.c.b16 %v2319, %v2318
      %v2362 = vpack.c.b16 %v2321, %v2320
      %v2363 = vpack.c.b16 %v2323, %v2322
      %v2364 = vpack.c.b16 %v2325, %v2324
      %v2365 = vpack.c.b16 %v2327, %v2326
      %v2366 = vpack.c.b16 %v2329, %v2328
      %v2367 = vpack.c.b16 %v2331, %v2330
      %v2368 = vpack.c.b16 %v2333, %v2332
      %v2369 = vpack.c.b16 %v2335, %v2334
      %v2370 = vpack.c.b16 %v2337, %v2336
      %v2371 = vpack.c.b16 %v2339, %v2338
      %v2372 = vpack.c.b16 %v2341, %v2340
      %v2373 = vpack.c.b16 %v2343, %v2342
      %v2374 = vpack.c.b16 %v2345, %v2344
      %v2375 = vpack.c.b16 %v2347, %v2346
      %v2376 = vpack.c.b16 %v2349, %v2348
      %v2377 = vpack.c.b16 %v2351, %v2350
      %v2378 = vpack.c.b16 %v2353, %v2352
      %v2379 = vpack.c.b16 %v2355, %v2354
      %2404 = vmatprep.subr.bf16.mxu0 0
      %2405 = vmatpush1.bf16.msra.mxu0 %v2363
      %2406 = vmatprep.subr.bf16.mxu0 0
      %2407 = vmatpush1.bf16.msra.mxu0 %v2362
      %2408 = vmatprep.subr.bf16.mxu0 0
      %2409 = vmatpush1.bf16.msra.mxu0 %v2361
      %2410 = vmatprep.subr.bf16.mxu0 0
      %2411 = vmatpush1.bf16.msra.mxu0 %v2360
      %2412 = vmatprep.subr.bf16.mxu0 0
      %2413 = vmatpush1.bf16.msra.mxu0 %v2359
      %2414 = vmatprep.subr.bf16.mxu0 0
      %2415 = vmatpush1.bf16.msra.mxu0 %v2358
      %2416 = vmatprep.subr.bf16.mxu0 0
      %2417 = vmatpush1.bf16.msra.mxu0 %v2357
      %2418 = vmatprep.subr.bf16.mxu0 0
      %2419 = vmatpush1.bf16.msra.mxu0 %v2356
      %2420 = vmatprep.subr.bf16.mxu0 0
      %2421 = vmatpush2.bf16.msra.mxu0 %v2371
      %2422 = vmatprep.subr.bf16.mxu0 0
      %2423 = vmatpush2.bf16.msra.mxu0 %v2370
      %2424 = vmatprep.subr.bf16.mxu0 0
      %2425 = vmatpush2.bf16.msra.mxu0 %v2369
      %2426 = vmatprep.subr.bf16.mxu0 0
      %2427 = vmatpush2.bf16.msra.mxu0 %v2368
      %2428 = vmatprep.subr.bf16.mxu0 0
      %2429 = vmatpush2.bf16.msra.mxu0 %v2367
      %2430 = vmatprep.subr.bf16.mxu0 0
      %2431 = vmatpush2.bf16.msra.mxu0 %v2366
      %2432 = vmatprep.subr.bf16.mxu0 0
      %2433 = vmatpush2.bf16.msra.mxu0 %v2365
      %2434 = vmatprep.subr.bf16.mxu0 0
      %2435 = vmatpush2.bf16.msra.mxu0 %v2364
      %2436 = vmatprep.mubr.bf16.mxu0 %v2213
      %2437 = vmatmul.mubr.bf16.gmra.mxu0 %v2212
      %v2438 = vpop.f32.mrf.mxu0
      %v2439 = vadd.f32 %v2070, %v2438
      %v2440 = vpop.f32.mrf.mxu0
      %v2441 = vpop.f32.mrf.mxu0
      %v2442 = vadd.f32 %v2073, %v2441
      %v2443 = vpop.f32.mrf.mxu0
      %2444 = vmatprep.mubr.bf16.mxu0 %v2216
      %2445 = vmatmul.mubr.bf16.gmra.mxu0 %v2215
      %v2446 = vpop.f32.mrf.mxu0
      %v2447 = vadd.f32 %v2078, %v2446
      %v2448 = vpop.f32.mrf.mxu0
      %v2449 = vpop.f32.mrf.mxu0
      %v2450 = vadd.f32 %v2081, %v2449
      %v2451 = vpop.f32.mrf.mxu0
      %2452 = vmatprep.mubr.bf16.mxu0 %v2219
      %2453 = vmatmul.mubr.bf16.gmra.mxu0 %v2218
      %v2454 = vpop.f32.mrf.mxu0
      %v2455 = vadd.f32 %v2086, %v2454
      %v2456 = vpop.f32.mrf.mxu0
      %v2457 = vpop.f32.mrf.mxu0
      %v2458 = vadd.f32 %v2089, %v2457
      %v2459 = vpop.f32.mrf.mxu0
      %2460 = vmatprep.mubr.bf16.mxu0 %v2222
      %2461 = vmatmul.mubr.bf16.gmra.mxu0 %v2221
      %v2462 = vpop.f32.mrf.mxu0
      %v2463 = vadd.f32 %v2094, %v2462
      %v2464 = vpop.f32.mrf.mxu0
      %v2465 = vpop.f32.mrf.mxu0
      %v2466 = vadd.f32 %v2097, %v2465
      %v2467 = vpop.f32.mrf.mxu0
      %2468 = vmatprep.mubr.bf16.mxu0 %v2225
      %2469 = vmatmul.mubr.bf16.gmra.mxu0 %v2224
      %v2470 = vpop.f32.mrf.mxu0
      %v2471 = vadd.f32 %v2102, %v2470
      %v2472 = vpop.f32.mrf.mxu0
      %v2473 = vpop.f32.mrf.mxu0
      %v2474 = vadd.f32 %v2105, %v2473
      %v2475 = vpop.f32.mrf.mxu0
      %2476 = vmatprep.mubr.bf16.mxu0 %v2228
      %2477 = vmatmul.mubr.bf16.gmra.mxu0 %v2227
      %v2478 = vpop.f32.mrf.mxu0
      %v2479 = vadd.f32 %v2110, %v2478
      %v2480 = vpop.f32.mrf.mxu0
      %v2481 = vpop.f32.mrf.mxu0
      %v2482 = vadd.f32 %v2113, %v2481
      %v2483 = vpop.f32.mrf.mxu0
      %2484 = vmatprep.mubr.bf16.mxu0 %v2231
      %2485 = vmatmul.mubr.bf16.gmra.mxu0 %v2230
      %v2486 = vpop.f32.mrf.mxu0
      %v2487 = vadd.f32 %v2118, %v2486
      %v2488 = vpop.f32.mrf.mxu0
      %v2489 = vpop.f32.mrf.mxu0
      %v2490 = vadd.f32 %v2121, %v2489
      %v2491 = vpop.f32.mrf.mxu0
      %2492 = vmatprep.mubr.bf16.mxu0 %v2234
      %2493 = vmatmul.mubr.bf16.gmra.mxu0 %v2233
      %v2494 = vpop.f32.mrf.mxu0
      %v2495 = vadd.f32 %v2126, %v2494
      %v2496 = vpop.f32.mrf.mxu0
      %v2497 = vpop.f32.mrf.mxu0
      %v2498 = vadd.f32 %v2129, %v2497
      %v2499 = vpop.f32.mrf.mxu0
      %2500 = vdwg.mxu0
      %2501 = vmatprep.subr.bf16.mxu0 0
      %2502 = vmatpush1.bf16.msra.mxu0 %v2379
      %2503 = vmatprep.subr.bf16.mxu0 0
      %2504 = vmatpush1.bf16.msra.mxu0 %v2378
      %2505 = vmatprep.subr.bf16.mxu0 0
      %2506 = vmatpush1.bf16.msra.mxu0 %v2377
      %2507 = vmatprep.subr.bf16.mxu0 0
      %2508 = vmatpush1.bf16.msra.mxu0 %v2376
      %2509 = vmatprep.subr.bf16.mxu0 0
      %2510 = vmatpush1.bf16.msra.mxu0 %v2375
      %2511 = vmatprep.subr.bf16.mxu0 0
      %2512 = vmatpush1.bf16.msra.mxu0 %v2374
      %2513 = vmatprep.subr.bf16.mxu0 0
      %2514 = vmatpush1.bf16.msra.mxu0 %v2373
      %2515 = vmatprep.subr.bf16.mxu0 0
      %2516 = vmatpush1.bf16.msra.mxu0 %v2372
      %2517 = vmatprep.subr.bf16.mxu0 0
      %2518 = vmatpush2.bf16.msra.mxu0 0
      %2519 = vmatprep.subr.bf16.mxu0 0
      %2520 = vmatpush2.bf16.msra.mxu0 0
      %2521 = vmatprep.subr.bf16.mxu0 0
      %2522 = vmatpush2.bf16.msra.mxu0 0
      %2523 = vmatprep.subr.bf16.mxu0 0
      %2524 = vmatpush2.bf16.msra.mxu0 0
      %2525 = vmatprep.subr.bf16.mxu0 0
      %2526 = vmatpush2.bf16.msra.mxu0 0
      %2527 = vmatprep.subr.bf16.mxu0 0
      %2528 = vmatpush2.bf16.msra.mxu0 0
      %2529 = vmatprep.subr.bf16.mxu0 0
      %2530 = vmatpush2.bf16.msra.mxu0 0
      %2531 = vmatprep.subr.bf16.mxu0 0
      %2532 = vmatpush2.bf16.msra.mxu0 0
      %2533 = vmatprep.mubr.bf16.mxu0 0
      %2534 = vmatmul.mubr.bf16.gmra.mxu0 %v2214
      %v2535 = vpop.f32.mrf.mxu0
      %v2536 = vadd.f32 %v2439, %v2535
      %v2537 = vpop.f32.mrf.mxu0
      %v2538 = vpop.f32.mrf.mxu0
      %v2539 = vadd.f32 %v2442, %v2538
      %v2540 = vpop.f32.mrf.mxu0
      %2541 = vmatprep.mubr.bf16.mxu0 0
      %2542 = vmatmul.mubr.bf16.gmra.mxu0 %v2217
      %v2543 = vpop.f32.mrf.mxu0
      %v2544 = vadd.f32 %v2447, %v2543
      %v2545 = vpop.f32.mrf.mxu0
      %v2546 = vpop.f32.mrf.mxu0
      %v2547 = vadd.f32 %v2450, %v2546
      %v2548 = vpop.f32.mrf.mxu0
      %2549 = vmatprep.mubr.bf16.mxu0 0
      %2550 = vmatmul.mubr.bf16.gmra.mxu0 %v2220
      %v2551 = vpop.f32.mrf.mxu0
      %v2552 = vadd.f32 %v2455, %v2551
      %v2553 = vpop.f32.mrf.mxu0
      %v2554 = vpop.f32.mrf.mxu0
      %v2555 = vadd.f32 %v2458, %v2554
      %v2556 = vpop.f32.mrf.mxu0
      %2557 = vmatprep.mubr.bf16.mxu0 0
      %2558 = vmatmul.mubr.bf16.gmra.mxu0 %v2223
      %v2559 = vpop.f32.mrf.mxu0
      %v2560 = vadd.f32 %v2463, %v2559
      %v2561 = vpop.f32.mrf.mxu0
      %v2562 = vpop.f32.mrf.mxu0
      %v2563 = vadd.f32 %v2466, %v2562
      %v2564 = vpop.f32.mrf.mxu0
      %2565 = vmatprep.mubr.bf16.mxu0 0
      %2566 = vmatmul.mubr.bf16.gmra.mxu0 %v2226
      %v2567 = vpop.f32.mrf.mxu0
      %v2568 = vadd.f32 %v2471, %v2567
      %v2569 = vpop.f32.mrf.mxu0
      %v2570 = vpop.f32.mrf.mxu0
      %v2571 = vadd.f32 %v2474, %v2570
      %v2572 = vpop.f32.mrf.mxu0
      %2573 = vmatprep.mubr.bf16.mxu0 0
      %2574 = vmatmul.mubr.bf16.gmra.mxu0 %v2229
      %v2575 = vpop.f32.mrf.mxu0
      %v2576 = vadd.f32 %v2479, %v2575
      %v2577 = vpop.f32.mrf.mxu0
      %v2578 = vpop.f32.mrf.mxu0
      %v2579 = vadd.f32 %v2482, %v2578
      %v2580 = vpop.f32.mrf.mxu0
      %2581 = vmatprep.mubr.bf16.mxu0 0
      %2582 = vmatmul.mubr.bf16.gmra.mxu0 %v2232
      %v2583 = vpop.f32.mrf.mxu0
      %v2584 = vadd.f32 %v2487, %v2583
      %v2585 = vpop.f32.mrf.mxu0
      %v2586 = vpop.f32.mrf.mxu0
      %v2587 = vadd.f32 %v2490, %v2586
      %v2588 = vpop.f32.mrf.mxu0
      %2589 = vmatprep.mubr.bf16.mxu0 0
      %2590 = vmatmul.mubr.bf16.gmra.mxu0 %v2235
      %v2591 = vpop.f32.mrf.mxu0
      %v2592 = vadd.f32 %v2495, %v2591
      %v2593 = vpop.f32.mrf.mxu0
      %v2594 = vpop.f32.mrf.mxu0
      %v2595 = vadd.f32 %v2498, %v2594
      %v2596 = vpop.f32.mrf.mxu0
      %2597 = vdwg.mxu0
      %s2598 = scalar_lea.vmem [#allocation3], 48
      %v2599 = vld [vmem:[%s2598] sm:$0xff]
      %v2600 = vld [vmem:[%s2598 + $0x8] sm:$0xf]
      %v2601 = vld [vmem:[%s2598 + $0xc] sm:$0xff]
      %v2602 = vld [vmem:[%s2598 + $0x14] sm:$0xf]
      %v2603 = vld [vmem:[%s2598 + $0x18] sm:$0xff]
      %v2604 = vld [vmem:[%s2598 + $0x20] sm:$0xf]
      %v2605 = vld [vmem:[%s2598 + $0x24] sm:$0xff]
      %v2606 = vld [vmem:[%s2598 + $0x2c] sm:$0xf]
      %v2607 = vld [vmem:[%s2598 + $0x30] sm:$0xff]
      %v2608 = vld [vmem:[%s2598 + $0x38] sm:$0xf]
      %v2609 = vld [vmem:[%s2598 + $0x3c] sm:$0xff]
      %v2610 = vld [vmem:[%s2598 + $0x44] sm:$0xf]
      %v2611 = vld [vmem:[%s2598 + $0x48] sm:$0xff]
      %v2612 = vld [vmem:[%s2598 + $0x50] sm:$0xf]
      %v2613 = vld [vmem:[%s2598 + $0x54] sm:$0xff]
      %v2614 = vld [vmem:[%s2598 + $0x5c] sm:$0xf]
      %v2615 = vld [vmem:[%s2598 + $0x60] sm:$0xff]
      %v2616 = vld [vmem:[%s2598 + $0x68] sm:$0xf]
      %v2617 = vld [vmem:[%s2598 + $0x6c] sm:$0xff]
      %v2618 = vld [vmem:[%s2598 + $0x74] sm:$0xf]
      %v2619 = vld [vmem:[%s2598 + $0x78] sm:$0xff]
      %v2620 = vld [vmem:[%s2598 + $0x80] sm:$0xf]
      %v2621 = vld [vmem:[%s2598 + $0x84] sm:$0xff]
      %v2622 = vld [vmem:[%s2598 + $0x8c] sm:$0xf]
      %v2623 = vld [vmem:[%s2598 + $0x90] sm:$0xff]
      %v2624 = vld [vmem:[%s2598 + $0x98] sm:$0xf]
      %v2625 = vld [vmem:[%s2598 + $0x9c] sm:$0xff]
      %v2626 = vld [vmem:[%s2598 + $0xa4] sm:$0xf]
      %v2627 = vld [vmem:[%s2598 + $0xa8] sm:$0xff]
      %v2628 = vld [vmem:[%s2598 + $0xb0] sm:$0xf]
      %v2629 = vld [vmem:[%s2598 + $0xb4] sm:$0xff]
      %v2630 = vld [vmem:[%s2598 + $0xbc] sm:$0xf]
      %s2631 = scalar_lea.vmem %s3, 384
      %v2632 = vld [vmem:[%s2631] sm:$0xf]
      %v2633 = vld [vmem:[%s2631 + $0x4] sm:$0xf]
      %v2634 = vld [vmem:[%s2631 + $0x8] sm:$0xf]
      %v2635 = vld [vmem:[%s2631 + $0xc] sm:$0xf]
      %v2636 = vld [vmem:[%s2631 + $0x10] sm:$0xf]
      %v2637 = vld [vmem:[%s2631 + $0x14] sm:$0xf]
      %v2638 = vld [vmem:[%s2631 + $0x18] sm:$0xf]
      %v2639 = vld [vmem:[%s2631 + $0x1c] sm:$0xf]
      %v2640 = vld [vmem:[%s2631 + $0x20] sm:$0xf]
      %v2641 = vld [vmem:[%s2631 + $0x24] sm:$0xf]
      %v2642 = vld [vmem:[%s2631 + $0x28] sm:$0xf]
      %v2643 = vld [vmem:[%s2631 + $0x2c] sm:$0xf]
      %v2644 = vld [vmem:[%s2631 + $0x30] sm:$0xf]
      %v2645 = vld [vmem:[%s2631 + $0x34] sm:$0xf]
      %v2646 = vld [vmem:[%s2631 + $0x38] sm:$0xf]
      %v2647 = vld [vmem:[%s2631 + $0x3c] sm:$0xf]
      %v2648 = vld [vmem:[%s2631 + $0x40] sm:$0xf]
      %v2649 = vld [vmem:[%s2631 + $0x44] sm:$0xf]
      %v2650 = vld [vmem:[%s2631 + $0x48] sm:$0xf]
      %v2651 = vld [vmem:[%s2631 + $0x4c] sm:$0xf]
      %v2652 = vld [vmem:[%s2631 + $0x50] sm:$0xf]
      %v2653 = vld [vmem:[%s2631 + $0x54] sm:$0xf]
      %v2654 = vld [vmem:[%s2631 + $0x58] sm:$0xf]
      %v2655 = vld [vmem:[%s2631 + $0x5c] sm:$0xf]
      %v2656 = vld [vmem:[%s2631 + $0x60] sm:$0xf]
      %v2657 = vld [vmem:[%s2631 + $0x64] sm:$0xf]
      %v2658 = vld [vmem:[%s2631 + $0x68] sm:$0xf]
      %v2659 = vld [vmem:[%s2631 + $0x6c] sm:$0xf]
      %v2660 = vld [vmem:[%s2631 + $0x70] sm:$0xf]
      %v2661 = vld [vmem:[%s2631 + $0x74] sm:$0xf]
      %v2662 = vld [vmem:[%s2631 + $0x78] sm:$0xf]
      %v2663 = vld [vmem:[%s2631 + $0x7c] sm:$0xf]
      %v2664 = vld [vmem:[%s2631 + $0x80] sm:$0xf]
      %v2665 = vld [vmem:[%s2631 + $0x84] sm:$0xf]
      %v2666 = vld [vmem:[%s2631 + $0x88] sm:$0xf]
      %v2667 = vld [vmem:[%s2631 + $0x8c] sm:$0xf]
      %v2668 = vld [vmem:[%s2631 + $0x90] sm:$0xf]
      %v2669 = vld [vmem:[%s2631 + $0x94] sm:$0xf]
      %v2670 = vld [vmem:[%s2631 + $0x98] sm:$0xf]
      %v2671 = vld [vmem:[%s2631 + $0x9c] sm:$0xf]
      %v2672 = vld [vmem:[%s2631 + $0xa0] sm:$0xf]
      %v2673 = vld [vmem:[%s2631 + $0xa4] sm:$0xf]
      %v2674 = vld [vmem:[%s2631 + $0xa8] sm:$0xf]
      %v2675 = vld [vmem:[%s2631 + $0xac] sm:$0xf]
      %v2676 = vld [vmem:[%s2631 + $0xb0] sm:$0xf]
      %v2677 = vld [vmem:[%s2631 + $0xb4] sm:$0xf]
      %v2678 = vld [vmem:[%s2631 + $0xb8] sm:$0xf]
      %v2679 = vld [vmem:[%s2631 + $0xbc] sm:$0xf]
      %v2712 = vunpack.c.l.b16 %v2599
      %v2713 = vunpack.c.h.b16 %v2599
      %v2714 = vunpack.c.l.b16 %v2600
      %v2715 = vunpack.c.l.b16 %v2601
      %v2716 = vunpack.c.h.b16 %v2601
      %v2717 = vunpack.c.l.b16 %v2602
      %v2718 = vunpack.c.l.b16 %v2603
      %v2719 = vunpack.c.h.b16 %v2603
      %v2720 = vunpack.c.l.b16 %v2604
      %v2721 = vunpack.c.l.b16 %v2605
      %v2722 = vunpack.c.h.b16 %v2605
      %v2723 = vunpack.c.l.b16 %v2606
      %v2724 = vunpack.c.l.b16 %v2607
      %v2725 = vunpack.c.h.b16 %v2607
      %v2726 = vunpack.c.l.b16 %v2608
      %v2727 = vunpack.c.l.b16 %v2609
      %v2728 = vunpack.c.h.b16 %v2609
      %v2729 = vunpack.c.l.b16 %v2610
      %v2730 = vunpack.c.l.b16 %v2611
      %v2731 = vunpack.c.h.b16 %v2611
      %v2732 = vunpack.c.l.b16 %v2612
      %v2733 = vunpack.c.l.b16 %v2613
      %v2734 = vunpack.c.h.b16 %v2613
      %v2735 = vunpack.c.l.b16 %v2614
      %v2736 = vunpack.c.l.b16 %v2615
      %v2737 = vunpack.c.h.b16 %v2615
      %v2738 = vunpack.c.l.b16 %v2616
      %v2739 = vunpack.c.l.b16 %v2617
      %v2740 = vunpack.c.h.b16 %v2617
      %v2741 = vunpack.c.l.b16 %v2618
      %v2742 = vunpack.c.l.b16 %v2619
      %v2743 = vunpack.c.h.b16 %v2619
      %v2744 = vunpack.c.l.b16 %v2620
      %v2745 = vunpack.c.l.b16 %v2621
      %v2746 = vunpack.c.h.b16 %v2621
      %v2747 = vunpack.c.l.b16 %v2622
      %v2748 = vunpack.c.l.b16 %v2623
      %v2749 = vunpack.c.h.b16 %v2623
      %v2750 = vunpack.c.l.b16 %v2624
      %v2751 = vunpack.c.l.b16 %v2625
      %v2752 = vunpack.c.h.b16 %v2625
      %v2753 = vunpack.c.l.b16 %v2626
      %v2754 = vunpack.c.l.b16 %v2627
      %v2755 = vunpack.c.h.b16 %v2627
      %v2756 = vunpack.c.l.b16 %v2628
      %v2757 = vunpack.c.l.b16 %v2629
      %v2758 = vunpack.c.h.b16 %v2629
      %v2759 = vunpack.c.l.b16 %v2630
      %v2760 = vpack.c.b16 %v2715, %v2712
      %v2761 = vpack.c.b16 %v2716, %v2713
      %v2762 = vpack.c.b16 %v2717, %v2714
      %v2763 = vpack.c.b16 %v2721, %v2718
      %v2764 = vpack.c.b16 %v2722, %v2719
      %v2765 = vpack.c.b16 %v2723, %v2720
      %v2766 = vpack.c.b16 %v2727, %v2724
      %v2767 = vpack.c.b16 %v2728, %v2725
      %v2768 = vpack.c.b16 %v2729, %v2726
      %v2769 = vpack.c.b16 %v2733, %v2730
      %v2770 = vpack.c.b16 %v2734, %v2731
      %v2771 = vpack.c.b16 %v2735, %v2732
      %v2772 = vpack.c.b16 %v2739, %v2736
      %v2773 = vpack.c.b16 %v2740, %v2737
      %v2774 = vpack.c.b16 %v2741, %v2738
      %v2775 = vpack.c.b16 %v2745, %v2742
      %v2776 = vpack.c.b16 %v2746, %v2743
      %v2777 = vpack.c.b16 %v2747, %v2744
      %v2778 = vpack.c.b16 %v2751, %v2748
      %v2779 = vpack.c.b16 %v2752, %v2749
      %v2780 = vpack.c.b16 %v2753, %v2750
      %v2781 = vpack.c.b16 %v2757, %v2754
      %v2782 = vpack.c.b16 %v2758, %v2755
      %v2783 = vpack.c.b16 %v2759, %v2756
      %v2856 = vunpack.c.l.b16 %v2632
      %v2857 = vunpack.c.l.b16 %v2633
      %v2858 = vunpack.c.l.b16 %v2634
      %v2859 = vunpack.c.l.b16 %v2635
      %v2860 = vunpack.c.l.b16 %v2636
      %v2861 = vunpack.c.l.b16 %v2637
      %v2862 = vunpack.c.l.b16 %v2638
      %v2863 = vunpack.c.l.b16 %v2639
      %v2864 = vunpack.c.l.b16 %v2640
      %v2865 = vunpack.c.l.b16 %v2641
      %v2866 = vunpack.c.l.b16 %v2642
      %v2867 = vunpack.c.l.b16 %v2643
      %v2868 = vunpack.c.l.b16 %v2644
      %v2869 = vunpack.c.l.b16 %v2645
      %v2870 = vunpack.c.l.b16 %v2646
      %v2871 = vunpack.c.l.b16 %v2647
      %v2872 = vunpack.c.l.b16 %v2648
      %v2873 = vunpack.c.l.b16 %v2649
      %v2874 = vunpack.c.l.b16 %v2650
      %v2875 = vunpack.c.l.b16 %v2651
      %v2876 = vunpack.c.l.b16 %v2652
      %v2877 = vunpack.c.l.b16 %v2653
      %v2878 = vunpack.c.l.b16 %v2654
      %v2879 = vunpack.c.l.b16 %v2655
      %v2880 = vunpack.c.l.b16 %v2656
      %v2881 = vunpack.c.l.b16 %v2657
      %v2882 = vunpack.c.l.b16 %v2658
      %v2883 = vunpack.c.l.b16 %v2659
      %v2884 = vunpack.c.l.b16 %v2660
      %v2885 = vunpack.c.l.b16 %v2661
      %v2886 = vunpack.c.l.b16 %v2662
      %v2887 = vunpack.c.l.b16 %v2663
      %v2888 = vunpack.c.l.b16 %v2664
      %v2889 = vunpack.c.l.b16 %v2665
      %v2890 = vunpack.c.l.b16 %v2666
      %v2891 = vunpack.c.l.b16 %v2667
      %v2892 = vunpack.c.l.b16 %v2668
      %v2893 = vunpack.c.l.b16 %v2669
      %v2894 = vunpack.c.l.b16 %v2670
      %v2895 = vunpack.c.l.b16 %v2671
      %v2896 = vunpack.c.l.b16 %v2672
      %v2897 = vunpack.c.l.b16 %v2673
      %v2898 = vunpack.c.l.b16 %v2674
      %v2899 = vunpack.c.l.b16 %v2675
      %v2900 = vunpack.c.l.b16 %v2676
      %v2901 = vunpack.c.l.b16 %v2677
      %v2902 = vunpack.c.l.b16 %v2678
      %v2903 = vunpack.c.l.b16 %v2679
      %v2904 = vpack.c.b16 %v2857, %v2856
      %v2905 = vpack.c.b16 %v2859, %v2858
      %v2906 = vpack.c.b16 %v2861, %v2860
      %v2907 = vpack.c.b16 %v2863, %v2862
      %v2908 = vpack.c.b16 %v2865, %v2864
      %v2909 = vpack.c.b16 %v2867, %v2866
      %v2910 = vpack.c.b16 %v2869, %v2868
      %v2911 = vpack.c.b16 %v2871, %v2870
      %v2912 = vpack.c.b16 %v2873, %v2872
      %v2913 = vpack.c.b16 %v2875, %v2874
      %v2914 = vpack.c.b16 %v2877, %v2876
      %v2915 = vpack.c.b16 %v2879, %v2878
      %v2916 = vpack.c.b16 %v2881, %v2880
      %v2917 = vpack.c.b16 %v2883, %v2882
      %v2918 = vpack.c.b16 %v2885, %v2884
      %v2919 = vpack.c.b16 %v2887, %v2886
      %v2920 = vpack.c.b16 %v2889, %v2888
      %v2921 = vpack.c.b16 %v2891, %v2890
      %v2922 = vpack.c.b16 %v2893, %v2892
      %v2923 = vpack.c.b16 %v2895, %v2894
      %v2924 = vpack.c.b16 %v2897, %v2896
      %v2925 = vpack.c.b16 %v2899, %v2898
      %v2926 = vpack.c.b16 %v2901, %v2900
      %v2927 = vpack.c.b16 %v2903, %v2902
      %2952 = vmatprep.subr.bf16.mxu0 0
      %2953 = vmatpush1.bf16.msra.mxu0 %v2911
      %2954 = vmatprep.subr.bf16.mxu0 0
      %2955 = vmatpush1.bf16.msra.mxu0 %v2910
      %2956 = vmatprep.subr.bf16.mxu0 0
      %2957 = vmatpush1.bf16.msra.mxu0 %v2909
      %2958 = vmatprep.subr.bf16.mxu0 0
      %2959 = vmatpush1.bf16.msra.mxu0 %v2908
      %2960 = vmatprep.subr.bf16.mxu0 0
      %2961 = vmatpush1.bf16.msra.mxu0 %v2907
      %2962 = vmatprep.subr.bf16.mxu0 0
      %2963 = vmatpush1.bf16.msra.mxu0 %v2906
      %2964 = vmatprep.subr.bf16.mxu0 0
      %2965 = vmatpush1.bf16.msra.mxu0 %v2905
      %2966 = vmatprep.subr.bf16.mxu0 0
      %2967 = vmatpush1.bf16.msra.mxu0 %v2904
      %2968 = vmatprep.subr.bf16.mxu0 0
      %2969 = vmatpush2.bf16.msra.mxu0 %v2919
      %2970 = vmatprep.subr.bf16.mxu0 0
      %2971 = vmatpush2.bf16.msra.mxu0 %v2918
      %2972 = vmatprep.subr.bf16.mxu0 0
      %2973 = vmatpush2.bf16.msra.mxu0 %v2917
      %2974 = vmatprep.subr.bf16.mxu0 0
      %2975 = vmatpush2.bf16.msra.mxu0 %v2916
      %2976 = vmatprep.subr.bf16.mxu0 0
      %2977 = vmatpush2.bf16.msra.mxu0 %v2915
      %2978 = vmatprep.subr.bf16.mxu0 0
      %2979 = vmatpush2.bf16.msra.mxu0 %v2914
      %2980 = vmatprep.subr.bf16.mxu0 0
      %2981 = vmatpush2.bf16.msra.mxu0 %v2913
      %2982 = vmatprep.subr.bf16.mxu0 0
      %2983 = vmatpush2.bf16.msra.mxu0 %v2912
      %2984 = vmatprep.mubr.bf16.mxu0 %v2761
      %2985 = vmatmul.mubr.bf16.gmra.mxu0 %v2760
      %v2986 = vpop.f32.mrf.mxu0
      %v2987 = vadd.f32 0.0, %v2986
      %v2988 = vpop.f32.mrf.mxu0
      %v2989 = vpop.f32.mrf.mxu0
      %v2990 = vadd.f32 0.0, %v2989
      %v2991 = vpop.f32.mrf.mxu0
      %2992 = vmatprep.mubr.bf16.mxu0 %v2764
      %2993 = vmatmul.mubr.bf16.gmra.mxu0 %v2763
      %v2994 = vpop.f32.mrf.mxu0
      %v2995 = vadd.f32 0.0, %v2994
      %v2996 = vpop.f32.mrf.mxu0
      %v2997 = vpop.f32.mrf.mxu0
      %v2998 = vadd.f32 0.0, %v2997
      %v2999 = vpop.f32.mrf.mxu0
      %3000 = vmatprep.mubr.bf16.mxu0 %v2767
      %3001 = vmatmul.mubr.bf16.gmra.mxu0 %v2766
      %v3002 = vpop.f32.mrf.mxu0
      %v3003 = vadd.f32 0.0, %v3002
      %v3004 = vpop.f32.mrf.mxu0
      %v3005 = vpop.f32.mrf.mxu0
      %v3006 = vadd.f32 0.0, %v3005
      %v3007 = vpop.f32.mrf.mxu0
      %3008 = vmatprep.mubr.bf16.mxu0 %v2770
      %3009 = vmatmul.mubr.bf16.gmra.mxu0 %v2769
      %v3010 = vpop.f32.mrf.mxu0
      %v3011 = vadd.f32 0.0, %v3010
      %v3012 = vpop.f32.mrf.mxu0
      %v3013 = vpop.f32.mrf.mxu0
      %v3014 = vadd.f32 0.0, %v3013
      %v3015 = vpop.f32.mrf.mxu0
      %3016 = vmatprep.mubr.bf16.mxu0 %v2773
      %3017 = vmatmul.mubr.bf16.gmra.mxu0 %v2772
      %v3018 = vpop.f32.mrf.mxu0
      %v3019 = vadd.f32 0.0, %v3018
      %v3020 = vpop.f32.mrf.mxu0
      %v3021 = vpop.f32.mrf.mxu0
      %v3022 = vadd.f32 0.0, %v3021
      %v3023 = vpop.f32.mrf.mxu0
      %3024 = vmatprep.mubr.bf16.mxu0 %v2776
      %3025 = vmatmul.mubr.bf16.gmra.mxu0 %v2775
      %v3026 = vpop.f32.mrf.mxu0
      %v3027 = vadd.f32 0.0, %v3026
      %v3028 = vpop.f32.mrf.mxu0
      %v3029 = vpop.f32.mrf.mxu0
      %v3030 = vadd.f32 0.0, %v3029
      %v3031 = vpop.f32.mrf.mxu0
      %3032 = vmatprep.mubr.bf16.mxu0 %v2779
      %3033 = vmatmul.mubr.bf16.gmra.mxu0 %v2778
      %v3034 = vpop.f32.mrf.mxu0
      %v3035 = vadd.f32 0.0, %v3034
      %v3036 = vpop.f32.mrf.mxu0
      %v3037 = vpop.f32.mrf.mxu0
      %v3038 = vadd.f32 0.0, %v3037
      %v3039 = vpop.f32.mrf.mxu0
      %3040 = vmatprep.mubr.bf16.mxu0 %v2782
      %3041 = vmatmul.mubr.bf16.gmra.mxu0 %v2781
      %v3042 = vpop.f32.mrf.mxu0
      %v3043 = vadd.f32 0.0, %v3042
      %v3044 = vpop.f32.mrf.mxu0
      %v3045 = vpop.f32.mrf.mxu0
      %v3046 = vadd.f32 0.0, %v3045
      %v3047 = vpop.f32.mrf.mxu0
      %3048 = vdwg.mxu0
      %3049 = vmatprep.subr.bf16.mxu0 0
      %3050 = vmatpush1.bf16.msra.mxu0 %v2927
      %3051 = vmatprep.subr.bf16.mxu0 0
      %3052 = vmatpush1.bf16.msra.mxu0 %v2926
      %3053 = vmatprep.subr.bf16.mxu0 0
      %3054 = vmatpush1.bf16.msra.mxu0 %v2925
      %3055 = vmatprep.subr.bf16.mxu0 0
      %3056 = vmatpush1.bf16.msra.mxu0 %v2924
      %3057 = vmatprep.subr.bf16.mxu0 0
      %3058 = vmatpush1.bf16.msra.mxu0 %v2923
      %3059 = vmatprep.subr.bf16.mxu0 0
      %3060 = vmatpush1.bf16.msra.mxu0 %v2922
      %3061 = vmatprep.subr.bf16.mxu0 0
      %3062 = vmatpush1.bf16.msra.mxu0 %v2921
      %3063 = vmatprep.subr.bf16.mxu0 0
      %3064 = vmatpush1.bf16.msra.mxu0 %v2920
      %3065 = vmatprep.subr.bf16.mxu0 0
      %3066 = vmatpush2.bf16.msra.mxu0 0
      %3067 = vmatprep.subr.bf16.mxu0 0
      %3068 = vmatpush2.bf16.msra.mxu0 0
      %3069 = vmatprep.subr.bf16.mxu0 0
      %3070 = vmatpush2.bf16.msra.mxu0 0
      %3071 = vmatprep.subr.bf16.mxu0 0
      %3072 = vmatpush2.bf16.msra.mxu0 0
      %3073 = vmatprep.subr.bf16.mxu0 0
      %3074 = vmatpush2.bf16.msra.mxu0 0
      %3075 = vmatprep.subr.bf16.mxu0 0
      %3076 = vmatpush2.bf16.msra.mxu0 0
      %3077 = vmatprep.subr.bf16.mxu0 0
      %3078 = vmatpush2.bf16.msra.mxu0 0
      %3079 = vmatprep.subr.bf16.mxu0 0
      %3080 = vmatpush2.bf16.msra.mxu0 0
      %3081 = vmatprep.mubr.bf16.mxu0 0
      %3082 = vmatmul.mubr.bf16.gmra.mxu0 %v2762
      %v3083 = vpop.f32.mrf.mxu0
      %v3084 = vadd.f32 %v2987, %v3083
      %v3085 = vpop.f32.mrf.mxu0
      %v3086 = vpop.f32.mrf.mxu0
      %v3087 = vadd.f32 %v2990, %v3086
      %v3088 = vpop.f32.mrf.mxu0
      %3089 = vmatprep.mubr.bf16.mxu0 0
      %3090 = vmatmul.mubr.bf16.gmra.mxu0 %v2765
      %v3091 = vpop.f32.mrf.mxu0
      %v3092 = vadd.f32 %v2995, %v3091
      %v3093 = vpop.f32.mrf.mxu0
      %v3094 = vpop.f32.mrf.mxu0
      %v3095 = vadd.f32 %v2998, %v3094
      %v3096 = vpop.f32.mrf.mxu0
      %3097 = vmatprep.mubr.bf16.mxu0 0
      %3098 = vmatmul.mubr.bf16.gmra.mxu0 %v2768
      %v3099 = vpop.f32.mrf.mxu0
      %v3100 = vadd.f32 %v3003, %v3099
      %v3101 = vpop.f32.mrf.mxu0
      %v3102 = vpop.f32.mrf.mxu0
      %v3103 = vadd.f32 %v3006, %v3102
      %v3104 = vpop.f32.mrf.mxu0
      %3105 = vmatprep.mubr.bf16.mxu0 0
      %3106 = vmatmul.mubr.bf16.gmra.mxu0 %v2771
      %v3107 = vpop.f32.mrf.mxu0
      %v3108 = vadd.f32 %v3011, %v3107
      %v3109 = vpop.f32.mrf.mxu0
      %v3110 = vpop.f32.mrf.mxu0
      %v3111 = vadd.f32 %v3014, %v3110
      %v3112 = vpop.f32.mrf.mxu0
      %3113 = vmatprep.mubr.bf16.mxu0 0
      %3114 = vmatmul.mubr.bf16.gmra.mxu0 %v2774
      %v3115 = vpop.f32.mrf.mxu0
      %v3116 = vadd.f32 %v3019, %v3115
      %v3117 = vpop.f32.mrf.mxu0
      %v3118 = vpop.f32.mrf.mxu0
      %v3119 = vadd.f32 %v3022, %v3118
      %v3120 = vpop.f32.mrf.mxu0
      %3121 = vmatprep.mubr.bf16.mxu0 0
      %3122 = vmatmul.mubr.bf16.gmra.mxu0 %v2777
      %v3123 = vpop.f32.mrf.mxu0
      %v3124 = vadd.f32 %v3027, %v3123
      %v3125 = vpop.f32.mrf.mxu0
      %v3126 = vpop.f32.mrf.mxu0
      %v3127 = vadd.f32 %v3030, %v3126
      %v3128 = vpop.f32.mrf.mxu0
      %3129 = vmatprep.mubr.bf16.mxu0 0
      %3130 = vmatmul.mubr.bf16.gmra.mxu0 %v2780
      %v3131 = vpop.f32.mrf.mxu0
      %v3132 = vadd.f32 %v3035, %v3131
      %v3133 = vpop.f32.mrf.mxu0
      %v3134 = vpop.f32.mrf.mxu0
      %v3135 = vadd.f32 %v3038, %v3134
      %v3136 = vpop.f32.mrf.mxu0
      %3137 = vmatprep.mubr.bf16.mxu0 0
      %3138 = vmatmul.mubr.bf16.gmra.mxu0 %v2783
      %v3139 = vpop.f32.mrf.mxu0
      %v3140 = vadd.f32 %v3043, %v3139
      %v3141 = vpop.f32.mrf.mxu0
      %v3142 = vpop.f32.mrf.mxu0
      %v3143 = vadd.f32 %v3046, %v3142
      %v3144 = vpop.f32.mrf.mxu0
      %3145 = vdwg.mxu0
      %v3146 = vadd.f32 %v2536, %v3084
      %v3147 = vadd.f32 %v2539, %v3087
      %v3148 = vadd.f32 %v2544, %v3092
      %v3149 = vadd.f32 %v2547, %v3095
      %v3150 = vadd.f32 %v2552, %v3100
      %v3151 = vadd.f32 %v2555, %v3103
      %v3152 = vadd.f32 %v2560, %v3108
      %v3153 = vadd.f32 %v2563, %v3111
      %v3154 = vadd.f32 %v2568, %v3116
      %v3155 = vadd.f32 %v2571, %v3119
      %v3156 = vadd.f32 %v2576, %v3124
      %v3157 = vadd.f32 %v2579, %v3127
      %v3158 = vadd.f32 %v2584, %v3132
      %v3159 = vadd.f32 %v2587, %v3135
      %v3160 = vadd.f32 %v2592, %v3140
      %v3161 = vadd.f32 %v2595, %v3143
      %v3162 = vld [vmem:[%s4] sm:$0x1]
      %v3164 = vlaneseq
      %v3165 = vshrl.u32 %v3164, 7
      %v3166 = vsub.s32 0, %v3165
      %v3167 = vrot.slane %v3162, %v3166
      %v3169 = vadd.f32 %v3146, %v3167
      %v3170 = vadd.f32 %v3147, %v3167
      %v3171 = vadd.f32 %v3148, %v3167
      %v3172 = vadd.f32 %v3149, %v3167
      %v3173 = vadd.f32 %v3150, %v3167
      %v3174 = vadd.f32 %v3151, %v3167
      %v3175 = vadd.f32 %v3152, %v3167
      %v3176 = vadd.f32 %v3153, %v3167
      %v3177 = vadd.f32 %v3154, %v3167
      %v3178 = vadd.f32 %v3155, %v3167
      %v3179 = vadd.f32 %v3156, %v3167
      %v3180 = vadd.f32 %v3157, %v3167
      %v3181 = vadd.f32 %v3158, %v3167
      %v3182 = vadd.f32 %v3159, %v3167
      %v3183 = vadd.f32 %v3160, %v3167
      %v3184 = vadd.f32 %v3161, %v3167
      %v3185 = vmax.f32 %v3169, 0.0
      %v3186 = vmax.f32 %v3170, 0.0
      %v3187 = vmax.f32 %v3171, 0.0
      %v3188 = vmax.f32 %v3172, 0.0
      %v3189 = vmax.f32 %v3173, 0.0
      %v3190 = vmax.f32 %v3174, 0.0
      %v3191 = vmax.f32 %v3175, 0.0
      %v3192 = vmax.f32 %v3176, 0.0
      %v3193 = vmax.f32 %v3177, 0.0
      %v3194 = vmax.f32 %v3178, 0.0
      %v3195 = vmax.f32 %v3179, 0.0
      %v3196 = vmax.f32 %v3180, 0.0
      %v3197 = vmax.f32 %v3181, 0.0
      %v3198 = vmax.f32 %v3182, 0.0
      %v3199 = vmax.f32 %v3183, 0.0
      %v3200 = vmax.f32 %v3184, 0.0
      %v3201 = vpack.c.bf16 %v3186, %v3185
      %v3202 = vpack.c.bf16 %v3188, %v3187
      %v3203 = vpack.c.bf16 %v3190, %v3189
      %v3204 = vpack.c.bf16 %v3192, %v3191
      %v3205 = vpack.c.bf16 %v3194, %v3193
      %v3206 = vpack.c.bf16 %v3196, %v3195
      %v3207 = vpack.c.bf16 %v3198, %v3197
      %v3208 = vpack.c.bf16 %v3200, %v3199
      %v3209 = vld [vmem:[%s5] sm:$0xf]
      %v3210 = vld [vmem:[%s5 + $0x4] sm:$0xf]
      %v3211 = vld [vmem:[%s5 + $0x8] sm:$0xf]
      %v3212 = vld [vmem:[%s5 + $0xc] sm:$0xf]
      %v3213 = vld [vmem:[%s5 + $0x10] sm:$0xf]
      %v3214 = vld [vmem:[%s5 + $0x14] sm:$0xf]
      %v3215 = vld [vmem:[%s5 + $0x18] sm:$0xf]
      %v3216 = vld [vmem:[%s5 + $0x1c] sm:$0xf]
      %v3217 = vld [vmem:[%s5 + $0x20] sm:$0xf]
      %v3218 = vld [vmem:[%s5 + $0x24] sm:$0xf]
      %v3219 = vld [vmem:[%s5 + $0x28] sm:$0xf]
      %v3220 = vld [vmem:[%s5 + $0x2c] sm:$0xf]
      %v3221 = vld [vmem:[%s5 + $0x30] sm:$0xf]
      %v3222 = vld [vmem:[%s5 + $0x34] sm:$0xf]
      %v3223 = vld [vmem:[%s5 + $0x38] sm:$0xf]
      %v3224 = vld [vmem:[%s5 + $0x3c] sm:$0xf]
      %v3225 = vld [vmem:[%s6] sm:$0x1]
      %v3227 = vlaneseq
      %v3228 = vshrl.u32 %v3227, 7
      %v3229 = vsub.s32 0, %v3228
      %v3230 = vrot.slane %v3225, %v3229
      %v3248 = vunpack.c.l.b16 %v3209
      %v3249 = vunpack.c.l.b16 %v3210
      %v3250 = vunpack.c.l.b16 %v3211
      %v3251 = vunpack.c.l.b16 %v3212
      %v3252 = vunpack.c.l.b16 %v3213
      %v3253 = vunpack.c.l.b16 %v3214
      %v3254 = vunpack.c.l.b16 %v3215
      %v3255 = vunpack.c.l.b16 %v3216
      %v3256 = vunpack.c.l.b16 %v3217
      %v3257 = vunpack.c.l.b16 %v3218
      %v3258 = vunpack.c.l.b16 %v3219
      %v3259 = vunpack.c.l.b16 %v3220
      %v3260 = vunpack.c.l.b16 %v3221
      %v3261 = vunpack.c.l.b16 %v3222
      %v3262 = vunpack.c.l.b16 %v3223
      %v3263 = vunpack.c.l.b16 %v3224
      %v3264 = vpack.c.b16 %v3249, %v3248
      %v3265 = vpack.c.b16 %v3251, %v3250
      %v3266 = vpack.c.b16 %v3253, %v3252
      %v3267 = vpack.c.b16 %v3255, %v3254
      %v3268 = vpack.c.b16 %v3257, %v3256
      %v3269 = vpack.c.b16 %v3259, %v3258
      %v3270 = vpack.c.b16 %v3261, %v3260
      %v3271 = vpack.c.b16 %v3263, %v3262
      %3280 = vmatprep.subr.bf16.mxu0 0
      %3281 = vmatpush1.bf16.msra.mxu0 %v3271
      %3282 = vmatprep.subr.bf16.mxu0 0
      %3283 = vmatpush1.bf16.msra.mxu0 %v3270
      %3284 = vmatprep.subr.bf16.mxu0 0
      %3285 = vmatpush1.bf16.msra.mxu0 %v3269
      %3286 = vmatprep.subr.bf16.mxu0 0
      %3287 = vmatpush1.bf16.msra.mxu0 %v3268
      %3288 = vmatprep.subr.bf16.mxu0 0
      %3289 = vmatpush1.bf16.msra.mxu0 %v3267
      %3290 = vmatprep.subr.bf16.mxu0 0
      %3291 = vmatpush1.bf16.msra.mxu0 %v3266
      %3292 = vmatprep.subr.bf16.mxu0 0
      %3293 = vmatpush1.bf16.msra.mxu0 %v3265
      %3294 = vmatprep.subr.bf16.mxu0 0
      %3295 = vmatpush1.bf16.msra.mxu0 %v3264
      %3296 = vmatprep.subr.bf16.mxu0 0
      %3297 = vmatpush2.bf16.msra.mxu0 0
      %3298 = vmatprep.subr.bf16.mxu0 0
      %3299 = vmatpush2.bf16.msra.mxu0 0
      %3300 = vmatprep.subr.bf16.mxu0 0
      %3301 = vmatpush2.bf16.msra.mxu0 0
      %3302 = vmatprep.subr.bf16.mxu0 0
      %3303 = vmatpush2.bf16.msra.mxu0 0
      %3304 = vmatprep.subr.bf16.mxu0 0
      %3305 = vmatpush2.bf16.msra.mxu0 0
      %3306 = vmatprep.subr.bf16.mxu0 0
      %3307 = vmatpush2.bf16.msra.mxu0 0
      %3308 = vmatprep.subr.bf16.mxu0 0
      %3309 = vmatpush2.bf16.msra.mxu0 0
      %3310 = vmatprep.subr.bf16.mxu0 0
      %3311 = vmatpush2.bf16.msra.mxu0 0
      %3312 = vmatprep.mubr.bf16.mxu0 0
      %3313 = vmatmul.mubr.bf16.gmra.mxu0 %v3201
      %v3314 = vpop.f32.mrf.mxu0
      %v3315 = vadd.f32 %v3230, %v3314
      %v3316 = vpop.f32.mrf.mxu0
      %v3317 = vpop.f32.mrf.mxu0
      %v3318 = vadd.f32 %v3230, %v3317
      %v3319 = vpop.f32.mrf.mxu0
      %3320 = vmatprep.mubr.bf16.mxu0 0
      %3321 = vmatmul.mubr.bf16.gmra.mxu0 %v3202
      %v3322 = vpop.f32.mrf.mxu0
      %v3323 = vadd.f32 %v3230, %v3322
      %v3324 = vpop.f32.mrf.mxu0
      %v3325 = vpop.f32.mrf.mxu0
      %v3326 = vadd.f32 %v3230, %v3325
      %v3327 = vpop.f32.mrf.mxu0
      %3328 = vmatprep.mubr.bf16.mxu0 0
      %3329 = vmatmul.mubr.bf16.gmra.mxu0 %v3203
      %v3330 = vpop.f32.mrf.mxu0
      %v3331 = vadd.f32 %v3230, %v3330
      %v3332 = vpop.f32.mrf.mxu0
      %v3333 = vpop.f32.mrf.mxu0
      %v3334 = vadd.f32 %v3230, %v3333
      %v3335 = vpop.f32.mrf.mxu0
      %3336 = vmatprep.mubr.bf16.mxu0 0
      %3337 = vmatmul.mubr.bf16.gmra.mxu0 %v3204
      %v3338 = vpop.f32.mrf.mxu0
      %v3339 = vadd.f32 %v3230, %v3338
      %v3340 = vpop.f32.mrf.mxu0
      %v3341 = vpop.f32.mrf.mxu0
      %v3342 = vadd.f32 %v3230, %v3341
      %v3343 = vpop.f32.mrf.mxu0
      %3344 = vmatprep.mubr.bf16.mxu0 0
      %3345 = vmatmul.mubr.bf16.gmra.mxu0 %v3205
      %v3346 = vpop.f32.mrf.mxu0
      %v3347 = vadd.f32 %v3230, %v3346
      %v3348 = vpop.f32.mrf.mxu0
      %v3349 = vpop.f32.mrf.mxu0
      %v3350 = vadd.f32 %v3230, %v3349
      %v3351 = vpop.f32.mrf.mxu0
      %3352 = vmatprep.mubr.bf16.mxu0 0
      %3353 = vmatmul.mubr.bf16.gmra.mxu0 %v3206
      %v3354 = vpop.f32.mrf.mxu0
      %v3355 = vadd.f32 %v3230, %v3354
      %v3356 = vpop.f32.mrf.mxu0
      %v3357 = vpop.f32.mrf.mxu0
      %v3358 = vadd.f32 %v3230, %v3357
      %v3359 = vpop.f32.mrf.mxu0
      %3360 = vmatprep.mubr.bf16.mxu0 0
      %3361 = vmatmul.mubr.bf16.gmra.mxu0 %v3207
      %v3362 = vpop.f32.mrf.mxu0
      %v3363 = vadd.f32 %v3230, %v3362
      %v3364 = vpop.f32.mrf.mxu0
      %v3365 = vpop.f32.mrf.mxu0
      %v3366 = vadd.f32 %v3230, %v3365
      %v3367 = vpop.f32.mrf.mxu0
      %3368 = vmatprep.mubr.bf16.mxu0 0
      %3369 = vmatmul.mubr.bf16.gmra.mxu0 %v3208
      %v3370 = vpop.f32.mrf.mxu0
      %v3371 = vadd.f32 %v3230, %v3370
      %v3372 = vpop.f32.mrf.mxu0
      %v3373 = vpop.f32.mrf.mxu0
      %v3374 = vadd.f32 %v3230, %v3373
      %v3375 = vpop.f32.mrf.mxu0
      %3376 = vdwg.mxu0
      %s3377 = sadd.s32 %s359, 1
      %s3378 = smul.u32 %s3377, 3
      %s3379 = smul.addr %s3378, 4
      %s3380 = scalar_lea.vmem %s346, %s3379
      %v3381 = vld [vmem:[%s3380] sm:$0xf]
      %v3382 = vld [vmem:[%s3380 + $0x4] sm:$0xf]
      %v3383 = vld [vmem:[%s3380 + $0x8] sm:$0x1]
      %v3384 = vld [vmem:[%s3380 + $0xc] sm:$0xf]
      %v3385 = vld [vmem:[%s3380 + $0x10] sm:$0xf]
      %v3386 = vld [vmem:[%s3380 + $0x14] sm:$0x1]
      %v3387 = vld [vmem:[%s3380 + $0x18] sm:$0xf]
      %v3388 = vld [vmem:[%s3380 + $0x1c] sm:$0xf]
      %v3389 = vld [vmem:[%s3380 + $0x20] sm:$0x1]
      %v3390 = vld [vmem:[%s3380 + $0x24] sm:$0xf]
      %v3391 = vld [vmem:[%s3380 + $0x28] sm:$0xf]
      %v3392 = vld [vmem:[%s3380 + $0x2c] sm:$0x1]
      %v3393 = vld [vmem:[%s3380 + $0x30] sm:$0xf]
      %v3394 = vld [vmem:[%s3380 + $0x34] sm:$0xf]
      %v3395 = vld [vmem:[%s3380 + $0x38] sm:$0x1]
      %v3396 = vld [vmem:[%s3380 + $0x3c] sm:$0xf]
      %v3397 = vld [vmem:[%s3380 + $0x40] sm:$0xf]
      %v3398 = vld [vmem:[%s3380 + $0x44] sm:$0x1]
      %v3399 = vld [vmem:[%s3380 + $0x48] sm:$0xf]
      %v3400 = vld [vmem:[%s3380 + $0x4c] sm:$0xf]
      %v3401 = vld [vmem:[%s3380 + $0x50] sm:$0x1]
      %v3402 = vld [vmem:[%s3380 + $0x54] sm:$0xf]
      %v3403 = vld [vmem:[%s3380 + $0x58] sm:$0xf]
      %v3404 = vld [vmem:[%s3380 + $0x5c] sm:$0x1]
      %v3406 = vshrl.u32 %v3381, 16
      %v3408 = vrot.slane %v3406, 4
      %v3409 = vshll.u32 %v3381, 16
      %v3411 = vrot.slane %v3409, 5
      %v3412 = vor.u32 %v3408, %v3411
      %v3413 = vrot.slane %v3412, 4
      %v3415 = vshll.u32 %v3382, 16
      %v3417 = vrot.slane %v3415, 5
      %v3418 = vsel %vm1050, %v3413, %v3417
      %v3419 = vshrl.u32 %v3382, 16
      %v3421 = vrot.slane %v3419, 4
      %v3422 = vor.u32 %v3421, %v3417
      %v3423 = vrot.slane %v3422, 4
      %v3425 = vshll.u32 %v3383, 16
      %v3427 = vrot.slane %v3425, 5
      %v3428 = vsel %vm1050, %v3423, %v3427
      %v3430 = vshrl.u32 %v3384, 16
      %v3432 = vrot.slane %v3430, 4
      %v3433 = vshll.u32 %v3384, 16
      %v3435 = vrot.slane %v3433, 5
      %v3436 = vor.u32 %v3432, %v3435
      %v3437 = vrot.slane %v3436, 4
      %v3439 = vshll.u32 %v3385, 16
      %v3441 = vrot.slane %v3439, 5
      %v3442 = vsel %vm1050, %v3437, %v3441
      %v3443 = vshrl.u32 %v3385, 16
      %v3445 = vrot.slane %v3443, 4
      %v3446 = vor.u32 %v3445, %v3441
      %v3447 = vrot.slane %v3446, 4
      %v3449 = vshll.u32 %v3386, 16
      %v3451 = vrot.slane %v3449, 5
      %v3452 = vsel %vm1050, %v3447, %v3451
      %v3454 = vshrl.u32 %v3387, 16
      %v3456 = vrot.slane %v3454, 4
      %v3457 = vshll.u32 %v3387, 16
      %v3459 = vrot.slane %v3457, 5
      %v3460 = vor.u32 %v3456, %v3459
      %v3461 = vrot.slane %v3460, 4
      %v3463 = vshll.u32 %v3388, 16
      %v3465 = vrot.slane %v3463, 5
      %v3466 = vsel %vm1050, %v3461, %v3465
      %v3467 = vshrl.u32 %v3388, 16
      %v3469 = vrot.slane %v3467, 4
      %v3470 = vor.u32 %v3469, %v3465
      %v3471 = vrot.slane %v3470, 4
      %v3473 = vshll.u32 %v3389, 16
      %v3475 = vrot.slane %v3473, 5
      %v3476 = vsel %vm1050, %v3471, %v3475
      %v3478 = vshrl.u32 %v3390, 16
      %v3480 = vrot.slane %v3478, 4
      %v3481 = vshll.u32 %v3390, 16
      %v3483 = vrot.slane %v3481, 5
      %v3484 = vor.u32 %v3480, %v3483
      %v3485 = vrot.slane %v3484, 4
      %v3487 = vshll.u32 %v3391, 16
      %v3489 = vrot.slane %v3487, 5
      %v3490 = vsel %vm1050, %v3485, %v3489
      %v3491 = vshrl.u32 %v3391, 16
      %v3493 = vrot.slane %v3491, 4
      %v3494 = vor.u32 %v3493, %v3489
      %v3495 = vrot.slane %v3494, 4
      %v3497 = vshll.u32 %v3392, 16
      %v3499 = vrot.slane %v3497, 5
      %v3500 = vsel %vm1050, %v3495, %v3499
      %v3502 = vshrl.u32 %v3393, 16
      %v3504 = vrot.slane %v3502, 4
      %v3505 = vshll.u32 %v3393, 16
      %v3507 = vrot.slane %v3505, 5
      %v3508 = vor.u32 %v3504, %v3507
      %v3509 = vrot.slane %v3508, 4
      %v3511 = vshll.u32 %v3394, 16
      %v3513 = vrot.slane %v3511, 5
      %v3514 = vsel %vm1050, %v3509, %v3513
      %v3515 = vshrl.u32 %v3394, 16
      %v3517 = vrot.slane %v3515, 4
      %v3518 = vor.u32 %v3517, %v3513
      %v3519 = vrot.slane %v3518, 4
      %v3521 = vshll.u32 %v3395, 16
      %v3523 = vrot.slane %v3521, 5
      %v3524 = vsel %vm1050, %v3519, %v3523
      %v3526 = vshrl.u32 %v3396, 16
      %v3528 = vrot.slane %v3526, 4
      %v3529 = vshll.u32 %v3396, 16
      %v3531 = vrot.slane %v3529, 5
      %v3532 = vor.u32 %v3528, %v3531
      %v3533 = vrot.slane %v3532, 4
      %v3535 = vshll.u32 %v3397, 16
      %v3537 = vrot.slane %v3535, 5
      %v3538 = vsel %vm1050, %v3533, %v3537
      %v3539 = vshrl.u32 %v3397, 16
      %v3541 = vrot.slane %v3539, 4
      %v3542 = vor.u32 %v3541, %v3537
      %v3543 = vrot.slane %v3542, 4
      %v3545 = vshll.u32 %v3398, 16
      %v3547 = vrot.slane %v3545, 5
      %v3548 = vsel %vm1050, %v3543, %v3547
      %v3550 = vshrl.u32 %v3399, 16
      %v3552 = vrot.slane %v3550, 4
      %v3553 = vshll.u32 %v3399, 16
      %v3555 = vrot.slane %v3553, 5
      %v3556 = vor.u32 %v3552, %v3555
      %v3557 = vrot.slane %v3556, 4
      %v3559 = vshll.u32 %v3400, 16
      %v3561 = vrot.slane %v3559, 5
      %v3562 = vsel %vm1050, %v3557, %v3561
      %v3563 = vshrl.u32 %v3400, 16
      %v3565 = vrot.slane %v3563, 4
      %v3566 = vor.u32 %v3565, %v3561
      %v3567 = vrot.slane %v3566, 4
      %v3569 = vshll.u32 %v3401, 16
      %v3571 = vrot.slane %v3569, 5
      %v3572 = vsel %vm1050, %v3567, %v3571
      %v3574 = vshrl.u32 %v3402, 16
      %v3576 = vrot.slane %v3574, 4
      %v3577 = vshll.u32 %v3402, 16
      %v3579 = vrot.slane %v3577, 5
      %v3580 = vor.u32 %v3576, %v3579
      %v3581 = vrot.slane %v3580, 4
      %v3583 = vshll.u32 %v3403, 16
      %v3585 = vrot.slane %v3583, 5
      %v3586 = vsel %vm1050, %v3581, %v3585
      %v3587 = vshrl.u32 %v3403, 16
      %v3589 = vrot.slane %v3587, 4
      %v3590 = vor.u32 %v3589, %v3585
      %v3591 = vrot.slane %v3590, 4
      %v3593 = vshll.u32 %v3404, 16
      %v3595 = vrot.slane %v3593, 5
      %v3596 = vsel %vm1050, %v3591, %v3595
      %v3597 = vld [vmem:[%s7] sm:$0xf]
      %v3598 = vld [vmem:[%s7 + $0x4] sm:$0xf]
      %v3599 = vld [vmem:[%s7 + $0x8] sm:$0xf]
      %v3600 = vld [vmem:[%s7 + $0xc] sm:$0xf]
      %v3601 = vld [vmem:[%s7 + $0x10] sm:$0xf]
      %v3602 = vld [vmem:[%s7 + $0x14] sm:$0xf]
      %v3603 = vld [vmem:[%s7 + $0x18] sm:$0xf]
      %v3604 = vld [vmem:[%s7 + $0x1c] sm:$0xf]
      %v3605 = vld [vmem:[%s7 + $0x20] sm:$0xf]
      %v3606 = vld [vmem:[%s7 + $0x24] sm:$0xf]
      %v3607 = vld [vmem:[%s7 + $0x28] sm:$0xf]
      %v3608 = vld [vmem:[%s7 + $0x2c] sm:$0xf]
      %v3609 = vld [vmem:[%s7 + $0x30] sm:$0xf]
      %v3610 = vld [vmem:[%s7 + $0x34] sm:$0xf]
      %v3611 = vld [vmem:[%s7 + $0x38] sm:$0xf]
      %v3612 = vld [vmem:[%s7 + $0x3c] sm:$0xf]
      %v3613 = vld [vmem:[%s8] sm:$0x1]
      %v3615 = vlaneseq
      %v3616 = vshrl.u32 %v3615, 7
      %v3617 = vsub.s32 0, %v3616
      %v3618 = vrot.slane %v3613, %v3617
      %v3620 = vunpack.c.l.b16 %v3418
      %v3621 = vunpack.c.l.b16 %v3428
      %v3622 = vunpack.c.l.b16 %v3442
      %v3623 = vunpack.c.l.b16 %v3452
      %v3624 = vunpack.c.l.b16 %v3466
      %v3625 = vunpack.c.l.b16 %v3476
      %v3626 = vunpack.c.l.b16 %v3490
      %v3627 = vunpack.c.l.b16 %v3500
      %v3628 = vunpack.c.l.b16 %v3514
      %v3629 = vunpack.c.l.b16 %v3524
      %v3630 = vunpack.c.l.b16 %v3538
      %v3631 = vunpack.c.l.b16 %v3548
      %v3632 = vunpack.c.l.b16 %v3562
      %v3633 = vunpack.c.l.b16 %v3572
      %v3634 = vunpack.c.l.b16 %v3586
      %v3635 = vunpack.c.l.b16 %v3596
      %v3636 = vpack.c.b16 %v3621, %v3620
      %v3637 = vpack.c.b16 %v3623, %v3622
      %v3638 = vpack.c.b16 %v3625, %v3624
      %v3639 = vpack.c.b16 %v3627, %v3626
      %v3640 = vpack.c.b16 %v3629, %v3628
      %v3641 = vpack.c.b16 %v3631, %v3630
      %v3642 = vpack.c.b16 %v3633, %v3632
      %v3643 = vpack.c.b16 %v3635, %v3634
      %v3668 = vunpack.c.l.b16 %v3597
      %v3669 = vunpack.c.l.b16 %v3598
      %v3670 = vunpack.c.l.b16 %v3599
      %v3671 = vunpack.c.l.b16 %v3600
      %v3672 = vunpack.c.l.b16 %v3601
      %v3673 = vunpack.c.l.b16 %v3602
      %v3674 = vunpack.c.l.b16 %v3603
      %v3675 = vunpack.c.l.b16 %v3604
      %v3676 = vunpack.c.l.b16 %v3605
      %v3677 = vunpack.c.l.b16 %v3606
      %v3678 = vunpack.c.l.b16 %v3607
      %v3679 = vunpack.c.l.b16 %v3608
      %v3680 = vunpack.c.l.b16 %v3609
      %v3681 = vunpack.c.l.b16 %v3610
      %v3682 = vunpack.c.l.b16 %v3611
      %v3683 = vunpack.c.l.b16 %v3612
      %v3684 = vpack.c.b16 %v3669, %v3668
      %v3685 = vpack.c.b16 %v3671, %v3670
      %v3686 = vpack.c.b16 %v3673, %v3672
      %v3687 = vpack.c.b16 %v3675, %v3674
      %v3688 = vpack.c.b16 %v3677, %v3676
      %v3689 = vpack.c.b16 %v3679, %v3678
      %v3690 = vpack.c.b16 %v3681, %v3680
      %v3691 = vpack.c.b16 %v3683, %v3682
      %3700 = vmatprep.subr.bf16.mxu0 0
      %3701 = vmatpush1.bf16.msra.mxu0 %v3691
      %3702 = vmatprep.subr.bf16.mxu0 0
      %3703 = vmatpush1.bf16.msra.mxu0 %v3690
      %3704 = vmatprep.subr.bf16.mxu0 0
      %3705 = vmatpush1.bf16.msra.mxu0 %v3689
      %3706 = vmatprep.subr.bf16.mxu0 0
      %3707 = vmatpush1.bf16.msra.mxu0 %v3688
      %3708 = vmatprep.subr.bf16.mxu0 0
      %3709 = vmatpush1.bf16.msra.mxu0 %v3687
      %3710 = vmatprep.subr.bf16.mxu0 0
      %3711 = vmatpush1.bf16.msra.mxu0 %v3686
      %3712 = vmatprep.subr.bf16.mxu0 0
      %3713 = vmatpush1.bf16.msra.mxu0 %v3685
      %3714 = vmatprep.subr.bf16.mxu0 0
      %3715 = vmatpush1.bf16.msra.mxu0 %v3684
      %3716 = vmatprep.subr.bf16.mxu0 0
      %3717 = vmatpush2.bf16.msra.mxu0 0
      %3718 = vmatprep.subr.bf16.mxu0 0
      %3719 = vmatpush2.bf16.msra.mxu0 0
      %3720 = vmatprep.subr.bf16.mxu0 0
      %3721 = vmatpush2.bf16.msra.mxu0 0
      %3722 = vmatprep.subr.bf16.mxu0 0
      %3723 = vmatpush2.bf16.msra.mxu0 0
      %3724 = vmatprep.subr.bf16.mxu0 0
      %3725 = vmatpush2.bf16.msra.mxu0 0
      %3726 = vmatprep.subr.bf16.mxu0 0
      %3727 = vmatpush2.bf16.msra.mxu0 0
      %3728 = vmatprep.subr.bf16.mxu0 0
      %3729 = vmatpush2.bf16.msra.mxu0 0
      %3730 = vmatprep.subr.bf16.mxu0 0
      %3731 = vmatpush2.bf16.msra.mxu0 0
      %3732 = vmatprep.mubr.bf16.mxu0 0
      %3733 = vmatmul.mubr.bf16.gmra.mxu0 %v3636
      %v3734 = vpop.f32.mrf.mxu0
      %v3735 = vadd.f32 %v3618, %v3734
      %v3736 = vpop.f32.mrf.mxu0
      %v3737 = vpop.f32.mrf.mxu0
      %v3738 = vadd.f32 %v3618, %v3737
      %v3739 = vpop.f32.mrf.mxu0
      %3740 = vmatprep.mubr.bf16.mxu0 0
      %3741 = vmatmul.mubr.bf16.gmra.mxu0 %v3637
      %v3742 = vpop.f32.mrf.mxu0
      %v3743 = vadd.f32 %v3618, %v3742
      %v3744 = vpop.f32.mrf.mxu0
      %v3745 = vpop.f32.mrf.mxu0
      %v3746 = vadd.f32 %v3618, %v3745
      %v3747 = vpop.f32.mrf.mxu0
      %3748 = vmatprep.mubr.bf16.mxu0 0
      %3749 = vmatmul.mubr.bf16.gmra.mxu0 %v3638
      %v3750 = vpop.f32.mrf.mxu0
      %v3751 = vadd.f32 %v3618, %v3750
      %v3752 = vpop.f32.mrf.mxu0
      %v3753 = vpop.f32.mrf.mxu0
      %v3754 = vadd.f32 %v3618, %v3753
      %v3755 = vpop.f32.mrf.mxu0
      %3756 = vmatprep.mubr.bf16.mxu0 0
      %3757 = vmatmul.mubr.bf16.gmra.mxu0 %v3639
      %v3758 = vpop.f32.mrf.mxu0
      %v3759 = vadd.f32 %v3618, %v3758
      %v3760 = vpop.f32.mrf.mxu0
      %v3761 = vpop.f32.mrf.mxu0
      %v3762 = vadd.f32 %v3618, %v3761
      %v3763 = vpop.f32.mrf.mxu0
      %3764 = vmatprep.mubr.bf16.mxu0 0
      %3765 = vmatmul.mubr.bf16.gmra.mxu0 %v3640
      %v3766 = vpop.f32.mrf.mxu0
      %v3767 = vadd.f32 %v3618, %v3766
      %v3768 = vpop.f32.mrf.mxu0
      %v3769 = vpop.f32.mrf.mxu0
      %v3770 = vadd.f32 %v3618, %v3769
      %v3771 = vpop.f32.mrf.mxu0
      %3772 = vmatprep.mubr.bf16.mxu0 0
      %3773 = vmatmul.mubr.bf16.gmra.mxu0 %v3641
      %v3774 = vpop.f32.mrf.mxu0
      %v3775 = vadd.f32 %v3618, %v3774
      %v3776 = vpop.f32.mrf.mxu0
      %v3777 = vpop.f32.mrf.mxu0
      %v3778 = vadd.f32 %v3618, %v3777
      %v3779 = vpop.f32.mrf.mxu0
      %3780 = vmatprep.mubr.bf16.mxu0 0
      %3781 = vmatmul.mubr.bf16.gmra.mxu0 %v3642
      %v3782 = vpop.f32.mrf.mxu0
      %v3783 = vadd.f32 %v3618, %v3782
      %v3784 = vpop.f32.mrf.mxu0
      %v3785 = vpop.f32.mrf.mxu0
      %v3786 = vadd.f32 %v3618, %v3785
      %v3787 = vpop.f32.mrf.mxu0
      %3788 = vmatprep.mubr.bf16.mxu0 0
      %3789 = vmatmul.mubr.bf16.gmra.mxu0 %v3643
      %v3790 = vpop.f32.mrf.mxu0
      %v3791 = vadd.f32 %v3618, %v3790
      %v3792 = vpop.f32.mrf.mxu0
      %v3793 = vpop.f32.mrf.mxu0
      %v3794 = vadd.f32 %v3618, %v3793
      %v3795 = vpop.f32.mrf.mxu0
      %3796 = vdwg.mxu0
      %v3797 = vadd.f32 %v3315, %v3735
      %v3798 = vadd.f32 %v3318, %v3738
      %v3799 = vadd.f32 %v3323, %v3743
      %v3800 = vadd.f32 %v3326, %v3746
      %v3801 = vadd.f32 %v3331, %v3751
      %v3802 = vadd.f32 %v3334, %v3754
      %v3803 = vadd.f32 %v3339, %v3759
      %v3804 = vadd.f32 %v3342, %v3762
      %v3805 = vadd.f32 %v3347, %v3767
      %v3806 = vadd.f32 %v3350, %v3770
      %v3807 = vadd.f32 %v3355, %v3775
      %v3808 = vadd.f32 %v3358, %v3778
      %v3809 = vadd.f32 %v3363, %v3783
      %v3810 = vadd.f32 %v3366, %v3786
      %v3811 = vadd.f32 %v3371, %v3791
      %v3812 = vadd.f32 %v3374, %v3794
      %v3813 = vmax.f32 %v3797, 0.0
      %v3814 = vmax.f32 %v3798, 0.0
      %v3815 = vmax.f32 %v3799, 0.0
      %v3816 = vmax.f32 %v3800, 0.0
      %v3817 = vmax.f32 %v3801, 0.0
      %v3818 = vmax.f32 %v3802, 0.0
      %v3819 = vmax.f32 %v3803, 0.0
      %v3820 = vmax.f32 %v3804, 0.0
      %v3821 = vmax.f32 %v3805, 0.0
      %v3822 = vmax.f32 %v3806, 0.0
      %v3823 = vmax.f32 %v3807, 0.0
      %v3824 = vmax.f32 %v3808, 0.0
      %v3825 = vmax.f32 %v3809, 0.0
      %v3826 = vmax.f32 %v3810, 0.0
      %v3827 = vmax.f32 %v3811, 0.0
      %v3828 = vmax.f32 %v3812, 0.0
      %3829 = vst [vmem:[%s356] sm:$0xff] %v3813
      %3830 = vst [vmem:[%s356 + $0x8] sm:$0xff] %v3814
      %3831 = vst [vmem:[%s356 + $0x10] sm:$0xff] %v3815
      %3832 = vst [vmem:[%s356 + $0x18] sm:$0xff] %v3816
      %3833 = vst [vmem:[%s356 + $0x20] sm:$0xff] %v3817
      %3834 = vst [vmem:[%s356 + $0x28] sm:$0xff] %v3818
      %3835 = vst [vmem:[%s356 + $0x30] sm:$0xff] %v3819
      %3836 = vst [vmem:[%s356 + $0x38] sm:$0xff] %v3820
      %3837 = vst [vmem:[%s356 + $0x40] sm:$0xff] %v3821
      %3838 = vst [vmem:[%s356 + $0x48] sm:$0xff] %v3822
      %3839 = vst [vmem:[%s356 + $0x50] sm:$0xff] %v3823
      %3840 = vst [vmem:[%s356 + $0x58] sm:$0xff] %v3824
      %3841 = vst [vmem:[%s356 + $0x60] sm:$0xff] %v3825
      %3842 = vst [vmem:[%s356 + $0x68] sm:$0xff] %v3826
      %3843 = vst [vmem:[%s356 + $0x70] sm:$0xff] %v3827
      %3844 = vst [vmem:[%s356 + $0x78] sm:$0xff] %v3828
      %s3845 = smul.u32 8, %s25
      %p3846 = scmp.lt.s32.totalorder %s24, 1
      %s3847 = scalar_select %p3846, %s24, 1
      %p3848 = scmp.lt.s32.totalorder %s3845, 15
      %s3849 = scalar_select %p3848, %s3845, 15
      %s3850 = smul.addr %s3849, 2
      %s3851 = smul.addr %s3847, 32
      %s3852 = sadd.s32 %s3850, %s3851
      %s3853 = smul.addr %s3852, 8
      %s3854 = scalar_lea.vmem %s9, %s3853
      // Predicated region
      $region65: #{bottleneck_forward.1} parent=55 // pred_check
        %p3855 = pneg %p246
      $region66: #{bottleneck_forward.1} parent=55 // pred_check_branch
        %3857 = sbr.rel (%p3855) target = $region68
      $region67: #{bottleneck_forward.1} parent=55 // pred_region
        %s3858 = smul.u32 8, %s25
      $region68: #{bottleneck_forward.1} parent=55 // pred_fallthru
        _
    $region56: #{bottleneck_forward.1} parent=5 // pred_fallthru
      _
    %p3859 = scmp.le.s32.totalorder 2, %s15
    // Predicated region
    $region69: #{bottleneck_forward.1} parent=5 // pred_check
      %p3860 = pneg %p3859
    $region70: #{bottleneck_forward.1} parent=5 // pred_check_branch
      %3862 = sbr.rel (%p3860) target = $region72
    $region71: #{bottleneck_forward.1} parent=5 // pred_region
      %s3863 = ssub.s32 %s15, 2
      // Predicated region
      $region73: #{bottleneck_forward.1} parent=71 // pred_check
        %p3864 = pneg %p252
      $region74: #{bottleneck_forward.1} parent=71 // pred_check_branch
        %3866 = sbr.rel (%p3864) target = $region76
      $region75: #{bottleneck_forward.1} parent=71 // pred_region
        %s3867 = smul.u32 8, %s27
        %p3868 = scmp.lt.s32.totalorder %s26, 1
        %s3869 = scalar_select %p3868, %s26, 1
        %p3870 = scmp.lt.s32.totalorder %s3867, 15
        %s3871 = scalar_select %p3870, %s3867, 15
        %s3872 = smul.addr %s3871, 2
        %s3873 = smul.addr %s3869, 32
        %s3874 = sadd.s32 %s3872, %s3873
        %s3875 = smul.addr %s3874, 8
        %s3876 = scalar_lea.vmem %s9, %s3875
      $region76: #{bottleneck_forward.1} parent=71 // pred_fallthru
        _
    $region72: #{bottleneck_forward.1} parent=5 // pred_fallthru
      _
  $region6: #{bottleneck_forward.1} parent=0 // loop_footer
    %s19 = sadd.s32 1, %s15
  $region7: #{bottleneck_forward.1} parent=0 // loop_footer_branch
    %14 = sbr.rel target = $region3
  $region8: #{bottleneck_forward.1} parent=0 // loop_exit
    _

// kernel: bottleneck_forward.1
$region0: #{bottleneck_forward.1}
  #allocation0 [shape = 'u32[]', space=smem, size = 0x4, offset = 0x4, fixed_abs, tag = 'smem constant byte address 0x4 - core index']
  #allocation1 [shape = 'u32[144,128]{1,0:T(1,128)}', space=vmem, size = 0x12000, scoped, tag = 'internal scratch']
  #allocation2 [shape = 'bf16[10,24,128]{2,1,0:T(8,128)(2,1)}', space=vmem, size = 0xf000, scoped, tag = 'scratch operand']
  #allocation3 [shape = 'bf16[10,16,384]{2,1,0:T(8,128)(2,1)}', space=vmem, size = 0x1e000, scoped, tag = 'scratch operand']
  %s0 = inlined_call_operand.vmem [shape: bf16[2,18,24,128], index: 0, kind: input, shape index: {}]
  %s1 = inlined_call_operand.vmem [shape: bf16[128,128], index: 1, kind: input, shape index: {}]
  %s2 = inlined_call_operand.vmem [shape: f32[1,128], index: 2, kind: input, shape index: {}]
  %s3 = inlined_call_operand.vmem [shape: bf16[3,384,128], index: 3, kind: input, shape index: {}]
  %s4 = inlined_call_operand.vmem [shape: f32[1,128], index: 4, kind: input, shape index: {}]
  %s5 = inlined_call_operand.vmem [shape: bf16[128,128], index: 5, kind: input, shape index: {}]
  %s6 = inlined_call_operand.vmem [shape: f32[1,128], index: 6, kind: input, shape index: {}]
  %s7 = inlined_call_operand.vmem [shape: bf16[128,128], index: 7, kind: input, shape index: {}]
  %s8 = inlined_call_operand.vmem [shape: f32[1,128], index: 8, kind: input, shape index: {}]
  %s9 = inlined_call_operand.vmem [shape: f32[2,16,16,128], index: 9, kind: output, shape index: {}]
  %s10 = sld [smem:[#allocation0]]
  $region77: #{bottleneck_forward.1} parent=0
    _
  %s12 = ssub.s32 1, %s10
  %s13 = scalar_select 0, %s12, %s10
  loop: start=0, step=1, limit=6
  $region2: #{bottleneck_forward.1} parent=0 // loop_pre_header
    _
  $region3: #{bottleneck_forward.1} parent=0 // loop_header
    %s15 = sphi 0, %s19
    %p16 = scmp.ge.s32.totalorder %s15, 6
    %s22 = sphi 0, %s34
    %s23 = sphi 0, %s30
    %s24 = sphi 0, %s22
    %s25 = sphi 0, %s23
    %s26 = sphi 0, %s24
    %s27 = sphi 0, %s25
    %s37 = sphi 0, %s39
    %s40 = sphi 0, %s37
    %s41 = sphi 0, %s40
    %s57 = sphi 0, %s41
    %s61 = sphi 0, %s61
    %s63 = sphi 0, %s61
    %s64 = sphi 0, %s63
    %s78 = sphi 0, %s64
    %s82 = sphi 0, %s82
    %s84 = sphi 0, %s82
    %s85 = sphi 0, %s84
    %s99 = sphi 0, %s85
    %s103 = sphi 0, %s103
    %s105 = sphi 0, %s103
    %s106 = sphi 0, %s105
    %s120 = sphi 0, %s106
    %s124 = sphi 0, %s124
    %s126 = sphi 0, %s124
    %s127 = sphi 0, %s126
    %s141 = sphi 0, %s127
    %s145 = sphi 0, %s145
    %s147 = sphi 0, %s145
    %s148 = sphi 0, %s147
    %s162 = sphi 0, %s148
    %s166 = sphi 0, %s166
    %s168 = sphi 0, %s166
    %s169 = sphi 0, %s168
    %s183 = sphi 0, %s169
    %s187 = sphi 0, %s187
    %s189 = sphi 0, %s187
    %s190 = sphi 0, %s189
    %s204 = sphi 0, %s190
    %s208 = sphi 0, %s208
    %s210 = sphi 0, %s208
    %s211 = sphi 0, %s210
    %s225 = sphi 0, %s211
    %s233 = sphi 0, %s235
    %s236 = sphi 0, %s233
    %s237 = sphi 0, %s236
    %s253 = sphi 0, %s237
  $region4: #{bottleneck_forward.1} parent=0 // loop_header_branch
    %18 = sbr.rel (%p16) target = $region8
  $region5: #{bottleneck_forward.1} parent=0 // loop_body
    %s20 = ssub.s32 %s15, 1
    %s21 = ssub.s32 %s15, 2
    %s28 = sadd.s32 1, %s23
    %p29 = scmp.ge.s32.totalorder %s28, 2
    %s30 = scalar_select %p29, 0, %s28
    %s31 = sadd.s32 1, %s22
    %s32 = scalar_select %p29, %s31, %s22
    %p33 = scmp.ge.s32.totalorder %s32, 2
    %s34 = scalar_select %p33, 0, %s32
    %s35 = ssub.s32 %s22, %s34
    %p36 = scmp.eq.s32.totalorder %s35, 0
    %s38 = sadd.s32 %s37, 1
    %s39 = scalar_select %p36, %s37, %s38
    %p42 = pneg %p36
    %p43 = scmp.eq.s32.totalorder %s15, 3
    %p44 = por %p42, %p43
    %p45 = scmp.ne.s32.totalorder %s37, %s40
    %p46 = scmp.eq.s32.totalorder %s15, 0
    %p47 = por %p45, %p46
    %p48 = scmp.ne.s32.totalorder %s37, %s40
    %p49 = scmp.eq.s32.totalorder %s20, 3
    %p50 = por %p48, %p49
    %p51 = scmp.ne.s32.totalorder %s40, %s41
    %p52 = scmp.eq.s32.totalorder %s20, 0
    %p53 = por %p51, %p52
    %p54 = scmp.ne.s32.totalorder %s40, %s41
    %p55 = scmp.eq.s32.totalorder %s21, 3
    %p56 = por %p54, %p55
    %p58 = scmp.ne.s32.totalorder %s41, %s57
    %p59 = scmp.eq.s32.totalorder %s21, 0
    %p60 = por %p58, %p59
    %s62 = sadd.s32 %s61, 1
    %p65 = scmp.eq.s32.totalorder %s15, 3
    %p66 = scmp.ne.s32.totalorder %s61, %s63
    %p67 = scmp.eq.s32.totalorder %s15, 0
    %p68 = por %p66, %p67
    %p69 = scmp.ne.s32.totalorder %s61, %s63
    %p70 = scmp.eq.s32.totalorder %s20, 3
    %p71 = por %p69, %p70
    %p72 = scmp.ne.s32.totalorder %s63, %s64
    %p73 = scmp.eq.s32.totalorder %s20, 0
    %p74 = por %p72, %p73
    %p75 = scmp.ne.s32.totalorder %s63, %s64
    %p76 = scmp.eq.s32.totalorder %s21, 3
    %p77 = por %p75, %p76
    %p79 = scmp.ne.s32.totalorder %s64, %s78
    %p80 = scmp.eq.s32.totalorder %s21, 0
    %p81 = por %p79, %p80
    %s83 = sadd.s32 %s82, 1
    %p86 = scmp.eq.s32.totalorder %s15, 3
    %p87 = scmp.ne.s32.totalorder %s82, %s84
    %p88 = scmp.eq.s32.totalorder %s15, 0
    %p89 = por %p87, %p88
    %p90 = scmp.ne.s32.totalorder %s82, %s84
    %p91 = scmp.eq.s32.totalorder %s20, 3
    %p92 = por %p90, %p91
    %p93 = scmp.ne.s32.totalorder %s84, %s85
    %p94 = scmp.eq.s32.totalorder %s20, 0
    %p95 = por %p93, %p94
    %p96 = scmp.ne.s32.totalorder %s84, %s85
    %p97 = scmp.eq.s32.totalorder %s21, 3
    %p98 = por %p96, %p97
    %p100 = scmp.ne.s32.totalorder %s85, %s99
    %p101 = scmp.eq.s32.totalorder %s21, 0
    %p102 = por %p100, %p101
    %s104 = sadd.s32 %s103, 1
    %p107 = scmp.eq.s32.totalorder %s15, 3
    %p108 = scmp.ne.s32.totalorder %s103, %s105
    %p109 = scmp.eq.s32.totalorder %s15, 0
    %p110 = por %p108, %p109
    %p111 = scmp.ne.s32.totalorder %s103, %s105
    %p112 = scmp.eq.s32.totalorder %s20, 3
    %p113 = por %p111, %p112
    %p114 = scmp.ne.s32.totalorder %s105, %s106
    %p115 = scmp.eq.s32.totalorder %s20, 0
    %p116 = por %p114, %p115
    %p117 = scmp.ne.s32.totalorder %s105, %s106
    %p118 = scmp.eq.s32.totalorder %s21, 3
    %p119 = por %p117, %p118
    %p121 = scmp.ne.s32.totalorder %s106, %s120
    %p122 = scmp.eq.s32.totalorder %s21, 0
    %p123 = por %p121, %p122
    %s125 = sadd.s32 %s124, 1
    %p128 = scmp.eq.s32.totalorder %s15, 3
    %p129 = scmp.ne.s32.totalorder %s124, %s126
    %p130 = scmp.eq.s32.totalorder %s15, 0
    %p131 = por %p129, %p130
    %p132 = scmp.ne.s32.totalorder %s124, %s126
    %p133 = scmp.eq.s32.totalorder %s20, 3
    %p134 = por %p132, %p133
    %p135 = scmp.ne.s32.totalorder %s126, %s127
    %p136 = scmp.eq.s32.totalorder %s20, 0
    %p137 = por %p135, %p136
    %p138 = scmp.ne.s32.totalorder %s126, %s127
    %p139 = scmp.eq.s32.totalorder %s21, 3
    %p140 = por %p138, %p139
    %p142 = scmp.ne.s32.totalorder %s127, %s141
    %p143 = scmp.eq.s32.totalorder %s21, 0
    %p144 = por %p142, %p143
    %s146 = sadd.s32 %s145, 1
    %p149 = scmp.eq.s32.totalorder %s15, 3
    %p150 = scmp.ne.s32.totalorder %s145, %s147
    %p151 = scmp.eq.s32.totalorder %s15, 0
    %p152 = por %p150, %p151
    %p153 = scmp.ne.s32.totalorder %s145, %s147
    %p154 = scmp.eq.s32.totalorder %s20, 3
    %p155 = por %p153, %p154
    %p156 = scmp.ne.s32.totalorder %s147, %s148
    %p157 = scmp.eq.s32.totalorder %s20, 0
    %p158 = por %p156, %p157
    %p159 = scmp.ne.s32.totalorder %s147, %s148
    %p160 = scmp.eq.s32.totalorder %s21, 3
    %p161 = por %p159, %p160
    %p163 = scmp.ne.s32.totalorder %s148, %s162
    %p164 = scmp.eq.s32.totalorder %s21, 0
    %p165 = por %p163, %p164
    %s167 = sadd.s32 %s166, 1
    %p170 = scmp.eq.s32.totalorder %s15, 3
    %p171 = scmp.ne.s32.totalorder %s166, %s168
    %p172 = scmp.eq.s32.totalorder %s15, 0
    %p173 = por %p171, %p172
    %p174 = scmp.ne.s32.totalorder %s166, %s168
    %p175 = scmp.eq.s32.totalorder %s20, 3
    %p176 = por %p174, %p175
    %p177 = scmp.ne.s32.totalorder %s168, %s169
    %p178 = scmp.eq.s32.totalorder %s20, 0
    %p179 = por %p177, %p178
    %p180 = scmp.ne.s32.totalorder %s168, %s169
    %p181 = scmp.eq.s32.totalorder %s21, 3
    %p182 = por %p180, %p181
    %p184 = scmp.ne.s32.totalorder %s169, %s183
    %p185 = scmp.eq.s32.totalorder %s21, 0
    %p186 = por %p184, %p185
    %s188 = sadd.s32 %s187, 1
    %p191 = scmp.eq.s32.totalorder %s15, 3
    %p192 = scmp.ne.s32.totalorder %s187, %s189
    %p193 = scmp.eq.s32.totalorder %s15, 0
    %p194 = por %p192, %p193
    %p195 = scmp.ne.s32.totalorder %s187, %s189
    %p196 = scmp.eq.s32.totalorder %s20, 3
    %p197 = por %p195, %p196
    %p198 = scmp.ne.s32.totalorder %s189, %s190
    %p199 = scmp.eq.s32.totalorder %s20, 0
    %p200 = por %p198, %p199
    %p201 = scmp.ne.s32.totalorder %s189, %s190
    %p202 = scmp.eq.s32.totalorder %s21, 3
    %p203 = por %p201, %p202
    %p205 = scmp.ne.s32.totalorder %s190, %s204
    %p206 = scmp.eq.s32.totalorder %s21, 0
    %p207 = por %p205, %p206
    %s209 = sadd.s32 %s208, 1
    %p212 = scmp.eq.s32.totalorder %s15, 3
    %p213 = scmp.ne.s32.totalorder %s208, %s210
    %p214 = scmp.eq.s32.totalorder %s15, 0
    %p215 = por %p213, %p214
    %p216 = scmp.ne.s32.totalorder %s208, %s210
    %p217 = scmp.eq.s32.totalorder %s20, 3
    %p218 = por %p216, %p217
    %p219 = scmp.ne.s32.totalorder %s210, %s211
    %p220 = scmp.eq.s32.totalorder %s20, 0
    %p221 = por %p219, %p220
    %p222 = scmp.ne.s32.totalorder %s210, %s211
    %p223 = scmp.eq.s32.totalorder %s21, 3
    %p224 = por %p222, %p223
    %p226 = scmp.ne.s32.totalorder %s211, %s225
    %p227 = scmp.eq.s32.totalorder %s21, 0
    %p228 = por %p226, %p227
    %s229 = ssub.s32 %s22, %s34
    %s230 = ssub.s32 %s23, %s30
    %s231 = sor.u32 %s229, %s230
    %p232 = scmp.eq.s32.totalorder %s231, 0
    %s234 = sadd.s32 %s233, 1
    %s235 = scalar_select %p232, %s233, %s234
    %p238 = pneg %p232
    %p239 = scmp.eq.s32.totalorder %s15, 3
    %p240 = por %p238, %p239
    %p241 = scmp.ne.s32.totalorder %s233, %s236
    %p242 = scmp.eq.s32.totalorder %s15, 0
    %p243 = por %p241, %p242
    %p244 = scmp.ne.s32.totalorder %s233, %s236
    %p245 = scmp.eq.s32.totalorder %s20, 3
    %p246 = por %p244, %p245
    %p247 = scmp.ne.s32.totalorder %s236, %s237
    %p248 = scmp.eq.s32.totalorder %s20, 0
    %p249 = por %p247, %p248
    %p250 = scmp.ne.s32.totalorder %s236, %s237
    %p251 = scmp.eq.s32.totalorder %s21, 3
    %p252 = por %p250, %p251
    %p254 = scmp.ne.s32.totalorder %s237, %s253
    %p255 = scmp.eq.s32.totalorder %s21, 0
    %p256 = por %p254, %p255
    %p257 = scmp.le.s32.totalorder 1, %s15
    %p258 = scmp.lt.s32.totalorder %s15, 5
    %p259 = pnand %p257, %p258
    %p260 = pneg %p259
    // Predicated region
    $region9: #{bottleneck_forward.1} parent=5 // pred_check
      _
    $region10: #{bottleneck_forward.1} parent=5 // pred_check_branch
      %262 = sbr.rel (%p259) target = $region12
    $region11: #{bottleneck_forward.1} parent=5 // pred_region
      %s263 = ssub.s32 %s15, 1
      // Predicated region
      $region13: #{bottleneck_forward.1} parent=11 // pred_check
        %p264 = pneg %p74
      $region14: #{bottleneck_forward.1} parent=11 // pred_check_branch
        %266 = sbr.rel (%p264) target = $region16
      $region15: #{bottleneck_forward.1} parent=11 // pred_region
        _
      $region16: #{bottleneck_forward.1} parent=11 // pred_fallthru
        _
      // Predicated region
      $region17: #{bottleneck_forward.1} parent=11 // pred_check
        %p267 = pneg %p95
      $region18: #{bottleneck_forward.1} parent=11 // pred_check_branch
        %269 = sbr.rel (%p267) target = $region20
      $region19: #{bottleneck_forward.1} parent=11 // pred_region
        _
      $region20: #{bottleneck_forward.1} parent=11 // pred_fallthru
        _
      // Predicated region
      $region21: #{bottleneck_forward.1} parent=11 // pred_check
        %p270 = pneg %p116
      $region22: #{bottleneck_forward.1} parent=11 // pred_check_branch
        %272 = sbr.rel (%p270) target = $region24
      $region23: #{bottleneck_forward.1} parent=11 // pred_region
        _
      $region24: #{bottleneck_forward.1} parent=11 // pred_fallthru
        _
      // Predicated region
      $region25: #{bottleneck_forward.1} parent=11 // pred_check
        %p273 = pneg %p137
      $region26: #{bottleneck_forward.1} parent=11 // pred_check_branch
        %275 = sbr.rel (%p273) target = $region28
      $region27: #{bottleneck_forward.1} parent=11 // pred_region
        _
      $region28: #{bottleneck_forward.1} parent=11 // pred_fallthru
        _
      // Predicated region
      $region29: #{bottleneck_forward.1} parent=11 // pred_check
        %p276 = pneg %p158
      $region30: #{bottleneck_forward.1} parent=11 // pred_check_branch
        %278 = sbr.rel (%p276) target = $region32
      $region31: #{bottleneck_forward.1} parent=11 // pred_region
        _
      $region32: #{bottleneck_forward.1} parent=11 // pred_fallthru
        _
      // Predicated region
      $region33: #{bottleneck_forward.1} parent=11 // pred_check
        %p279 = pneg %p179
      $region34: #{bottleneck_forward.1} parent=11 // pred_check_branch
        %281 = sbr.rel (%p279) target = $region36
      $region35: #{bottleneck_forward.1} parent=11 // pred_region
        _
      $region36: #{bottleneck_forward.1} parent=11 // pred_fallthru
        _
      // Predicated region
      $region37: #{bottleneck_forward.1} parent=11 // pred_check
        %p282 = pneg %p200
      $region38: #{bottleneck_forward.1} parent=11 // pred_check_branch
        %284 = sbr.rel (%p282) target = $region40
      $region39: #{bottleneck_forward.1} parent=11 // pred_region
        _
      $region40: #{bottleneck_forward.1} parent=11 // pred_fallthru
        _
      // Predicated region
      $region41: #{bottleneck_forward.1} parent=11 // pred_check
        %p285 = pneg %p221
      $region42: #{bottleneck_forward.1} parent=11 // pred_check_branch
        %287 = sbr.rel (%p285) target = $region44
      $region43: #{bottleneck_forward.1} parent=11 // pred_region
        _
      $region44: #{bottleneck_forward.1} parent=11 // pred_fallthru
        _
    $region12: #{bottleneck_forward.1} parent=5 // pred_fallthru
      _
    %p288 = scmp.lt.s32.totalorder %s15, 4
    // Predicated region
    $region45: #{bottleneck_forward.1} parent=5 // pred_check
      %p289 = pneg %p288
    $region46: #{bottleneck_forward.1} parent=5 // pred_check_branch
      %291 = sbr.rel (%p289) target = $region48
    $region47: #{bottleneck_forward.1} parent=5 // pred_region
      // Predicated region
      $region49: #{bottleneck_forward.1} parent=47 // pred_check
        %p292 = pneg %p47
      $region50: #{bottleneck_forward.1} parent=47 // pred_check_branch
        %294 = sbr.rel (%p292) target = $region52
      $region51: #{bottleneck_forward.1} parent=47 // pred_region
        %p295 = scmp.lt.s32.totalorder %s22, 1
        %s296 = scalar_select %p295, %s22, 1
        %s297 = smul.addr %s296, 54
        %s298 = smul.addr %s297, 4
        %s299 = scalar_lea.vmem %s0, %s298
      $region52: #{bottleneck_forward.1} parent=47 // pred_fallthru
        _
    $region48: #{bottleneck_forward.1} parent=5 // pred_fallthru
      _
    %p300 = scmp.le.s32.totalorder 1, %s15
    %p301 = scmp.lt.s32.totalorder %s15, 5
    %p302 = pnand %p300, %p301
    %p303 = pneg %p302
    // Predicated region
    $region53: #{bottleneck_forward.1} parent=5 // pred_check
      _
    $region54: #{bottleneck_forward.1} parent=5 // pred_check_branch
      %305 = sbr.rel (%p302) target = $region56
    $region55: #{bottleneck_forward.1} parent=5 // pred_region
      %s306 = ssub.s32 %s15, 1
      %p307 = scmp.lt.s32.totalorder %s24, 1
      %s308 = scalar_select %p307, %s24, 1
      %s309 = smul.addr %s308, 54
      %s310 = smul.addr %s309, 4
      %s311 = scalar_lea.vmem %s0, %s310
      %p312 = pneg %p53
      %p313 = pneg %p50
      %p314 = pneg %p74
      %p315 = pneg %p71
      %p316 = pneg %p95
      %p317 = pneg %p92
      %p318 = pneg %p116
      %p319 = pneg %p113
      %p320 = pneg %p137
      %p321 = pneg %p134
      %p322 = pneg %p158
      %p323 = pneg %p155
      %p324 = pneg %p179
      %p325 = pneg %p176
      %p326 = pneg %p200
      %p327 = pneg %p197
      %p328 = pneg %p221
      %p329 = pneg %p218
      %p330 = pneg %p249
      %p331 = pneg %p246
      %s332 = smul.u32 8, %s25
      %p333 = scmp.lt.s32.totalorder %s24, 1
      %s334 = scalar_select %p333, %s24, 1
      %p335 = scmp.lt.s32.totalorder %s332, 15
      %s336 = scalar_select %p335, %s332, 15
      %s337 = smul.addr %s336, 2
      %s338 = smul.addr %s334, 32
      %s339 = sadd.s32 %s337, %s338
      %s340 = smul.addr %s339, 8
      %s341 = scalar_lea.vmem %s9, %s340
      %p342 = scmp.lt.s32.totalorder %s24, 1
      %s343 = scalar_select %p342, %s24, 1
      %s344 = smul.addr %s343, 54
      %s345 = smul.addr %s344, 4
      %s346 = scalar_lea.vmem %s0, %s345
      %s347 = smul.u32 8, %s25
      %p348 = scmp.lt.s32.totalorder %s24, 1
      %s349 = scalar_select %p348, %s24, 1
      %p350 = scmp.lt.s32.totalorder %s347, 15
      %s351 = scalar_select %p350, %s347, 15
      %s352 = smul.addr %s351, 2
      %s353 = smul.addr %s349, 32
      %s354 = sadd.s32 %s352, %s353
      %s355 = smul.addr %s354, 8
      %s356 = scalar_lea.vmem %s9, %s355
      %s357 = smul.u32 8, %s25
      %s359 = smul.u32 %s25, 8
      %s360 = smul.u32 %s359, 3
      %s361 = smul.addr %s360, 4
      %s362 = scalar_lea.vmem %s346, %s361
      %v363 = vld [vmem:[%s362] sm:$0xf]
      %v364 = vld [vmem:[%s362 + $0x4] sm:$0xf]
      %v365 = vld [vmem:[%s362 + $0x8] sm:$0xf]
      %v366 = vld [vmem:[%s362 + $0xc] sm:$0xf]
      %v367 = vld [vmem:[%s362 + $0x10] sm:$0xf]
      %v368 = vld [vmem:[%s362 + $0x14] sm:$0xf]
      %v369 = vld [vmem:[%s362 + $0x18] sm:$0xf]
      %v370 = vld [vmem:[%s362 + $0x1c] sm:$0xf]
      %v371 = vld [vmem:[%s362 + $0x20] sm:$0xf]
      %v372 = vld [vmem:[%s362 + $0x24] sm:$0xf]
      %v373 = vld [vmem:[%s362 + $0x28] sm:$0xf]
      %v374 = vld [vmem:[%s362 + $0x2c] sm:$0xf]
      %v375 = vld [vmem:[%s362 + $0x30] sm:$0xf]
      %v376 = vld [vmem:[%s362 + $0x34] sm:$0xf]
      %v377 = vld [vmem:[%s362 + $0x38] sm:$0xf]
      %v378 = vld [vmem:[%s362 + $0x3c] sm:$0xf]
      %v379 = vld [vmem:[%s362 + $0x40] sm:$0xf]
      %v380 = vld [vmem:[%s362 + $0x44] sm:$0xf]
      %v381 = vld [vmem:[%s362 + $0x48] sm:$0xf]
      %v382 = vld [vmem:[%s362 + $0x4c] sm:$0xf]
      %v383 = vld [vmem:[%s362 + $0x50] sm:$0xf]
      %v384 = vld [vmem:[%s362 + $0x54] sm:$0xf]
      %v385 = vld [vmem:[%s362 + $0x58] sm:$0xf]
      %v386 = vld [vmem:[%s362 + $0x5c] sm:$0xf]
      %v387 = vld [vmem:[%s362 + $0x60] sm:$0xf]
      %v388 = vld [vmem:[%s362 + $0x64] sm:$0xf]
      %v389 = vld [vmem:[%s362 + $0x68] sm:$0xf]
      %v390 = vld [vmem:[%s362 + $0x6c] sm:$0xf]
      %v391 = vld [vmem:[%s362 + $0x70] sm:$0xf]
      %v392 = vld [vmem:[%s362 + $0x74] sm:$0xf]
      %v393 = vld [vmem:[%s1] sm:$0xf]
      %v394 = vld [vmem:[%s1 + $0x4] sm:$0xf]
      %v395 = vld [vmem:[%s1 + $0x8] sm:$0xf]
      %v396 = vld [vmem:[%s1 + $0xc] sm:$0xf]
      %v397 = vld [vmem:[%s1 + $0x10] sm:$0xf]
      %v398 = vld [vmem:[%s1 + $0x14] sm:$0xf]
      %v399 = vld [vmem:[%s1 + $0x18] sm:$0xf]
      %v400 = vld [vmem:[%s1 + $0x1c] sm:$0xf]
      %v401 = vld [vmem:[%s1 + $0x20] sm:$0xf]
      %v402 = vld [vmem:[%s1 + $0x24] sm:$0xf]
      %v403 = vld [vmem:[%s1 + $0x28] sm:$0xf]
      %v404 = vld [vmem:[%s1 + $0x2c] sm:$0xf]
      %v405 = vld [vmem:[%s1 + $0x30] sm:$0xf]
      %v406 = vld [vmem:[%s1 + $0x34] sm:$0xf]
      %v407 = vld [vmem:[%s1 + $0x38] sm:$0xf]
      %v408 = vld [vmem:[%s1 + $0x3c] sm:$0xf]
      %v409 = vld [vmem:[%s2] sm:$0x1]
      %v411 = vlaneseq
      %v412 = vshrl.u32 %v411, 7
      %v413 = vsub.s32 0, %v412
      %v414 = vrot.slane %v409, %v413
      %v446 = vunpack.c.l.b16 %v363
      %v447 = vunpack.c.l.b16 %v364
      %v448 = vunpack.c.l.b16 %v365
      %v449 = vunpack.c.l.b16 %v366
      %v450 = vunpack.c.l.b16 %v367
      %v451 = vunpack.c.l.b16 %v368
      %v452 = vunpack.c.l.b16 %v369
      %v453 = vunpack.c.l.b16 %v370
      %v454 = vunpack.c.l.b16 %v371
      %v455 = vunpack.c.l.b16 %v372
      %v456 = vunpack.c.l.b16 %v373
      %v457 = vunpack.c.l.b16 %v374
      %v458 = vunpack.c.l.b16 %v375
      %v459 = vunpack.c.l.b16 %v376
      %v460 = vunpack.c.l.b16 %v377
      %v461 = vunpack.c.l.b16 %v378
      %v462 = vunpack.c.l.b16 %v379
      %v463 = vunpack.c.l.b16 %v380
      %v464 = vunpack.c.l.b16 %v381
      %v465 = vunpack.c.l.b16 %v382
      %v466 = vunpack.c.l.b16 %v383
      %v467 = vunpack.c.l.b16 %v384
      %v468 = vunpack.c.l.b16 %v385
      %v469 = vunpack.c.l.b16 %v386
      %v470 = vunpack.c.l.b16 %v387
      %v471 = vunpack.c.l.b16 %v388
      %v472 = vunpack.c.l.b16 %v389
      %v473 = vunpack.c.l.b16 %v390
      %v474 = vunpack.c.l.b16 %v391
      %v475 = vunpack.c.l.b16 %v392
      %v476 = vpack.c.b16 %v447, %v446
      %v477 = vpack.c.b16 %v449, %v448
      %v478 = vpack.c.b16 %v451, %v450
      %v479 = vpack.c.b16 %v453, %v452
      %v480 = vpack.c.b16 %v455, %v454
      %v481 = vpack.c.b16 %v457, %v456
      %v482 = vpack.c.b16 %v459, %v458
      %v483 = vpack.c.b16 %v461, %v460
      %v484 = vpack.c.b16 %v463, %v462
      %v485 = vpack.c.b16 %v465, %v464
      %v486 = vpack.c.b16 %v467, %v466
      %v487 = vpack.c.b16 %v469, %v468
      %v488 = vpack.c.b16 %v471, %v470
      %v489 = vpack.c.b16 %v473, %v472
      %v490 = vpack.c.b16 %v475, %v474
      %v522 = vunpack.c.l.b16 %v393
      %v523 = vunpack.c.l.b16 %v394
      %v524 = vunpack.c.l.b16 %v395
      %v525 = vunpack.c.l.b16 %v396
      %v526 = vunpack.c.l.b16 %v397
      %v527 = vunpack.c.l.b16 %v398
      %v528 = vunpack.c.l.b16 %v399
      %v529 = vunpack.c.l.b16 %v400
      %v530 = vunpack.c.l.b16 %v401
      %v531 = vunpack.c.l.b16 %v402
      %v532 = vunpack.c.l.b16 %v403
      %v533 = vunpack.c.l.b16 %v404
      %v534 = vunpack.c.l.b16 %v405
      %v535 = vunpack.c.l.b16 %v406
      %v536 = vunpack.c.l.b16 %v407
      %v537 = vunpack.c.l.b16 %v408
      %v538 = vpack.c.b16 %v523, %v522
      %v539 = vpack.c.b16 %v525, %v524
      %v540 = vpack.c.b16 %v527, %v526
      %v541 = vpack.c.b16 %v529, %v528
      %v542 = vpack.c.b16 %v531, %v530
      %v543 = vpack.c.b16 %v533, %v532
      %v544 = vpack.c.b16 %v535, %v534
      %v545 = vpack.c.b16 %v537, %v536
      %554 = vmatprep.subr.bf16.mxu0 0
      %555 = vmatpush1.bf16.msra.mxu0 %v545
      %556 = vmatprep.subr.bf16.mxu0 0
      %557 = vmatpush1.bf16.msra.mxu0 %v544
      %558 = vmatprep.subr.bf16.mxu0 0
      %559 = vmatpush1.bf16.msra.mxu0 %v543
      %560 = vmatprep.subr.bf16.mxu0 0
      %561 = vmatpush1.bf16.msra.mxu0 %v542
      %562 = vmatprep.subr.bf16.mxu0 0
      %563 = vmatpush1.bf16.msra.mxu0 %v541
      %564 = vmatprep.subr.bf16.mxu0 0
      %565 = vmatpush1.bf16.msra.mxu0 %v540
      %566 = vmatprep.subr.bf16.mxu0 0
      %567 = vmatpush1.bf16.msra.mxu0 %v539
      %568 = vmatprep.subr.bf16.mxu0 0
      %569 = vmatpush1.bf16.msra.mxu0 %v538
      %570 = vmatprep.subr.bf16.mxu0 0
      %571 = vmatpush2.bf16.msra.mxu0 0
      %572 = vmatprep.subr.bf16.mxu0 0
      %573 = vmatpush2.bf16.msra.mxu0 0
      %574 = vmatprep.subr.bf16.mxu0 0
      %575 = vmatpush2.bf16.msra.mxu0 0
      %576 = vmatprep.subr.bf16.mxu0 0
      %577 = vmatpush2.bf16.msra.mxu0 0
      %578 = vmatprep.subr.bf16.mxu0 0
      %579 = vmatpush2.bf16.msra.mxu0 0
      %580 = vmatprep.subr.bf16.mxu0 0
      %581 = vmatpush2.bf16.msra.mxu0 0
      %582 = vmatprep.subr.bf16.mxu0 0
      %583 = vmatpush2.bf16.msra.mxu0 0
      %584 = vmatprep.subr.bf16.mxu0 0
      %585 = vmatpush2.bf16.msra.mxu0 0
      %586 = vmatprep.mubr.bf16.mxu0 0
      %587 = vmatmul.mubr.bf16.gmra.mxu0 %v476
      %v588 = vpop.f32.mrf.mxu0
      %v589 = vadd.f32 %v414, %v588
      %v590 = vpop.f32.mrf.mxu0
      %v591 = vpop.f32.mrf.mxu0
      %v592 = vadd.f32 %v414, %v591
      %v593 = vpop.f32.mrf.mxu0
      %594 = vmatprep.mubr.bf16.mxu0 0
      %595 = vmatmul.mubr.bf16.gmra.mxu0 %v477
      %v596 = vpop.f32.mrf.mxu0
      %v597 = vadd.f32 %v414, %v596
      %v598 = vpop.f32.mrf.mxu0
      %v599 = vpop.f32.mrf.mxu0
      %v600 = vadd.f32 %v414, %v599
      %v601 = vpop.f32.mrf.mxu0
      %602 = vmatprep.mubr.bf16.mxu0 0
      %603 = vmatmul.mubr.bf16.gmra.mxu0 %v478
      %v604 = vpop.f32.mrf.mxu0
      %v605 = vadd.f32 %v414, %v604
      %v606 = vpop.f32.mrf.mxu0
      %v607 = vpop.f32.mrf.mxu0
      %v608 = vadd.f32 %v414, %v607
      %v609 = vpop.f32.mrf.mxu0
      %610 = vmatprep.mubr.bf16.mxu0 0
      %611 = vmatmul.mubr.bf16.gmra.mxu0 %v479
      %v612 = vpop.f32.mrf.mxu0
      %v613 = vadd.f32 %v414, %v612
      %v614 = vpop.f32.mrf.mxu0
      %v615 = vpop.f32.mrf.mxu0
      %v616 = vadd.f32 %v414, %v615
      %v617 = vpop.f32.mrf.mxu0
      %618 = vmatprep.mubr.bf16.mxu0 0
      %619 = vmatmul.mubr.bf16.gmra.mxu0 %v480
      %v620 = vpop.f32.mrf.mxu0
      %v621 = vadd.f32 %v414, %v620
      %v622 = vpop.f32.mrf.mxu0
      %v623 = vpop.f32.mrf.mxu0
      %v624 = vadd.f32 %v414, %v623
      %v625 = vpop.f32.mrf.mxu0
      %626 = vmatprep.mubr.bf16.mxu0 0
      %627 = vmatmul.mubr.bf16.gmra.mxu0 %v481
      %v628 = vpop.f32.mrf.mxu0
      %v629 = vadd.f32 %v414, %v628
      %v630 = vpop.f32.mrf.mxu0
      %v631 = vpop.f32.mrf.mxu0
      %v632 = vadd.f32 %v414, %v631
      %v633 = vpop.f32.mrf.mxu0
      %634 = vmatprep.mubr.bf16.mxu0 0
      %635 = vmatmul.mubr.bf16.gmra.mxu0 %v482
      %v636 = vpop.f32.mrf.mxu0
      %v637 = vadd.f32 %v414, %v636
      %v638 = vpop.f32.mrf.mxu0
      %v639 = vpop.f32.mrf.mxu0
      %v640 = vadd.f32 %v414, %v639
      %v641 = vpop.f32.mrf.mxu0
      %642 = vmatprep.mubr.bf16.mxu0 0
      %643 = vmatmul.mubr.bf16.gmra.mxu0 %v483
      %v644 = vpop.f32.mrf.mxu0
      %v645 = vadd.f32 %v414, %v644
      %v646 = vpop.f32.mrf.mxu0
      %v647 = vpop.f32.mrf.mxu0
      %v648 = vadd.f32 %v414, %v647
      %v649 = vpop.f32.mrf.mxu0
      %650 = vmatprep.mubr.bf16.mxu0 0
      %651 = vmatmul.mubr.bf16.gmra.mxu0 %v484
      %v652 = vpop.f32.mrf.mxu0
      %v653 = vadd.f32 %v414, %v652
      %v654 = vpop.f32.mrf.mxu0
      %v655 = vpop.f32.mrf.mxu0
      %v656 = vadd.f32 %v414, %v655
      %v657 = vpop.f32.mrf.mxu0
      %658 = vmatprep.mubr.bf16.mxu0 0
      %659 = vmatmul.mubr.bf16.gmra.mxu0 %v485
      %v660 = vpop.f32.mrf.mxu0
      %v661 = vadd.f32 %v414, %v660
      %v662 = vpop.f32.mrf.mxu0
      %v663 = vpop.f32.mrf.mxu0
      %v664 = vadd.f32 %v414, %v663
      %v665 = vpop.f32.mrf.mxu0
      %666 = vmatprep.mubr.bf16.mxu0 0
      %667 = vmatmul.mubr.bf16.gmra.mxu0 %v486
      %v668 = vpop.f32.mrf.mxu0
      %v669 = vadd.f32 %v414, %v668
      %v670 = vpop.f32.mrf.mxu0
      %v671 = vpop.f32.mrf.mxu0
      %v672 = vadd.f32 %v414, %v671
      %v673 = vpop.f32.mrf.mxu0
      %674 = vmatprep.mubr.bf16.mxu0 0
      %675 = vmatmul.mubr.bf16.gmra.mxu0 %v487
      %v676 = vpop.f32.mrf.mxu0
      %v677 = vadd.f32 %v414, %v676
      %v678 = vpop.f32.mrf.mxu0
      %v679 = vpop.f32.mrf.mxu0
      %v680 = vadd.f32 %v414, %v679
      %v681 = vpop.f32.mrf.mxu0
      %682 = vmatprep.mubr.bf16.mxu0 0
      %683 = vmatmul.mubr.bf16.gmra.mxu0 %v488
      %v684 = vpop.f32.mrf.mxu0
      %v685 = vadd.f32 %v414, %v684
      %v686 = vpop.f32.mrf.mxu0
      %v687 = vpop.f32.mrf.mxu0
      %v688 = vadd.f32 %v414, %v687
      %v689 = vpop.f32.mrf.mxu0
      %690 = vmatprep.mubr.bf16.mxu0 0
      %691 = vmatmul.mubr.bf16.gmra.mxu0 %v489
      %v692 = vpop.f32.mrf.mxu0
      %v693 = vadd.f32 %v414, %v692
      %v694 = vpop.f32.mrf.mxu0
      %v695 = vpop.f32.mrf.mxu0
      %v696 = vadd.f32 %v414, %v695
      %v697 = vpop.f32.mrf.mxu0
      %698 = vmatprep.mubr.bf16.mxu0 0
      %699 = vmatmul.mubr.bf16.gmra.mxu0 %v490
      %v700 = vpop.f32.mrf.mxu0
      %v701 = vadd.f32 %v414, %v700
      %v702 = vpop.f32.mrf.mxu0
      %v703 = vpop.f32.mrf.mxu0
      %v704 = vadd.f32 %v414, %v703
      %v705 = vpop.f32.mrf.mxu0
      %706 = vdwg.mxu0
      %v707 = vmax.f32 %v589, 0.0
      %v708 = vmax.f32 %v592, 0.0
      %v709 = vmax.f32 %v597, 0.0
      %v710 = vmax.f32 %v600, 0.0
      %v711 = vmax.f32 %v605, 0.0
      %v712 = vmax.f32 %v608, 0.0
      %v713 = vmax.f32 %v613, 0.0
      %v714 = vmax.f32 %v616, 0.0
      %v715 = vmax.f32 %v621, 0.0
      %v716 = vmax.f32 %v624, 0.0
      %v717 = vmax.f32 %v629, 0.0
      %v718 = vmax.f32 %v632, 0.0
      %v719 = vmax.f32 %v637, 0.0
      %v720 = vmax.f32 %v640, 0.0
      %v721 = vmax.f32 %v645, 0.0
      %v722 = vmax.f32 %v648, 0.0
      %v723 = vmax.f32 %v653, 0.0
      %v724 = vmax.f32 %v656, 0.0
      %v725 = vmax.f32 %v661, 0.0
      %v726 = vmax.f32 %v664, 0.0
      %v727 = vmax.f32 %v669, 0.0
      %v728 = vmax.f32 %v672, 0.0
      %v729 = vmax.f32 %v677, 0.0
      %v730 = vmax.f32 %v680, 0.0
      %v731 = vmax.f32 %v685, 0.0
      %v732 = vmax.f32 %v688, 0.0
      %v733 = vmax.f32 %v693, 0.0
      %v734 = vmax.f32 %v696, 0.0
      %v735 = vmax.f32 %v701, 0.0
      %v736 = vmax.f32 %v704, 0.0
      %v737 = vpack.c.bf16 %v708, %v707
      %v738 = vpack.c.bf16 %v709, %v709
      %v739 = vpack.c.bf16 %v711, %v710
      %v740 = vpack.c.bf16 %v712, %v712
      %v741 = vpack.c.bf16 %v714, %v713
      %v742 = vpack.c.bf16 %v715, %v715
      %v743 = vpack.c.bf16 %v717, %v716
      %v744 = vpack.c.bf16 %v718, %v718
      %v745 = vpack.c.bf16 %v720, %v719
      %v746 = vpack.c.bf16 %v721, %v721
      %v747 = vpack.c.bf16 %v723, %v722
      %v748 = vpack.c.bf16 %v724, %v724
      %v749 = vpack.c.bf16 %v726, %v725
      %v750 = vpack.c.bf16 %v727, %v727
      %v751 = vpack.c.bf16 %v729, %v728
      %v752 = vpack.c.bf16 %v730, %v730
      %v753 = vpack.c.bf16 %v732, %v731
      %v754 = vpack.c.bf16 %v733, %v733
      %v755 = vpack.c.bf16 %v735, %v734
      %v756 = vpack.c.bf16 %v736, %v736
      %v777 = vunpack.c.l.b16 %v737
      %v778 = vunpack.c.h.b16 %v737
      %v779 = vunpack.c.l.b16 %v738
      %v780 = vunpack.c.l.b16 %v739
      %v781 = vunpack.c.h.b16 %v739
      %v782 = vunpack.c.l.b16 %v740
      %v783 = vunpack.c.l.b16 %v741
      %v784 = vunpack.c.h.b16 %v741
      %v785 = vunpack.c.l.b16 %v742
      %v786 = vunpack.c.l.b16 %v743
      %v787 = vunpack.c.h.b16 %v743
      %v788 = vunpack.c.l.b16 %v744
      %v789 = vunpack.c.l.b16 %v745
      %v790 = vunpack.c.h.b16 %v745
      %v791 = vunpack.c.l.b16 %v746
      %v792 = vunpack.c.l.b16 %v747
      %v793 = vunpack.c.h.b16 %v747
      %v794 = vunpack.c.l.b16 %v748
      %v795 = vunpack.c.l.b16 %v749
      %v796 = vunpack.c.h.b16 %v749
      %v797 = vunpack.c.l.b16 %v750
      %v798 = vunpack.c.l.b16 %v751
      %v799 = vunpack.c.h.b16 %v751
      %v800 = vunpack.c.l.b16 %v752
      %v801 = vunpack.c.l.b16 %v753
      %v802 = vunpack.c.h.b16 %v753
      %v803 = vunpack.c.l.b16 %v754
      %v804 = vunpack.c.l.b16 %v755
      %v805 = vunpack.c.h.b16 %v755
      %v806 = vunpack.c.l.b16 %v756
      %v807 = vpack.c.b16 %v777, %v777
      %v808 = vpack.c.b16 %v778, %v778
      %v809 = vpack.c.b16 %v779, %v779
      %v810 = vpack.c.b16 %v780, %v780
      %v811 = vpack.c.b16 %v781, %v781
      %v812 = vpack.c.b16 %v782, %v782
      %v813 = vpack.c.b16 %v783, %v783
      %v814 = vpack.c.b16 %v784, %v784
      %v815 = vpack.c.b16 %v785, %v785
      %v816 = vpack.c.b16 %v786, %v786
      %v817 = vpack.c.b16 %v787, %v787
      %v818 = vpack.c.b16 %v788, %v788
      %v819 = vpack.c.b16 %v789, %v789
      %v820 = vpack.c.b16 %v790, %v790
      %v821 = vpack.c.b16 %v791, %v791
      %v822 = vpack.c.b16 %v792, %v792
      %v823 = vpack.c.b16 %v793, %v793
      %v824 = vpack.c.b16 %v794, %v794
      %v825 = vpack.c.b16 %v795, %v795
      %v826 = vpack.c.b16 %v796, %v796
      %v827 = vpack.c.b16 %v797, %v797
      %v828 = vpack.c.b16 %v798, %v798
      %v829 = vpack.c.b16 %v799, %v799
      %v830 = vpack.c.b16 %v800, %v800
      %v831 = vpack.c.b16 %v801, %v801
      %v832 = vpack.c.b16 %v802, %v802
      %v833 = vpack.c.b16 %v803, %v803
      %v834 = vpack.c.b16 %v804, %v804
      %v835 = vpack.c.b16 %v805, %v805
      %v836 = vpack.c.b16 %v806, %v806
      %867 = vst [vmem:[#allocation2] sm:$0xf] %v807
      %868 = vst [vmem:[#allocation2 + $0x4] sm:$0xf] %v808
      %869 = vst [vmem:[#allocation2 + $0x8] sm:$0xf] %v809
      %870 = vst [vmem:[#allocation2 + $0xc] sm:$0xf] %v810
      %871 = vst [vmem:[#allocation2 + $0x10] sm:$0xf] %v811
      %872 = vst [vmem:[#allocation2 + $0x14] sm:$0xf] %v812
      %873 = vst [vmem:[#allocation2 + $0x18] sm:$0xf] %v813
      %874 = vst [vmem:[#allocation2 + $0x1c] sm:$0xf] %v814
      %875 = vst [vmem:[#allocation2 + $0x20] sm:$0xf] %v815
      %876 = vst [vmem:[#allocation2 + $0x24] sm:$0xf] %v816
      %877 = vst [vmem:[#allocation2 + $0x28] sm:$0xf] %v817
      %878 = vst [vmem:[#allocation2 + $0x2c] sm:$0xf] %v818
      %879 = vst [vmem:[#allocation2 + $0x30] sm:$0xf] %v819
      %880 = vst [vmem:[#allocation2 + $0x34] sm:$0xf] %v820
      %881 = vst [vmem:[#allocation2 + $0x38] sm:$0xf] %v821
      %882 = vst [vmem:[#allocation2 + $0x3c] sm:$0xf] %v822
      %883 = vst [vmem:[#allocation2 + $0x40] sm:$0xf] %v823
      %884 = vst [vmem:[#allocation2 + $0x44] sm:$0xf] %v824
      %885 = vst [vmem:[#allocation2 + $0x48] sm:$0xf] %v825
      %886 = vst [vmem:[#allocation2 + $0x4c] sm:$0xf] %v826
      %887 = vst [vmem:[#allocation2 + $0x50] sm:$0xf] %v827
      %888 = vst [vmem:[#allocation2 + $0x54] sm:$0xf] %v828
      %889 = vst [vmem:[#allocation2 + $0x58] sm:$0xf] %v829
      %890 = vst [vmem:[#allocation2 + $0x5c] sm:$0xf] %v830
      %891 = vst [vmem:[#allocation2 + $0x60] sm:$0xf] %v831
      %892 = vst [vmem:[#allocation2 + $0x64] sm:$0xf] %v832
      %893 = vst [vmem:[#allocation2 + $0x68] sm:$0xf] %v833
      %894 = vst [vmem:[#allocation2 + $0x6c] sm:$0xf] %v834
      %895 = vst [vmem:[#allocation2 + $0x70] sm:$0xf] %v835
      %896 = vst [vmem:[#allocation2 + $0x74] sm:$0xf] %v836
      %vm897 = vcmask 1040384
      %vm898 = vsmask.f32 256
      %vm899 = vmand %vm897, %vm898
      %v900 = vld [vmem:[#allocation2] sm:$0x1]
      %v901 = vsel %vm899, 0, %v900
      %902 = vst [vmem:[#allocation2] sm:$0x1] %v901
      %v903 = vld [vmem:[#allocation2 + $0xc] sm:$0x1]
      %v904 = vsel %vm899, 0, %v903
      %905 = vst [vmem:[#allocation2 + $0xc] sm:$0x1] %v904
      %v906 = vld [vmem:[#allocation2 + $0x18] sm:$0x1]
      %v907 = vsel %vm899, 0, %v906
      %908 = vst [vmem:[#allocation2 + $0x18] sm:$0x1] %v907
      %v909 = vld [vmem:[#allocation2 + $0x24] sm:$0x1]
      %v910 = vsel %vm899, 0, %v909
      %911 = vst [vmem:[#allocation2 + $0x24] sm:$0x1] %v910
      %v912 = vld [vmem:[#allocation2 + $0x30] sm:$0x1]
      %v913 = vsel %vm899, 0, %v912
      %914 = vst [vmem:[#allocation2 + $0x30] sm:$0x1] %v913
      %v915 = vld [vmem:[#allocation2 + $0x3c] sm:$0x1]
      %v916 = vsel %vm899, 0, %v915
      %917 = vst [vmem:[#allocation2 + $0x3c] sm:$0x1] %v916
      %v918 = vld [vmem:[#allocation2 + $0x48] sm:$0x1]
      %v919 = vsel %vm899, 0, %v918
      %920 = vst [vmem:[#allocation2 + $0x48] sm:$0x1] %v919
      %v921 = vld [vmem:[#allocation2 + $0x54] sm:$0x1]
      %v922 = vsel %vm899, 0, %v921
      %923 = vst [vmem:[#allocation2 + $0x54] sm:$0x1] %v922
      %v924 = vld [vmem:[#allocation2 + $0x60] sm:$0x1]
      %v925 = vsel %vm899, 0, %v924
      %926 = vst [vmem:[#allocation2 + $0x60] sm:$0x1] %v925
      %v927 = vld [vmem:[#allocation2 + $0x6c] sm:$0x1]
      %v928 = vsel %vm899, 0, %v927
      %929 = vst [vmem:[#allocation2 + $0x6c] sm:$0x1] %v928
      %vm930 = vsmask.f32 7938
      %vm931 = vmand %vm897, %vm930
      %v932 = vld [vmem:[#allocation2 + $0x8] sm:$0x1]
      %v933 = vsel %vm931, 0, %v932
      %934 = vst [vmem:[#allocation2 + $0x8] sm:$0x1] %v933
      %v935 = vld [vmem:[#allocation2 + $0x14] sm:$0x1]
      %v936 = vsel %vm931, 0, %v935
      %937 = vst [vmem:[#allocation2 + $0x14] sm:$0x1] %v936
      %v938 = vld [vmem:[#allocation2 + $0x20] sm:$0x1]
      %v939 = vsel %vm931, 0, %v938
      %940 = vst [vmem:[#allocation2 + $0x20] sm:$0x1] %v939
      %v941 = vld [vmem:[#allocation2 + $0x2c] sm:$0x1]
      %v942 = vsel %vm931, 0, %v941
      %943 = vst [vmem:[#allocation2 + $0x2c] sm:$0x1] %v942
      %v944 = vld [vmem:[#allocation2 + $0x38] sm:$0x1]
      %v945 = vsel %vm931, 0, %v944
      %946 = vst [vmem:[#allocation2 + $0x38] sm:$0x1] %v945
      %v947 = vld [vmem:[#allocation2 + $0x44] sm:$0x1]
      %v948 = vsel %vm931, 0, %v947
      %949 = vst [vmem:[#allocation2 + $0x44] sm:$0x1] %v948
      %v950 = vld [vmem:[#allocation2 + $0x50] sm:$0x1]
      %v951 = vsel %vm931, 0, %v950
      %952 = vst [vmem:[#allocation2 + $0x50] sm:$0x1] %v951
      %v953 = vld [vmem:[#allocation2 + $0x5c] sm:$0x1]
      %v954 = vsel %vm931, 0, %v953
      %955 = vst [vmem:[#allocation2 + $0x5c] sm:$0x1] %v954
      %v956 = vld [vmem:[#allocation2 + $0x68] sm:$0x1]
      %v957 = vsel %vm931, 0, %v956
      %958 = vst [vmem:[#allocation2 + $0x68] sm:$0x1] %v957
      %v959 = vld [vmem:[#allocation2 + $0x74] sm:$0x1]
      %v960 = vsel %vm931, 0, %v959
      %961 = vst [vmem:[#allocation2 + $0x74] sm:$0x1] %v960
      %p962 = scmp.eq.s32.totalorder %s359, 0
      // Predicated region
      $region57: #{bottleneck_forward.1} parent=55 // pred_check
        %p963 = pneg %p962
      $region58: #{bottleneck_forward.1} parent=55 // pred_check_branch
        %965 = sbr.rel (%p963) target = $region60
      $region59: #{bottleneck_forward.1} parent=55 // pred_region
        %966 = vst [vmem:[#allocation2] sm:$0xf] 0
        %967 = vst [vmem:[#allocation2 + $0x4] sm:$0xf] 0
        %968 = vst [vmem:[#allocation2 + $0x8] sm:$0xf] 0
      $region60: #{bottleneck_forward.1} parent=55 // pred_fallthru
        _
      %s969 = sadd.s32 %s359, 9
      %p970 = scmp.eq.s32.totalorder %s969, 17
      // Predicated region
      $region61: #{bottleneck_forward.1} parent=55 // pred_check
        %p971 = pneg %p970
      $region62: #{bottleneck_forward.1} parent=55 // pred_check_branch
        %973 = sbr.rel (%p971) target = $region64
      $region63: #{bottleneck_forward.1} parent=55 // pred_region
        %s974 = scalar_lea.vmem [#allocation2], 108
        %975 = vst [vmem:[%s974] sm:$0xf] 0
        %976 = vst [vmem:[%s974 + $0x4] sm:$0xf] 0
        %977 = vst [vmem:[%s974 + $0x8] sm:$0xf] 0
      $region64: #{bottleneck_forward.1} parent=55 // pred_fallthru
        _
      %v978 = vld [vmem:[#allocation2] sm:$0xf]
      %v979 = vld [vmem:[#allocation2 + $0x4] sm:$0xf]
      %v980 = vld [vmem:[#allocation2 + $0xc] sm:$0xf]
      %v981 = vld [vmem:[#allocation2 + $0x10] sm:$0xf]
      %v982 = vld [vmem:[#allocation2 + $0x18] sm:$0xf]
      %v983 = vld [vmem:[#allocation2 + $0x1c] sm:$0xf]
      %v984 = vld [vmem:[#allocation2 + $0x24] sm:$0xf]
      %v985 = vld [vmem:[#allocation2 + $0x28] sm:$0xf]
      %v986 = vld [vmem:[#allocation2 + $0x30] sm:$0xf]
      %v987 = vld [vmem:[#allocation2 + $0x34] sm:$0xf]
      %v988 = vld [vmem:[#allocation2 + $0x3c] sm:$0xf]
      %v989 = vld [vmem:[#allocation2 + $0x40] sm:$0xf]
      %v990 = vld [vmem:[#allocation2 + $0x48] sm:$0xf]
      %v991 = vld [vmem:[#allocation2 + $0x4c] sm:$0xf]
      %v992 = vld [vmem:[#allocation2 + $0x54] sm:$0xf]
      %v993 = vld [vmem:[#allocation2 + $0x58] sm:$0xf]
      %v994 = vld [vmem:[#allocation2 + $0x60] sm:$0xf]
      %v995 = vld [vmem:[#allocation2 + $0x64] sm:$0xf]
      %v996 = vld [vmem:[#allocation2 + $0x6c] sm:$0xf]
      %v997 = vld [vmem:[#allocation2 + $0x70] sm:$0xf]
      %998 = vst [vmem:[#allocation3] sm:$0xf] %v978
      %999 = vst [vmem:[#allocation3 + $0xc] sm:$0xf] %v979
      %1000 = vst [vmem:[#allocation3 + $0x18] sm:$0xf] %v980
      %1001 = vst [vmem:[#allocation3 + $0x24] sm:$0xf] %v981
      %1002 = vst [vmem:[#allocation3 + $0x30] sm:$0xf] %v982
      %1003 = vst [vmem:[#allocation3 + $0x3c] sm:$0xf] %v983
      %1004 = vst [vmem:[#allocation3 + $0x48] sm:$0xf] %v984
      %1005 = vst [vmem:[#allocation3 + $0x54] sm:$0xf] %v985
      %1006 = vst [vmem:[#allocation3 + $0x60] sm:$0xf] %v986
      %1007 = vst [vmem:[#allocation3 + $0x6c] sm:$0xf] %v987
      %1008 = vst [vmem:[#allocation3 + $0x78] sm:$0xf] %v988
      %1009 = vst [vmem:[#allocation3 + $0x84] sm:$0xf] %v989
      %1010 = vst [vmem:[#allocation3 + $0x90] sm:$0xf] %v990
      %1011 = vst [vmem:[#allocation3 + $0x9c] sm:$0xf] %v991
      %1012 = vst [vmem:[#allocation3 + $0xa8] sm:$0xf] %v992
      %1013 = vst [vmem:[#allocation3 + $0xb4] sm:$0xf] %v993
      %1014 = vst [vmem:[#allocation3 + $0xc0] sm:$0xf] %v994
      %1015 = vst [vmem:[#allocation3 + $0xcc] sm:$0xf] %v995
      %1016 = vst [vmem:[#allocation3 + $0xd8] sm:$0xf] %v996
      %1017 = vst [vmem:[#allocation3 + $0xe4] sm:$0xf] %v997
      %v1018 = vld [vmem:[#allocation2] sm:$0xf]
      %v1019 = vld [vmem:[#allocation2 + $0x4] sm:$0xf]
      %v1020 = vld [vmem:[#allocation2 + $0x8] sm:$0x1]
      %v1021 = vld [vmem:[#allocation2 + $0xc] sm:$0xf]
      %v1022 = vld [vmem:[#allocation2 + $0x10] sm:$0xf]
      %v1023 = vld [vmem:[#allocation2 + $0x14] sm:$0x1]
      %v1024 = vld [vmem:[#allocation2 + $0x18] sm:$0xf]
      %v1025 = vld [vmem:[#allocation2 + $0x1c] sm:$0xf]
      %v1026 = vld [vmem:[#allocation2 + $0x20] sm:$0x1]
      %v1027 = vld [vmem:[#allocation2 + $0x24] sm:$0xf]
      %v1028 = vld [vmem:[#allocation2 + $0x28] sm:$0xf]
      %v1029 = vld [vmem:[#allocation2 + $0x2c] sm:$0x1]
      %v1030 = vld [vmem:[#allocation2 + $0x30] sm:$0xf]
      %v1031 = vld [vmem:[#allocation2 + $0x34] sm:$0xf]
      %v1032 = vld [vmem:[#allocation2 + $0x38] sm:$0x1]
      %v1033 = vld [vmem:[#allocation2 + $0x3c] sm:$0xf]
      %v1034 = vld [vmem:[#allocation2 + $0x40] sm:$0xf]
      %v1035 = vld [vmem:[#allocation2 + $0x44] sm:$0x1]
      %v1036 = vld [vmem:[#allocation2 + $0x48] sm:$0xf]
      %v1037 = vld [vmem:[#allocation2 + $0x4c] sm:$0xf]
      %v1038 = vld [vmem:[#allocation2 + $0x50] sm:$0x1]
      %v1039 = vld [vmem:[#allocation2 + $0x54] sm:$0xf]
      %v1040 = vld [vmem:[#allocation2 + $0x58] sm:$0xf]
      %v1041 = vld [vmem:[#allocation2 + $0x5c] sm:$0x1]
      %v1042 = vld [vmem:[#allocation2 + $0x60] sm:$0xf]
      %v1043 = vld [vmem:[#allocation2 + $0x64] sm:$0xf]
      %v1044 = vld [vmem:[#allocation2 + $0x68] sm:$0x1]
      %v1045 = vld [vmem:[#allocation2 + $0x6c] sm:$0xf]
      %v1046 = vld [vmem:[#allocation2 + $0x70] sm:$0xf]
      %v1047 = vld [vmem:[#allocation2 + $0x74] sm:$0x1]
      %vm1048 = vsmask.f32 3328
      %vm1049 = vsmask.f32 7440
      %vm1050 = vmor %vm1048, %vm1049
      %v1052 = vshrl.u32 %v1018, 16
      %v1054 = vrot.slane %v1052, 4
      %v1055 = vshll.u32 %v1018, 16
      %v1057 = vrot.slane %v1055, 5
      %v1058 = vor.u32 %v1054, %v1057
      %v1059 = vrot.slane %v1058, 4
      %v1061 = vshll.u32 %v1019, 16
      %v1063 = vrot.slane %v1061, 5
      %v1064 = vsel %vm1050, %v1059, %v1063
      %v1065 = vshrl.u32 %v1019, 16
      %v1067 = vrot.slane %v1065, 4
      %v1068 = vor.u32 %v1067, %v1063
      %v1069 = vrot.slane %v1068, 4
      %v1071 = vshll.u32 %v1020, 16
      %v1073 = vrot.slane %v1071, 5
      %v1074 = vsel %vm1050, %v1069, %v1073
      %v1076 = vshrl.u32 %v1021, 16
      %v1078 = vrot.slane %v1076, 4
      %v1079 = vshll.u32 %v1021, 16
      %v1081 = vrot.slane %v1079, 5
      %v1082 = vor.u32 %v1078, %v1081
      %v1083 = vrot.slane %v1082, 4
      %v1085 = vshll.u32 %v1022, 16
      %v1087 = vrot.slane %v1085, 5
      %v1088 = vsel %vm1050, %v1083, %v1087
      %v1089 = vshrl.u32 %v1022, 16
      %v1091 = vrot.slane %v1089, 4
      %v1092 = vor.u32 %v1091, %v1087
      %v1093 = vrot.slane %v1092, 4
      %v1095 = vshll.u32 %v1023, 16
      %v1097 = vrot.slane %v1095, 5
      %v1098 = vsel %vm1050, %v1093, %v1097
      %v1100 = vshrl.u32 %v1024, 16
      %v1102 = vrot.slane %v1100, 4
      %v1103 = vshll.u32 %v1024, 16
      %v1105 = vrot.slane %v1103, 5
      %v1106 = vor.u32 %v1102, %v1105
      %v1107 = vrot.slane %v1106, 4
      %v1109 = vshll.u32 %v1025, 16
      %v1111 = vrot.slane %v1109, 5
      %v1112 = vsel %vm1050, %v1107, %v1111
      %v1113 = vshrl.u32 %v1025, 16
      %v1115 = vrot.slane %v1113, 4
      %v1116 = vor.u32 %v1115, %v1111
      %v1117 = vrot.slane %v1116, 4
      %v1119 = vshll.u32 %v1026, 16
      %v1121 = vrot.slane %v1119, 5
      %v1122 = vsel %vm1050, %v1117, %v1121
      %v1124 = vshrl.u32 %v1027, 16
      %v1126 = vrot.slane %v1124, 4
      %v1127 = vshll.u32 %v1027, 16
      %v1129 = vrot.slane %v1127, 5
      %v1130 = vor.u32 %v1126, %v1129
      %v1131 = vrot.slane %v1130, 4
      %v1133 = vshll.u32 %v1028, 16
      %v1135 = vrot.slane %v1133, 5
      %v1136 = vsel %vm1050, %v1131, %v1135
      %v1137 = vshrl.u32 %v1028, 16
      %v1139 = vrot.slane %v1137, 4
      %v1140 = vor.u32 %v1139, %v1135
      %v1141 = vrot.slane %v1140, 4
      %v1143 = vshll.u32 %v1029, 16
      %v1145 = vrot.slane %v1143, 5
      %v1146 = vsel %vm1050, %v1141, %v1145
      %v1148 = vshrl.u32 %v1030, 16
      %v1150 = vrot.slane %v1148, 4
      %v1151 = vshll.u32 %v1030, 16
      %v1153 = vrot.slane %v1151, 5
      %v1154 = vor.u32 %v1150, %v1153
      %v1155 = vrot.slane %v1154, 4
      %v1157 = vshll.u32 %v1031, 16
      %v1159 = vrot.slane %v1157, 5
      %v1160 = vsel %vm1050, %v1155, %v1159
      %v1161 = vshrl.u32 %v1031, 16
      %v1163 = vrot.slane %v1161, 4
      %v1164 = vor.u32 %v1163, %v1159
      %v1165 = vrot.slane %v1164, 4
      %v1167 = vshll.u32 %v1032, 16
      %v1169 = vrot.slane %v1167, 5
      %v1170 = vsel %vm1050, %v1165, %v1169
      %v1172 = vshrl.u32 %v1033, 16
      %v1174 = vrot.slane %v1172, 4
      %v1175 = vshll.u32 %v1033, 16
      %v1177 = vrot.slane %v1175, 5
      %v1178 = vor.u32 %v1174, %v1177
      %v1179 = vrot.slane %v1178, 4
      %v1181 = vshll.u32 %v1034, 16
      %v1183 = vrot.slane %v1181, 5
      %v1184 = vsel %vm1050, %v1179, %v1183
      %v1185 = vshrl.u32 %v1034, 16
      %v1187 = vrot.slane %v1185, 4
      %v1188 = vor.u32 %v1187, %v1183
      %v1189 = vrot.slane %v1188, 4
      %v1191 = vshll.u32 %v1035, 16
      %v1193 = vrot.slane %v1191, 5
      %v1194 = vsel %vm1050, %v1189, %v1193
      %v1196 = vshrl.u32 %v1036, 16
      %v1198 = vrot.slane %v1196, 4
      %v1199 = vshll.u32 %v1036, 16
      %v1201 = vrot.slane %v1199, 5
      %v1202 = vor.u32 %v1198, %v1201
      %v1203 = vrot.slane %v1202, 4
      %v1205 = vshll.u32 %v1037, 16
      %v1207 = vrot.slane %v1205, 5
      %v1208 = vsel %vm1050, %v1203, %v1207
      %v1209 = vshrl.u32 %v1037, 16
      %v1211 = vrot.slane %v1209, 4
      %v1212 = vor.u32 %v1211, %v1207
      %v1213 = vrot.slane %v1212, 4
      %v1215 = vshll.u32 %v1038, 16
      %v1217 = vrot.slane %v1215, 5
      %v1218 = vsel %vm1050, %v1213, %v1217
      %v1220 = vshrl.u32 %v1039, 16
      %v1222 = vrot.slane %v1220, 4
      %v1223 = vshll.u32 %v1039, 16
      %v1225 = vrot.slane %v1223, 5
      %v1226 = vor.u32 %v1222, %v1225
      %v1227 = vrot.slane %v1226, 4
      %v1229 = vshll.u32 %v1040, 16
      %v1231 = vrot.slane %v1229, 5
      %v1232 = vsel %vm1050, %v1227, %v1231
      %v1233 = vshrl.u32 %v1040, 16
      %v1235 = vrot.slane %v1233, 4
      %v1236 = vor.u32 %v1235, %v1231
      %v1237 = vrot.slane %v1236, 4
      %v1239 = vshll.u32 %v1041, 16
      %v1241 = vrot.slane %v1239, 5
      %v1242 = vsel %vm1050, %v1237, %v1241
      %v1244 = vshrl.u32 %v1042, 16
      %v1246 = vrot.slane %v1244, 4
      %v1247 = vshll.u32 %v1042, 16
      %v1249 = vrot.slane %v1247, 5
      %v1250 = vor.u32 %v1246, %v1249
      %v1251 = vrot.slane %v1250, 4
      %v1253 = vshll.u32 %v1043, 16
      %v1255 = vrot.slane %v1253, 5
      %v1256 = vsel %vm1050, %v1251, %v1255
      %v1257 = vshrl.u32 %v1043, 16
      %v1259 = vrot.slane %v1257, 4
      %v1260 = vor.u32 %v1259, %v1255
      %v1261 = vrot.slane %v1260, 4
      %v1263 = vshll.u32 %v1044, 16
      %v1265 = vrot.slane %v1263, 5
      %v1266 = vsel %vm1050, %v1261, %v1265
      %v1268 = vshrl.u32 %v1045, 16
      %v1270 = vrot.slane %v1268, 4
      %v1271 = vshll.u32 %v1045, 16
      %v1273 = vrot.slane %v1271, 5
      %v1274 = vor.u32 %v1270, %v1273
      %v1275 = vrot.slane %v1274, 4
      %v1277 = vshll.u32 %v1046, 16
      %v1279 = vrot.slane %v1277, 5
      %v1280 = vsel %vm1050, %v1275, %v1279
      %v1281 = vshrl.u32 %v1046, 16
      %v1283 = vrot.slane %v1281, 4
      %v1284 = vor.u32 %v1283, %v1279
      %v1285 = vrot.slane %v1284, 4
      %v1287 = vshll.u32 %v1047, 16
      %v1289 = vrot.slane %v1287, 5
      %v1290 = vsel %vm1050, %v1285, %v1289
      %1311 = vst [vmem:[#allocation3 + $0x4] sm:$0xf] %v1064
      %1312 = vst [vmem:[#allocation3 + $0x10] sm:$0xf] %v1074
      %1313 = vst [vmem:[#allocation3 + $0x1c] sm:$0xf] %v1088
      %1314 = vst [vmem:[#allocation3 + $0x28] sm:$0xf] %v1098
      %1315 = vst [vmem:[#allocation3 + $0x34] sm:$0xf] %v1112
      %1316 = vst [vmem:[#allocation3 + $0x40] sm:$0xf] %v1122
      %1317 = vst [vmem:[#allocation3 + $0x4c] sm:$0xf] %v1136
      %1318 = vst [vmem:[#allocation3 + $0x58] sm:$0xf] %v1146
      %1319 = vst [vmem:[#allocation3 + $0x64] sm:$0xf] %v1160
      %1320 = vst [vmem:[#allocation3 + $0x70] sm:$0xf] %v1170
      %1321 = vst [vmem:[#allocation3 + $0x7c] sm:$0xf] %v1184
      %1322 = vst [vmem:[#allocation3 + $0x88] sm:$0xf] %v1194
      %1323 = vst [vmem:[#allocation3 + $0x94] sm:$0xf] %v1208
      %1324 = vst [vmem:[#allocation3 + $0xa0] sm:$0xf] %v1218
      %1325 = vst [vmem:[#allocation3 + $0xac] sm:$0xf] %v1232
      %1326 = vst [vmem:[#allocation3 + $0xb8] sm:$0xf] %v1242
      %1327 = vst [vmem:[#allocation3 + $0xc4] sm:$0xf] %v1256
      %1328 = vst [vmem:[#allocation3 + $0xd0] sm:$0xf] %v1266
      %1329 = vst [vmem:[#allocation3 + $0xdc] sm:$0xf] %v1280
      %1330 = vst [vmem:[#allocation3 + $0xe8] sm:$0xf] %v1290
      %v1331 = vld [vmem:[#allocation2] sm:$0xe]
      %v1332 = vld [vmem:[#allocation2 + $0x4] sm:$0xf]
      %v1333 = vld [vmem:[#allocation2 + $0x8] sm:$0x1]
      %v1334 = vld [vmem:[#allocation2 + $0xc] sm:$0xe]
      %v1335 = vld [vmem:[#allocation2 + $0x10] sm:$0xf]
      %v1336 = vld [vmem:[#allocation2 + $0x14] sm:$0x1]
      %v1337 = vld [vmem:[#allocation2 + $0x18] sm:$0xe]
      %v1338 = vld [vmem:[#allocation2 + $0x1c] sm:$0xf]
      %v1339 = vld [vmem:[#allocation2 + $0x20] sm:$0x1]
      %v1340 = vld [vmem:[#allocation2 + $0x24] sm:$0xe]
      %v1341 = vld [vmem:[#allocation2 + $0x28] sm:$0xf]
      %v1342 = vld [vmem:[#allocation2 + $0x2c] sm:$0x1]
      %v1343 = vld [vmem:[#allocation2 + $0x30] sm:$0xe]
      %v1344 = vld [vmem:[#allocation2 + $0x34] sm:$0xf]
      %v1345 = vld [vmem:[#allocation2 + $0x38] sm:$0x1]
      %v1346 = vld [vmem:[#allocation2 + $0x3c] sm:$0xe]
      %v1347 = vld [vmem:[#allocation2 + $0x40] sm:$0xf]
      %v1348 = vld [vmem:[#allocation2 + $0x44] sm:$0x1]
      %v1349 = vld [vmem:[#allocation2 + $0x48] sm:$0xe]
      %v1350 = vld [vmem:[#allocation2 + $0x4c] sm:$0xf]
      %v1351 = vld [vmem:[#allocation2 + $0x50] sm:$0x1]
      %v1352 = vld [vmem:[#allocation2 + $0x54] sm:$0xe]
      %v1353 = vld [vmem:[#allocation2 + $0x58] sm:$0xf]
      %v1354 = vld [vmem:[#allocation2 + $0x5c] sm:$0x1]
      %v1355 = vld [vmem:[#allocation2 + $0x60] sm:$0xe]
      %v1356 = vld [vmem:[#allocation2 + $0x64] sm:$0xf]
      %v1357 = vld [vmem:[#allocation2 + $0x68] sm:$0x1]
      %v1358 = vld [vmem:[#allocation2 + $0x6c] sm:$0xe]
      %v1359 = vld [vmem:[#allocation2 + $0x70] sm:$0xf]
      %v1360 = vld [vmem:[#allocation2 + $0x74] sm:$0x1]
      %vm1391 = vcmask 1042432
      %vm1392 = vcmask 1046532
      %vm1393 = vmor %vm1391, %vm1392
      %v1394 = vrot.slane %v1331, 5
      %v1395 = vrot.slane %v1394, 4
      %v1396 = vrot.slane %v1332, 5
      %v1397 = vsel %vm1393, %v1395, %v1396
      %v1398 = vrot.slane %v1396, 4
      %v1399 = vrot.slane %v1333, 5
      %v1400 = vsel %vm1393, %v1398, %v1399
      %v1401 = vrot.slane %v1334, 5
      %v1402 = vrot.slane %v1401, 4
      %v1403 = vrot.slane %v1335, 5
      %v1404 = vsel %vm1393, %v1402, %v1403
      %v1405 = vrot.slane %v1403, 4
      %v1406 = vrot.slane %v1336, 5
      %v1407 = vsel %vm1393, %v1405, %v1406
      %v1408 = vrot.slane %v1337, 5
      %v1409 = vrot.slane %v1408, 4
      %v1410 = vrot.slane %v1338, 5
      %v1411 = vsel %vm1393, %v1409, %v1410
      %v1412 = vrot.slane %v1410, 4
      %v1413 = vrot.slane %v1339, 5
      %v1414 = vsel %vm1393, %v1412, %v1413
      %v1415 = vrot.slane %v1340, 5
      %v1416 = vrot.slane %v1415, 4
      %v1417 = vrot.slane %v1341, 5
      %v1418 = vsel %vm1393, %v1416, %v1417
      %v1419 = vrot.slane %v1417, 4
      %v1420 = vrot.slane %v1342, 5
      %v1421 = vsel %vm1393, %v1419, %v1420
      %v1422 = vrot.slane %v1343, 5
      %v1423 = vrot.slane %v1422, 4
      %v1424 = vrot.slane %v1344, 5
      %v1425 = vsel %vm1393, %v1423, %v1424
      %v1426 = vrot.slane %v1424, 4
      %v1427 = vrot.slane %v1345, 5
      %v1428 = vsel %vm1393, %v1426, %v1427
      %v1429 = vrot.slane %v1346, 5
      %v1430 = vrot.slane %v1429, 4
      %v1431 = vrot.slane %v1347, 5
      %v1432 = vsel %vm1393, %v1430, %v1431
      %v1433 = vrot.slane %v1431, 4
      %v1434 = vrot.slane %v1348, 5
      %v1435 = vsel %vm1393, %v1433, %v1434
      %v1436 = vrot.slane %v1349, 5
      %v1437 = vrot.slane %v1436, 4
      %v1438 = vrot.slane %v1350, 5
      %v1439 = vsel %vm1393, %v1437, %v1438
      %v1440 = vrot.slane %v1438, 4
      %v1441 = vrot.slane %v1351, 5
      %v1442 = vsel %vm1393, %v1440, %v1441
      %v1443 = vrot.slane %v1352, 5
      %v1444 = vrot.slane %v1443, 4
      %v1445 = vrot.slane %v1353, 5
      %v1446 = vsel %vm1393, %v1444, %v1445
      %v1447 = vrot.slane %v1445, 4
      %v1448 = vrot.slane %v1354, 5
      %v1449 = vsel %vm1393, %v1447, %v1448
      %v1450 = vrot.slane %v1355, 5
      %v1451 = vrot.slane %v1450, 4
      %v1452 = vrot.slane %v1356, 5
      %v1453 = vsel %vm1393, %v1451, %v1452
      %v1454 = vrot.slane %v1452, 4
      %v1455 = vrot.slane %v1357, 5
      %v1456 = vsel %vm1393, %v1454, %v1455
      %v1457 = vrot.slane %v1358, 5
      %v1458 = vrot.slane %v1457, 4
      %v1459 = vrot.slane %v1359, 5
      %v1460 = vsel %vm1393, %v1458, %v1459
      %v1461 = vrot.slane %v1459, 4
      %v1462 = vrot.slane %v1360, 5
      %v1463 = vsel %vm1393, %v1461, %v1462
      %1484 = vst [vmem:[#allocation3 + $0x8] sm:$0xf] %v1397
      %1485 = vst [vmem:[#allocation3 + $0x14] sm:$0xf] %v1400
      %1486 = vst [vmem:[#allocation3 + $0x20] sm:$0xf] %v1404
      %1487 = vst [vmem:[#allocation3 + $0x2c] sm:$0xf] %v1407
      %1488 = vst [vmem:[#allocation3 + $0x38] sm:$0xf] %v1411
      %1489 = vst [vmem:[#allocation3 + $0x44] sm:$0xf] %v1414
      %1490 = vst [vmem:[#allocation3 + $0x50] sm:$0xf] %v1418
      %1491 = vst [vmem:[#allocation3 + $0x5c] sm:$0xf] %v1421
      %1492 = vst [vmem:[#allocation3 + $0x68] sm:$0xf] %v1425
      %1493 = vst [vmem:[#allocation3 + $0x74] sm:$0xf] %v1428
      %1494 = vst [vmem:[#allocation3 + $0x80] sm:$0xf] %v1432
      %1495 = vst [vmem:[#allocation3 + $0x8c] sm:$0xf] %v1435
      %1496 = vst [vmem:[#allocation3 + $0x98] sm:$0xf] %v1439
      %1497 = vst [vmem:[#allocation3 + $0xa4] sm:$0xf] %v1442
      %1498 = vst [vmem:[#allocation3 + $0xb0] sm:$0xf] %v1446
      %1499 = vst [vmem:[#allocation3 + $0xbc] sm:$0xf] %v1449
      %1500 = vst [vmem:[#allocation3 + $0xc8] sm:$0xf] %v1453
      %1501 = vst [vmem:[#allocation3 + $0xd4] sm:$0xf] %v1456
      %1502 = vst [vmem:[#allocation3 + $0xe0] sm:$0xf] %v1460
      %1503 = vst [vmem:[#allocation3 + $0xec] sm:$0xf] %v1463
      %v1504 = vld [vmem:[#allocation3] sm:$0xff]
      %v1505 = vld [vmem:[#allocation3 + $0x8] sm:$0xf]
      %v1506 = vld [vmem:[#allocation3 + $0xc] sm:$0xff]
      %v1507 = vld [vmem:[#allocation3 + $0x14] sm:$0xf]
      %v1508 = vld [vmem:[#allocation3 + $0x18] sm:$0xff]
      %v1509 = vld [vmem:[#allocation3 + $0x20] sm:$0xf]
      %v1510 = vld [vmem:[#allocation3 + $0x24] sm:$0xff]
      %v1511 = vld [vmem:[#allocation3 + $0x2c] sm:$0xf]
      %v1512 = vld [vmem:[#allocation3 + $0x30] sm:$0xff]
      %v1513 = vld [vmem:[#allocation3 + $0x38] sm:$0xf]
      %v1514 = vld [vmem:[#allocation3 + $0x3c] sm:$0xff]
      %v1515 = vld [vmem:[#allocation3 + $0x44] sm:$0xf]
      %v1516 = vld [vmem:[#allocation3 + $0x48] sm:$0xff]
      %v1517 = vld [vmem:[#allocation3 + $0x50] sm:$0xf]
      %v1518 = vld [vmem:[#allocation3 + $0x54] sm:$0xff]
      %v1519 = vld [vmem:[#allocation3 + $0x5c] sm:$0xf]
      %v1520 = vld [vmem:[#allocation3 + $0x60] sm:$0xff]
      %v1521 = vld [vmem:[#allocation3 + $0x68] sm:$0xf]
      %v1522 = vld [vmem:[#allocation3 + $0x6c] sm:$0xff]
      %v1523 = vld [vmem:[#allocation3 + $0x74] sm:$0xf]
      %v1524 = vld [vmem:[#allocation3 + $0x78] sm:$0xff]
      %v1525 = vld [vmem:[#allocation3 + $0x80] sm:$0xf]
      %v1526 = vld [vmem:[#allocation3 + $0x84] sm:$0xff]
      %v1527 = vld [vmem:[#allocation3 + $0x8c] sm:$0xf]
      %v1528 = vld [vmem:[#allocation3 + $0x90] sm:$0xff]
      %v1529 = vld [vmem:[#allocation3 + $0x98] sm:$0xf]
      %v1530 = vld [vmem:[#allocation3 + $0x9c] sm:$0xff]
      %v1531 = vld [vmem:[#allocation3 + $0xa4] sm:$0xf]
      %v1532 = vld [vmem:[#allocation3 + $0xa8] sm:$0xff]
      %v1533 = vld [vmem:[#allocation3 + $0xb0] sm:$0xf]
      %v1534 = vld [vmem:[#allocation3 + $0xb4] sm:$0xff]
      %v1535 = vld [vmem:[#allocation3 + $0xbc] sm:$0xf]
      %v1536 = vld [vmem:[%s3] sm:$0xf]
      %v1537 = vld [vmem:[%s3 + $0x4] sm:$0xf]
      %v1538 = vld [vmem:[%s3 + $0x8] sm:$0xf]
      %v1539 = vld [vmem:[%s3 + $0xc] sm:$0xf]
      %v1540 = vld [vmem:[%s3 + $0x10] sm:$0xf]
      %v1541 = vld [vmem:[%s3 + $0x14] sm:$0xf]
      %v1542 = vld [vmem:[%s3 + $0x18] sm:$0xf]
      %v1543 = vld [vmem:[%s3 + $0x1c] sm:$0xf]
      %v1544 = vld [vmem:[%s3 + $0x20] sm:$0xf]
      %v1545 = vld [vmem:[%s3 + $0x24] sm:$0xf]
      %v1546 = vld [vmem:[%s3 + $0x28] sm:$0xf]
      %v1547 = vld [vmem:[%s3 + $0x2c] sm:$0xf]
      %v1548 = vld [vmem:[%s3 + $0x30] sm:$0xf]
      %v1549 = vld [vmem:[%s3 + $0x34] sm:$0xf]
      %v1550 = vld [vmem:[%s3 + $0x38] sm:$0xf]
      %v1551 = vld [vmem:[%s3 + $0x3c] sm:$0xf]
      %v1552 = vld [vmem:[%s3 + $0x40] sm:$0xf]
      %v1553 = vld [vmem:[%s3 + $0x44] sm:$0xf]
      %v1554 = vld [vmem:[%s3 + $0x48] sm:$0xf]
      %v1555 = vld [vmem:[%s3 + $0x4c] sm:$0xf]
      %v1556 = vld [vmem:[%s3 + $0x50] sm:$0xf]
      %v1557 = vld [vmem:[%s3 + $0x54] sm:$0xf]
      %v1558 = vld [vmem:[%s3 + $0x58] sm:$0xf]
      %v1559 = vld [vmem:[%s3 + $0x5c] sm:$0xf]
      %v1560 = vld [vmem:[%s3 + $0x60] sm:$0xf]
      %v1561 = vld [vmem:[%s3 + $0x64] sm:$0xf]
      %v1562 = vld [vmem:[%s3 + $0x68] sm:$0xf]
      %v1563 = vld [vmem:[%s3 + $0x6c] sm:$0xf]
      %v1564 = vld [vmem:[%s3 + $0x70] sm:$0xf]
      %v1565 = vld [vmem:[%s3 + $0x74] sm:$0xf]
      %v1566 = vld [vmem:[%s3 + $0x78] sm:$0xf]
      %v1567 = vld [vmem:[%s3 + $0x7c] sm:$0xf]
      %v1568 = vld [vmem:[%s3 + $0x80] sm:$0xf]
      %v1569 = vld [vmem:[%s3 + $0x84] sm:$0xf]
      %v1570 = vld [vmem:[%s3 + $0x88] sm:$0xf]
      %v1571 = vld [vmem:[%s3 + $0x8c] sm:$0xf]
      %v1572 = vld [vmem:[%s3 + $0x90] sm:$0xf]
      %v1573 = vld [vmem:[%s3 + $0x94] sm:$0xf]
      %v1574 = vld [vmem:[%s3 + $0x98] sm:$0xf]
      %v1575 = vld [vmem:[%s3 + $0x9c] sm:$0xf]
      %v1576 = vld [vmem:[%s3 + $0xa0] sm:$0xf]
      %v1577 = vld [vmem:[%s3 + $0xa4] sm:$0xf]
      %v1578 = vld [vmem:[%s3 + $0xa8] sm:$0xf]
      %v1579 = vld [vmem:[%s3 + $0xac] sm:$0xf]
      %v1580 = vld [vmem:[%s3 + $0xb0] sm:$0xf]
      %v1581 = vld [vmem:[%s3 + $0xb4] sm:$0xf]
      %v1582 = vld [vmem:[%s3 + $0xb8] sm:$0xf]
      %v1583 = vld [vmem:[%s3 + $0xbc] sm:$0xf]
      %s1584 = scalar_lea.vmem [#allocation3], 24
      %v1585 = vld [vmem:[%s1584] sm:$0xff]
      %v1586 = vld [vmem:[%s1584 + $0x8] sm:$0xf]
      %v1587 = vld [vmem:[%s1584 + $0xc] sm:$0xff]
      %v1588 = vld [vmem:[%s1584 + $0x14] sm:$0xf]
      %v1589 = vld [vmem:[%s1584 + $0x18] sm:$0xff]
      %v1590 = vld [vmem:[%s1584 + $0x20] sm:$0xf]
      %v1591 = vld [vmem:[%s1584 + $0x24] sm:$0xff]
      %v1592 = vld [vmem:[%s1584 + $0x2c] sm:$0xf]
      %v1593 = vld [vmem:[%s1584 + $0x30] sm:$0xff]
      %v1594 = vld [vmem:[%s1584 + $0x38] sm:$0xf]
      %v1595 = vld [vmem:[%s1584 + $0x3c] sm:$0xff]
      %v1596 = vld [vmem:[%s1584 + $0x44] sm:$0xf]
      %v1597 = vld [vmem:[%s1584 + $0x48] sm:$0xff]
      %v1598 = vld [vmem:[%s1584 + $0x50] sm:$0xf]
      %v1599 = vld [vmem:[%s1584 + $0x54] sm:$0xff]
      %v1600 = vld [vmem:[%s1584 + $0x5c] sm:$0xf]
      %v1601 = vld [vmem:[%s1584 + $0x60] sm:$0xff]
      %v1602 = vld [vmem:[%s1584 + $0x68] sm:$0xf]
      %v1603 = vld [vmem:[%s1584 + $0x6c] sm:$0xff]
      %v1604 = vld [vmem:[%s1584 + $0x74] sm:$0xf]
      %v1605 = vld [vmem:[%s1584 + $0x78] sm:$0xff]
      %v1606 = vld [vmem:[%s1584 + $0x80] sm:$0xf]
      %v1607 = vld [vmem:[%s1584 + $0x84] sm:$0xff]
      %v1608 = vld [vmem:[%s1584 + $0x8c] sm:$0xf]
      %v1609 = vld [vmem:[%s1584 + $0x90] sm:$0xff]
      %v1610 = vld [vmem:[%s1584 + $0x98] sm:$0xf]
      %v1611 = vld [vmem:[%s1584 + $0x9c] sm:$0xff]
      %v1612 = vld [vmem:[%s1584 + $0xa4] sm:$0xf]
      %v1613 = vld [vmem:[%s1584 + $0xa8] sm:$0xff]
      %v1614 = vld [vmem:[%s1584 + $0xb0] sm:$0xf]
      %v1615 = vld [vmem:[%s1584 + $0xb4] sm:$0xff]
      %v1616 = vld [vmem:[%s1584 + $0xbc] sm:$0xf]
      %s1617 = scalar_lea.vmem %s3, 192
      %v1618 = vld [vmem:[%s1617] sm:$0xf]
      %v1619 = vld [vmem:[%s1617 + $0x4] sm:$0xf]
      %v1620 = vld [vmem:[%s1617 + $0x8] sm:$0xf]
      %v1621 = vld [vmem:[%s1617 + $0xc] sm:$0xf]
      %v1622 = vld [vmem:[%s1617 + $0x10] sm:$0xf]
      %v1623 = vld [vmem:[%s1617 + $0x14] sm:$0xf]
      %v1624 = vld [vmem:[%s1617 + $0x18] sm:$0xf]
      %v1625 = vld [vmem:[%s1617 + $0x1c] sm:$0xf]
      %v1626 = vld [vmem:[%s1617 + $0x20] sm:$0xf]
      %v1627 = vld [vmem:[%s1617 + $0x24] sm:$0xf]
      %v1628 = vld [vmem:[%s1617 + $0x28] sm:$0xf]
      %v1629 = vld [vmem:[%s1617 + $0x2c] sm:$0xf]
      %v1630 = vld [vmem:[%s1617 + $0x30] sm:$0xf]
      %v1631 = vld [vmem:[%s1617 + $0x34] sm:$0xf]
      %v1632 = vld [vmem:[%s1617 + $0x38] sm:$0xf]
      %v1633 = vld [vmem:[%s1617 + $0x3c] sm:$0xf]
      %v1634 = vld [vmem:[%s1617 + $0x40] sm:$0xf]
      %v1635 = vld [vmem:[%s1617 + $0x44] sm:$0xf]
      %v1636 = vld [vmem:[%s1617 + $0x48] sm:$0xf]
      %v1637 = vld [vmem:[%s1617 + $0x4c] sm:$0xf]
      %v1638 = vld [vmem:[%s1617 + $0x50] sm:$0xf]
      %v1639 = vld [vmem:[%s1617 + $0x54] sm:$0xf]
      %v1640 = vld [vmem:[%s1617 + $0x58] sm:$0xf]
      %v1641 = vld [vmem:[%s1617 + $0x5c] sm:$0xf]
      %v1642 = vld [vmem:[%s1617 + $0x60] sm:$0xf]
      %v1643 = vld [vmem:[%s1617 + $0x64] sm:$0xf]
      %v1644 = vld [vmem:[%s1617 + $0x68] sm:$0xf]
      %v1645 = vld [vmem:[%s1617 + $0x6c] sm:$0xf]
      %v1646 = vld [vmem:[%s1617 + $0x70] sm:$0xf]
      %v1647 = vld [vmem:[%s1617 + $0x74] sm:$0xf]
      %v1648 = vld [vmem:[%s1617 + $0x78] sm:$0xf]
      %v1649 = vld [vmem:[%s1617 + $0x7c] sm:$0xf]
      %v1650 = vld [vmem:[%s1617 + $0x80] sm:$0xf]
      %v1651 = vld [vmem:[%s1617 + $0x84] sm:$0xf]
      %v1652 = vld [vmem:[%s1617 + $0x88] sm:$0xf]
      %v1653 = vld [vmem:[%s1617 + $0x8c] sm:$0xf]
      %v1654 = vld [vmem:[%s1617 + $0x90] sm:$0xf]
      %v1655 = vld [vmem:[%s1617 + $0x94] sm:$0xf]
      %v1656 = vld [vmem:[%s1617 + $0x98] sm:$0xf]
      %v1657 = vld [vmem:[%s1617 + $0x9c] sm:$0xf]
      %v1658 = vld [vmem:[%s1617 + $0xa0] sm:$0xf]
      %v1659 = vld [vmem:[%s1617 + $0xa4] sm:$0xf]
      %v1660 = vld [vmem:[%s1617 + $0xa8] sm:$0xf]
      %v1661 = vld [vmem:[%s1617 + $0xac] sm:$0xf]
      %v1662 = vld [vmem:[%s1617 + $0xb0] sm:$0xf]
      %v1663 = vld [vmem:[%s1617 + $0xb4] sm:$0xf]
      %v1664 = vld [vmem:[%s1617 + $0xb8] sm:$0xf]
      %v1665 = vld [vmem:[%s1617 + $0xbc] sm:$0xf]
      %v1698 = vunpack.c.l.b16 %v1585
      %v1699 = vunpack.c.h.b16 %v1585
      %v1700 = vunpack.c.l.b16 %v1586
      %v1701 = vunpack.c.l.b16 %v1587
      %v1702 = vunpack.c.h.b16 %v1587
      %v1703 = vunpack.c.l.b16 %v1588
      %v1704 = vunpack.c.l.b16 %v1589
      %v1705 = vunpack.c.h.b16 %v1589
      %v1706 = vunpack.c.l.b16 %v1590
      %v1707 = vunpack.c.l.b16 %v1591
      %v1708 = vunpack.c.h.b16 %v1591
      %v1709 = vunpack.c.l.b16 %v1592
      %v1710 = vunpack.c.l.b16 %v1593
      %v1711 = vunpack.c.h.b16 %v1593
      %v1712 = vunpack.c.l.b16 %v1594
      %v1713 = vunpack.c.l.b16 %v1595
      %v1714 = vunpack.c.h.b16 %v1595
      %v1715 = vunpack.c.l.b16 %v1596
      %v1716 = vunpack.c.l.b16 %v1597
      %v1717 = vunpack.c.h.b16 %v1597
      %v1718 = vunpack.c.l.b16 %v1598
      %v1719 = vunpack.c.l.b16 %v1599
      %v1720 = vunpack.c.h.b16 %v1599
      %v1721 = vunpack.c.l.b16 %v1600
      %v1722 = vunpack.c.l.b16 %v1601
      %v1723 = vunpack.c.h.b16 %v1601
      %v1724 = vunpack.c.l.b16 %v1602
      %v1725 = vunpack.c.l.b16 %v1603
      %v1726 = vunpack.c.h.b16 %v1603
      %v1727 = vunpack.c.l.b16 %v1604
      %v1728 = vunpack.c.l.b16 %v1605
      %v1729 = vunpack.c.h.b16 %v1605
      %v1730 = vunpack.c.l.b16 %v1606
      %v1731 = vunpack.c.l.b16 %v1607
      %v1732 = vunpack.c.h.b16 %v1607
      %v1733 = vunpack.c.l.b16 %v1608
      %v1734 = vunpack.c.l.b16 %v1609
      %v1735 = vunpack.c.h.b16 %v1609
      %v1736 = vunpack.c.l.b16 %v1610
      %v1737 = vunpack.c.l.b16 %v1611
      %v1738 = vunpack.c.h.b16 %v1611
      %v1739 = vunpack.c.l.b16 %v1612
      %v1740 = vunpack.c.l.b16 %v1613
      %v1741 = vunpack.c.h.b16 %v1613
      %v1742 = vunpack.c.l.b16 %v1614
      %v1743 = vunpack.c.l.b16 %v1615
      %v1744 = vunpack.c.h.b16 %v1615
      %v1745 = vunpack.c.l.b16 %v1616
      %v1746 = vpack.c.b16 %v1701, %v1698
      %v1747 = vpack.c.b16 %v1702, %v1699
      %v1748 = vpack.c.b16 %v1703, %v1700
      %v1749 = vpack.c.b16 %v1707, %v1704
      %v1750 = vpack.c.b16 %v1708, %v1705
      %v1751 = vpack.c.b16 %v1709, %v1706
      %v1752 = vpack.c.b16 %v1713, %v1710
      %v1753 = vpack.c.b16 %v1714, %v1711
      %v1754 = vpack.c.b16 %v1715, %v1712
      %v1755 = vpack.c.b16 %v1719, %v1716
      %v1756 = vpack.c.b16 %v1720, %v1717
      %v1757 = vpack.c.b16 %v1721, %v1718
      %v1758 = vpack.c.b16 %v1725, %v1722
      %v1759 = vpack.c.b16 %v1726, %v1723
      %v1760 = vpack.c.b16 %v1727, %v1724
      %v1761 = vpack.c.b16 %v1731, %v1728
      %v1762 = vpack.c.b16 %v1732, %v1729
      %v1763 = vpack.c.b16 %v1733, %v1730
      %v1764 = vpack.c.b16 %v1737, %v1734
      %v1765 = vpack.c.b16 %v1738, %v1735
      %v1766 = vpack.c.b16 %v1739, %v1736
      %v1767 = vpack.c.b16 %v1743, %v1740
      %v1768 = vpack.c.b16 %v1744, %v1741
      %v1769 = vpack.c.b16 %v1745, %v1742
      %v1842 = vunpack.c.l.b16 %v1618
      %v1843 = vunpack.c.l.b16 %v1619
      %v1844 = vunpack.c.l.b16 %v1620
      %v1845 = vunpack.c.l.b16 %v1621
      %v1846 = vunpack.c.l.b16 %v1622
      %v1847 = vunpack.c.l.b16 %v1623
      %v1848 = vunpack.c.l.b16 %v1624
      %v1849 = vunpack.c.l.b16 %v1625
      %v1850 = vunpack.c.l.b16 %v1626
      %v1851 = vunpack.c.l.b16 %v1627
      %v1852 = vunpack.c.l.b16 %v1628
      %v1853 = vunpack.c.l.b16 %v1629
      %v1854 = vunpack.c.l.b16 %v1630
      %v1855 = vunpack.c.l.b16 %v1631
      %v1856 = vunpack.c.l.b16 %v1632
      %v1857 = vunpack.c.l.b16 %v1633
      %v1858 = vunpack.c.l.b16 %v1634
      %v1859 = vunpack.c.l.b16 %v1635
      %v1860 = vunpack.c.l.b16 %v1636
      %v1861 = vunpack.c.l.b16 %v1637
      %v1862 = vunpack.c.l.b16 %v1638
      %v1863 = vunpack.c.l.b16 %v1639
      %v1864 = vunpack.c.l.b16 %v1640
      %v1865 = vunpack.c.l.b16 %v1641
      %v1866 = vunpack.c.l.b16 %v1642
      %v1867 = vunpack.c.l.b16 %v1643
      %v1868 = vunpack.c.l.b16 %v1644
      %v1869 = vunpack.c.l.b16 %v1645
      %v1870 = vunpack.c.l.b16 %v1646
      %v1871 = vunpack.c.l.b16 %v1647
      %v1872 = vunpack.c.l.b16 %v1648
      %v1873 = vunpack.c.l.b16 %v1649
      %v1874 = vunpack.c.l.b16 %v1650
      %v1875 = vunpack.c.l.b16 %v1651
      %v1876 = vunpack.c.l.b16 %v1652
      %v1877 = vunpack.c.l.b16 %v1653
      %v1878 = vunpack.c.l.b16 %v1654
      %v1879 = vunpack.c.l.b16 %v1655
      %v1880 = vunpack.c.l.b16 %v1656
      %v1881 = vunpack.c.l.b16 %v1657
      %v1882 = vunpack.c.l.b16 %v1658
      %v1883 = vunpack.c.l.b16 %v1659
      %v1884 = vunpack.c.l.b16 %v1660
      %v1885 = vunpack.c.l.b16 %v1661
      %v1886 = vunpack.c.l.b16 %v1662
      %v1887 = vunpack.c.l.b16 %v1663
      %v1888 = vunpack.c.l.b16 %v1664
      %v1889 = vunpack.c.l.b16 %v1665
      %v1890 = vpack.c.b16 %v1843, %v1842
      %v1891 = vpack.c.b16 %v1845, %v1844
      %v1892 = vpack.c.b16 %v1847, %v1846
      %v1893 = vpack.c.b16 %v1849, %v1848
      %v1894 = vpack.c.b16 %v1851, %v1850
      %v1895 = vpack.c.b16 %v1853, %v1852
      %v1896 = vpack.c.b16 %v1855, %v1854
      %v1897 = vpack.c.b16 %v1857, %v1856
      %v1898 = vpack.c.b16 %v1859, %v1858
      %v1899 = vpack.c.b16 %v1861, %v1860
      %v1900 = vpack.c.b16 %v1863, %v1862
      %v1901 = vpack.c.b16 %v1865, %v1864
      %v1902 = vpack.c.b16 %v1867, %v1866
      %v1903 = vpack.c.b16 %v1869, %v1868
      %v1904 = vpack.c.b16 %v1871, %v1870
      %v1905 = vpack.c.b16 %v1873, %v1872
      %v1906 = vpack.c.b16 %v1875, %v1874
      %v1907 = vpack.c.b16 %v1877, %v1876
      %v1908 = vpack.c.b16 %v1879, %v1878
      %v1909 = vpack.c.b16 %v1881, %v1880
      %v1910 = vpack.c.b16 %v1883, %v1882
      %v1911 = vpack.c.b16 %v1885, %v1884
      %v1912 = vpack.c.b16 %v1887, %v1886
      %v1913 = vpack.c.b16 %v1889, %v1888
      %1938 = vmatprep.subr.bf16.mxu0 0
      %1939 = vmatpush1.bf16.msra.mxu0 %v1897
      %1940 = vmatprep.subr.bf16.mxu0 0
      %1941 = vmatpush1.bf16.msra.mxu0 %v1896
      %1942 = vmatprep.subr.bf16.mxu0 0
      %1943 = vmatpush1.bf16.msra.mxu0 %v1895
      %1944 = vmatprep.subr.bf16.mxu0 0
      %1945 = vmatpush1.bf16.msra.mxu0 %v1894
      %1946 = vmatprep.subr.bf16.mxu0 0
      %1947 = vmatpush1.bf16.msra.mxu0 %v1893
      %1948 = vmatprep.subr.bf16.mxu0 0
      %1949 = vmatpush1.bf16.msra.mxu0 %v1892
      %1950 = vmatprep.subr.bf16.mxu0 0
      %1951 = vmatpush1.bf16.msra.mxu0 %v1891
      %1952 = vmatprep.subr.bf16.mxu0 0
      %1953 = vmatpush1.bf16.msra.mxu0 %v1890
      %1954 = vmatprep.subr.bf16.mxu0 0
      %1955 = vmatpush2.bf16.msra.mxu0 %v1905
      %1956 = vmatprep.subr.bf16.mxu0 0
      %1957 = vmatpush2.bf16.msra.mxu0 %v1904
      %1958 = vmatprep.subr.bf16.mxu0 0
      %1959 = vmatpush2.bf16.msra.mxu0 %v1903
      %1960 = vmatprep.subr.bf16.mxu0 0
      %1961 = vmatpush2.bf16.msra.mxu0 %v1902
      %1962 = vmatprep.subr.bf16.mxu0 0
      %1963 = vmatpush2.bf16.msra.mxu0 %v1901
      %1964 = vmatprep.subr.bf16.mxu0 0
      %1965 = vmatpush2.bf16.msra.mxu0 %v1900
      %1966 = vmatprep.subr.bf16.mxu0 0
      %1967 = vmatpush2.bf16.msra.mxu0 %v1899
      %1968 = vmatprep.subr.bf16.mxu0 0
      %1969 = vmatpush2.bf16.msra.mxu0 %v1898
      %1970 = vmatprep.mubr.bf16.mxu0 %v1747
      %1971 = vmatmul.mubr.bf16.gmra.mxu0 %v1746
      %v1972 = vpop.f32.mrf.mxu0
      %v1973 = vadd.f32 0.0, %v1972
      %v1974 = vpop.f32.mrf.mxu0
      %v1975 = vpop.f32.mrf.mxu0
      %v1976 = vadd.f32 0.0, %v1975
      %v1977 = vpop.f32.mrf.mxu0
      %1978 = vmatprep.mubr.bf16.mxu0 %v1750
      %1979 = vmatmul.mubr.bf16.gmra.mxu0 %v1749
      %v1980 = vpop.f32.mrf.mxu0
      %v1981 = vadd.f32 0.0, %v1980
      %v1982 = vpop.f32.mrf.mxu0
      %v1983 = vpop.f32.mrf.mxu0
      %v1984 = vadd.f32 0.0, %v1983
      %v1985 = vpop.f32.mrf.mxu0
      %1986 = vmatprep.mubr.bf16.mxu0 %v1753
      %1987 = vmatmul.mubr.bf16.gmra.mxu0 %v1752
      %v1988 = vpop.f32.mrf.mxu0
      %v1989 = vadd.f32 0.0, %v1988
      %v1990 = vpop.f32.mrf.mxu0
      %v1991 = vpop.f32.mrf.mxu0
      %v1992 = vadd.f32 0.0, %v1991
      %v1993 = vpop.f32.mrf.mxu0
      %1994 = vmatprep.mubr.bf16.mxu0 %v1756
      %1995 = vmatmul.mubr.bf16.gmra.mxu0 %v1755
      %v1996 = vpop.f32.mrf.mxu0
      %v1997 = vadd.f32 0.0, %v1996
      %v1998 = vpop.f32.mrf.mxu0
      %v1999 = vpop.f32.mrf.mxu0
      %v2000 = vadd.f32 0.0, %v1999
      %v2001 = vpop.f32.mrf.mxu0
      %2002 = vmatprep.mubr.bf16.mxu0 %v1759
      %2003 = vmatmul.mubr.bf16.gmra.mxu0 %v1758
      %v2004 = vpop.f32.mrf.mxu0
      %v2005 = vadd.f32 0.0, %v2004
      %v2006 = vpop.f32.mrf.mxu0
      %v2007 = vpop.f32.mrf.mxu0
      %v2008 = vadd.f32 0.0, %v2007
      %v2009 = vpop.f32.mrf.mxu0
      %2010 = vmatprep.mubr.bf16.mxu0 %v1762
      %2011 = vmatmul.mubr.bf16.gmra.mxu0 %v1761
      %v2012 = vpop.f32.mrf.mxu0
      %v2013 = vadd.f32 0.0, %v2012
      %v2014 = vpop.f32.mrf.mxu0
      %v2015 = vpop.f32.mrf.mxu0
      %v2016 = vadd.f32 0.0, %v2015
      %v2017 = vpop.f32.mrf.mxu0
      %2018 = vmatprep.mubr.bf16.mxu0 %v1765
      %2019 = vmatmul.mubr.bf16.gmra.mxu0 %v1764
      %v2020 = vpop.f32.mrf.mxu0
      %v2021 = vadd.f32 0.0, %v2020
      %v2022 = vpop.f32.mrf.mxu0
      %v2023 = vpop.f32.mrf.mxu0
      %v2024 = vadd.f32 0.0, %v2023
      %v2025 = vpop.f32.mrf.mxu0
      %2026 = vmatprep.mubr.bf16.mxu0 %v1768
      %2027 = vmatmul.mubr.bf16.gmra.mxu0 %v1767
      %v2028 = vpop.f32.mrf.mxu0
      %v2029 = vadd.f32 0.0, %v2028
      %v2030 = vpop.f32.mrf.mxu0
      %v2031 = vpop.f32.mrf.mxu0
      %v2032 = vadd.f32 0.0, %v2031
      %v2033 = vpop.f32.mrf.mxu0
      %2034 = vdwg.mxu0
      %2035 = vmatprep.subr.bf16.mxu0 0
      %2036 = vmatpush1.bf16.msra.mxu0 %v1913
      %2037 = vmatprep.subr.bf16.mxu0 0
      %2038 = vmatpush1.bf16.msra.mxu0 %v1912
      %2039 = vmatprep.subr.bf16.mxu0 0
      %2040 = vmatpush1.bf16.msra.mxu0 %v1911
      %2041 = vmatprep.subr.bf16.mxu0 0
      %2042 = vmatpush1.bf16.msra.mxu0 %v1910
      %2043 = vmatprep.subr.bf16.mxu0 0
      %2044 = vmatpush1.bf16.msra.mxu0 %v1909
      %2045 = vmatprep.subr.bf16.mxu0 0
      %2046 = vmatpush1.bf16.msra.mxu0 %v1908
      %2047 = vmatprep.subr.bf16.mxu0 0
      %2048 = vmatpush1.bf16.msra.mxu0 %v1907
      %2049 = vmatprep.subr.bf16.mxu0 0
      %2050 = vmatpush1.bf16.msra.mxu0 %v1906
      %2051 = vmatprep.subr.bf16.mxu0 0
      %2052 = vmatpush2.bf16.msra.mxu0 0
      %2053 = vmatprep.subr.bf16.mxu0 0
      %2054 = vmatpush2.bf16.msra.mxu0 0
      %2055 = vmatprep.subr.bf16.mxu0 0
      %2056 = vmatpush2.bf16.msra.mxu0 0
      %2057 = vmatprep.subr.bf16.mxu0 0
      %2058 = vmatpush2.bf16.msra.mxu0 0
      %2059 = vmatprep.subr.bf16.mxu0 0
      %2060 = vmatpush2.bf16.msra.mxu0 0
      %2061 = vmatprep.subr.bf16.mxu0 0
      %2062 = vmatpush2.bf16.msra.mxu0 0
      %2063 = vmatprep.subr.bf16.mxu0 0
      %2064 = vmatpush2.bf16.msra.mxu0 0
      %2065 = vmatprep.subr.bf16.mxu0 0
      %2066 = vmatpush2.bf16.msra.mxu0 0
      %2067 = vmatprep.mubr.bf16.mxu0 0
      %2068 = vmatmul.mubr.bf16.gmra.mxu0 %v1748
      %v2069 = vpop.f32.mrf.mxu0
      %v2070 = vadd.f32 %v1973, %v2069
      %v2071 = vpop.f32.mrf.mxu0
      %v2072 = vpop.f32.mrf.mxu0
      %v2073 = vadd.f32 %v1976, %v2072
      %v2074 = vpop.f32.mrf.mxu0
      %2075 = vmatprep.mubr.bf16.mxu0 0
      %2076 = vmatmul.mubr.bf16.gmra.mxu0 %v1751
      %v2077 = vpop.f32.mrf.mxu0
      %v2078 = vadd.f32 %v1981, %v2077
      %v2079 = vpop.f32.mrf.mxu0
      %v2080 = vpop.f32.mrf.mxu0
      %v2081 = vadd.f32 %v1984, %v2080
      %v2082 = vpop.f32.mrf.mxu0
      %2083 = vmatprep.mubr.bf16.mxu0 0
      %2084 = vmatmul.mubr.bf16.gmra.mxu0 %v1754
      %v2085 = vpop.f32.mrf.mxu0
      %v2086 = vadd.f32 %v1989, %v2085
      %v2087 = vpop.f32.mrf.mxu0
      %v2088 = vpop.f32.mrf.mxu0
      %v2089 = vadd.f32 %v1992, %v2088
      %v2090 = vpop.f32.mrf.mxu0
      %2091 = vmatprep.mubr.bf16.mxu0 0
      %2092 = vmatmul.mubr.bf16.gmra.mxu0 %v1757
      %v2093 = vpop.f32.mrf.mxu0
      %v2094 = vadd.f32 %v1997, %v2093
      %v2095 = vpop.f32.mrf.mxu0
      %v2096 = vpop.f32.mrf.mxu0
      %v2097 = vadd.f32 %v2000, %v2096
      %v2098 = vpop.f32.mrf.mxu0
      %2099 = vmatprep.mubr.bf16.mxu0 0
      %2100 = vmatmul.mubr.bf16.gmra.mxu0 %v1760
      %v2101 = vpop.f32.mrf.mxu0
      %v2102 = vadd.f32 %v2005, %v2101
      %v2103 = vpop.f32.mrf.mxu0
      %v2104 = vpop.f32.mrf.mxu0
      %v2105 = vadd.f32 %v2008, %v2104
      %v2106 = vpop.f32.mrf.mxu0
      %2107 = vmatprep.mubr.bf16.mxu0 0
      %2108 = vmatmul.mubr.bf16.gmra.mxu0 %v1763
      %v2109 = vpop.f32.mrf.mxu0
      %v2110 = vadd.f32 %v2013, %v2109
      %v2111 = vpop.f32.mrf.mxu0
      %v2112 = vpop.f32.mrf.mxu0
      %v2113 = vadd.f32 %v2016, %v2112
      %v2114 = vpop.f32.mrf.mxu0
      %2115 = vmatprep.mubr.bf16.mxu0 0
      %2116 = vmatmul.mubr.bf16.gmra.mxu0 %v1766
      %v2117 = vpop.f32.mrf.mxu0
      %v2118 = vadd.f32 %v2021, %v2117
      %v2119 = vpop.f32.mrf.mxu0
      %v2120 = vpop.f32.mrf.mxu0
      %v2121 = vadd.f32 %v2024, %v2120
      %v2122 = vpop.f32.mrf.mxu0
      %2123 = vmatprep.mubr.bf16.mxu0 0
      %2124 = vmatmul.mubr.bf16.gmra.mxu0 %v1769
      %v2125 = vpop.f32.mrf.mxu0
      %v2126 = vadd.f32 %v2029, %v2125
      %v2127 = vpop.f32.mrf.mxu0
      %v2128 = vpop.f32.mrf.mxu0
      %v2129 = vadd.f32 %v2032, %v2128
      %v2130 = vpop.f32.mrf.mxu0
      %2131 = vdwg.mxu0
      %v2164 = vunpack.c.l.b16 %v1504
      %v2165 = vunpack.c.h.b16 %v1504
      %v2166 = vunpack.c.l.b16 %v1505
      %v2167 = vunpack.c.l.b16 %v1506
      %v2168 = vunpack.c.h.b16 %v1506
      %v2169 = vunpack.c.l.b16 %v1507
      %v2170 = vunpack.c.l.b16 %v1508
      %v2171 = vunpack.c.h.b16 %v1508
      %v2172 = vunpack.c.l.b16 %v1509
      %v2173 = vunpack.c.l.b16 %v1510
      %v2174 = vunpack.c.h.b16 %v1510
      %v2175 = vunpack.c.l.b16 %v1511
      %v2176 = vunpack.c.l.b16 %v1512
      %v2177 = vunpack.c.h.b16 %v1512
      %v2178 = vunpack.c.l.b16 %v1513
      %v2179 = vunpack.c.l.b16 %v1514
      %v2180 = vunpack.c.h.b16 %v1514
      %v2181 = vunpack.c.l.b16 %v1515
      %v2182 = vunpack.c.l.b16 %v1516
      %v2183 = vunpack.c.h.b16 %v1516
      %v2184 = vunpack.c.l.b16 %v1517
      %v2185 = vunpack.c.l.b16 %v1518
      %v2186 = vunpack.c.h.b16 %v1518
      %v2187 = vunpack.c.l.b16 %v1519
      %v2188 = vunpack.c.l.b16 %v1520
      %v2189 = vunpack.c.h.b16 %v1520
      %v2190 = vunpack.c.l.b16 %v1521
      %v2191 = vunpack.c.l.b16 %v1522
      %v2192 = vunpack.c.h.b16 %v1522
      %v2193 = vunpack.c.l.b16 %v1523
      %v2194 = vunpack.c.l.b16 %v1524
      %v2195 = vunpack.c.h.b16 %v1524
      %v2196 = vunpack.c.l.b16 %v1525
      %v2197 = vunpack.c.l.b16 %v1526
      %v2198 = vunpack.c.h.b16 %v1526
      %v2199 = vunpack.c.l.b16 %v1527
      %v2200 = vunpack.c.l.b16 %v1528
      %v2201 = vunpack.c.h.b16 %v1528
      %v2202 = vunpack.c.l.b16 %v1529
      %v2203 = vunpack.c.l.b16 %v1530
      %v2204 = vunpack.c.h.b16 %v1530
      %v2205 = vunpack.c.l.b16 %v1531
      %v2206 = vunpack.c.l.b16 %v1532
      %v2207 = vunpack.c.h.b16 %v1532
      %v2208 = vunpack.c.l.b16 %v1533
      %v2209 = vunpack.c.l.b16 %v1534
      %v2210 = vunpack.c.h.b16 %v1534
      %v2211 = vunpack.c.l.b16 %v1535
      %v2212 = vpack.c.b16 %v2167, %v2164
      %v2213 = vpack.c.b16 %v2168, %v2165
      %v2214 = vpack.c.b16 %v2169, %v2166
      %v2215 = vpack.c.b16 %v2173, %v2170
      %v2216 = vpack.c.b16 %v2174, %v2171
      %v2217 = vpack.c.b16 %v2175, %v2172
      %v2218 = vpack.c.b16 %v2179, %v2176
      %v2219 = vpack.c.b16 %v2180, %v2177
      %v2220 = vpack.c.b16 %v2181, %v2178
      %v2221 = vpack.c.b16 %v2185, %v2182
      %v2222 = vpack.c.b16 %v2186, %v2183
      %v2223 = vpack.c.b16 %v2187, %v2184
      %v2224 = vpack.c.b16 %v2191, %v2188
      %v2225 = vpack.c.b16 %v2192, %v2189
      %v2226 = vpack.c.b16 %v2193, %v2190
      %v2227 = vpack.c.b16 %v2197, %v2194
      %v2228 = vpack.c.b16 %v2198, %v2195
      %v2229 = vpack.c.b16 %v2199, %v2196
      %v2230 = vpack.c.b16 %v2203, %v2200
      %v2231 = vpack.c.b16 %v2204, %v2201
      %v2232 = vpack.c.b16 %v2205, %v2202
      %v2233 = vpack.c.b16 %v2209, %v2206
      %v2234 = vpack.c.b16 %v2210, %v2207
      %v2235 = vpack.c.b16 %v2211, %v2208
      %v2308 = vunpack.c.l.b16 %v1536
      %v2309 = vunpack.c.l.b16 %v1537
      %v2310 = vunpack.c.l.b16 %v1538
      %v2311 = vunpack.c.l.b16 %v1539
      %v2312 = vunpack.c.l.b16 %v1540
      %v2313 = vunpack.c.l.b16 %v1541
      %v2314 = vunpack.c.l.b16 %v1542
      %v2315 = vunpack.c.l.b16 %v1543
      %v2316 = vunpack.c.l.b16 %v1544
      %v2317 = vunpack.c.l.b16 %v1545
      %v2318 = vunpack.c.l.b16 %v1546
      %v2319 = vunpack.c.l.b16 %v1547
      %v2320 = vunpack.c.l.b16 %v1548
      %v2321 = vunpack.c.l.b16 %v1549
      %v2322 = vunpack.c.l.b16 %v1550
      %v2323 = vunpack.c.l.b16 %v1551
      %v2324 = vunpack.c.l.b16 %v1552
      %v2325 = vunpack.c.l.b16 %v1553
      %v2326 = vunpack.c.l.b16 %v1554
      %v2327 = vunpack.c.l.b16 %v1555
      %v2328 = vunpack.c.l.b16 %v1556
      %v2329 = vunpack.c.l.b16 %v1557
      %v2330 = vunpack.c.l.b16 %v1558
      %v2331 = vunpack.c.l.b16 %v1559
      %v2332 = vunpack.c.l.b16 %v1560
      %v2333 = vunpack.c.l.b16 %v1561
      %v2334 = vunpack.c.l.b16 %v1562
      %v2335 = vunpack.c.l.b16 %v1563
      %v2336 = vunpack.c.l.b16 %v1564
      %v2337 = vunpack.c.l.b16 %v1565
      %v2338 = vunpack.c.l.b16 %v1566
      %v2339 = vunpack.c.l.b16 %v1567
      %v2340 = vunpack.c.l.b16 %v1568
      %v2341 = vunpack.c.l.b16 %v1569
      %v2342 = vunpack.c.l.b16 %v1570
      %v2343 = vunpack.c.l.b16 %v1571
      %v2344 = vunpack.c.l.b16 %v1572
      %v2345 = vunpack.c.l.b16 %v1573
      %v2346 = vunpack.c.l.b16 %v1574
      %v2347 = vunpack.c.l.b16 %v1575
      %v2348 = vunpack.c.l.b16 %v1576
      %v2349 = vunpack.c.l.b16 %v1577
      %v2350 = vunpack.c.l.b16 %v1578
      %v2351 = vunpack.c.l.b16 %v1579
      %v2352 = vunpack.c.l.b16 %v1580
      %v2353 = vunpack.c.l.b16 %v1581
      %v2354 = vunpack.c.l.b16 %v1582
      %v2355 = vunpack.c.l.b16 %v1583
      %v2356 = vpack.c.b16 %v2309, %v2308
      %v2357 = vpack.c.b16 %v2311, %v2310
      %v2358 = vpack.c.b16 %v2313, %v2312
      %v2359 = vpack.c.b16 %v2315, %v2314
      %v2360 = vpack.c.b16 %v2317, %v2316
      %v2361 = vpack.c.b16 %v2319, %v2318
      %v2362 = vpack.c.b16 %v2321, %v2320
      %v2363 = vpack.c.b16 %v2323, %v2322
      %v2364 = vpack.c.b16 %v2325, %v2324
      %v2365 = vpack.c.b16 %v2327, %v2326
      %v2366 = vpack.c.b16 %v2329, %v2328
      %v2367 = vpack.c.b16 %v2331, %v2330
      %v2368 = vpack.c.b16 %v2333, %v2332
      %v2369 = vpack.c.b16 %v2335, %v2334
      %v2370 = vpack.c.b16 %v2337, %v2336
      %v2371 = vpack.c.b16 %v2339, %v2338
      %v2372 = vpack.c.b16 %v2341, %v2340
      %v2373 = vpack.c.b16 %v2343, %v2342
      %v2374 = vpack.c.b16 %v2345, %v2344
      %v2375 = vpack.c.b16 %v2347, %v2346
      %v2376 = vpack.c.b16 %v2349, %v2348
      %v2377 = vpack.c.b16 %v2351, %v2350
      %v2378 = vpack.c.b16 %v2353, %v2352
      %v2379 = vpack.c.b16 %v2355, %v2354
      %2404 = vmatprep.subr.bf16.mxu0 0
      %2405 = vmatpush1.bf16.msra.mxu0 %v2363
      %2406 = vmatprep.subr.bf16.mxu0 0
      %2407 = vmatpush1.bf16.msra.mxu0 %v2362
      %2408 = vmatprep.subr.bf16.mxu0 0
      %2409 = vmatpush1.bf16.msra.mxu0 %v2361
      %2410 = vmatprep.subr.bf16.mxu0 0
      %2411 = vmatpush1.bf16.msra.mxu0 %v2360
      %2412 = vmatprep.subr.bf16.mxu0 0
      %2413 = vmatpush1.bf16.msra.mxu0 %v2359
      %2414 = vmatprep.subr.bf16.mxu0 0
      %2415 = vmatpush1.bf16.msra.mxu0 %v2358
      %2416 = vmatprep.subr.bf16.mxu0 0
      %2417 = vmatpush1.bf16.msra.mxu0 %v2357
      %2418 = vmatprep.subr.bf16.mxu0 0
      %2419 = vmatpush1.bf16.msra.mxu0 %v2356
      %2420 = vmatprep.subr.bf16.mxu0 0
      %2421 = vmatpush2.bf16.msra.mxu0 %v2371
      %2422 = vmatprep.subr.bf16.mxu0 0
      %2423 = vmatpush2.bf16.msra.mxu0 %v2370
      %2424 = vmatprep.subr.bf16.mxu0 0
      %2425 = vmatpush2.bf16.msra.mxu0 %v2369
      %2426 = vmatprep.subr.bf16.mxu0 0
      %2427 = vmatpush2.bf16.msra.mxu0 %v2368
      %2428 = vmatprep.subr.bf16.mxu0 0
      %2429 = vmatpush2.bf16.msra.mxu0 %v2367
      %2430 = vmatprep.subr.bf16.mxu0 0
      %2431 = vmatpush2.bf16.msra.mxu0 %v2366
      %2432 = vmatprep.subr.bf16.mxu0 0
      %2433 = vmatpush2.bf16.msra.mxu0 %v2365
      %2434 = vmatprep.subr.bf16.mxu0 0
      %2435 = vmatpush2.bf16.msra.mxu0 %v2364
      %2436 = vmatprep.mubr.bf16.mxu0 %v2213
      %2437 = vmatmul.mubr.bf16.gmra.mxu0 %v2212
      %v2438 = vpop.f32.mrf.mxu0
      %v2439 = vadd.f32 %v2070, %v2438
      %v2440 = vpop.f32.mrf.mxu0
      %v2441 = vpop.f32.mrf.mxu0
      %v2442 = vadd.f32 %v2073, %v2441
      %v2443 = vpop.f32.mrf.mxu0
      %2444 = vmatprep.mubr.bf16.mxu0 %v2216
      %2445 = vmatmul.mubr.bf16.gmra.mxu0 %v2215
      %v2446 = vpop.f32.mrf.mxu0
      %v2447 = vadd.f32 %v2078, %v2446
      %v2448 = vpop.f32.mrf.mxu0
      %v2449 = vpop.f32.mrf.mxu0
      %v2450 = vadd.f32 %v2081, %v2449
      %v2451 = vpop.f32.mrf.mxu0
      %2452 = vmatprep.mubr.bf16.mxu0 %v2219
      %2453 = vmatmul.mubr.bf16.gmra.mxu0 %v2218
      %v2454 = vpop.f32.mrf.mxu0
      %v2455 = vadd.f32 %v2086, %v2454
      %v2456 = vpop.f32.mrf.mxu0
      %v2457 = vpop.f32.mrf.mxu0
      %v2458 = vadd.f32 %v2089, %v2457
      %v2459 = vpop.f32.mrf.mxu0
      %2460 = vmatprep.mubr.bf16.mxu0 %v2222
      %2461 = vmatmul.mubr.bf16.gmra.mxu0 %v2221
      %v2462 = vpop.f32.mrf.mxu0
      %v2463 = vadd.f32 %v2094, %v2462
      %v2464 = vpop.f32.mrf.mxu0
      %v2465 = vpop.f32.mrf.mxu0
      %v2466 = vadd.f32 %v2097, %v2465
      %v2467 = vpop.f32.mrf.mxu0
      %2468 = vmatprep.mubr.bf16.mxu0 %v2225
      %2469 = vmatmul.mubr.bf16.gmra.mxu0 %v2224
      %v2470 = vpop.f32.mrf.mxu0
      %v2471 = vadd.f32 %v2102, %v2470
      %v2472 = vpop.f32.mrf.mxu0
      %v2473 = vpop.f32.mrf.mxu0
      %v2474 = vadd.f32 %v2105, %v2473
      %v2475 = vpop.f32.mrf.mxu0
      %2476 = vmatprep.mubr.bf16.mxu0 %v2228
      %2477 = vmatmul.mubr.bf16.gmra.mxu0 %v2227
      %v2478 = vpop.f32.mrf.mxu0
      %v2479 = vadd.f32 %v2110, %v2478
      %v2480 = vpop.f32.mrf.mxu0
      %v2481 = vpop.f32.mrf.mxu0
      %v2482 = vadd.f32 %v2113, %v2481
      %v2483 = vpop.f32.mrf.mxu0
      %2484 = vmatprep.mubr.bf16.mxu0 %v2231
      %2485 = vmatmul.mubr.bf16.gmra.mxu0 %v2230
      %v2486 = vpop.f32.mrf.mxu0
      %v2487 = vadd.f32 %v2118, %v2486
      %v2488 = vpop.f32.mrf.mxu0
      %v2489 = vpop.f32.mrf.mxu0
      %v2490 = vadd.f32 %v2121, %v2489
      %v2491 = vpop.f32.mrf.mxu0
      %2492 = vmatprep.mubr.bf16.mxu0 %v2234
      %2493 = vmatmul.mubr.bf16.gmra.mxu0 %v2233
      %v2494 = vpop.f32.mrf.mxu0
      %v2495 = vadd.f32 %v2126, %v2494
      %v2496 = vpop.f32.mrf.mxu0
      %v2497 = vpop.f32.mrf.mxu0
      %v2498 = vadd.f32 %v2129, %v2497
      %v2499 = vpop.f32.mrf.mxu0
      %2500 = vdwg.mxu0
      %2501 = vmatprep.subr.bf16.mxu0 0
      %2502 = vmatpush1.bf16.msra.mxu0 %v2379
      %2503 = vmatprep.subr.bf16.mxu0 0
      %2504 = vmatpush1.bf16.msra.mxu0 %v2378
      %2505 = vmatprep.subr.bf16.mxu0 0
      %2506 = vmatpush1.bf16.msra.mxu0 %v2377
      %2507 = vmatprep.subr.bf16.mxu0 0
      %2508 = vmatpush1.bf16.msra.mxu0 %v2376
      %2509 = vmatprep.subr.bf16.mxu0 0
      %2510 = vmatpush1.bf16.msra.mxu0 %v2375
      %2511 = vmatprep.subr.bf16.mxu0 0
      %2512 = vmatpush1.bf16.msra.mxu0 %v2374
      %2513 = vmatprep.subr.bf16.mxu0 0
      %2514 = vmatpush1.bf16.msra.mxu0 %v2373
      %2515 = vmatprep.subr.bf16.mxu0 0
      %2516 = vmatpush1.bf16.msra.mxu0 %v2372
      %2517 = vmatprep.subr.bf16.mxu0 0
      %2518 = vmatpush2.bf16.msra.mxu0 0
      %2519 = vmatprep.subr.bf16.mxu0 0
      %2520 = vmatpush2.bf16.msra.mxu0 0
      %2521 = vmatprep.subr.bf16.mxu0 0
      %2522 = vmatpush2.bf16.msra.mxu0 0
      %2523 = vmatprep.subr.bf16.mxu0 0
      %2524 = vmatpush2.bf16.msra.mxu0 0
      %2525 = vmatprep.subr.bf16.mxu0 0
      %2526 = vmatpush2.bf16.msra.mxu0 0
      %2527 = vmatprep.subr.bf16.mxu0 0
      %2528 = vmatpush2.bf16.msra.mxu0 0
      %2529 = vmatprep.subr.bf16.mxu0 0
      %2530 = vmatpush2.bf16.msra.mxu0 0
      %2531 = vmatprep.subr.bf16.mxu0 0
      %2532 = vmatpush2.bf16.msra.mxu0 0
      %2533 = vmatprep.mubr.bf16.mxu0 0
      %2534 = vmatmul.mubr.bf16.gmra.mxu0 %v2214
      %v2535 = vpop.f32.mrf.mxu0
      %v2536 = vadd.f32 %v2439, %v2535
      %v2537 = vpop.f32.mrf.mxu0
      %v2538 = vpop.f32.mrf.mxu0
      %v2539 = vadd.f32 %v2442, %v2538
      %v2540 = vpop.f32.mrf.mxu0
      %2541 = vmatprep.mubr.bf16.mxu0 0
      %2542 = vmatmul.mubr.bf16.gmra.mxu0 %v2217
      %v2543 = vpop.f32.mrf.mxu0
      %v2544 = vadd.f32 %v2447, %v2543
      %v2545 = vpop.f32.mrf.mxu0
      %v2546 = vpop.f32.mrf.mxu0
      %v2547 = vadd.f32 %v2450, %v2546
      %v2548 = vpop.f32.mrf.mxu0
      %2549 = vmatprep.mubr.bf16.mxu0 0
      %2550 = vmatmul.mubr.bf16.gmra.mxu0 %v2220
      %v2551 = vpop.f32.mrf.mxu0
      %v2552 = vadd.f32 %v2455, %v2551
      %v2553 = vpop.f32.mrf.mxu0
      %v2554 = vpop.f32.mrf.mxu0
      %v2555 = vadd.f32 %v2458, %v2554
      %v2556 = vpop.f32.mrf.mxu0
      %2557 = vmatprep.mubr.bf16.mxu0 0
      %2558 = vmatmul.mubr.bf16.gmra.mxu0 %v2223
      %v2559 = vpop.f32.mrf.mxu0
      %v2560 = vadd.f32 %v2463, %v2559
      %v2561 = vpop.f32.mrf.mxu0
      %v2562 = vpop.f32.mrf.mxu0
      %v2563 = vadd.f32 %v2466, %v2562
      %v2564 = vpop.f32.mrf.mxu0
      %2565 = vmatprep.mubr.bf16.mxu0 0
      %2566 = vmatmul.mubr.bf16.gmra.mxu0 %v2226
      %v2567 = vpop.f32.mrf.mxu0
      %v2568 = vadd.f32 %v2471, %v2567
      %v2569 = vpop.f32.mrf.mxu0
      %v2570 = vpop.f32.mrf.mxu0
      %v2571 = vadd.f32 %v2474, %v2570
      %v2572 = vpop.f32.mrf.mxu0
      %2573 = vmatprep.mubr.bf16.mxu0 0
      %2574 = vmatmul.mubr.bf16.gmra.mxu0 %v2229
      %v2575 = vpop.f32.mrf.mxu0
      %v2576 = vadd.f32 %v2479, %v2575
      %v2577 = vpop.f32.mrf.mxu0
      %v2578 = vpop.f32.mrf.mxu0
      %v2579 = vadd.f32 %v2482, %v2578
      %v2580 = vpop.f32.mrf.mxu0
      %2581 = vmatprep.mubr.bf16.mxu0 0
      %2582 = vmatmul.mubr.bf16.gmra.mxu0 %v2232
      %v2583 = vpop.f32.mrf.mxu0
      %v2584 = vadd.f32 %v2487, %v2583
      %v2585 = vpop.f32.mrf.mxu0
      %v2586 = vpop.f32.mrf.mxu0
      %v2587 = vadd.f32 %v2490, %v2586
      %v2588 = vpop.f32.mrf.mxu0
      %2589 = vmatprep.mubr.bf16.mxu0 0
      %2590 = vmatmul.mubr.bf16.gmra.mxu0 %v2235
      %v2591 = vpop.f32.mrf.mxu0
      %v2592 = vadd.f32 %v2495, %v2591
      %v2593 = vpop.f32.mrf.mxu0
      %v2594 = vpop.f32.mrf.mxu0
      %v2595 = vadd.f32 %v2498, %v2594
      %v2596 = vpop.f32.mrf.mxu0
      %2597 = vdwg.mxu0
      %s2598 = scalar_lea.vmem [#allocation3], 48
      %v2599 = vld [vmem:[%s2598] sm:$0xff]
      %v2600 = vld [vmem:[%s2598 + $0x8] sm:$0xf]
      %v2601 = vld [vmem:[%s2598 + $0xc] sm:$0xff]
      %v2602 = vld [vmem:[%s2598 + $0x14] sm:$0xf]
      %v2603 = vld [vmem:[%s2598 + $0x18] sm:$0xff]
      %v2604 = vld [vmem:[%s2598 + $0x20] sm:$0xf]
      %v2605 = vld [vmem:[%s2598 + $0x24] sm:$0xff]
      %v2606 = vld [vmem:[%s2598 + $0x2c] sm:$0xf]
      %v2607 = vld [vmem:[%s2598 + $0x30] sm:$0xff]
      %v2608 = vld [vmem:[%s2598 + $0x38] sm:$0xf]
      %v2609 = vld [vmem:[%s2598 + $0x3c] sm:$0xff]
      %v2610 = vld [vmem:[%s2598 + $0x44] sm:$0xf]
      %v2611 = vld [vmem:[%s2598 + $0x48] sm:$0xff]
      %v2612 = vld [vmem:[%s2598 + $0x50] sm:$0xf]
      %v2613 = vld [vmem:[%s2598 + $0x54] sm:$0xff]
      %v2614 = vld [vmem:[%s2598 + $0x5c] sm:$0xf]
      %v2615 = vld [vmem:[%s2598 + $0x60] sm:$0xff]
      %v2616 = vld [vmem:[%s2598 + $0x68] sm:$0xf]
      %v2617 = vld [vmem:[%s2598 + $0x6c] sm:$0xff]
      %v2618 = vld [vmem:[%s2598 + $0x74] sm:$0xf]
      %v2619 = vld [vmem:[%s2598 + $0x78] sm:$0xff]
      %v2620 = vld [vmem:[%s2598 + $0x80] sm:$0xf]
      %v2621 = vld [vmem:[%s2598 + $0x84] sm:$0xff]
      %v2622 = vld [vmem:[%s2598 + $0x8c] sm:$0xf]
      %v2623 = vld [vmem:[%s2598 + $0x90] sm:$0xff]
      %v2624 = vld [vmem:[%s2598 + $0x98] sm:$0xf]
      %v2625 = vld [vmem:[%s2598 + $0x9c] sm:$0xff]
      %v2626 = vld [vmem:[%s2598 + $0xa4] sm:$0xf]
      %v2627 = vld [vmem:[%s2598 + $0xa8] sm:$0xff]
      %v2628 = vld [vmem:[%s2598 + $0xb0] sm:$0xf]
      %v2629 = vld [vmem:[%s2598 + $0xb4] sm:$0xff]
      %v2630 = vld [vmem:[%s2598 + $0xbc] sm:$0xf]
      %s2631 = scalar_lea.vmem %s3, 384
      %v2632 = vld [vmem:[%s2631] sm:$0xf]
      %v2633 = vld [vmem:[%s2631 + $0x4] sm:$0xf]
      %v2634 = vld [vmem:[%s2631 + $0x8] sm:$0xf]
      %v2635 = vld [vmem:[%s2631 + $0xc] sm:$0xf]
      %v2636 = vld [vmem:[%s2631 + $0x10] sm:$0xf]
      %v2637 = vld [vmem:[%s2631 + $0x14] sm:$0xf]
      %v2638 = vld [vmem:[%s2631 + $0x18] sm:$0xf]
      %v2639 = vld [vmem:[%s2631 + $0x1c] sm:$0xf]
      %v2640 = vld [vmem:[%s2631 + $0x20] sm:$0xf]
      %v2641 = vld [vmem:[%s2631 + $0x24] sm:$0xf]
      %v2642 = vld [vmem:[%s2631 + $0x28] sm:$0xf]
      %v2643 = vld [vmem:[%s2631 + $0x2c] sm:$0xf]
      %v2644 = vld [vmem:[%s2631 + $0x30] sm:$0xf]
      %v2645 = vld [vmem:[%s2631 + $0x34] sm:$0xf]
      %v2646 = vld [vmem:[%s2631 + $0x38] sm:$0xf]
      %v2647 = vld [vmem:[%s2631 + $0x3c] sm:$0xf]
      %v2648 = vld [vmem:[%s2631 + $0x40] sm:$0xf]
      %v2649 = vld [vmem:[%s2631 + $0x44] sm:$0xf]
      %v2650 = vld [vmem:[%s2631 + $0x48] sm:$0xf]
      %v2651 = vld [vmem:[%s2631 + $0x4c] sm:$0xf]
      %v2652 = vld [vmem:[%s2631 + $0x50] sm:$0xf]
      %v2653 = vld [vmem:[%s2631 + $0x54] sm:$0xf]
      %v2654 = vld [vmem:[%s2631 + $0x58] sm:$0xf]
      %v2655 = vld [vmem:[%s2631 + $0x5c] sm:$0xf]
      %v2656 = vld [vmem:[%s2631 + $0x60] sm:$0xf]
      %v2657 = vld [vmem:[%s2631 + $0x64] sm:$0xf]
      %v2658 = vld [vmem:[%s2631 + $0x68] sm:$0xf]
      %v2659 = vld [vmem:[%s2631 + $0x6c] sm:$0xf]
      %v2660 = vld [vmem:[%s2631 + $0x70] sm:$0xf]
      %v2661 = vld [vmem:[%s2631 + $0x74] sm:$0xf]
      %v2662 = vld [vmem:[%s2631 + $0x78] sm:$0xf]
      %v2663 = vld [vmem:[%s2631 + $0x7c] sm:$0xf]
      %v2664 = vld [vmem:[%s2631 + $0x80] sm:$0xf]
      %v2665 = vld [vmem:[%s2631 + $0x84] sm:$0xf]
      %v2666 = vld [vmem:[%s2631 + $0x88] sm:$0xf]
      %v2667 = vld [vmem:[%s2631 + $0x8c] sm:$0xf]
      %v2668 = vld [vmem:[%s2631 + $0x90] sm:$0xf]
      %v2669 = vld [vmem:[%s2631 + $0x94] sm:$0xf]
      %v2670 = vld [vmem:[%s2631 + $0x98] sm:$0xf]
      %v2671 = vld [vmem:[%s2631 + $0x9c] sm:$0xf]
      %v2672 = vld [vmem:[%s2631 + $0xa0] sm:$0xf]
      %v2673 = vld [vmem:[%s2631 + $0xa4] sm:$0xf]
      %v2674 = vld [vmem:[%s2631 + $0xa8] sm:$0xf]
      %v2675 = vld [vmem:[%s2631 + $0xac] sm:$0xf]
      %v2676 = vld [vmem:[%s2631 + $0xb0] sm:$0xf]
      %v2677 = vld [vmem:[%s2631 + $0xb4] sm:$0xf]
      %v2678 = vld [vmem:[%s2631 + $0xb8] sm:$0xf]
      %v2679 = vld [vmem:[%s2631 + $0xbc] sm:$0xf]
      %v2712 = vunpack.c.l.b16 %v2599
      %v2713 = vunpack.c.h.b16 %v2599
      %v2714 = vunpack.c.l.b16 %v2600
      %v2715 = vunpack.c.l.b16 %v2601
      %v2716 = vunpack.c.h.b16 %v2601
      %v2717 = vunpack.c.l.b16 %v2602
      %v2718 = vunpack.c.l.b16 %v2603
      %v2719 = vunpack.c.h.b16 %v2603
      %v2720 = vunpack.c.l.b16 %v2604
      %v2721 = vunpack.c.l.b16 %v2605
      %v2722 = vunpack.c.h.b16 %v2605
      %v2723 = vunpack.c.l.b16 %v2606
      %v2724 = vunpack.c.l.b16 %v2607
      %v2725 = vunpack.c.h.b16 %v2607
      %v2726 = vunpack.c.l.b16 %v2608
      %v2727 = vunpack.c.l.b16 %v2609
      %v2728 = vunpack.c.h.b16 %v2609
      %v2729 = vunpack.c.l.b16 %v2610
      %v2730 = vunpack.c.l.b16 %v2611
      %v2731 = vunpack.c.h.b16 %v2611
      %v2732 = vunpack.c.l.b16 %v2612
      %v2733 = vunpack.c.l.b16 %v2613
      %v2734 = vunpack.c.h.b16 %v2613
      %v2735 = vunpack.c.l.b16 %v2614
      %v2736 = vunpack.c.l.b16 %v2615
      %v2737 = vunpack.c.h.b16 %v2615
      %v2738 = vunpack.c.l.b16 %v2616
      %v2739 = vunpack.c.l.b16 %v2617
      %v2740 = vunpack.c.h.b16 %v2617
      %v2741 = vunpack.c.l.b16 %v2618
      %v2742 = vunpack.c.l.b16 %v2619
      %v2743 = vunpack.c.h.b16 %v2619
      %v2744 = vunpack.c.l.b16 %v2620
      %v2745 = vunpack.c.l.b16 %v2621
      %v2746 = vunpack.c.h.b16 %v2621
      %v2747 = vunpack.c.l.b16 %v2622
      %v2748 = vunpack.c.l.b16 %v2623
      %v2749 = vunpack.c.h.b16 %v2623
      %v2750 = vunpack.c.l.b16 %v2624
      %v2751 = vunpack.c.l.b16 %v2625
      %v2752 = vunpack.c.h.b16 %v2625
      %v2753 = vunpack.c.l.b16 %v2626
      %v2754 = vunpack.c.l.b16 %v2627
      %v2755 = vunpack.c.h.b16 %v2627
      %v2756 = vunpack.c.l.b16 %v2628
      %v2757 = vunpack.c.l.b16 %v2629
      %v2758 = vunpack.c.h.b16 %v2629
      %v2759 = vunpack.c.l.b16 %v2630
      %v2760 = vpack.c.b16 %v2715, %v2712
      %v2761 = vpack.c.b16 %v2716, %v2713
      %v2762 = vpack.c.b16 %v2717, %v2714
      %v2763 = vpack.c.b16 %v2721, %v2718
      %v2764 = vpack.c.b16 %v2722, %v2719
      %v2765 = vpack.c.b16 %v2723, %v2720
      %v2766 = vpack.c.b16 %v2727, %v2724
      %v2767 = vpack.c.b16 %v2728, %v2725
      %v2768 = vpack.c.b16 %v2729, %v2726
      %v2769 = vpack.c.b16 %v2733, %v2730
      %v2770 = vpack.c.b16 %v2734, %v2731
      %v2771 = vpack.c.b16 %v2735, %v2732
      %v2772 = vpack.c.b16 %v2739, %v2736
      %v2773 = vpack.c.b16 %v2740, %v2737
      %v2774 = vpack.c.b16 %v2741, %v2738
      %v2775 = vpack.c.b16 %v2745, %v2742
      %v2776 = vpack.c.b16 %v2746, %v2743
      %v2777 = vpack.c.b16 %v2747, %v2744
      %v2778 = vpack.c.b16 %v2751, %v2748
      %v2779 = vpack.c.b16 %v2752, %v2749
      %v2780 = vpack.c.b16 %v2753, %v2750
      %v2781 = vpack.c.b16 %v2757, %v2754
      %v2782 = vpack.c.b16 %v2758, %v2755
      %v2783 = vpack.c.b16 %v2759, %v2756
      %v2856 = vunpack.c.l.b16 %v2632
      %v2857 = vunpack.c.l.b16 %v2633
      %v2858 = vunpack.c.l.b16 %v2634
      %v2859 = vunpack.c.l.b16 %v2635
      %v2860 = vunpack.c.l.b16 %v2636
      %v2861 = vunpack.c.l.b16 %v2637
      %v2862 = vunpack.c.l.b16 %v2638
      %v2863 = vunpack.c.l.b16 %v2639
      %v2864 = vunpack.c.l.b16 %v2640
      %v2865 = vunpack.c.l.b16 %v2641
      %v2866 = vunpack.c.l.b16 %v2642
      %v2867 = vunpack.c.l.b16 %v2643
      %v2868 = vunpack.c.l.b16 %v2644
      %v2869 = vunpack.c.l.b16 %v2645
      %v2870 = vunpack.c.l.b16 %v2646
      %v2871 = vunpack.c.l.b16 %v2647
      %v2872 = vunpack.c.l.b16 %v2648
      %v2873 = vunpack.c.l.b16 %v2649
      %v2874 = vunpack.c.l.b16 %v2650
      %v2875 = vunpack.c.l.b16 %v2651
      %v2876 = vunpack.c.l.b16 %v2652
      %v2877 = vunpack.c.l.b16 %v2653
      %v2878 = vunpack.c.l.b16 %v2654
      %v2879 = vunpack.c.l.b16 %v2655
      %v2880 = vunpack.c.l.b16 %v2656
      %v2881 = vunpack.c.l.b16 %v2657
      %v2882 = vunpack.c.l.b16 %v2658
      %v2883 = vunpack.c.l.b16 %v2659
      %v2884 = vunpack.c.l.b16 %v2660
      %v2885 = vunpack.c.l.b16 %v2661
      %v2886 = vunpack.c.l.b16 %v2662
      %v2887 = vunpack.c.l.b16 %v2663
      %v2888 = vunpack.c.l.b16 %v2664
      %v2889 = vunpack.c.l.b16 %v2665
      %v2890 = vunpack.c.l.b16 %v2666
      %v2891 = vunpack.c.l.b16 %v2667
      %v2892 = vunpack.c.l.b16 %v2668
      %v2893 = vunpack.c.l.b16 %v2669
      %v2894 = vunpack.c.l.b16 %v2670
      %v2895 = vunpack.c.l.b16 %v2671
      %v2896 = vunpack.c.l.b16 %v2672
      %v2897 = vunpack.c.l.b16 %v2673
      %v2898 = vunpack.c.l.b16 %v2674
      %v2899 = vunpack.c.l.b16 %v2675
      %v2900 = vunpack.c.l.b16 %v2676
      %v2901 = vunpack.c.l.b16 %v2677
      %v2902 = vunpack.c.l.b16 %v2678
      %v2903 = vunpack.c.l.b16 %v2679
      %v2904 = vpack.c.b16 %v2857, %v2856
      %v2905 = vpack.c.b16 %v2859, %v2858
      %v2906 = vpack.c.b16 %v2861, %v2860
      %v2907 = vpack.c.b16 %v2863, %v2862
      %v2908 = vpack.c.b16 %v2865, %v2864
      %v2909 = vpack.c.b16 %v2867, %v2866
      %v2910 = vpack.c.b16 %v2869, %v2868
      %v2911 = vpack.c.b16 %v2871, %v2870
      %v2912 = vpack.c.b16 %v2873, %v2872
      %v2913 = vpack.c.b16 %v2875, %v2874
      %v2914 = vpack.c.b16 %v2877, %v2876
      %v2915 = vpack.c.b16 %v2879, %v2878
      %v2916 = vpack.c.b16 %v2881, %v2880
      %v2917 = vpack.c.b16 %v2883, %v2882
      %v2918 = vpack.c.b16 %v2885, %v2884
      %v2919 = vpack.c.b16 %v2887, %v2886
      %v2920 = vpack.c.b16 %v2889, %v2888
      %v2921 = vpack.c.b16 %v2891, %v2890
      %v2922 = vpack.c.b16 %v2893, %v2892
      %v2923 = vpack.c.b16 %v2895, %v2894
      %v2924 = vpack.c.b16 %v2897, %v2896
      %v2925 = vpack.c.b16 %v2899, %v2898
      %v2926 = vpack.c.b16 %v2901, %v2900
      %v2927 = vpack.c.b16 %v2903, %v2902
      %2952 = vmatprep.subr.bf16.mxu0 0
      %2953 = vmatpush1.bf16.msra.mxu0 %v2911
      %2954 = vmatprep.subr.bf16.mxu0 0
      %2955 = vmatpush1.bf16.msra.mxu0 %v2910
      %2956 = vmatprep.subr.bf16.mxu0 0
      %2957 = vmatpush1.bf16.msra.mxu0 %v2909
      %2958 = vmatprep.subr.bf16.mxu0 0
      %2959 = vmatpush1.bf16.msra.mxu0 %v2908
      %2960 = vmatprep.subr.bf16.mxu0 0
      %2961 = vmatpush1.bf16.msra.mxu0 %v2907
      %2962 = vmatprep.subr.bf16.mxu0 0
      %2963 = vmatpush1.bf16.msra.mxu0 %v2906
      %2964 = vmatprep.subr.bf16.mxu0 0
      %2965 = vmatpush1.bf16.msra.mxu0 %v2905
      %2966 = vmatprep.subr.bf16.mxu0 0
      %2967 = vmatpush1.bf16.msra.mxu0 %v2904
      %2968 = vmatprep.subr.bf16.mxu0 0
      %2969 = vmatpush2.bf16.msra.mxu0 %v2919
      %2970 = vmatprep.subr.bf16.mxu0 0
      %2971 = vmatpush2.bf16.msra.mxu0 %v2918
      %2972 = vmatprep.subr.bf16.mxu0 0
      %2973 = vmatpush2.bf16.msra.mxu0 %v2917
      %2974 = vmatprep.subr.bf16.mxu0 0
      %2975 = vmatpush2.bf16.msra.mxu0 %v2916
      %2976 = vmatprep.subr.bf16.mxu0 0
      %2977 = vmatpush2.bf16.msra.mxu0 %v2915
      %2978 = vmatprep.subr.bf16.mxu0 0
      %2979 = vmatpush2.bf16.msra.mxu0 %v2914
      %2980 = vmatprep.subr.bf16.mxu0 0
      %2981 = vmatpush2.bf16.msra.mxu0 %v2913
      %2982 = vmatprep.subr.bf16.mxu0 0
      %2983 = vmatpush2.bf16.msra.mxu0 %v2912
      %2984 = vmatprep.mubr.bf16.mxu0 %v2761
      %2985 = vmatmul.mubr.bf16.gmra.mxu0 %v2760
      %v2986 = vpop.f32.mrf.mxu0
      %v2987 = vadd.f32 0.0, %v2986
      %v2988 = vpop.f32.mrf.mxu0
      %v2989 = vpop.f32.mrf.mxu0
      %v2990 = vadd.f32 0.0, %v2989
      %v2991 = vpop.f32.mrf.mxu0
      %2992 = vmatprep.mubr.bf16.mxu0 %v2764
      %2993 = vmatmul.mubr.bf16.gmra.mxu0 %v2763
      %v2994 = vpop.f32.mrf.mxu0
      %v2995 = vadd.f32 0.0, %v2994
      %v2996 = vpop.f32.mrf.mxu0
      %v2997 = vpop.f32.mrf.mxu0
      %v2998 = vadd.f32 0.0, %v2997
      %v2999 = vpop.f32.mrf.mxu0
      %3000 = vmatprep.mubr.bf16.mxu0 %v2767
      %3001 = vmatmul.mubr.bf16.gmra.mxu0 %v2766
      %v3002 = vpop.f32.mrf.mxu0
      %v3003 = vadd.f32 0.0, %v3002
      %v3004 = vpop.f32.mrf.mxu0
      %v3005 = vpop.f32.mrf.mxu0
      %v3006 = vadd.f32 0.0, %v3005
      %v3007 = vpop.f32.mrf.mxu0
      %3008 = vmatprep.mubr.bf16.mxu0 %v2770
      %3009 = vmatmul.mubr.bf16.gmra.mxu0 %v2769
      %v3010 = vpop.f32.mrf.mxu0
      %v3011 = vadd.f32 0.0, %v3010
      %v3012 = vpop.f32.mrf.mxu0
      %v3013 = vpop.f32.mrf.mxu0
      %v3014 = vadd.f32 0.0, %v3013
      %v3015 = vpop.f32.mrf.mxu0
      %3016 = vmatprep.mubr.bf16.mxu0 %v2773
      %3017 = vmatmul.mubr.bf16.gmra.mxu0 %v2772
      %v3018 = vpop.f32.mrf.mxu0
      %v3019 = vadd.f32 0.0, %v3018
      %v3020 = vpop.f32.mrf.mxu0
      %v3021 = vpop.f32.mrf.mxu0
      %v3022 = vadd.f32 0.0, %v3021
      %v3023 = vpop.f32.mrf.mxu0
      %3024 = vmatprep.mubr.bf16.mxu0 %v2776
      %3025 = vmatmul.mubr.bf16.gmra.mxu0 %v2775
      %v3026 = vpop.f32.mrf.mxu0
      %v3027 = vadd.f32 0.0, %v3026
      %v3028 = vpop.f32.mrf.mxu0
      %v3029 = vpop.f32.mrf.mxu0
      %v3030 = vadd.f32 0.0, %v3029
      %v3031 = vpop.f32.mrf.mxu0
      %3032 = vmatprep.mubr.bf16.mxu0 %v2779
      %3033 = vmatmul.mubr.bf16.gmra.mxu0 %v2778
      %v3034 = vpop.f32.mrf.mxu0
      %v3035 = vadd.f32 0.0, %v3034
      %v3036 = vpop.f32.mrf.mxu0
      %v3037 = vpop.f32.mrf.mxu0
      %v3038 = vadd.f32 0.0, %v3037
      %v3039 = vpop.f32.mrf.mxu0
      %3040 = vmatprep.mubr.bf16.mxu0 %v2782
      %3041 = vmatmul.mubr.bf16.gmra.mxu0 %v2781
      %v3042 = vpop.f32.mrf.mxu0
      %v3043 = vadd.f32 0.0, %v3042
      %v3044 = vpop.f32.mrf.mxu0
      %v3045 = vpop.f32.mrf.mxu0
      %v3046 = vadd.f32 0.0, %v3045
      %v3047 = vpop.f32.mrf.mxu0
      %3048 = vdwg.mxu0
      %3049 = vmatprep.subr.bf16.mxu0 0
      %3050 = vmatpush1.bf16.msra.mxu0 %v2927
      %3051 = vmatprep.subr.bf16.mxu0 0
      %3052 = vmatpush1.bf16.msra.mxu0 %v2926
      %3053 = vmatprep.subr.bf16.mxu0 0
      %3054 = vmatpush1.bf16.msra.mxu0 %v2925
      %3055 = vmatprep.subr.bf16.mxu0 0
      %3056 = vmatpush1.bf16.msra.mxu0 %v2924
      %3057 = vmatprep.subr.bf16.mxu0 0
      %3058 = vmatpush1.bf16.msra.mxu0 %v2923
      %3059 = vmatprep.subr.bf16.mxu0 0
      %3060 = vmatpush1.bf16.msra.mxu0 %v2922
      %3061 = vmatprep.subr.bf16.mxu0 0
      %3062 = vmatpush1.bf16.msra.mxu0 %v2921
      %3063 = vmatprep.subr.bf16.mxu0 0
      %3064 = vmatpush1.bf16.msra.mxu0 %v2920
      %3065 = vmatprep.subr.bf16.mxu0 0
      %3066 = vmatpush2.bf16.msra.mxu0 0
      %3067 = vmatprep.subr.bf16.mxu0 0
      %3068 = vmatpush2.bf16.msra.mxu0 0
      %3069 = vmatprep.subr.bf16.mxu0 0
      %3070 = vmatpush2.bf16.msra.mxu0 0
      %3071 = vmatprep.subr.bf16.mxu0 0
      %3072 = vmatpush2.bf16.msra.mxu0 0
      %3073 = vmatprep.subr.bf16.mxu0 0
      %3074 = vmatpush2.bf16.msra.mxu0 0
      %3075 = vmatprep.subr.bf16.mxu0 0
      %3076 = vmatpush2.bf16.msra.mxu0 0
      %3077 = vmatprep.subr.bf16.mxu0 0
      %3078 = vmatpush2.bf16.msra.mxu0 0
      %3079 = vmatprep.subr.bf16.mxu0 0
      %3080 = vmatpush2.bf16.msra.mxu0 0
      %3081 = vmatprep.mubr.bf16.mxu0 0
      %3082 = vmatmul.mubr.bf16.gmra.mxu0 %v2762
      %v3083 = vpop.f32.mrf.mxu0
      %v3084 = vadd.f32 %v2987, %v3083
      %v3085 = vpop.f32.mrf.mxu0
      %v3086 = vpop.f32.mrf.mxu0
      %v3087 = vadd.f32 %v2990, %v3086
      %v3088 = vpop.f32.mrf.mxu0
      %3089 = vmatprep.mubr.bf16.mxu0 0
      %3090 = vmatmul.mubr.bf16.gmra.mxu0 %v2765
      %v3091 = vpop.f32.mrf.mxu0
      %v3092 = vadd.f32 %v2995, %v3091
      %v3093 = vpop.f32.mrf.mxu0
      %v3094 = vpop.f32.mrf.mxu0
      %v3095 = vadd.f32 %v2998, %v3094
      %v3096 = vpop.f32.mrf.mxu0
      %3097 = vmatprep.mubr.bf16.mxu0 0
      %3098 = vmatmul.mubr.bf16.gmra.mxu0 %v2768
      %v3099 = vpop.f32.mrf.mxu0
      %v3100 = vadd.f32 %v3003, %v3099
      %v3101 = vpop.f32.mrf.mxu0
      %v3102 = vpop.f32.mrf.mxu0
      %v3103 = vadd.f32 %v3006, %v3102
      %v3104 = vpop.f32.mrf.mxu0
      %3105 = vmatprep.mubr.bf16.mxu0 0
      %3106 = vmatmul.mubr.bf16.gmra.mxu0 %v2771
      %v3107 = vpop.f32.mrf.mxu0
      %v3108 = vadd.f32 %v3011, %v3107
      %v3109 = vpop.f32.mrf.mxu0
      %v3110 = vpop.f32.mrf.mxu0
      %v3111 = vadd.f32 %v3014, %v3110
      %v3112 = vpop.f32.mrf.mxu0
      %3113 = vmatprep.mubr.bf16.mxu0 0
      %3114 = vmatmul.mubr.bf16.gmra.mxu0 %v2774
      %v3115 = vpop.f32.mrf.mxu0
      %v3116 = vadd.f32 %v3019, %v3115
      %v3117 = vpop.f32.mrf.mxu0
      %v3118 = vpop.f32.mrf.mxu0
      %v3119 = vadd.f32 %v3022, %v3118
      %v3120 = vpop.f32.mrf.mxu0
      %3121 = vmatprep.mubr.bf16.mxu0 0
      %3122 = vmatmul.mubr.bf16.gmra.mxu0 %v2777
      %v3123 = vpop.f32.mrf.mxu0
      %v3124 = vadd.f32 %v3027, %v3123
      %v3125 = vpop.f32.mrf.mxu0
      %v3126 = vpop.f32.mrf.mxu0
      %v3127 = vadd.f32 %v3030, %v3126
      %v3128 = vpop.f32.mrf.mxu0
      %3129 = vmatprep.mubr.bf16.mxu0 0
      %3130 = vmatmul.mubr.bf16.gmra.mxu0 %v2780
      %v3131 = vpop.f32.mrf.mxu0
      %v3132 = vadd.f32 %v3035, %v3131
      %v3133 = vpop.f32.mrf.mxu0
      %v3134 = vpop.f32.mrf.mxu0
      %v3135 = vadd.f32 %v3038, %v3134
      %v3136 = vpop.f32.mrf.mxu0
      %3137 = vmatprep.mubr.bf16.mxu0 0
      %3138 = vmatmul.mubr.bf16.gmra.mxu0 %v2783
      %v3139 = vpop.f32.mrf.mxu0
      %v3140 = vadd.f32 %v3043, %v3139
      %v3141 = vpop.f32.mrf.mxu0
      %v3142 = vpop.f32.mrf.mxu0
      %v3143 = vadd.f32 %v3046, %v3142
      %v3144 = vpop.f32.mrf.mxu0
      %3145 = vdwg.mxu0
      %v3146 = vadd.f32 %v2536, %v3084
      %v3147 = vadd.f32 %v2539, %v3087
      %v3148 = vadd.f32 %v2544, %v3092
      %v3149 = vadd.f32 %v2547, %v3095
      %v3150 = vadd.f32 %v2552, %v3100
      %v3151 = vadd.f32 %v2555, %v3103
      %v3152 = vadd.f32 %v2560, %v3108
      %v3153 = vadd.f32 %v2563, %v3111
      %v3154 = vadd.f32 %v2568, %v3116
      %v3155 = vadd.f32 %v2571, %v3119
      %v3156 = vadd.f32 %v2576, %v3124
      %v3157 = vadd.f32 %v2579, %v3127
      %v3158 = vadd.f32 %v2584, %v3132
      %v3159 = vadd.f32 %v2587, %v3135
      %v3160 = vadd.f32 %v2592, %v3140
      %v3161 = vadd.f32 %v2595, %v3143
      %v3162 = vld [vmem:[%s4] sm:$0x1]
      %v3164 = vlaneseq
      %v3165 = vshrl.u32 %v3164, 7
      %v3166 = vsub.s32 0, %v3165
      %v3167 = vrot.slane %v3162, %v3166
      %v3169 = vadd.f32 %v3146, %v3167
      %v3170 = vadd.f32 %v3147, %v3167
      %v3171 = vadd.f32 %v3148, %v3167
      %v3172 = vadd.f32 %v3149, %v3167
      %v3173 = vadd.f32 %v3150, %v3167
      %v3174 = vadd.f32 %v3151, %v3167
      %v3175 = vadd.f32 %v3152, %v3167
      %v3176 = vadd.f32 %v3153, %v3167
      %v3177 = vadd.f32 %v3154, %v3167
      %v3178 = vadd.f32 %v3155, %v3167
      %v3179 = vadd.f32 %v3156, %v3167
      %v3180 = vadd.f32 %v3157, %v3167
      %v3181 = vadd.f32 %v3158, %v3167
      %v3182 = vadd.f32 %v3159, %v3167
      %v3183 = vadd.f32 %v3160, %v3167
      %v3184 = vadd.f32 %v3161, %v3167
      %v3185 = vmax.f32 %v3169, 0.0
      %v3186 = vmax.f32 %v3170, 0.0
      %v3187 = vmax.f32 %v3171, 0.0
      %v3188 = vmax.f32 %v3172, 0.0
      %v3189 = vmax.f32 %v3173, 0.0
      %v3190 = vmax.f32 %v3174, 0.0
      %v3191 = vmax.f32 %v3175, 0.0
      %v3192 = vmax.f32 %v3176, 0.0
      %v3193 = vmax.f32 %v3177, 0.0
      %v3194 = vmax.f32 %v3178, 0.0
      %v3195 = vmax.f32 %v3179, 0.0
      %v3196 = vmax.f32 %v3180, 0.0
      %v3197 = vmax.f32 %v3181, 0.0
      %v3198 = vmax.f32 %v3182, 0.0
      %v3199 = vmax.f32 %v3183, 0.0
      %v3200 = vmax.f32 %v3184, 0.0
      %v3201 = vpack.c.bf16 %v3186, %v3185
      %v3202 = vpack.c.bf16 %v3188, %v3187
      %v3203 = vpack.c.bf16 %v3190, %v3189
      %v3204 = vpack.c.bf16 %v3192, %v3191
      %v3205 = vpack.c.bf16 %v3194, %v3193
      %v3206 = vpack.c.bf16 %v3196, %v3195
      %v3207 = vpack.c.bf16 %v3198, %v3197
      %v3208 = vpack.c.bf16 %v3200, %v3199
      %v3209 = vld [vmem:[%s5] sm:$0xf]
      %v3210 = vld [vmem:[%s5 + $0x4] sm:$0xf]
      %v3211 = vld [vmem:[%s5 + $0x8] sm:$0xf]
      %v3212 = vld [vmem:[%s5 + $0xc] sm:$0xf]
      %v3213 = vld [vmem:[%s5 + $0x10] sm:$0xf]
      %v3214 = vld [vmem:[%s5 + $0x14] sm:$0xf]
      %v3215 = vld [vmem:[%s5 + $0x18] sm:$0xf]
      %v3216 = vld [vmem:[%s5 + $0x1c] sm:$0xf]
      %v3217 = vld [vmem:[%s5 + $0x20] sm:$0xf]
      %v3218 = vld [vmem:[%s5 + $0x24] sm:$0xf]
      %v3219 = vld [vmem:[%s5 + $0x28] sm:$0xf]
      %v3220 = vld [vmem:[%s5 + $0x2c] sm:$0xf]
      %v3221 = vld [vmem:[%s5 + $0x30] sm:$0xf]
      %v3222 = vld [vmem:[%s5 + $0x34] sm:$0xf]
      %v3223 = vld [vmem:[%s5 + $0x38] sm:$0xf]
      %v3224 = vld [vmem:[%s5 + $0x3c] sm:$0xf]
      %v3225 = vld [vmem:[%s6] sm:$0x1]
      %v3227 = vlaneseq
      %v3228 = vshrl.u32 %v3227, 7
      %v3229 = vsub.s32 0, %v3228
      %v3230 = vrot.slane %v3225, %v3229
      %v3248 = vunpack.c.l.b16 %v3209
      %v3249 = vunpack.c.l.b16 %v3210
      %v3250 = vunpack.c.l.b16 %v3211
      %v3251 = vunpack.c.l.b16 %v3212
      %v3252 = vunpack.c.l.b16 %v3213
      %v3253 = vunpack.c.l.b16 %v3214
      %v3254 = vunpack.c.l.b16 %v3215
      %v3255 = vunpack.c.l.b16 %v3216
      %v3256 = vunpack.c.l.b16 %v3217
      %v3257 = vunpack.c.l.b16 %v3218
      %v3258 = vunpack.c.l.b16 %v3219
      %v3259 = vunpack.c.l.b16 %v3220
      %v3260 = vunpack.c.l.b16 %v3221
      %v3261 = vunpack.c.l.b16 %v3222
      %v3262 = vunpack.c.l.b16 %v3223
      %v3263 = vunpack.c.l.b16 %v3224
      %v3264 = vpack.c.b16 %v3249, %v3248
      %v3265 = vpack.c.b16 %v3251, %v3250
      %v3266 = vpack.c.b16 %v3253, %v3252
      %v3267 = vpack.c.b16 %v3255, %v3254
      %v3268 = vpack.c.b16 %v3257, %v3256
      %v3269 = vpack.c.b16 %v3259, %v3258
      %v3270 = vpack.c.b16 %v3261, %v3260
      %v3271 = vpack.c.b16 %v3263, %v3262
      %3280 = vmatprep.subr.bf16.mxu0 0
      %3281 = vmatpush1.bf16.msra.mxu0 %v3271
      %3282 = vmatprep.subr.bf16.mxu0 0
      %3283 = vmatpush1.bf16.msra.mxu0 %v3270
      %3284 = vmatprep.subr.bf16.mxu0 0
      %3285 = vmatpush1.bf16.msra.mxu0 %v3269
      %3286 = vmatprep.subr.bf16.mxu0 0
      %3287 = vmatpush1.bf16.msra.mxu0 %v3268
      %3288 = vmatprep.subr.bf16.mxu0 0
      %3289 = vmatpush1.bf16.msra.mxu0 %v3267
      %3290 = vmatprep.subr.bf16.mxu0 0
      %3291 = vmatpush1.bf16.msra.mxu0 %v3266
      %3292 = vmatprep.subr.bf16.mxu0 0
      %3293 = vmatpush1.bf16.msra.mxu0 %v3265
      %3294 = vmatprep.subr.bf16.mxu0 0
      %3295 = vmatpush1.bf16.msra.mxu0 %v3264
      %3296 = vmatprep.subr.bf16.mxu0 0
      %3297 = vmatpush2.bf16.msra.mxu0 0
      %3298 = vmatprep.subr.bf16.mxu0 0
      %3299 = vmatpush2.bf16.msra.mxu0 0
      %3300 = vmatprep.subr.bf16.mxu0 0
      %3301 = vmatpush2.bf16.msra.mxu0 0
      %3302 = vmatprep.subr.bf16.mxu0 0
      %3303 = vmatpush2.bf16.msra.mxu0 0
      %3304 = vmatprep.subr.bf16.mxu0 0
      %3305 = vmatpush2.bf16.msra.mxu0 0
      %3306 = vmatprep.subr.bf16.mxu0 0
      %3307 = vmatpush2.bf16.msra.mxu0 0
      %3308 = vmatprep.subr.bf16.mxu0 0
      %3309 = vmatpush2.bf16.msra.mxu0 0
      %3310 = vmatprep.subr.bf16.mxu0 0
      %3311 = vmatpush2.bf16.msra.mxu0 0
      %3312 = vmatprep.mubr.bf16.mxu0 0
      %3313 = vmatmul.mubr.bf16.gmra.mxu0 %v3201
      %v3314 = vpop.f32.mrf.mxu0
      %v3315 = vadd.f32 %v3230, %v3314
      %v3316 = vpop.f32.mrf.mxu0
      %v3317 = vpop.f32.mrf.mxu0
      %v3318 = vadd.f32 %v3230, %v3317
      %v3319 = vpop.f32.mrf.mxu0
      %3320 = vmatprep.mubr.bf16.mxu0 0
      %3321 = vmatmul.mubr.bf16.gmra.mxu0 %v3202
      %v3322 = vpop.f32.mrf.mxu0
      %v3323 = vadd.f32 %v3230, %v3322
      %v3324 = vpop.f32.mrf.mxu0
      %v3325 = vpop.f32.mrf.mxu0
      %v3326 = vadd.f32 %v3230, %v3325
      %v3327 = vpop.f32.mrf.mxu0
      %3328 = vmatprep.mubr.bf16.mxu0 0
      %3329 = vmatmul.mubr.bf16.gmra.mxu0 %v3203
      %v3330 = vpop.f32.mrf.mxu0
      %v3331 = vadd.f32 %v3230, %v3330
      %v3332 = vpop.f32.mrf.mxu0
      %v3333 = vpop.f32.mrf.mxu0
      %v3334 = vadd.f32 %v3230, %v3333
      %v3335 = vpop.f32.mrf.mxu0
      %3336 = vmatprep.mubr.bf16.mxu0 0
      %3337 = vmatmul.mubr.bf16.gmra.mxu0 %v3204
      %v3338 = vpop.f32.mrf.mxu0
      %v3339 = vadd.f32 %v3230, %v3338
      %v3340 = vpop.f32.mrf.mxu0
      %v3341 = vpop.f32.mrf.mxu0
      %v3342 = vadd.f32 %v3230, %v3341
      %v3343 = vpop.f32.mrf.mxu0
      %3344 = vmatprep.mubr.bf16.mxu0 0
      %3345 = vmatmul.mubr.bf16.gmra.mxu0 %v3205
      %v3346 = vpop.f32.mrf.mxu0
      %v3347 = vadd.f32 %v3230, %v3346
      %v3348 = vpop.f32.mrf.mxu0
      %v3349 = vpop.f32.mrf.mxu0
      %v3350 = vadd.f32 %v3230, %v3349
      %v3351 = vpop.f32.mrf.mxu0
      %3352 = vmatprep.mubr.bf16.mxu0 0
      %3353 = vmatmul.mubr.bf16.gmra.mxu0 %v3206
      %v3354 = vpop.f32.mrf.mxu0
      %v3355 = vadd.f32 %v3230, %v3354
      %v3356 = vpop.f32.mrf.mxu0
      %v3357 = vpop.f32.mrf.mxu0
      %v3358 = vadd.f32 %v3230, %v3357
      %v3359 = vpop.f32.mrf.mxu0
      %3360 = vmatprep.mubr.bf16.mxu0 0
      %3361 = vmatmul.mubr.bf16.gmra.mxu0 %v3207
      %v3362 = vpop.f32.mrf.mxu0
      %v3363 = vadd.f32 %v3230, %v3362
      %v3364 = vpop.f32.mrf.mxu0
      %v3365 = vpop.f32.mrf.mxu0
      %v3366 = vadd.f32 %v3230, %v3365
      %v3367 = vpop.f32.mrf.mxu0
      %3368 = vmatprep.mubr.bf16.mxu0 0
      %3369 = vmatmul.mubr.bf16.gmra.mxu0 %v3208
      %v3370 = vpop.f32.mrf.mxu0
      %v3371 = vadd.f32 %v3230, %v3370
      %v3372 = vpop.f32.mrf.mxu0
      %v3373 = vpop.f32.mrf.mxu0
      %v3374 = vadd.f32 %v3230, %v3373
      %v3375 = vpop.f32.mrf.mxu0
      %3376 = vdwg.mxu0
      %s3377 = sadd.s32 %s359, 1
      %s3378 = smul.u32 %s3377, 3
      %s3379 = smul.addr %s3378, 4
      %s3380 = scalar_lea.vmem %s346, %s3379
      %v3381 = vld [vmem:[%s3380] sm:$0xf]
      %v3382 = vld [vmem:[%s3380 + $0x4] sm:$0xf]
      %v3383 = vld [vmem:[%s3380 + $0x8] sm:$0x1]
      %v3384 = vld [vmem:[%s3380 + $0xc] sm:$0xf]
      %v3385 = vld [vmem:[%s3380 + $0x10] sm:$0xf]
      %v3386 = vld [vmem:[%s3380 + $0x14] sm:$0x1]
      %v3387 = vld [vmem:[%s3380 + $0x18] sm:$0xf]
      %v3388 = vld [vmem:[%s3380 + $0x1c] sm:$0xf]
      %v3389 = vld [vmem:[%s3380 + $0x20] sm:$0x1]
      %v3390 = vld [vmem:[%s3380 + $0x24] sm:$0xf]
      %v3391 = vld [vmem:[%s3380 + $0x28] sm:$0xf]
      %v3392 = vld [vmem:[%s3380 + $0x2c] sm:$0x1]
      %v3393 = vld [vmem:[%s3380 + $0x30] sm:$0xf]
      %v3394 = vld [vmem:[%s3380 + $0x34] sm:$0xf]
      %v3395 = vld [vmem:[%s3380 + $0x38] sm:$0x1]
      %v3396 = vld [vmem:[%s3380 + $0x3c] sm:$0xf]
      %v3397 = vld [vmem:[%s3380 + $0x40] sm:$0xf]
      %v3398 = vld [vmem:[%s3380 + $0x44] sm:$0x1]
      %v3399 = vld [vmem:[%s3380 + $0x48] sm:$0xf]
      %v3400 = vld [vmem:[%s3380 + $0x4c] sm:$0xf]
      %v3401 = vld [vmem:[%s3380 + $0x50] sm:$0x1]
      %v3402 = vld [vmem:[%s3380 + $0x54] sm:$0xf]
      %v3403 = vld [vmem:[%s3380 + $0x58] sm:$0xf]
      %v3404 = vld [vmem:[%s3380 + $0x5c] sm:$0x1]
      %v3406 = vshrl.u32 %v3381, 16
      %v3408 = vrot.slane %v3406, 4
      %v3409 = vshll.u32 %v3381, 16
      %v3411 = vrot.slane %v3409, 5
      %v3412 = vor.u32 %v3408, %v3411
      %v3413 = vrot.slane %v3412, 4
      %v3415 = vshll.u32 %v3382, 16
      %v3417 = vrot.slane %v3415, 5
      %v3418 = vsel %vm1050, %v3413, %v3417
      %v3419 = vshrl.u32 %v3382, 16
      %v3421 = vrot.slane %v3419, 4
      %v3422 = vor.u32 %v3421, %v3417
      %v3423 = vrot.slane %v3422, 4
      %v3425 = vshll.u32 %v3383, 16
      %v3427 = vrot.slane %v3425, 5
      %v3428 = vsel %vm1050, %v3423, %v3427
      %v3430 = vshrl.u32 %v3384, 16
      %v3432 = vrot.slane %v3430, 4
      %v3433 = vshll.u32 %v3384, 16
      %v3435 = vrot.slane %v3433, 5
      %v3436 = vor.u32 %v3432, %v3435
      %v3437 = vrot.slane %v3436, 4
      %v3439 = vshll.u32 %v3385, 16
      %v3441 = vrot.slane %v3439, 5
      %v3442 = vsel %vm1050, %v3437, %v3441
      %v3443 = vshrl.u32 %v3385, 16
      %v3445 = vrot.slane %v3443, 4
      %v3446 = vor.u32 %v3445, %v3441
      %v3447 = vrot.slane %v3446, 4
      %v3449 = vshll.u32 %v3386, 16
      %v3451 = vrot.slane %v3449, 5
      %v3452 = vsel %vm1050, %v3447, %v3451
      %v3454 = vshrl.u32 %v3387, 16
      %v3456 = vrot.slane %v3454, 4
      %v3457 = vshll.u32 %v3387, 16
      %v3459 = vrot.slane %v3457, 5
      %v3460 = vor.u32 %v3456, %v3459
      %v3461 = vrot.slane %v3460, 4
      %v3463 = vshll.u32 %v3388, 16
      %v3465 = vrot.slane %v3463, 5
      %v3466 = vsel %vm1050, %v3461, %v3465
      %v3467 = vshrl.u32 %v3388, 16
      %v3469 = vrot.slane %v3467, 4
      %v3470 = vor.u32 %v3469, %v3465
      %v3471 = vrot.slane %v3470, 4
      %v3473 = vshll.u32 %v3389, 16
      %v3475 = vrot.slane %v3473, 5
      %v3476 = vsel %vm1050, %v3471, %v3475
      %v3478 = vshrl.u32 %v3390, 16
      %v3480 = vrot.slane %v3478, 4
      %v3481 = vshll.u32 %v3390, 16
      %v3483 = vrot.slane %v3481, 5
      %v3484 = vor.u32 %v3480, %v3483
      %v3485 = vrot.slane %v3484, 4
      %v3487 = vshll.u32 %v3391, 16
      %v3489 = vrot.slane %v3487, 5
      %v3490 = vsel %vm1050, %v3485, %v3489
      %v3491 = vshrl.u32 %v3391, 16
      %v3493 = vrot.slane %v3491, 4
      %v3494 = vor.u32 %v3493, %v3489
      %v3495 = vrot.slane %v3494, 4
      %v3497 = vshll.u32 %v3392, 16
      %v3499 = vrot.slane %v3497, 5
      %v3500 = vsel %vm1050, %v3495, %v3499
      %v3502 = vshrl.u32 %v3393, 16
      %v3504 = vrot.slane %v3502, 4
      %v3505 = vshll.u32 %v3393, 16
      %v3507 = vrot.slane %v3505, 5
      %v3508 = vor.u32 %v3504, %v3507
      %v3509 = vrot.slane %v3508, 4
      %v3511 = vshll.u32 %v3394, 16
      %v3513 = vrot.slane %v3511, 5
      %v3514 = vsel %vm1050, %v3509, %v3513
      %v3515 = vshrl.u32 %v3394, 16
      %v3517 = vrot.slane %v3515, 4
      %v3518 = vor.u32 %v3517, %v3513
      %v3519 = vrot.slane %v3518, 4
      %v3521 = vshll.u32 %v3395, 16
      %v3523 = vrot.slane %v3521, 5
      %v3524 = vsel %vm1050, %v3519, %v3523
      %v3526 = vshrl.u32 %v3396, 16
      %v3528 = vrot.slane %v3526, 4
      %v3529 = vshll.u32 %v3396, 16
      %v3531 = vrot.slane %v3529, 5
      %v3532 = vor.u32 %v3528, %v3531
      %v3533 = vrot.slane %v3532, 4
      %v3535 = vshll.u32 %v3397, 16
      %v3537 = vrot.slane %v3535, 5
      %v3538 = vsel %vm1050, %v3533, %v3537
      %v3539 = vshrl.u32 %v3397, 16
      %v3541 = vrot.slane %v3539, 4
      %v3542 = vor.u32 %v3541, %v3537
      %v3543 = vrot.slane %v3542, 4
      %v3545 = vshll.u32 %v3398, 16
      %v3547 = vrot.slane %v3545, 5
      %v3548 = vsel %vm1050, %v3543, %v3547
      %v3550 = vshrl.u32 %v3399, 16
      %v3552 = vrot.slane %v3550, 4
      %v3553 = vshll.u32 %v3399, 16
      %v3555 = vrot.slane %v3553, 5
      %v3556 = vor.u32 %v3552, %v3555
      %v3557 = vrot.slane %v3556, 4
      %v3559 = vshll.u32 %v3400, 16
      %v3561 = vrot.slane %v3559, 5
      %v3562 = vsel %vm1050, %v3557, %v3561
      %v3563 = vshrl.u32 %v3400, 16
      %v3565 = vrot.slane %v3563, 4
      %v3566 = vor.u32 %v3565, %v3561
      %v3567 = vrot.slane %v3566, 4
      %v3569 = vshll.u32 %v3401, 16
      %v3571 = vrot.slane %v3569, 5
      %v3572 = vsel %vm1050, %v3567, %v3571
      %v3574 = vshrl.u32 %v3402, 16
      %v3576 = vrot.slane %v3574, 4
      %v3577 = vshll.u32 %v3402, 16
      %v3579 = vrot.slane %v3577, 5
      %v3580 = vor.u32 %v3576, %v3579
      %v3581 = vrot.slane %v3580, 4
      %v3583 = vshll.u32 %v3403, 16
      %v3585 = vrot.slane %v3583, 5
      %v3586 = vsel %vm1050, %v3581, %v3585
      %v3587 = vshrl.u32 %v3403, 16
      %v3589 = vrot.slane %v3587, 4
      %v3590 = vor.u32 %v3589, %v3585
      %v3591 = vrot.slane %v3590, 4
      %v3593 = vshll.u32 %v3404, 16
      %v3595 = vrot.slane %v3593, 5
      %v3596 = vsel %vm1050, %v3591, %v3595
      %v3597 = vld [vmem:[%s7] sm:$0xf]
      %v3598 = vld [vmem:[%s7 + $0x4] sm:$0xf]
      %v3599 = vld [vmem:[%s7 + $0x8] sm:$0xf]
      %v3600 = vld [vmem:[%s7 + $0xc] sm:$0xf]
      %v3601 = vld [vmem:[%s7 + $0x10] sm:$0xf]
      %v3602 = vld [vmem:[%s7 + $0x14] sm:$0xf]
      %v3603 = vld [vmem:[%s7 + $0x18] sm:$0xf]
      %v3604 = vld [vmem:[%s7 + $0x1c] sm:$0xf]
      %v3605 = vld [vmem:[%s7 + $0x20] sm:$0xf]
      %v3606 = vld [vmem:[%s7 + $0x24] sm:$0xf]
      %v3607 = vld [vmem:[%s7 + $0x28] sm:$0xf]
      %v3608 = vld [vmem:[%s7 + $0x2c] sm:$0xf]
      %v3609 = vld [vmem:[%s7 + $0x30] sm:$0xf]
      %v3610 = vld [vmem:[%s7 + $0x34] sm:$0xf]
      %v3611 = vld [vmem:[%s7 + $0x38] sm:$0xf]
      %v3612 = vld [vmem:[%s7 + $0x3c] sm:$0xf]
      %v3613 = vld [vmem:[%s8] sm:$0x1]
      %v3615 = vlaneseq
      %v3616 = vshrl.u32 %v3615, 7
      %v3617 = vsub.s32 0, %v3616
      %v3618 = vrot.slane %v3613, %v3617
      %v3620 = vunpack.c.l.b16 %v3418
      %v3621 = vunpack.c.l.b16 %v3428
      %v3622 = vunpack.c.l.b16 %v3442
      %v3623 = vunpack.c.l.b16 %v3452
      %v3624 = vunpack.c.l.b16 %v3466
      %v3625 = vunpack.c.l.b16 %v3476
      %v3626 = vunpack.c.l.b16 %v3490
      %v3627 = vunpack.c.l.b16 %v3500
      %v3628 = vunpack.c.l.b16 %v3514
      %v3629 = vunpack.c.l.b16 %v3524
      %v3630 = vunpack.c.l.b16 %v3538
      %v3631 = vunpack.c.l.b16 %v3548
      %v3632 = vunpack.c.l.b16 %v3562
      %v3633 = vunpack.c.l.b16 %v3572
      %v3634 = vunpack.c.l.b16 %v3586
      %v3635 = vunpack.c.l.b16 %v3596
      %v3636 = vpack.c.b16 %v3621, %v3620
      %v3637 = vpack.c.b16 %v3623, %v3622
      %v3638 = vpack.c.b16 %v3625, %v3624
      %v3639 = vpack.c.b16 %v3627, %v3626
      %v3640 = vpack.c.b16 %v3629, %v3628
      %v3641 = vpack.c.b16 %v3631, %v3630
      %v3642 = vpack.c.b16 %v3633, %v3632
      %v3643 = vpack.c.b16 %v3635, %v3634
      %v3668 = vunpack.c.l.b16 %v3597
      %v3669 = vunpack.c.l.b16 %v3598
      %v3670 = vunpack.c.l.b16 %v3599
      %v3671 = vunpack.c.l.b16 %v3600
      %v3672 = vunpack.c.l.b16 %v3601
      %v3673 = vunpack.c.l.b16 %v3602
      %v3674 = vunpack.c.l.b16 %v3603
      %v3675 = vunpack.c.l.b16 %v3604
      %v3676 = vunpack.c.l.b16 %v3605
      %v3677 = vunpack.c.l.b16 %v3606
      %v3678 = vunpack.c.l.b16 %v3607
      %v3679 = vunpack.c.l.b16 %v3608
      %v3680 = vunpack.c.l.b16 %v3609
      %v3681 = vunpack.c.l.b16 %v3610
      %v3682 = vunpack.c.l.b16 %v3611
      %v3683 = vunpack.c.l.b16 %v3612
      %v3684 = vpack.c.b16 %v3669, %v3668
      %v3685 = vpack.c.b16 %v3671, %v3670
      %v3686 = vpack.c.b16 %v3673, %v3672
      %v3687 = vpack.c.b16 %v3675, %v3674
      %v3688 = vpack.c.b16 %v3677, %v3676
      %v3689 = vpack.c.b16 %v3679, %v3678
      %v3690 = vpack.c.b16 %v3681, %v3680
      %v3691 = vpack.c.b16 %v3683, %v3682
      %3700 = vmatprep.subr.bf16.mxu0 0
      %3701 = vmatpush1.bf16.msra.mxu0 %v3691
      %3702 = vmatprep.subr.bf16.mxu0 0
      %3703 = vmatpush1.bf16.msra.mxu0 %v3690
      %3704 = vmatprep.subr.bf16.mxu0 0
      %3705 = vmatpush1.bf16.msra.mxu0 %v3689
      %3706 = vmatprep.subr.bf16.mxu0 0
      %3707 = vmatpush1.bf16.msra.mxu0 %v3688
      %3708 = vmatprep.subr.bf16.mxu0 0
      %3709 = vmatpush1.bf16.msra.mxu0 %v3687
      %3710 = vmatprep.subr.bf16.mxu0 0
      %3711 = vmatpush1.bf16.msra.mxu0 %v3686
      %3712 = vmatprep.subr.bf16.mxu0 0
      %3713 = vmatpush1.bf16.msra.mxu0 %v3685
      %3714 = vmatprep.subr.bf16.mxu0 0
      %3715 = vmatpush1.bf16.msra.mxu0 %v3684
      %3716 = vmatprep.subr.bf16.mxu0 0
      %3717 = vmatpush2.bf16.msra.mxu0 0
      %3718 = vmatprep.subr.bf16.mxu0 0
      %3719 = vmatpush2.bf16.msra.mxu0 0
      %3720 = vmatprep.subr.bf16.mxu0 0
      %3721 = vmatpush2.bf16.msra.mxu0 0
      %3722 = vmatprep.subr.bf16.mxu0 0
      %3723 = vmatpush2.bf16.msra.mxu0 0
      %3724 = vmatprep.subr.bf16.mxu0 0
      %3725 = vmatpush2.bf16.msra.mxu0 0
      %3726 = vmatprep.subr.bf16.mxu0 0
      %3727 = vmatpush2.bf16.msra.mxu0 0
      %3728 = vmatprep.subr.bf16.mxu0 0
      %3729 = vmatpush2.bf16.msra.mxu0 0
      %3730 = vmatprep.subr.bf16.mxu0 0
      %3731 = vmatpush2.bf16.msra.mxu0 0
      %3732 = vmatprep.mubr.bf16.mxu0 0
      %3733 = vmatmul.mubr.bf16.gmra.mxu0 %v3636
      %v3734 = vpop.f32.mrf.mxu0
      %v3735 = vadd.f32 %v3618, %v3734
      %v3736 = vpop.f32.mrf.mxu0
      %v3737 = vpop.f32.mrf.mxu0
      %v3738 = vadd.f32 %v3618, %v3737
      %v3739 = vpop.f32.mrf.mxu0
      %3740 = vmatprep.mubr.bf16.mxu0 0
      %3741 = vmatmul.mubr.bf16.gmra.mxu0 %v3637
      %v3742 = vpop.f32.mrf.mxu0
      %v3743 = vadd.f32 %v3618, %v3742
      %v3744 = vpop.f32.mrf.mxu0
      %v3745 = vpop.f32.mrf.mxu0
      %v3746 = vadd.f32 %v3618, %v3745
      %v3747 = vpop.f32.mrf.mxu0
      %3748 = vmatprep.mubr.bf16.mxu0 0
      %3749 = vmatmul.mubr.bf16.gmra.mxu0 %v3638
      %v3750 = vpop.f32.mrf.mxu0
      %v3751 = vadd.f32 %v3618, %v3750
      %v3752 = vpop.f32.mrf.mxu0
      %v3753 = vpop.f32.mrf.mxu0
      %v3754 = vadd.f32 %v3618, %v3753
      %v3755 = vpop.f32.mrf.mxu0
      %3756 = vmatprep.mubr.bf16.mxu0 0
      %3757 = vmatmul.mubr.bf16.gmra.mxu0 %v3639
      %v3758 = vpop.f32.mrf.mxu0
      %v3759 = vadd.f32 %v3618, %v3758
      %v3760 = vpop.f32.mrf.mxu0
      %v3761 = vpop.f32.mrf.mxu0
      %v3762 = vadd.f32 %v3618, %v3761
      %v3763 = vpop.f32.mrf.mxu0
      %3764 = vmatprep.mubr.bf16.mxu0 0
      %3765 = vmatmul.mubr.bf16.gmra.mxu0 %v3640
      %v3766 = vpop.f32.mrf.mxu0
      %v3767 = vadd.f32 %v3618, %v3766
      %v3768 = vpop.f32.mrf.mxu0
      %v3769 = vpop.f32.mrf.mxu0
      %v3770 = vadd.f32 %v3618, %v3769
      %v3771 = vpop.f32.mrf.mxu0
      %3772 = vmatprep.mubr.bf16.mxu0 0
      %3773 = vmatmul.mubr.bf16.gmra.mxu0 %v3641
      %v3774 = vpop.f32.mrf.mxu0
      %v3775 = vadd.f32 %v3618, %v3774
      %v3776 = vpop.f32.mrf.mxu0
      %v3777 = vpop.f32.mrf.mxu0
      %v3778 = vadd.f32 %v3618, %v3777
      %v3779 = vpop.f32.mrf.mxu0
      %3780 = vmatprep.mubr.bf16.mxu0 0
      %3781 = vmatmul.mubr.bf16.gmra.mxu0 %v3642
      %v3782 = vpop.f32.mrf.mxu0
      %v3783 = vadd.f32 %v3618, %v3782
      %v3784 = vpop.f32.mrf.mxu0
      %v3785 = vpop.f32.mrf.mxu0
      %v3786 = vadd.f32 %v3618, %v3785
      %v3787 = vpop.f32.mrf.mxu0
      %3788 = vmatprep.mubr.bf16.mxu0 0
      %3789 = vmatmul.mubr.bf16.gmra.mxu0 %v3643
      %v3790 = vpop.f32.mrf.mxu0
      %v3791 = vadd.f32 %v3618, %v3790
      %v3792 = vpop.f32.mrf.mxu0
      %v3793 = vpop.f32.mrf.mxu0
      %v3794 = vadd.f32 %v3618, %v3793
      %v3795 = vpop.f32.mrf.mxu0
      %3796 = vdwg.mxu0
      %v3797 = vadd.f32 %v3315, %v3735
      %v3798 = vadd.f32 %v3318, %v3738
      %v3799 = vadd.f32 %v3323, %v3743
      %v3800 = vadd.f32 %v3326, %v3746
      %v3801 = vadd.f32 %v3331, %v3751
      %v3802 = vadd.f32 %v3334, %v3754
      %v3803 = vadd.f32 %v3339, %v3759
      %v3804 = vadd.f32 %v3342, %v3762
      %v3805 = vadd.f32 %v3347, %v3767
      %v3806 = vadd.f32 %v3350, %v3770
      %v3807 = vadd.f32 %v3355, %v3775
      %v3808 = vadd.f32 %v3358, %v3778
      %v3809 = vadd.f32 %v3363, %v3783
      %v3810 = vadd.f32 %v3366, %v3786
      %v3811 = vadd.f32 %v3371, %v3791
      %v3812 = vadd.f32 %v3374, %v3794
      %v3813 = vmax.f32 %v3797, 0.0
      %v3814 = vmax.f32 %v3798, 0.0
      %v3815 = vmax.f32 %v3799, 0.0
      %v3816 = vmax.f32 %v3800, 0.0
      %v3817 = vmax.f32 %v3801, 0.0
      %v3818 = vmax.f32 %v3802, 0.0
      %v3819 = vmax.f32 %v3803, 0.0
      %v3820 = vmax.f32 %v3804, 0.0
      %v3821 = vmax.f32 %v3805, 0.0
      %v3822 = vmax.f32 %v3806, 0.0
      %v3823 = vmax.f32 %v3807, 0.0
      %v3824 = vmax.f32 %v3808, 0.0
      %v3825 = vmax.f32 %v3809, 0.0
      %v3826 = vmax.f32 %v3810, 0.0
      %v3827 = vmax.f32 %v3811, 0.0
      %v3828 = vmax.f32 %v3812, 0.0
      %3829 = vst [vmem:[%s356] sm:$0xff] %v3813
      %3830 = vst [vmem:[%s356 + $0x8] sm:$0xff] %v3814
      %3831 = vst [vmem:[%s356 + $0x10] sm:$0xff] %v3815
      %3832 = vst [vmem:[%s356 + $0x18] sm:$0xff] %v3816
      %3833 = vst [vmem:[%s356 + $0x20] sm:$0xff] %v3817
      %3834 = vst [vmem:[%s356 + $0x28] sm:$0xff] %v3818
      %3835 = vst [vmem:[%s356 + $0x30] sm:$0xff] %v3819
      %3836 = vst [vmem:[%s356 + $0x38] sm:$0xff] %v3820
      %3837 = vst [vmem:[%s356 + $0x40] sm:$0xff] %v3821
      %3838 = vst [vmem:[%s356 + $0x48] sm:$0xff] %v3822
      %3839 = vst [vmem:[%s356 + $0x50] sm:$0xff] %v3823
      %3840 = vst [vmem:[%s356 + $0x58] sm:$0xff] %v3824
      %3841 = vst [vmem:[%s356 + $0x60] sm:$0xff] %v3825
      %3842 = vst [vmem:[%s356 + $0x68] sm:$0xff] %v3826
      %3843 = vst [vmem:[%s356 + $0x70] sm:$0xff] %v3827
      %3844 = vst [vmem:[%s356 + $0x78] sm:$0xff] %v3828
      %s3845 = smul.u32 8, %s25
      %p3846 = scmp.lt.s32.totalorder %s24, 1
      %s3847 = scalar_select %p3846, %s24, 1
      %p3848 = scmp.lt.s32.totalorder %s3845, 15
      %s3849 = scalar_select %p3848, %s3845, 15
      %s3850 = smul.addr %s3849, 2
      %s3851 = smul.addr %s3847, 32
      %s3852 = sadd.s32 %s3850, %s3851
      %s3853 = smul.addr %s3852, 8
      %s3854 = scalar_lea.vmem %s9, %s3853
      // Predicated region
      $region65: #{bottleneck_forward.1} parent=55 // pred_check
        %p3855 = pneg %p246
      $region66: #{bottleneck_forward.1} parent=55 // pred_check_branch
        %3857 = sbr.rel (%p3855) target = $region68
      $region67: #{bottleneck_forward.1} parent=55 // pred_region
        %s3858 = smul.u32 8, %s25
      $region68: #{bottleneck_forward.1} parent=55 // pred_fallthru
        _
    $region56: #{bottleneck_forward.1} parent=5 // pred_fallthru
      _
    %p3859 = scmp.le.s32.totalorder 2, %s15
    // Predicated region
    $region69: #{bottleneck_forward.1} parent=5 // pred_check
      %p3860 = pneg %p3859
    $region70: #{bottleneck_forward.1} parent=5 // pred_check_branch
      %3862 = sbr.rel (%p3860) target = $region72
    $region71: #{bottleneck_forward.1} parent=5 // pred_region
      %s3863 = ssub.s32 %s15, 2
      // Predicated region
      $region73: #{bottleneck_forward.1} parent=71 // pred_check
        %p3864 = pneg %p252
      $region74: #{bottleneck_forward.1} parent=71 // pred_check_branch
        %3866 = sbr.rel (%p3864) target = $region76
      $region75: #{bottleneck_forward.1} parent=71 // pred_region
        %s3867 = smul.u32 8, %s27
        %p3868 = scmp.lt.s32.totalorder %s26, 1
        %s3869 = scalar_select %p3868, %s26, 1
        %p3870 = scmp.lt.s32.totalorder %s3867, 15
        %s3871 = scalar_select %p3870, %s3867, 15
        %s3872 = smul.addr %s3871, 2
        %s3873 = smul.addr %s3869, 32
        %s3874 = sadd.s32 %s3872, %s3873
        %s3875 = smul.addr %s3874, 8
        %s3876 = scalar_lea.vmem %s9, %s3875
      $region76: #{bottleneck_forward.1} parent=71 // pred_fallthru
        _
    $region72: #{bottleneck_forward.1} parent=5 // pred_fallthru
      _
  $region6: #{bottleneck_forward.1} parent=0 // loop_footer
    %s19 = sadd.s32 1, %s15
  $region7: #{bottleneck_forward.1} parent=0 // loop_footer_branch
    %14 = sbr.rel target = $region3
  $region8: #{bottleneck_forward.1} parent=0 // loop_exit
    _

</llo_original>
